<compile_context>
chip_gen: v7x
topology: tpu7x:2x2x1
jax: 0.10.0
libtpu: 0.0.40
codegen_flags: <defaults>
</compile_context>

<pallas_src>
import jax
import jax.numpy as jnp
from jax.experimental import pallas as pl
from jax.experimental.pallas import tpu as pltpu


# --------------------------------------------------------------------------
# Tiling helpers
# --------------------------------------------------------------------------
def _pick_tile(s):
    """Largest lane-tile <= 512 that divides the spatial size (128-aligned if possible)."""
    for t in (512, 256, 128):
        if s % t == 0:
            return t
    return s  # fall back to a single full-width block


_PAR2 = pltpu.CompilerParams(dimension_semantics=("parallel", "parallel"))


# --------------------------------------------------------------------------
# Kernel A: fused 1x1 conv  o = [relu]( W @ [relu](x) + b + residual )
# --------------------------------------------------------------------------
def conv1x1(x, w, b=None, *, pre_relu=False, post_relu=False, residual=None,
            out_dtype=jnp.bfloat16):
    """x: (B, Cin, S); w: (Cout, Cin) bf16; b: (Cout,) f32 or None;
    residual: (B, Cout, S) or None.  Returns (B, Cout, S)."""
    B, Cin, S = x.shape
    Cout = w.shape[0]
    tn = _pick_tile(S)
    has_bias = b is not None
    has_res = residual is not None

    def kernel(*refs):
        i = 0
        x_ref = refs[i]; i += 1
        w_ref = refs[i]; i += 1
        b_ref = refs[i] if has_bias else None
        i += 1 if has_bias else 0
        r_ref = refs[i] if has_res else None
        i += 1 if has_res else 0
        o_ref = refs[i]

        xv = x_ref[0]
        if pre_relu:
            xv = jnp.maximum(xv, 0)
        acc = jnp.dot(w_ref[...], xv.astype(jnp.bfloat16),
                      preferred_element_type=jnp.float32)
        if has_bias:
            acc = acc + b_ref[...]
        if has_res:
            acc = acc + r_ref[0].astype(jnp.float32)
        if post_relu:
            acc = jnp.maximum(acc, 0.0)
        o_ref[0] = acc.astype(o_ref.dtype)

    in_specs = [pl.BlockSpec((1, Cin, tn), lambda bb, nn_: (bb, 0, nn_)),
                pl.BlockSpec((Cout, Cin), lambda bb, nn_: (0, 0))]
    args = [x, w]
    if has_bias:
        in_specs.append(pl.BlockSpec((Cout, 1), lambda bb, nn_: (0, 0)))
        args.append(b.reshape(Cout, 1).astype(jnp.float32))
    if has_res:
        in_specs.append(pl.BlockSpec((1, Cout, tn), lambda bb, nn_: (bb, 0, nn_)))
        args.append(residual)

    return pl.pallas_call(
        kernel,
        out_shape=jax.ShapeDtypeStruct((B, Cout, S), out_dtype),
        grid=(B, S // tn),
        in_specs=in_specs,
        out_specs=pl.BlockSpec((1, Cout, tn), lambda bb, nn_: (bb, 0, nn_)),
        compiler_params=_PAR2,
    )(*args)


# --------------------------------------------------------------------------
# Kernel B: two 1x1 convs sharing one read of the input activation
# --------------------------------------------------------------------------
def conv1x1_dual(x, w_a, b_a, w_b, b_b, *, pre_relu=False, out_dtype=jnp.bfloat16):
    """Returns (W_a @ x + b_a, W_b @ x + b_b) with the x tile loaded once."""
    B, Cin, S = x.shape
    Ca, Cb = w_a.shape[0], w_b.shape[0]
    tn = _pick_tile(S)
    has_bias = b_a is not None

    def kernel(*refs):
        i = 0
        x_ref = refs[i]; i += 1
        wa_ref = refs[i]; i += 1
        wb_ref = refs[i]; i += 1
        if has_bias:
            ba_ref, bb_ref = refs[i], refs[i + 1]
            i += 2
        oa_ref, ob_ref = refs[i], refs[i + 1]

        xv = x_ref[0]
        if pre_relu:
            xv = jnp.maximum(xv, 0)
        xv = xv.astype(jnp.bfloat16)
        acc_a = jnp.dot(wa_ref[...], xv, preferred_element_type=jnp.float32)
        acc_b = jnp.dot(wb_ref[...], xv, preferred_element_type=jnp.float32)
        if has_bias:
            acc_a = acc_a + ba_ref[...]
            acc_b = acc_b + bb_ref[...]
        oa_ref[0] = acc_a.astype(oa_ref.dtype)
        ob_ref[0] = acc_b.astype(ob_ref.dtype)

    in_specs = [pl.BlockSpec((1, Cin, tn), lambda bb, nn_: (bb, 0, nn_)),
                pl.BlockSpec((Ca, Cin), lambda bb, nn_: (0, 0)),
                pl.BlockSpec((Cb, Cin), lambda bb, nn_: (0, 0))]
    args = [x, w_a, w_b]
    if has_bias:
        in_specs += [pl.BlockSpec((Ca, 1), lambda bb, nn_: (0, 0)),
                     pl.BlockSpec((Cb, 1), lambda bb, nn_: (0, 0))]
        args += [b_a.reshape(Ca, 1).astype(jnp.float32),
                 b_b.reshape(Cb, 1).astype(jnp.float32)]

    return pl.pallas_call(
        kernel,
        out_shape=(jax.ShapeDtypeStruct((B, Ca, S), out_dtype),
                   jax.ShapeDtypeStruct((B, Cb, S), out_dtype)),
        grid=(B, S // tn),
        in_specs=in_specs,
        out_specs=(pl.BlockSpec((1, Ca, tn), lambda bb, nn_: (bb, 0, nn_)),
                   pl.BlockSpec((1, Cb, tn), lambda bb, nn_: (bb, 0, nn_))),
        compiler_params=_PAR2,
    )(*args)


# --------------------------------------------------------------------------
# Kernel C: fused conv_w chain   w2 @ relu( w1 @ relu([x1; x2]) ) + b2
# (the concat is never materialised: w1 is split column-wise instead)
# --------------------------------------------------------------------------
def conv_w_branch(x1, x2, w1, w2, b2, rel, out_dtype=jnp.bfloat16):
    B, _, N = x1.shape
    C2 = x2.shape[1]
    ms = w1.shape[0]
    kms = w2.shape[0]
    tn = _pick_tile(N)
    w1a = w1[:, :rel]
    w1b = w1[:, rel:]

    def kernel(x1_ref, x2_ref, w1a_ref, w1b_ref, w2_ref, b2_ref, o_ref):
        a = jnp.maximum(x1_ref[0], 0).astype(jnp.bfloat16)
        c = jnp.maximum(x2_ref[0], 0).astype(jnp.bfloat16)
        h = jnp.dot(w1a_ref[...], a, preferred_element_type=jnp.float32)
        h = h + jnp.dot(w1b_ref[...], c, preferred_element_type=jnp.float32)
        h = jnp.maximum(h, 0.0).astype(jnp.bfloat16)
        out = jnp.dot(w2_ref[...], h, preferred_element_type=jnp.float32) + b2_ref[...]
        o_ref[0] = out.astype(o_ref.dtype)

    return pl.pallas_call(
        kernel,
        out_shape=jax.ShapeDtypeStruct((B, kms, N), out_dtype),
        grid=(B, N // tn),
        in_specs=[pl.BlockSpec((1, rel, tn), lambda bb, nn_: (bb, 0, nn_)),
                  pl.BlockSpec((1, C2, tn), lambda bb, nn_: (bb, 0, nn_)),
                  pl.BlockSpec((ms, rel), lambda bb, nn_: (0, 0)),
                  pl.BlockSpec((ms, C2), lambda bb, nn_: (0, 0)),
                  pl.BlockSpec((kms, ms), lambda bb, nn_: (0, 0)),
                  pl.BlockSpec((kms, 1), lambda bb, nn_: (0, 0))],
        out_specs=pl.BlockSpec((1, kms, tn), lambda bb, nn_: (bb, 0, nn_)),
        compiler_params=_PAR2,
    )(x1, x2, w1a, w1b, w2, b2.reshape(kms, 1).astype(jnp.float32))


# --------------------------------------------------------------------------
# Kernel D: relu( sum_k  w(share-broadcast) * x3 )
# The PyTorch `w.repeat(1, share_planes, 1, 1)` is expressed via index
# mapping: the same (ms, K, tn) w block is reused for every share group.
# --------------------------------------------------------------------------
def weighted_sum_relu(w, x3, share, out_dtype=jnp.bfloat16):
    """w: (B, ms, K, N); x3: (B, mid, K, N) with mid = share * ms  ->  (B, mid, N)."""
    B, ms, K, N = w.shape
    mid = x3.shape[1]
    assert mid == share * ms
    x3g = x3.reshape(B * share, ms, K, N)          # free, contiguous view
    tn = _pick_tile(N)

    def kernel(w_ref, x3_ref, o_ref):
        prod = w_ref[0].astype(jnp.float32) * x3_ref[0].astype(jnp.float32)  # (ms,K,tn)
        o_ref[0] = jnp.maximum(jnp.sum(prod, axis=1), 0.0).astype(o_ref.dtype)

    out = pl.pallas_call(
        kernel,
        out_shape=jax.ShapeDtypeStruct((B * share, ms, N), out_dtype),
        grid=(B, N // tn, share),                  # share innermost -> w block DMA reused
        in_specs=[pl.BlockSpec((1, ms, K, tn),
                               lambda bb, nn_, ss: (bb, 0, 0, nn_)),
                  pl.BlockSpec((1, ms, K, tn),
                               lambda bb, nn_, ss: (bb * share + ss, 0, 0, nn_))],
        out_specs=pl.BlockSpec((1, ms, tn),
                               lambda bb, nn_, ss: (bb * share + ss, 0, nn_)),
        compiler_params=pltpu.CompilerParams(
            dimension_semantics=("parallel", "parallel", "arbitrary")),
    )(w, x3g)
    return out.reshape(B, mid, N)


# --------------------------------------------------------------------------
# Plain-JAX helpers (data-dependent gather / tiny attention math)
# --------------------------------------------------------------------------
def get_edge_features(x, idx):
    """x: (B, C, N), idx: (B, N, k) -> neighbor features (B, C, k, N)."""
    # TODO(synk): data-dependent gather has no static-BlockSpec equivalent; kept in XLA.
    idx_t = jnp.swapaxes(idx, 1, 2)                       # (B, k, N)
    return jax.vmap(lambda f, i: f[:, i])(x, idx_t)       # (B, C, k, N)


# --------------------------------------------------------------------------
# Module forward passes
# --------------------------------------------------------------------------
def sa_module_forward(p, x, idx, share, k):
    """x: (B, C, N) (identity saved pre-ReLU); returns relu(SA(x)) as (B, C, N)."""
    B, C, N = x.shape
    rel = p['conv1']['w'].shape[0]
    mid = p['conv3']['w'].shape[0]
    ms = mid // share

    # relu(x) is never materialised: gather commutes with ReLU, so the ReLU is
    # fused into the conv kernels (pre_relu=True).
    xn = get_edge_features(x, idx)                        # (B, C, k, N)
    xn_flat = xn.reshape(B, C, k * N)

    x1 = conv1x1(x, p['conv1']['w'], p['conv1']['b'], pre_relu=True)        # (B, rel, N)
    x2f, x3f = conv1x1_dual(xn_flat,
                            p['conv2']['w'], p['conv2']['b'],
                            p['conv3']['w'], p['conv3']['b'],
                            pre_relu=True)                # (B, rel, kN), (B, mid, kN)
    x2 = x2f.reshape(B, rel, k, N).reshape(B, rel * k, N)  # == PyTorch .view(B,-1,1,N)
    x3 = x3f.reshape(B, mid, k, N)

    wgt = conv_w_branch(x1, x2, p['convw1']['w'], p['convw2']['w'],
                        p['convw2']['b'], rel)            # (B, k*ms, N)
    wgt = wgt.reshape(B, ms, k, N)                        # == .view(B,-1,k,N)

    s = weighted_sum_relu(wgt, x3, share)                 # (B, mid, N)

    # conv_out + residual(identity) + the SK_SA ReLU, all fused.
    return conv1x1(s, p['conv_out']['w'], p['conv_out']['b'],
                   residual=x, post_relu=True)            # (B, C, N)


def sk_sa_forward(p, x, idxs, share, ks):
    feas = [sa_module_forward(sam_p, x, idxs[i], share, ks[i])
            for i, sam_p in enumerate(p['sams'])]
    feas_st = jnp.stack(feas, axis=1).astype(jnp.float32)     # (B, nk, C, N)
    fea_U = jnp.sum(feas_st, axis=1)                          # (B, C, N)
    fea_s = jnp.mean(fea_U, axis=-1)                          # (B, C)
    # TODO(synk): the (B,C)-sized squeeze/excite linears + softmax stay in plain JAX.
    fea_z = fea_s @ p['fc']['w'].T + p['fc']['b']             # (B, d)
    att = jnp.stack([fea_z @ fp['w'].T + fp['b'] for fp in p['fcs']], axis=1)
    att = jax.nn.softmax(att, axis=1)                         # (B, nk, C)
    fea_v = jnp.sum(feas_st * att[:, :, :, None], axis=1)     # (B, C, N)
    return fea_v.astype(jnp.bfloat16)


def skn_res_unit_forward(p, feat, idxs, ks, share=8):
    """feat: (B, Cin, 1, N) float32; idxs: list of (B, N, k_i) int32."""
    B, Cin, _, N = feat.shape
    f = feat[:, :, 0, :]                                      # (B, Cin, N)
    # conv1 and conv_res share a single read of feat.
    x, res = conv1x1_dual(f, p['conv1']['w'], None, p['conv_res']['w'], None,
                          pre_relu=False)
    for blk in p['sam']:
        x = sk_sa_forward(blk, x, idxs, share, ks)
    # conv2(relu(x)) + conv_res(feat), residual add fused in the epilogue.
    out = conv1x1(x, p['conv2']['w'], None, pre_relu=True,
                  residual=res, out_dtype=jnp.float32)        # (B, Cout, N)
    return out[:, :, None, :]                                 # (B, Cout, 1, N)


# --------------------------------------------------------------------------
# Deterministic PyTorch-default-style parameter init (weights bf16, biases f32)
# --------------------------------------------------------------------------
def _init_conv(key, cin, cout, bias=True):
    bound = 1.0 / (cin ** 0.5)
    kw, kb = jax.random.split(key)
    w = jax.random.uniform(kw, (cout, cin), jnp.float32, -bound, bound)
    b = (jax.random.uniform(kb, (cout,), jnp.float32, -bound, bound)
         if bias else None)
    return {'w': w.astype(jnp.bfloat16), 'b': b}


def _init_linear(key, fin, fout):
    bound = 1.0 / (fin ** 0.5)
    kw, kb = jax.random.split(key)
    return {'w': jax.random.uniform(kw, (fout, fin), jnp.float32, -bound, bound),
            'b': jax.random.uniform(kb, (fout,), jnp.float32, -bound, bound)}


def init_sa(key, in_p, rel, mid, out_p, share, k):
    keys = jax.random.split(key, 6)
    return {
        'conv1': _init_conv(keys[0], in_p, rel),
        'conv2': _init_conv(keys[1], in_p, rel),
        'conv3': _init_conv(keys[2], in_p, mid),
        'convw1': _init_conv(keys[3], rel * (k + 1), mid // share, bias=False),
        'convw2': _init_conv(keys[4], mid // share, k * mid // share),
        'conv_out': _init_conv(keys[5], mid, out_p),
    }


def init_sk(key, in_p, rel, mid, out_p, share, ks, r=2, L=32):
    d = max(out_p // r, L)
    keys = jax.random.split(key, 2 * len(ks) + 1)
    return {
        'sams': [init_sa(keys[i], in_p, rel, mid, out_p, share, ks[i])
                 for i in range(len(ks))],
        'fc': _init_linear(keys[len(ks)], out_p, d),
        'fcs': [_init_linear(keys[len(ks) + 1 + i], d, out_p)
                for i in range(len(ks))],
    }


def init_skn_res(key, in_size, out_size, ks, layers):
    keys = jax.random.split(key, layers + 3)
    return {
        'conv1': _init_conv(keys[0], in_size, out_size, bias=False),
        'sam': [init_sk(keys[1 + i], out_size, out_size // 16,
                        out_size // 4, out_size, 8, ks)
                for i in range(layers)],
        'conv2': _init_conv(keys[layers + 1], out_size, out_size, bias=False),
        'conv_res': _init_conv(keys[layers + 2], in_size, out_size, bias=False),
    }


# --------------------------------------------------------------------------
if __name__ == "__main__":
    B, N = 2, 256
    in_size, out_size = 16, 64       # out_size multiple of 32 so share=8 divides mid
    ks = [4, 8]
    layers = 1
    share = 8

    root = jax.random.PRNGKey(0)
    k_param, k_feat, k_idx = jax.random.split(root, 3)
    params = init_skn_res(k_param, in_size, out_size, ks, layers)

    feat = jax.random.normal(k_feat, (B, in_size, 1, N), jnp.float32)
    idxs = []
    for kk in ks:
        k_idx, sub = jax.random.split(k_idx)
        idxs.append(jax.random.randint(sub, (B, N, kk), 0, N, dtype=jnp.int32))

    fwd = jax.jit(lambda p, f, ids: skn_res_unit_forward(p, f, ids, ks, share))
    out = fwd(params, feat, idxs)
    out = jax.block_until_ready(out)

    assert out.shape == (B, out_size, 1, N), out.shape
    assert bool(jnp.all(jnp.isfinite(out)))
    print("KERNEL_OK")
</pallas_src>

<mosaic_0001>
module attributes {stable_mosaic.version = 11 : i64} {
  func.func @kernel(%arg0: i32, %arg1: i32, %arg2: memref<1x16x256xf32, #tpu.memory_space<vmem>>, %arg3: memref<64x16xbf16, #tpu.memory_space<vmem>>, %arg4: memref<64x16xbf16, #tpu.memory_space<vmem>>, %arg5: memref<1x64x256xbf16, #tpu.memory_space<vmem>>, %arg6: memref<1x64x256xbf16, #tpu.memory_space<vmem>>) attributes {dimension_semantics = [#tpu.dimension_semantics<parallel>, #tpu.dimension_semantics<parallel>], iteration_bounds = array<i64: 2, 1>, scalar_prefetch = 0 : i64, scratch_operands = 0 : i64, tpu.core_type = #tpu.core_type<tc>, window_params = [{transform_indices = @transform_0, window_bounds = array<i64: 1, 16, 256>}, {pipeline_mode = #tpu.pipeline_mode<synchronous>, transform_indices = @transform_1, window_bounds = array<i64: 64, 16>}, {pipeline_mode = #tpu.pipeline_mode<synchronous>, transform_indices = @transform_2, window_bounds = array<i64: 64, 16>}, {transform_indices = @transform_3, window_bounds = array<i64: 1, 64, 256>}, {transform_indices = @transform_4, window_bounds = array<i64: 1, 64, 256>}]} {
    %c0 = arith.constant 0 : index
    %c0_0 = arith.constant 0 : index
    %c0_1 = arith.constant 0 : index
    %0 = vector.load %arg2[%c0, %c0_0, %c0_1] : memref<1x16x256xf32, #tpu.memory_space<vmem>>, vector<1x16x256xf32>
    %1 = vector.shape_cast %0 : vector<1x16x256xf32> to vector<16x256xf32>
    %2 = arith.truncf %1 : vector<16x256xf32> to vector<16x256xbf16>
    %c0_2 = arith.constant 0 : index
    %c0_3 = arith.constant 0 : index
    %3 = vector.load %arg3[%c0_2, %c0_3] : memref<64x16xbf16, #tpu.memory_space<vmem>>, vector<64x16xbf16>
    %cst = arith.constant dense<0.000000e+00> : vector<64x256xf32>
    %4 = tpu.matmul %3, %2, %cst {dimension_numbers = #tpu.dot_dimension_numbers<[1], [0], [0], [1], [0, 0, 1, 1], [], []>} : vector<64x16xbf16>, vector<16x256xbf16>, vector<64x256xf32> -> vector<64x256xf32>
    %c0_4 = arith.constant 0 : index
    %c0_5 = arith.constant 0 : index
    %5 = vector.load %arg4[%c0_4, %c0_5] : memref<64x16xbf16, #tpu.memory_space<vmem>>, vector<64x16xbf16>
    %cst_6 = arith.constant dense<0.000000e+00> : vector<64x256xf32>
    %6 = tpu.matmul %5, %2, %cst_6 {dimension_numbers = #tpu.dot_dimension_numbers<[1], [0], [0], [1], [0, 0, 1, 1], [], []>} : vector<64x16xbf16>, vector<16x256xbf16>, vector<64x256xf32> -> vector<64x256xf32>
    %7 = arith.truncf %4 : vector<64x256xf32> to vector<64x256xbf16>
    %c0_7 = arith.constant 0 : index
    %c0_8 = arith.constant 0 : index
    %c0_9 = arith.constant 0 : index
    %8 = vector.load %arg5[%c0_7, %c0_8, %c0_9] : memref<1x64x256xbf16, #tpu.memory_space<vmem>>, vector<1x64x256xbf16>
    %9 = vector.shape_cast %8 : vector<1x64x256xbf16> to vector<64x256xbf16>
    %10 = vector.shape_cast %7 : vector<64x256xbf16> to vector<1x64x256xbf16>
    tpu.vector_store %arg5[%c0_7, %c0_8, %c0_9], %10 {strides = array<i32>} : memref<1x64x256xbf16, #tpu.memory_space<vmem>>, vector<1x64x256xbf16>,
    %11 = arith.truncf %6 : vector<64x256xf32> to vector<64x256xbf16>
    %c0_10 = arith.constant 0 : index
    %c0_11 = arith.constant 0 : index
    %c0_12 = arith.constant 0 : index
    %12 = vector.load %arg6[%c0_10, %c0_11, %c0_12] : memref<1x64x256xbf16, #tpu.memory_space<vmem>>, vector<1x64x256xbf16>
    %13 = vector.shape_cast %12 : vector<1x64x256xbf16> to vector<64x256xbf16>
    %14 = vector.shape_cast %11 : vector<64x256xbf16> to vector<1x64x256xbf16>
    tpu.vector_store %arg6[%c0_10, %c0_11, %c0_12], %14 {strides = array<i32>} : memref<1x64x256xbf16, #tpu.memory_space<vmem>>, vector<1x64x256xbf16>,
    return
  }
  func.func @transform_0(%arg0: i32, %arg1: i32) -> (i32, i32, i32) {
    %c0_i32 = arith.constant 0 : i32
    %c0_i32_0 = arith.constant 0 : i32
    return %arg0, %c0_i32, %arg1 : i32, i32, i32
  }
  func.func @transform_1(%arg0: i32, %arg1: i32) -> (i32, i32) {
    %c0_i32 = arith.constant 0 : i32
    %c0_i32_0 = arith.constant 0 : i32
    %c0_i32_1 = arith.constant 0 : i32
    return %c0_i32, %c0_i32_0 : i32, i32
  }
  func.func @transform_2(%arg0: i32, %arg1: i32) -> (i32, i32) {
    %c0_i32 = arith.constant 0 : i32
    %c0_i32_0 = arith.constant 0 : i32
    %c0_i32_1 = arith.constant 0 : i32
    return %c0_i32, %c0_i32_0 : i32, i32
  }
  func.func @transform_3(%arg0: i32, %arg1: i32) -> (i32, i32, i32) {
    %c0_i32 = arith.constant 0 : i32
    %c0_i32_0 = arith.constant 0 : i32
    return %arg0, %c0_i32, %arg1 : i32, i32, i32
  }
  func.func @transform_4(%arg0: i32, %arg1: i32) -> (i32, i32, i32) {
    %c0_i32 = arith.constant 0 : i32
    %c0_i32_0 = arith.constant 0 : i32
    return %arg0, %c0_i32, %arg1 : i32, i32, i32
  }
}

module attributes {stable_mosaic.version = 11 : i64} {
  func.func @kernel(%arg0: i32, %arg1: i32, %arg2: memref<1x64x512xbf16, #tpu.memory_space<vmem>>, %arg3: memref<4x64xbf16, #tpu.memory_space<vmem>>, %arg4: memref<16x64xbf16, #tpu.memory_space<vmem>>, %arg5: memref<4x1xf32, #tpu.memory_space<vmem>>, %arg6: memref<16x1xf32, #tpu.memory_space<vmem>>, %arg7: memref<1x4x512xbf16, #tpu.memory_space<vmem>>, %arg8: memref<1x16x512xbf16, #tpu.memory_space<vmem>>) attributes {dimension_semantics = [#tpu.dimension_semantics<parallel>, #tpu.dimension_semantics<parallel>], iteration_bounds = array<i64: 2, 2>, scalar_prefetch = 0 : i64, scratch_operands = 0 : i64, tpu.core_type = #tpu.core_type<tc>, window_params = [{transform_indices = @transform_0, window_bounds = array<i64: 1, 64, 512>}, {pipeline_mode = #tpu.pipeline_mode<synchronous>, transform_indices = @transform_1, window_bounds = array<i64: 4, 64>}, {pipeline_mode = #tpu.pipeline_mode<synchronous>, transform_indices = @transform_2, window_bounds = array<i64: 16, 64>}, {pipeline_mode = #tpu.pipeline_mode<synchronous>, transform_indices = @transform_3, window_bounds = array<i64: 4, 1>}, {pipeline_mode = #tpu.pipeline_mode<synchronous>, transform_indices = @transform_4, window_bounds = array<i64: 16, 1>}, {transform_indices = @transform_5, window_bounds = array<i64: 1, 4, 512>}, {transform_indices = @transform_6, window_bounds = array<i64: 1, 16, 512>}]} {
    %c0 = arith.constant 0 : index
    %c0_0 = arith.constant 0 : index
    %c0_1 = arith.constant 0 : index
    %0 = vector.load %arg2[%c0, %c0_0, %c0_1] : memref<1x64x512xbf16, #tpu.memory_space<vmem>>, vector<1x64x512xbf16>
    %1 = vector.shape_cast %0 : vector<1x64x512xbf16> to vector<64x512xbf16>
    %cst = arith.constant 0.000000e+00 : bf16
    %2 = vector.broadcast %cst : bf16 to vector<64x512xbf16>
    %3 = arith.maximumf %1, %2 : vector<64x512xbf16>
    %c0_2 = arith.constant 0 : index
    %c0_3 = arith.constant 0 : index
    %4 = vector.load %arg3[%c0_2, %c0_3] : memref<4x64xbf16, #tpu.memory_space<vmem>>, vector<4x64xbf16>
    %cst_4 = arith.constant dense<0.000000e+00> : vector<4x512xf32>
    %5 = tpu.matmul %4, %3, %cst_4 {dimension_numbers = #tpu.dot_dimension_numbers<[1], [0], [0], [1], [0, 0, 1, 1], [], []>} : vector<4x64xbf16>, vector<64x512xbf16>, vector<4x512xf32> -> vector<4x512xf32>
    %c0_5 = arith.constant 0 : index
    %c0_6 = arith.constant 0 : index
    %6 = vector.load %arg4[%c0_5, %c0_6] : memref<16x64xbf16, #tpu.memory_space<vmem>>, vector<16x64xbf16>
    %cst_7 = arith.constant dense<0.000000e+00> : vector<16x512xf32>
    %7 = tpu.matmul %6, %3, %cst_7 {dimension_numbers = #tpu.dot_dimension_numbers<[1], [0], [0], [1], [0, 0, 1, 1], [], []>} : vector<16x64xbf16>, vector<64x512xbf16>, vector<16x512xf32> -> vector<16x512xf32>
    %c0_8 = arith.constant 0 : index
    %c0_9 = arith.constant 0 : index
    %8 = vector.load %arg5[%c0_8, %c0_9] : memref<4x1xf32, #tpu.memory_space<vmem>>, vector<4x1xf32>
    %9 = vector.broadcast %8 : vector<4x1xf32> to vector<4x512xf32>
    %10 = arith.addf %5, %9 : vector<4x512xf32>
    %c0_10 = arith.constant 0 : index
    %c0_11 = arith.constant 0 : index
    %11 = vector.load %arg6[%c0_10, %c0_11] : memref<16x1xf32, #tpu.memory_space<vmem>>, vector<16x1xf32>
    %12 = vector.broadcast %11 : vector<16x1xf32> to vector<16x512xf32>
    %13 = arith.addf %7, %12 : vector<16x512xf32>
    %14 = arith.truncf %10 : vector<4x512xf32> to vector<4x512xbf16>
    %c0_12 = arith.constant 0 : index
    %c0_13 = arith.constant 0 : index
    %c0_14 = arith.constant 0 : index
    %15 = vector.load %arg7[%c0_12, %c0_13, %c0_14] : memref<1x4x512xbf16, #tpu.memory_space<vmem>>, vector<1x4x512xbf16>
    %16 = vector.shape_cast %15 : vector<1x4x512xbf16> to vector<4x512xbf16>
    %17 = vector.shape_cast %14 : vector<4x512xbf16> to vector<1x4x512xbf16>
    tpu.vector_store %arg7[%c0_12, %c0_13, %c0_14], %17 {strides = array<i32>} : memref<1x4x512xbf16, #tpu.memory_space<vmem>>, vector<1x4x512xbf16>,
    %18 = arith.truncf %13 : vector<16x512xf32> to vector<16x512xbf16>
    %c0_15 = arith.constant 0 : index
    %c0_16 = arith.constant 0 : index
    %c0_17 = arith.constant 0 : index
    %19 = vector.load %arg8[%c0_15, %c0_16, %c0_17] : memref<1x16x512xbf16, #tpu.memory_space<vmem>>, vector<1x16x512xbf16>
    %20 = vector.shape_cast %19 : vector<1x16x512xbf16> to vector<16x512xbf16>
    %21 = vector.shape_cast %18 : vector<16x512xbf16> to vector<1x16x512xbf16>
    tpu.vector_store %arg8[%c0_15, %c0_16, %c0_17], %21 {strides = array<i32>} : memref<1x16x512xbf16, #tpu.memory_space<vmem>>, vector<1x16x512xbf16>,
    return
  }
  func.func @transform_0(%arg0: i32, %arg1: i32) -> (i32, i32, i32) {
    %c0_i32 = arith.constant 0 : i32
    %c0_i32_0 = arith.constant 0 : i32
    return %arg0, %c0_i32, %arg1 : i32, i32, i32
  }
  func.func @transform_1(%arg0: i32, %arg1: i32) -> (i32, i32) {
    %c0_i32 = arith.constant 0 : i32
    %c0_i32_0 = arith.constant 0 : i32
    %c0_i32_1 = arith.constant 0 : i32
    return %c0_i32, %c0_i32_0 : i32, i32
  }
  func.func @transform_2(%arg0: i32, %arg1: i32) -> (i32, i32) {
    %c0_i32 = arith.constant 0 : i32
    %c0_i32_0 = arith.constant 0 : i32
    %c0_i32_1 = arith.constant 0 : i32
    return %c0_i32, %c0_i32_0 : i32, i32
  }
  func.func @transform_3(%arg0: i32, %arg1: i32) -> (i32, i32) {
    %c0_i32 = arith.constant 0 : i32
    %c0_i32_0 = arith.constant 0 : i32
    %c0_i32_1 = arith.constant 0 : i32
    return %c0_i32, %c0_i32_0 : i32, i32
  }
  func.func @transform_4(%arg0: i32, %arg1: i32) -> (i32, i32) {
    %c0_i32 = arith.constant 0 : i32
    %c0_i32_0 = arith.constant 0 : i32
    %c0_i32_1 = arith.constant 0 : i32
    return %c0_i32, %c0_i32_0 : i32, i32
  }
  func.func @transform_5(%arg0: i32, %arg1: i32) -> (i32, i32, i32) {
    %c0_i32 = arith.constant 0 : i32
    %c0_i32_0 = arith.constant 0 : i32
    return %arg0, %c0_i32, %arg1 : i32, i32, i32
  }
  func.func @transform_6(%arg0: i32, %arg1: i32) -> (i32, i32, i32) {
    %c0_i32 = arith.constant 0 : i32
    %c0_i32_0 = arith.constant 0 : i32
    return %arg0, %c0_i32, %arg1 : i32, i32, i32
  }
}

module attributes {stable_mosaic.version = 11 : i64} {
  func.func @kernel(%arg0: i32, %arg1: i32, %arg2: memref<1x64x256xbf16, #tpu.memory_space<vmem>>, %arg3: memref<4x64xbf16, #tpu.memory_space<vmem>>, %arg4: memref<4x1xf32, #tpu.memory_space<vmem>>, %arg5: memref<1x4x256xbf16, #tpu.memory_space<vmem>>) attributes {dimension_semantics = [#tpu.dimension_semantics<parallel>, #tpu.dimension_semantics<parallel>], iteration_bounds = array<i64: 2, 1>, scalar_prefetch = 0 : i64, scratch_operands = 0 : i64, tpu.core_type = #tpu.core_type<tc>, window_params = [{transform_indices = @transform_0, window_bounds = array<i64: 1, 64, 256>}, {pipeline_mode = #tpu.pipeline_mode<synchronous>, transform_indices = @transform_1, window_bounds = array<i64: 4, 64>}, {pipeline_mode = #tpu.pipeline_mode<synchronous>, transform_indices = @transform_2, window_bounds = array<i64: 4, 1>}, {transform_indices = @transform_3, window_bounds = array<i64: 1, 4, 256>}]} {
    %c0 = arith.constant 0 : index
    %c0_0 = arith.constant 0 : index
    %c0_1 = arith.constant 0 : index
    %0 = vector.load %arg2[%c0, %c0_0, %c0_1] : memref<1x64x256xbf16, #tpu.memory_space<vmem>>, vector<1x64x256xbf16>
    %1 = vector.shape_cast %0 : vector<1x64x256xbf16> to vector<64x256xbf16>
    %cst = arith.constant 0.000000e+00 : bf16
    %2 = vector.broadcast %cst : bf16 to vector<64x256xbf16>
    %3 = arith.maximumf %1, %2 : vector<64x256xbf16>
    %c0_2 = arith.constant 0 : index
    %c0_3 = arith.constant 0 : index
    %4 = vector.load %arg3[%c0_2, %c0_3] : memref<4x64xbf16, #tpu.memory_space<vmem>>, vector<4x64xbf16>
    %cst_4 = arith.constant dense<0.000000e+00> : vector<4x256xf32>
    %5 = tpu.matmul %4, %3, %cst_4 {dimension_numbers = #tpu.dot_dimension_numbers<[1], [0], [0], [1], [0, 0, 1, 1], [], []>} : vector<4x64xbf16>, vector<64x256xbf16>, vector<4x256xf32> -> vector<4x256xf32>
    %c0_5 = arith.constant 0 : index
    %c0_6 = arith.constant 0 : index
    %6 = vector.load %arg4[%c0_5, %c0_6] : memref<4x1xf32, #tpu.memory_space<vmem>>, vector<4x1xf32>
    %7 = vector.broadcast %6 : vector<4x1xf32> to vector<4x256xf32>
    %8 = arith.addf %5, %7 : vector<4x256xf32>
    %9 = arith.truncf %8 : vector<4x256xf32> to vector<4x256xbf16>
    %c0_7 = arith.constant 0 : index
    %c0_8 = arith.constant 0 : index
    %c0_9 = arith.constant 0 : index
    %10 = vector.load %arg5[%c0_7, %c0_8, %c0_9] : memref<1x4x256xbf16, #tpu.memory_space<vmem>>, vector<1x4x256xbf16>
    %11 = vector.shape_cast %10 : vector<1x4x256xbf16> to vector<4x256xbf16>
    %12 = vector.shape_cast %9 : vector<4x256xbf16> to vector<1x4x256xbf16>
    tpu.vector_store %arg5[%c0_7, %c0_8, %c0_9], %12 {strides = array<i32>} : memref<1x4x256xbf16, #tpu.memory_space<vmem>>, vector<1x4x256xbf16>,
    return
  }
  func.func @transform_0(%arg0: i32, %arg1: i32) -> (i32, i32, i32) {
    %c0_i32 = arith.constant 0 : i32
    %c0_i32_0 = arith.constant 0 : i32
    return %arg0, %c0_i32, %arg1 : i32, i32, i32
  }
  func.func @transform_1(%arg0: i32, %arg1: i32) -> (i32, i32) {
    %c0_i32 = arith.constant 0 : i32
    %c0_i32_0 = arith.constant 0 : i32
    %c0_i32_1 = arith.constant 0 : i32
    return %c0_i32, %c0_i32_0 : i32, i32
  }
  func.func @transform_2(%arg0: i32, %arg1: i32) -> (i32, i32) {
    %c0_i32 = arith.constant 0 : i32
    %c0_i32_0 = arith.constant 0 : i32
    %c0_i32_1 = arith.constant 0 : i32
    return %c0_i32, %c0_i32_0 : i32, i32
  }
  func.func @transform_3(%arg0: i32, %arg1: i32) -> (i32, i32, i32) {
    %c0_i32 = arith.constant 0 : i32
    %c0_i32_0 = arith.constant 0 : i32
    return %arg0, %c0_i32, %arg1 : i32, i32, i32
  }
}

module attributes {stable_mosaic.version = 11 : i64} {
  func.func @kernel(%arg0: i32, %arg1: i32, %arg2: memref<1x4x256xbf16, #tpu.memory_space<vmem>>, %arg3: memref<1x16x256xbf16, #tpu.memory_space<vmem>>, %arg4: memref<2x4xbf16, #tpu.memory_space<vmem>>, %arg5: memref<2x16xbf16, #tpu.memory_space<vmem>>, %arg6: memref<8x2xbf16, #tpu.memory_space<vmem>>, %arg7: memref<8x1xf32, #tpu.memory_space<vmem>>, %arg8: memref<1x8x256xbf16, #tpu.memory_space<vmem>>) attributes {dimension_semantics = [#tpu.dimension_semantics<parallel>, #tpu.dimension_semantics<parallel>], iteration_bounds = array<i64: 2, 1>, scalar_prefetch = 0 : i64, scratch_operands = 0 : i64, tpu.core_type = #tpu.core_type<tc>, window_params = [{transform_indices = @transform_0, window_bounds = array<i64: 1, 4, 256>}, {transform_indices = @transform_1, window_bounds = array<i64: 1, 16, 256>}, {pipeline_mode = #tpu.pipeline_mode<synchronous>, transform_indices = @transform_2, window_bounds = array<i64: 2, 4>}, {pipeline_mode = #tpu.pipeline_mode<synchronous>, transform_indices = @transform_3, window_bounds = array<i64: 2, 16>}, {pipeline_mode = #tpu.pipeline_mode<synchronous>, transform_indices = @transform_4, window_bounds = array<i64: 8, 2>}, {pipeline_mode = #tpu.pipeline_mode<synchronous>, transform_indices = @transform_5, window_bounds = array<i64: 8, 1>}, {transform_indices = @transform_6, window_bounds = array<i64: 1, 8, 256>}]} {
    %c0 = arith.constant 0 : index
    %c0_0 = arith.constant 0 : index
    %c0_1 = arith.constant 0 : index
    %0 = vector.load %arg2[%c0, %c0_0, %c0_1] : memref<1x4x256xbf16, #tpu.memory_space<vmem>>, vector<1x4x256xbf16>
    %1 = vector.shape_cast %0 : vector<1x4x256xbf16> to vector<4x256xbf16>
    %cst = arith.constant 0.000000e+00 : bf16
    %2 = vector.broadcast %cst : bf16 to vector<4x256xbf16>
    %3 = arith.maximumf %1, %2 : vector<4x256xbf16>
    %c0_2 = arith.constant 0 : index
    %c0_3 = arith.constant 0 : index
    %c0_4 = arith.constant 0 : index
    %4 = vector.load %arg3[%c0_2, %c0_3, %c0_4] : memref<1x16x256xbf16, #tpu.memory_space<vmem>>, vector<1x16x256xbf16>
    %5 = vector.shape_cast %4 : vector<1x16x256xbf16> to vector<16x256xbf16>
    %cst_5 = arith.constant 0.000000e+00 : bf16
    %6 = vector.broadcast %cst_5 : bf16 to vector<16x256xbf16>
    %7 = arith.maximumf %5, %6 : vector<16x256xbf16>
    %c0_6 = arith.constant 0 : index
    %c0_7 = arith.constant 0 : index
    %8 = vector.load %arg4[%c0_6, %c0_7] : memref<2x4xbf16, #tpu.memory_space<vmem>>, vector<2x4xbf16>
    %cst_8 = arith.constant dense<0.000000e+00> : vector<2x256xf32>
    %9 = tpu.matmul %8, %3, %cst_8 {dimension_numbers = #tpu.dot_dimension_numbers<[1], [0], [0], [1], [0, 0, 1, 1], [], []>} : vector<2x4xbf16>, vector<4x256xbf16>, vector<2x256xf32> -> vector<2x256xf32>
    %c0_9 = arith.constant 0 : index
    %c0_10 = arith.constant 0 : index
    %10 = vector.load %arg5[%c0_9, %c0_10] : memref<2x16xbf16, #tpu.memory_space<vmem>>, vector<2x16xbf16>
    %cst_11 = arith.constant dense<0.000000e+00> : vector<2x256xf32>
    %11 = tpu.matmul %10, %7, %cst_11 {dimension_numbers = #tpu.dot_dimension_numbers<[1], [0], [0], [1], [0, 0, 1, 1], [], []>} : vector<2x16xbf16>, vector<16x256xbf16>, vector<2x256xf32> -> vector<2x256xf32>
    %12 = arith.addf %9, %11 : vector<2x256xf32>
    %cst_12 = arith.constant 0.000000e+00 : f32
    %13 = vector.broadcast %cst_12 : f32 to vector<2x256xf32>
    %14 = arith.maximumf %12, %13 : vector<2x256xf32>
    %15 = arith.truncf %14 : vector<2x256xf32> to vector<2x256xbf16>
    %c0_13 = arith.constant 0 : index
    %c0_14 = arith.constant 0 : index
    %16 = vector.load %arg6[%c0_13, %c0_14] : memref<8x2xbf16, #tpu.memory_space<vmem>>, vector<8x2xbf16>
    %cst_15 = arith.constant dense<0.000000e+00> : vector<8x256xf32>
    %17 = tpu.matmul %16, %15, %cst_15 {dimension_numbers = #tpu.dot_dimension_numbers<[1], [0], [0], [1], [0, 0, 1, 1], [], []>} : vector<8x2xbf16>, vector<2x256xbf16>, vector<8x256xf32> -> vector<8x256xf32>
    %c0_16 = arith.constant 0 : index
    %c0_17 = arith.constant 0 : index
    %18 = vector.load %arg7[%c0_16, %c0_17] : memref<8x1xf32, #tpu.memory_space<vmem>>, vector<8x1xf32>
    %19 = vector.broadcast %18 : vector<8x1xf32> to vector<8x256xf32>
    %20 = arith.addf %17, %19 : vector<8x256xf32>
    %21 = arith.truncf %20 : vector<8x256xf32> to vector<8x256xbf16>
    %c0_18 = arith.constant 0 : index
    %c0_19 = arith.constant 0 : index
    %c0_20 = arith.constant 0 : index
    %22 = vector.load %arg8[%c0_18, %c0_19, %c0_20] : memref<1x8x256xbf16, #tpu.memory_space<vmem>>, vector<1x8x256xbf16>
    %23 = vector.shape_cast %22 : vector<1x8x256xbf16> to vector<8x256xbf16>
    %24 = vector.shape_cast %21 : vector<8x256xbf16> to vector<1x8x256xbf16>
    tpu.vector_store %arg8[%c0_18, %c0_19, %c0_20], %24 {strides = array<i32>} : memref<1x8x256xbf16, #tpu.memory_space<vmem>>, vector<1x8x256xbf16>,
    return
  }
  func.func @transform_0(%arg0: i32, %arg1: i32) -> (i32, i32, i32) {
    %c0_i32 = arith.constant 0 : i32
    %c0_i32_0 = arith.constant 0 : i32
    return %arg0, %c0_i32, %arg1 : i32, i32, i32
  }
  func.func @transform_1(%arg0: i32, %arg1: i32) -> (i32, i32, i32) {
    %c0_i32 = arith.constant 0 : i32
    %c0_i32_0 = arith.constant 0 : i32
    return %arg0, %c0_i32, %arg1 : i32, i32, i32
  }
  func.func @transform_2(%arg0: i32, %arg1: i32) -> (i32, i32) {
    %c0_i32 = arith.constant 0 : i32
    %c0_i32_0 = arith.constant 0 : i32
    %c0_i32_1 = arith.constant 0 : i32
    return %c0_i32, %c0_i32_0 : i32, i32
  }
  func.func @transform_3(%arg0: i32, %arg1: i32) -> (i32, i32) {
    %c0_i32 = arith.constant 0 : i32
    %c0_i32_0 = arith.constant 0 : i32
    %c0_i32_1 = arith.constant 0 : i32
    return %c0_i32, %c0_i32_0 : i32, i32
  }
  func.func @transform_4(%arg0: i32, %arg1: i32) -> (i32, i32) {
    %c0_i32 = arith.constant 0 : i32
    %c0_i32_0 = arith.constant 0 : i32
    %c0_i32_1 = arith.constant 0 : i32
    return %c0_i32, %c0_i32_0 : i32, i32
  }
  func.func @transform_5(%arg0: i32, %arg1: i32) -> (i32, i32) {
    %c0_i32 = arith.constant 0 : i32
    %c0_i32_0 = arith.constant 0 : i32
    %c0_i32_1 = arith.constant 0 : i32
    return %c0_i32, %c0_i32_0 : i32, i32
  }
  func.func @transform_6(%arg0: i32, %arg1: i32) -> (i32, i32, i32) {
    %c0_i32 = arith.constant 0 : i32
    %c0_i32_0 = arith.constant 0 : i32
    return %arg0, %c0_i32, %arg1 : i32, i32, i32
  }
}

module attributes {stable_mosaic.version = 11 : i64} {
  func.func @kernel(%arg0: i32, %arg1: i32, %arg2: i32, %arg3: memref<1x2x4x256xbf16, #tpu.memory_space<vmem>>, %arg4: memref<1x2x4x256xbf16, #tpu.memory_space<vmem>>, %arg5: memref<1x2x256xbf16, #tpu.memory_space<vmem>>) attributes {dimension_semantics = [#tpu.dimension_semantics<parallel>, #tpu.dimension_semantics<parallel>, #tpu.dimension_semantics<arbitrary>], iteration_bounds = array<i64: 2, 1, 8>, scalar_prefetch = 0 : i64, scratch_operands = 0 : i64, tpu.core_type = #tpu.core_type<tc>, window_params = [{transform_indices = @transform_0, window_bounds = array<i64: 1, 2, 4, 256>}, {transform_indices = @transform_1, window_bounds = array<i64: 1, 2, 4, 256>}, {transform_indices = @transform_2, window_bounds = array<i64: 1, 2, 256>}]} {
    %c0 = arith.constant 0 : index
    %c0_0 = arith.constant 0 : index
    %c0_1 = arith.constant 0 : index
    %c0_2 = arith.constant 0 : index
    %0 = vector.load %arg3[%c0, %c0_0, %c0_1, %c0_2] : memref<1x2x4x256xbf16, #tpu.memory_space<vmem>>, vector<1x2x4x256xbf16>
    %1 = vector.shape_cast %0 : vector<1x2x4x256xbf16> to vector<2x4x256xbf16>
    %2 = arith.extf %1 : vector<2x4x256xbf16> to vector<2x4x256xf32>
    %c0_3 = arith.constant 0 : index
    %c0_4 = arith.constant 0 : index
    %c0_5 = arith.constant 0 : index
    %c0_6 = arith.constant 0 : index
    %3 = vector.load %arg4[%c0_3, %c0_4, %c0_5, %c0_6] : memref<1x2x4x256xbf16, #tpu.memory_space<vmem>>, vector<1x2x4x256xbf16>
    %4 = vector.shape_cast %3 : vector<1x2x4x256xbf16> to vector<2x4x256xbf16>
    %5 = arith.extf %4 : vector<2x4x256xbf16> to vector<2x4x256xf32>
    %6 = arith.mulf %2, %5 : vector<2x4x256xf32>
    %cst = arith.constant dense<0.000000e+00> : vector<2x256xf32>
    %7 = vector.multi_reduction <add>, %6, %cst [1] : vector<2x4x256xf32> to vector<2x256xf32>
    %cst_7 = arith.constant 0.000000e+00 : f32
    %8 = vector.broadcast %cst_7 : f32 to vector<2x256xf32>
    %9 = arith.maximumf %7, %8 : vector<2x256xf32>
    %10 = arith.truncf %9 : vector<2x256xf32> to vector<2x256xbf16>
    %c0_8 = arith.constant 0 : index
    %c0_9 = arith.constant 0 : index
    %c0_10 = arith.constant 0 : index
    %11 = vector.load %arg5[%c0_8, %c0_9, %c0_10] : memref<1x2x256xbf16, #tpu.memory_space<vmem>>, vector<1x2x256xbf16>
    %12 = vector.shape_cast %11 : vector<1x2x256xbf16> to vector<2x256xbf16>
    %13 = vector.shape_cast %10 : vector<2x256xbf16> to vector<1x2x256xbf16>
    tpu.vector_store %arg5[%c0_8, %c0_9, %c0_10], %13 {strides = array<i32>} : memref<1x2x256xbf16, #tpu.memory_space<vmem>>, vector<1x2x256xbf16>,
    return
  }
  func.func @transform_0(%arg0: i32, %arg1: i32, %arg2: i32) -> (i32, i32, i32, i32) {
    %c0_i32 = arith.constant 0 : i32
    %c0_i32_0 = arith.constant 0 : i32
    %c0_i32_1 = arith.constant 0 : i32
    return %arg0, %c0_i32, %c0_i32_0, %arg1 : i32, i32, i32, i32
  }
  func.func @transform_1(%arg0: i32, %arg1: i32, %arg2: i32) -> (i32, i32, i32, i32) {
    %c8_i32 = arith.constant 8 : i32
    %0 = arith.muli %arg0, %c8_i32 : i32
    %1 = arith.addi %0, %arg2 : i32
    %c0_i32 = arith.constant 0 : i32
    %c0_i32_0 = arith.constant 0 : i32
    %c0_i32_1 = arith.constant 0 : i32
    return %1, %c0_i32, %c0_i32_0, %arg1 : i32, i32, i32, i32
  }
  func.func @transform_2(%arg0: i32, %arg1: i32, %arg2: i32) -> (i32, i32, i32) {
    %c8_i32 = arith.constant 8 : i32
    %0 = arith.muli %arg0, %c8_i32 : i32
    %1 = arith.addi %0, %arg2 : i32
    %c0_i32 = arith.constant 0 : i32
    %c0_i32_0 = arith.constant 0 : i32
    return %1, %c0_i32, %arg1 : i32, i32, i32
  }
}

module attributes {stable_mosaic.version = 11 : i64} {
  func.func @kernel(%arg0: i32, %arg1: i32, %arg2: memref<1x16x256xbf16, #tpu.memory_space<vmem>>, %arg3: memref<64x16xbf16, #tpu.memory_space<vmem>>, %arg4: memref<64x1xf32, #tpu.memory_space<vmem>>, %arg5: memref<1x64x256xbf16, #tpu.memory_space<vmem>>, %arg6: memref<1x64x256xbf16, #tpu.memory_space<vmem>>) attributes {dimension_semantics = [#tpu.dimension_semantics<parallel>, #tpu.dimension_semantics<parallel>], iteration_bounds = array<i64: 2, 1>, scalar_prefetch = 0 : i64, scratch_operands = 0 : i64, tpu.core_type = #tpu.core_type<tc>, window_params = [{transform_indices = @transform_0, window_bounds = array<i64: 1, 16, 256>}, {pipeline_mode = #tpu.pipeline_mode<synchronous>, transform_indices = @transform_1, window_bounds = array<i64: 64, 16>}, {pipeline_mode = #tpu.pipeline_mode<synchronous>, transform_indices = @transform_2, window_bounds = array<i64: 64, 1>}, {transform_indices = @transform_3, window_bounds = array<i64: 1, 64, 256>}, {transform_indices = @transform_4, window_bounds = array<i64: 1, 64, 256>}]} {
    %c0 = arith.constant 0 : index
    %c0_0 = arith.constant 0 : index
    %c0_1 = arith.constant 0 : index
    %0 = vector.load %arg2[%c0, %c0_0, %c0_1] : memref<1x16x256xbf16, #tpu.memory_space<vmem>>, vector<1x16x256xbf16>
    %1 = vector.shape_cast %0 : vector<1x16x256xbf16> to vector<16x256xbf16>
    %c0_2 = arith.constant 0 : index
    %c0_3 = arith.constant 0 : index
    %2 = vector.load %arg3[%c0_2, %c0_3] : memref<64x16xbf16, #tpu.memory_space<vmem>>, vector<64x16xbf16>
    %cst = arith.constant dense<0.000000e+00> : vector<64x256xf32>
    %3 = tpu.matmul %2, %1, %cst {dimension_numbers = #tpu.dot_dimension_numbers<[1], [0], [0], [1], [0, 0, 1, 1], [], []>} : vector<64x16xbf16>, vector<16x256xbf16>, vector<64x256xf32> -> vector<64x256xf32>
    %c0_4 = arith.constant 0 : index
    %c0_5 = arith.constant 0 : index
    %4 = vector.load %arg4[%c0_4, %c0_5] : memref<64x1xf32, #tpu.memory_space<vmem>>, vector<64x1xf32>
    %5 = vector.broadcast %4 : vector<64x1xf32> to vector<64x256xf32>
    %6 = arith.addf %3, %5 : vector<64x256xf32>
    %c0_6 = arith.constant 0 : index
    %c0_7 = arith.constant 0 : index
    %c0_8 = arith.constant 0 : index
    %7 = vector.load %arg5[%c0_6, %c0_7, %c0_8] : memref<1x64x256xbf16, #tpu.memory_space<vmem>>, vector<1x64x256xbf16>
    %8 = vector.shape_cast %7 : vector<1x64x256xbf16> to vector<64x256xbf16>
    %9 = arith.extf %8 : vector<64x256xbf16> to vector<64x256xf32>
    %10 = arith.addf %6, %9 : vector<64x256xf32>
    %cst_9 = arith.constant 0.000000e+00 : f32
    %11 = vector.broadcast %cst_9 : f32 to vector<64x256xf32>
    %12 = arith.maximumf %10, %11 : vector<64x256xf32>
    %13 = arith.truncf %12 : vector<64x256xf32> to vector<64x256xbf16>
    %c0_10 = arith.constant 0 : index
    %c0_11 = arith.constant 0 : index
    %c0_12 = arith.constant 0 : index
    %14 = vector.load %arg6[%c0_10, %c0_11, %c0_12] : memref<1x64x256xbf16, #tpu.memory_space<vmem>>, vector<1x64x256xbf16>
    %15 = vector.shape_cast %14 : vector<1x64x256xbf16> to vector<64x256xbf16>
    %16 = vector.shape_cast %13 : vector<64x256xbf16> to vector<1x64x256xbf16>
    tpu.vector_store %arg6[%c0_10, %c0_11, %c0_12], %16 {strides = array<i32>} : memref<1x64x256xbf16, #tpu.memory_space<vmem>>, vector<1x64x256xbf16>,
    return
  }
  func.func @transform_0(%arg0: i32, %arg1: i32) -> (i32, i32, i32) {
    %c0_i32 = arith.constant 0 : i32
    %c0_i32_0 = arith.constant 0 : i32
    return %arg0, %c0_i32, %arg1 : i32, i32, i32
  }
  func.func @transform_1(%arg0: i32, %arg1: i32) -> (i32, i32) {
    %c0_i32 = arith.constant 0 : i32
    %c0_i32_0 = arith.constant 0 : i32
    %c0_i32_1 = arith.constant 0 : i32
    return %c0_i32, %c0_i32_0 : i32, i32
  }
  func.func @transform_2(%arg0: i32, %arg1: i32) -> (i32, i32) {
    %c0_i32 = arith.constant 0 : i32
    %c0_i32_0 = arith.constant 0 : i32
    %c0_i32_1 = arith.constant 0 : i32
    return %c0_i32, %c0_i32_0 : i32, i32
  }
  func.func @transform_3(%arg0: i32, %arg1: i32) -> (i32, i32, i32) {
    %c0_i32 = arith.constant 0 : i32
    %c0_i32_0 = arith.constant 0 : i32
    return %arg0, %c0_i32, %arg1 : i32, i32, i32
  }
  func.func @transform_4(%arg0: i32, %arg1: i32) -> (i32, i32, i32) {
    %c0_i32 = arith.constant 0 : i32
    %c0_i32_0 = arith.constant 0 : i32
    return %arg0, %c0_i32, %arg1 : i32, i32, i32
  }
}

module attributes {stable_mosaic.version = 11 : i64} {
  func.func @kernel(%arg0: i32, %arg1: i32, %arg2: memref<1x64x512xbf16, #tpu.memory_space<vmem>>, %arg3: memref<4x64xbf16, #tpu.memory_space<vmem>>, %arg4: memref<16x64xbf16, #tpu.memory_space<vmem>>, %arg5: memref<4x1xf32, #tpu.memory_space<vmem>>, %arg6: memref<16x1xf32, #tpu.memory_space<vmem>>, %arg7: memref<1x4x512xbf16, #tpu.memory_space<vmem>>, %arg8: memref<1x16x512xbf16, #tpu.memory_space<vmem>>) attributes {dimension_semantics = [#tpu.dimension_semantics<parallel>, #tpu.dimension_semantics<parallel>], iteration_bounds = array<i64: 2, 4>, scalar_prefetch = 0 : i64, scratch_operands = 0 : i64, tpu.core_type = #tpu.core_type<tc>, window_params = [{transform_indices = @transform_0, window_bounds = array<i64: 1, 64, 512>}, {pipeline_mode = #tpu.pipeline_mode<synchronous>, transform_indices = @transform_1, window_bounds = array<i64: 4, 64>}, {pipeline_mode = #tpu.pipeline_mode<synchronous>, transform_indices = @transform_2, window_bounds = array<i64: 16, 64>}, {pipeline_mode = #tpu.pipeline_mode<synchronous>, transform_indices = @transform_3, window_bounds = array<i64: 4, 1>}, {pipeline_mode = #tpu.pipeline_mode<synchronous>, transform_indices = @transform_4, window_bounds = array<i64: 16, 1>}, {transform_indices = @transform_5, window_bounds = array<i64: 1, 4, 512>}, {transform_indices = @transform_6, window_bounds = array<i64: 1, 16, 512>}]} {
    %c0 = arith.constant 0 : index
    %c0_0 = arith.constant 0 : index
    %c0_1 = arith.constant 0 : index
    %0 = vector.load %arg2[%c0, %c0_0, %c0_1] : memref<1x64x512xbf16, #tpu.memory_space<vmem>>, vector<1x64x512xbf16>
    %1 = vector.shape_cast %0 : vector<1x64x512xbf16> to vector<64x512xbf16>
    %cst = arith.constant 0.000000e+00 : bf16
    %2 = vector.broadcast %cst : bf16 to vector<64x512xbf16>
    %3 = arith.maximumf %1, %2 : vector<64x512xbf16>
    %c0_2 = arith.constant 0 : index
    %c0_3 = arith.constant 0 : index
    %4 = vector.load %arg3[%c0_2, %c0_3] : memref<4x64xbf16, #tpu.memory_space<vmem>>, vector<4x64xbf16>
    %cst_4 = arith.constant dense<0.000000e+00> : vector<4x512xf32>
    %5 = tpu.matmul %4, %3, %cst_4 {dimension_numbers = #tpu.dot_dimension_numbers<[1], [0], [0], [1], [0, 0, 1, 1], [], []>} : vector<4x64xbf16>, vector<64x512xbf16>, vector<4x512xf32> -> vector<4x512xf32>
    %c0_5 = arith.constant 0 : index
    %c0_6 = arith.constant 0 : index
    %6 = vector.load %arg4[%c0_5, %c0_6] : memref<16x64xbf16, #tpu.memory_space<vmem>>, vector<16x64xbf16>
    %cst_7 = arith.constant dense<0.000000e+00> : vector<16x512xf32>
    %7 = tpu.matmul %6, %3, %cst_7 {dimension_numbers = #tpu.dot_dimension_numbers<[1], [0], [0], [1], [0, 0, 1, 1], [], []>} : vector<16x64xbf16>, vector<64x512xbf16>, vector<16x512xf32> -> vector<16x512xf32>
    %c0_8 = arith.constant 0 : index
    %c0_9 = arith.constant 0 : index
    %8 = vector.load %arg5[%c0_8, %c0_9] : memref<4x1xf32, #tpu.memory_space<vmem>>, vector<4x1xf32>
    %9 = vector.broadcast %8 : vector<4x1xf32> to vector<4x512xf32>
    %10 = arith.addf %5, %9 : vector<4x512xf32>
    %c0_10 = arith.constant 0 : index
    %c0_11 = arith.constant 0 : index
    %11 = vector.load %arg6[%c0_10, %c0_11] : memref<16x1xf32, #tpu.memory_space<vmem>>, vector<16x1xf32>
    %12 = vector.broadcast %11 : vector<16x1xf32> to vector<16x512xf32>
    %13 = arith.addf %7, %12 : vector<16x512xf32>
    %14 = arith.truncf %10 : vector<4x512xf32> to vector<4x512xbf16>
    %c0_12 = arith.constant 0 : index
    %c0_13 = arith.constant 0 : index
    %c0_14 = arith.constant 0 : index
    %15 = vector.load %arg7[%c0_12, %c0_13, %c0_14] : memref<1x4x512xbf16, #tpu.memory_space<vmem>>, vector<1x4x512xbf16>
    %16 = vector.shape_cast %15 : vector<1x4x512xbf16> to vector<4x512xbf16>
    %17 = vector.shape_cast %14 : vector<4x512xbf16> to vector<1x4x512xbf16>
    tpu.vector_store %arg7[%c0_12, %c0_13, %c0_14], %17 {strides = array<i32>} : memref<1x4x512xbf16, #tpu.memory_space<vmem>>, vector<1x4x512xbf16>,
    %18 = arith.truncf %13 : vector<16x512xf32> to vector<16x512xbf16>
    %c0_15 = arith.constant 0 : index
    %c0_16 = arith.constant 0 : index
    %c0_17 = arith.constant 0 : index
    %19 = vector.load %arg8[%c0_15, %c0_16, %c0_17] : memref<1x16x512xbf16, #tpu.memory_space<vmem>>, vector<1x16x512xbf16>
    %20 = vector.shape_cast %19 : vector<1x16x512xbf16> to vector<16x512xbf16>
    %21 = vector.shape_cast %18 : vector<16x512xbf16> to vector<1x16x512xbf16>
    tpu.vector_store %arg8[%c0_15, %c0_16, %c0_17], %21 {strides = array<i32>} : memref<1x16x512xbf16, #tpu.memory_space<vmem>>, vector<1x16x512xbf16>,
    return
  }
  func.func @transform_0(%arg0: i32, %arg1: i32) -> (i32, i32, i32) {
    %c0_i32 = arith.constant 0 : i32
    %c0_i32_0 = arith.constant 0 : i32
    return %arg0, %c0_i32, %arg1 : i32, i32, i32
  }
  func.func @transform_1(%arg0: i32, %arg1: i32) -> (i32, i32) {
    %c0_i32 = arith.constant 0 : i32
    %c0_i32_0 = arith.constant 0 : i32
    %c0_i32_1 = arith.constant 0 : i32
    return %c0_i32, %c0_i32_0 : i32, i32
  }
  func.func @transform_2(%arg0: i32, %arg1: i32) -> (i32, i32) {
    %c0_i32 = arith.constant 0 : i32
    %c0_i32_0 = arith.constant 0 : i32
    %c0_i32_1 = arith.constant 0 : i32
    return %c0_i32, %c0_i32_0 : i32, i32
  }
  func.func @transform_3(%arg0: i32, %arg1: i32) -> (i32, i32) {
    %c0_i32 = arith.constant 0 : i32
    %c0_i32_0 = arith.constant 0 : i32
    %c0_i32_1 = arith.constant 0 : i32
    return %c0_i32, %c0_i32_0 : i32, i32
  }
  func.func @transform_4(%arg0: i32, %arg1: i32) -> (i32, i32) {
    %c0_i32 = arith.constant 0 : i32
    %c0_i32_0 = arith.constant 0 : i32
    %c0_i32_1 = arith.constant 0 : i32
    return %c0_i32, %c0_i32_0 : i32, i32
  }
  func.func @transform_5(%arg0: i32, %arg1: i32) -> (i32, i32, i32) {
    %c0_i32 = arith.constant 0 : i32
    %c0_i32_0 = arith.constant 0 : i32
    return %arg0, %c0_i32, %arg1 : i32, i32, i32
  }
  func.func @transform_6(%arg0: i32, %arg1: i32) -> (i32, i32, i32) {
    %c0_i32 = arith.constant 0 : i32
    %c0_i32_0 = arith.constant 0 : i32
    return %arg0, %c0_i32, %arg1 : i32, i32, i32
  }
}

module attributes {stable_mosaic.version = 11 : i64} {
  func.func @kernel(%arg0: i32, %arg1: i32, %arg2: memref<1x4x256xbf16, #tpu.memory_space<vmem>>, %arg3: memref<1x32x256xbf16, #tpu.memory_space<vmem>>, %arg4: memref<2x4xbf16, #tpu.memory_space<vmem>>, %arg5: memref<2x32xbf16, #tpu.memory_space<vmem>>, %arg6: memref<16x2xbf16, #tpu.memory_space<vmem>>, %arg7: memref<16x1xf32, #tpu.memory_space<vmem>>, %arg8: memref<1x16x256xbf16, #tpu.memory_space<vmem>>) attributes {dimension_semantics = [#tpu.dimension_semantics<parallel>, #tpu.dimension_semantics<parallel>], iteration_bounds = array<i64: 2, 1>, scalar_prefetch = 0 : i64, scratch_operands = 0 : i64, tpu.core_type = #tpu.core_type<tc>, window_params = [{transform_indices = @transform_0, window_bounds = array<i64: 1, 4, 256>}, {transform_indices = @transform_1, window_bounds = array<i64: 1, 32, 256>}, {pipeline_mode = #tpu.pipeline_mode<synchronous>, transform_indices = @transform_2, window_bounds = array<i64: 2, 4>}, {pipeline_mode = #tpu.pipeline_mode<synchronous>, transform_indices = @transform_3, window_bounds = array<i64: 2, 32>}, {pipeline_mode = #tpu.pipeline_mode<synchronous>, transform_indices = @transform_4, window_bounds = array<i64: 16, 2>}, {pipeline_mode = #tpu.pipeline_mode<synchronous>, transform_indices = @transform_5, window_bounds = array<i64: 16, 1>}, {transform_indices = @transform_6, window_bounds = array<i64: 1, 16, 256>}]} {
    %c0 = arith.constant 0 : index
    %c0_0 = arith.constant 0 : index
    %c0_1 = arith.constant 0 : index
    %0 = vector.load %arg2[%c0, %c0_0, %c0_1] : memref<1x4x256xbf16, #tpu.memory_space<vmem>>, vector<1x4x256xbf16>
    %1 = vector.shape_cast %0 : vector<1x4x256xbf16> to vector<4x256xbf16>
    %cst = arith.constant 0.000000e+00 : bf16
    %2 = vector.broadcast %cst : bf16 to vector<4x256xbf16>
    %3 = arith.maximumf %1, %2 : vector<4x256xbf16>
    %c0_2 = arith.constant 0 : index
    %c0_3 = arith.constant 0 : index
    %c0_4 = arith.constant 0 : index
    %4 = vector.load %arg3[%c0_2, %c0_3, %c0_4] : memref<1x32x256xbf16, #tpu.memory_space<vmem>>, vector<1x32x256xbf16>
    %5 = vector.shape_cast %4 : vector<1x32x256xbf16> to vector<32x256xbf16>
    %cst_5 = arith.constant 0.000000e+00 : bf16
    %6 = vector.broadcast %cst_5 : bf16 to vector<32x256xbf16>
    %7 = arith.maximumf %5, %6 : vector<32x256xbf16>
    %c0_6 = arith.constant 0 : index
    %c0_7 = arith.constant 0 : index
    %8 = vector.load %arg4[%c0_6, %c0_7] : memref<2x4xbf16, #tpu.memory_space<vmem>>, vector<2x4xbf16>
    %cst_8 = arith.constant dense<0.000000e+00> : vector<2x256xf32>
    %9 = tpu.matmul %8, %3, %cst_8 {dimension_numbers = #tpu.dot_dimension_numbers<[1], [0], [0], [1], [0, 0, 1, 1], [], []>} : vector<2x4xbf16>, vector<4x256xbf16>, vector<2x256xf32> -> vector<2x256xf32>
    %c0_9 = arith.constant 0 : index
    %c0_10 = arith.constant 0 : index
    %10 = vector.load %arg5[%c0_9, %c0_10] : memref<2x32xbf16, #tpu.memory_space<vmem>>, vector<2x32xbf16>
    %cst_11 = arith.constant dense<0.000000e+00> : vector<2x256xf32>
    %11 = tpu.matmul %10, %7, %cst_11 {dimension_numbers = #tpu.dot_dimension_numbers<[1], [0], [0], [1], [0, 0, 1, 1], [], []>} : vector<2x32xbf16>, vector<32x256xbf16>, vector<2x256xf32> -> vector<2x256xf32>
    %12 = arith.addf %9, %11 : vector<2x256xf32>
    %cst_12 = arith.constant 0.000000e+00 : f32
    %13 = vector.broadcast %cst_12 : f32 to vector<2x256xf32>
    %14 = arith.maximumf %12, %13 : vector<2x256xf32>
    %15 = arith.truncf %14 : vector<2x256xf32> to vector<2x256xbf16>
    %c0_13 = arith.constant 0 : index
    %c0_14 = arith.constant 0 : index
    %16 = vector.load %arg6[%c0_13, %c0_14] : memref<16x2xbf16, #tpu.memory_space<vmem>>, vector<16x2xbf16>
    %cst_15 = arith.constant dense<0.000000e+00> : vector<16x256xf32>
    %17 = tpu.matmul %16, %15, %cst_15 {dimension_numbers = #tpu.dot_dimension_numbers<[1], [0], [0], [1], [0, 0, 1, 1], [], []>} : vector<16x2xbf16>, vector<2x256xbf16>, vector<16x256xf32> -> vector<16x256xf32>
    %c0_16 = arith.constant 0 : index
    %c0_17 = arith.constant 0 : index
    %18 = vector.load %arg7[%c0_16, %c0_17] : memref<16x1xf32, #tpu.memory_space<vmem>>, vector<16x1xf32>
    %19 = vector.broadcast %18 : vector<16x1xf32> to vector<16x256xf32>
    %20 = arith.addf %17, %19 : vector<16x256xf32>
    %21 = arith.truncf %20 : vector<16x256xf32> to vector<16x256xbf16>
    %c0_18 = arith.constant 0 : index
    %c0_19 = arith.constant 0 : index
    %c0_20 = arith.constant 0 : index
    %22 = vector.load %arg8[%c0_18, %c0_19, %c0_20] : memref<1x16x256xbf16, #tpu.memory_space<vmem>>, vector<1x16x256xbf16>
    %23 = vector.shape_cast %22 : vector<1x16x256xbf16> to vector<16x256xbf16>
    %24 = vector.shape_cast %21 : vector<16x256xbf16> to vector<1x16x256xbf16>
    tpu.vector_store %arg8[%c0_18, %c0_19, %c0_20], %24 {strides = array<i32>} : memref<1x16x256xbf16, #tpu.memory_space<vmem>>, vector<1x16x256xbf16>,
    return
  }
  func.func @transform_0(%arg0: i32, %arg1: i32) -> (i32, i32, i32) {
    %c0_i32 = arith.constant 0 : i32
    %c0_i32_0 = arith.constant 0 : i32
    return %arg0, %c0_i32, %arg1 : i32, i32, i32
  }
  func.func @transform_1(%arg0: i32, %arg1: i32) -> (i32, i32, i32) {
    %c0_i32 = arith.constant 0 : i32
    %c0_i32_0 = arith.constant 0 : i32
    return %arg0, %c0_i32, %arg1 : i32, i32, i32
  }
  func.func @transform_2(%arg0: i32, %arg1: i32) -> (i32, i32) {
    %c0_i32 = arith.constant 0 : i32
    %c0_i32_0 = arith.constant 0 : i32
    %c0_i32_1 = arith.constant 0 : i32
    return %c0_i32, %c0_i32_0 : i32, i32
  }
  func.func @transform_3(%arg0: i32, %arg1: i32) -> (i32, i32) {
    %c0_i32 = arith.constant 0 : i32
    %c0_i32_0 = arith.constant 0 : i32
    %c0_i32_1 = arith.constant 0 : i32
    return %c0_i32, %c0_i32_0 : i32, i32
  }
  func.func @transform_4(%arg0: i32, %arg1: i32) -> (i32, i32) {
    %c0_i32 = arith.constant 0 : i32
    %c0_i32_0 = arith.constant 0 : i32
    %c0_i32_1 = arith.constant 0 : i32
    return %c0_i32, %c0_i32_0 : i32, i32
  }
  func.func @transform_5(%arg0: i32, %arg1: i32) -> (i32, i32) {
    %c0_i32 = arith.constant 0 : i32
    %c0_i32_0 = arith.constant 0 : i32
    %c0_i32_1 = arith.constant 0 : i32
    return %c0_i32, %c0_i32_0 : i32, i32
  }
  func.func @transform_6(%arg0: i32, %arg1: i32) -> (i32, i32, i32) {
    %c0_i32 = arith.constant 0 : i32
    %c0_i32_0 = arith.constant 0 : i32
    return %arg0, %c0_i32, %arg1 : i32, i32, i32
  }
}

module attributes {stable_mosaic.version = 11 : i64} {
  func.func @kernel(%arg0: i32, %arg1: i32, %arg2: i32, %arg3: memref<1x2x8x256xbf16, #tpu.memory_space<vmem>>, %arg4: memref<1x2x8x256xbf16, #tpu.memory_space<vmem>>, %arg5: memref<1x2x256xbf16, #tpu.memory_space<vmem>>) attributes {dimension_semantics = [#tpu.dimension_semantics<parallel>, #tpu.dimension_semantics<parallel>, #tpu.dimension_semantics<arbitrary>], iteration_bounds = array<i64: 2, 1, 8>, scalar_prefetch = 0 : i64, scratch_operands = 0 : i64, tpu.core_type = #tpu.core_type<tc>, window_params = [{transform_indices = @transform_0, window_bounds = array<i64: 1, 2, 8, 256>}, {transform_indices = @transform_1, window_bounds = array<i64: 1, 2, 8, 256>}, {transform_indices = @transform_2, window_bounds = array<i64: 1, 2, 256>}]} {
    %c0 = arith.constant 0 : index
    %c0_0 = arith.constant 0 : index
    %c0_1 = arith.constant 0 : index
    %c0_2 = arith.constant 0 : index
    %0 = vector.load %arg3[%c0, %c0_0, %c0_1, %c0_2] : memref<1x2x8x256xbf16, #tpu.memory_space<vmem>>, vector<1x2x8x256xbf16>
    %1 = vector.shape_cast %0 : vector<1x2x8x256xbf16> to vector<2x8x256xbf16>
    %2 = arith.extf %1 : vector<2x8x256xbf16> to vector<2x8x256xf32>
    %c0_3 = arith.constant 0 : index
    %c0_4 = arith.constant 0 : index
    %c0_5 = arith.constant 0 : index
    %c0_6 = arith.constant 0 : index
    %3 = vector.load %arg4[%c0_3, %c0_4, %c0_5, %c0_6] : memref<1x2x8x256xbf16, #tpu.memory_space<vmem>>, vector<1x2x8x256xbf16>
    %4 = vector.shape_cast %3 : vector<1x2x8x256xbf16> to vector<2x8x256xbf16>
    %5 = arith.extf %4 : vector<2x8x256xbf16> to vector<2x8x256xf32>
    %6 = arith.mulf %2, %5 : vector<2x8x256xf32>
    %cst = arith.constant dense<0.000000e+00> : vector<2x256xf32>
    %7 = vector.multi_reduction <add>, %6, %cst [1] : vector<2x8x256xf32> to vector<2x256xf32>
    %cst_7 = arith.constant 0.000000e+00 : f32
    %8 = vector.broadcast %cst_7 : f32 to vector<2x256xf32>
    %9 = arith.maximumf %7, %8 : vector<2x256xf32>
    %10 = arith.truncf %9 : vector<2x256xf32> to vector<2x256xbf16>
    %c0_8 = arith.constant 0 : index
    %c0_9 = arith.constant 0 : index
    %c0_10 = arith.constant 0 : index
    %11 = vector.load %arg5[%c0_8, %c0_9, %c0_10] : memref<1x2x256xbf16, #tpu.memory_space<vmem>>, vector<1x2x256xbf16>
    %12 = vector.shape_cast %11 : vector<1x2x256xbf16> to vector<2x256xbf16>
    %13 = vector.shape_cast %10 : vector<2x256xbf16> to vector<1x2x256xbf16>
    tpu.vector_store %arg5[%c0_8, %c0_9, %c0_10], %13 {strides = array<i32>} : memref<1x2x256xbf16, #tpu.memory_space<vmem>>, vector<1x2x256xbf16>,
    return
  }
  func.func @transform_0(%arg0: i32, %arg1: i32, %arg2: i32) -> (i32, i32, i32, i32) {
    %c0_i32 = arith.constant 0 : i32
    %c0_i32_0 = arith.constant 0 : i32
    %c0_i32_1 = arith.constant 0 : i32
    return %arg0, %c0_i32, %c0_i32_0, %arg1 : i32, i32, i32, i32
  }
  func.func @transform_1(%arg0: i32, %arg1: i32, %arg2: i32) -> (i32, i32, i32, i32) {
    %c8_i32 = arith.constant 8 : i32
    %0 = arith.muli %arg0, %c8_i32 : i32
    %1 = arith.addi %0, %arg2 : i32
    %c0_i32 = arith.constant 0 : i32
    %c0_i32_0 = arith.constant 0 : i32
    %c0_i32_1 = arith.constant 0 : i32
    return %1, %c0_i32, %c0_i32_0, %arg1 : i32, i32, i32, i32
  }
  func.func @transform_2(%arg0: i32, %arg1: i32, %arg2: i32) -> (i32, i32, i32) {
    %c8_i32 = arith.constant 8 : i32
    %0 = arith.muli %arg0, %c8_i32 : i32
    %1 = arith.addi %0, %arg2 : i32
    %c0_i32 = arith.constant 0 : i32
    %c0_i32_0 = arith.constant 0 : i32
    return %1, %c0_i32, %arg1 : i32, i32, i32
  }
}

module attributes {stable_mosaic.version = 11 : i64} {
  func.func @kernel(%arg0: i32, %arg1: i32, %arg2: memref<1x64x256xbf16, #tpu.memory_space<vmem>>, %arg3: memref<64x64xbf16, #tpu.memory_space<vmem>>, %arg4: memref<1x64x256xbf16, #tpu.memory_space<vmem>>, %arg5: memref<1x64x256xf32, #tpu.memory_space<vmem>>) attributes {dimension_semantics = [#tpu.dimension_semantics<parallel>, #tpu.dimension_semantics<parallel>], iteration_bounds = array<i64: 2, 1>, scalar_prefetch = 0 : i64, scratch_operands = 0 : i64, tpu.core_type = #tpu.core_type<tc>, window_params = [{transform_indices = @transform_0, window_bounds = array<i64: 1, 64, 256>}, {pipeline_mode = #tpu.pipeline_mode<synchronous>, transform_indices = @transform_1, window_bounds = array<i64: 64, 64>}, {transform_indices = @transform_2, window_bounds = array<i64: 1, 64, 256>}, {transform_indices = @transform_3, window_bounds = array<i64: 1, 64, 256>}]} {
    %c0 = arith.constant 0 : index
    %c0_0 = arith.constant 0 : index
    %c0_1 = arith.constant 0 : index
    %0 = vector.load %arg2[%c0, %c0_0, %c0_1] : memref<1x64x256xbf16, #tpu.memory_space<vmem>>, vector<1x64x256xbf16>
    %1 = vector.shape_cast %0 : vector<1x64x256xbf16> to vector<64x256xbf16>
    %cst = arith.constant 0.000000e+00 : bf16
    %2 = vector.broadcast %cst : bf16 to vector<64x256xbf16>
    %3 = arith.maximumf %1, %2 : vector<64x256xbf16>
    %c0_2 = arith.constant 0 : index
    %c0_3 = arith.constant 0 : index
    %4 = vector.load %arg3[%c0_2, %c0_3] : memref<64x64xbf16, #tpu.memory_space<vmem>>, vector<64x64xbf16>
    %cst_4 = arith.constant dense<0.000000e+00> : vector<64x256xf32>
    %5 = tpu.matmul %4, %3, %cst_4 {dimension_numbers = #tpu.dot_dimension_numbers<[1], [0], [0], [1], [0, 0, 1, 1], [], []>} : vector<64x64xbf16>, vector<64x256xbf16>, vector<64x256xf32> -> vector<64x256xf32>
    %c0_5 = arith.constant 0 : index
    %c0_6 = arith.constant 0 : index
    %c0_7 = arith.constant 0 : index
    %6 = vector.load %arg4[%c0_5, %c0_6, %c0_7] : memref<1x64x256xbf16, #tpu.memory_space<vmem>>, vector<1x64x256xbf16>
    %7 = vector.shape_cast %6 : vector<1x64x256xbf16> to vector<64x256xbf16>
    %8 = arith.extf %7 : vector<64x256xbf16> to vector<64x256xf32>
    %9 = arith.addf %5, %8 : vector<64x256xf32>
    %c0_8 = arith.constant 0 : index
    %c0_9 = arith.constant 0 : index
    %c0_10 = arith.constant 0 : index
    %10 = vector.load %arg5[%c0_8, %c0_9, %c0_10] : memref<1x64x256xf32, #tpu.memory_space<vmem>>, vector<1x64x256xf32>
    %11 = vector.shape_cast %10 : vector<1x64x256xf32> to vector<64x256xf32>
    %12 = vector.shape_cast %9 : vector<64x256xf32> to vector<1x64x256xf32>
    tpu.vector_store %arg5[%c0_8, %c0_9, %c0_10], %12 {strides = array<i32>} : memref<1x64x256xf32, #tpu.memory_space<vmem>>, vector<1x64x256xf32>,
    return
  }
  func.func @transform_0(%arg0: i32, %arg1: i32) -> (i32, i32, i32) {
    %c0_i32 = arith.constant 0 : i32
    %c0_i32_0 = arith.constant 0 : i32
    return %arg0, %c0_i32, %arg1 : i32, i32, i32
  }
  func.func @transform_1(%arg0: i32, %arg1: i32) -> (i32, i32) {
    %c0_i32 = arith.constant 0 : i32
    %c0_i32_0 = arith.constant 0 : i32
    %c0_i32_1 = arith.constant 0 : i32
    return %c0_i32, %c0_i32_0 : i32, i32
  }
  func.func @transform_2(%arg0: i32, %arg1: i32) -> (i32, i32, i32) {
    %c0_i32 = arith.constant 0 : i32
    %c0_i32_0 = arith.constant 0 : i32
    return %arg0, %c0_i32, %arg1 : i32, i32, i32
  }
  func.func @transform_3(%arg0: i32, %arg1: i32) -> (i32, i32, i32) {
    %c0_i32 = arith.constant 0 : i32
    %c0_i32_0 = arith.constant 0 : i32
    return %arg0, %c0_i32, %arg1 : i32, i32, i32
  }
}

</mosaic_0001>

<llo_original>
// kernel: _lambda_.12
$region0: #{_lambda_.12}
  #allocation0 [shape = 'u32[]', space=smem, size = 0x4, offset = 0x4, fixed_abs, tag = 'smem constant byte address 0x4 - core index']
  #allocation1 [shape = 'u32[144,128]{1,0:T(1,128)}', space=vmem, size = 0x12000, scoped, tag = 'internal scratch']
  %s0 = inlined_call_operand.vmem [shape: f32[2,16,256], index: 0, kind: input, shape index: {}]
  %s1 = inlined_call_operand.vmem [shape: bf16[64,16], index: 1, kind: input, shape index: {}]
  %s2 = inlined_call_operand.vmem [shape: bf16[64,16], index: 2, kind: input, shape index: {}]
  %s3 = inlined_call_operand.vmem [shape: bf16[2,64,256], index: 3, kind: output, shape index: {0}]
  %s4 = inlined_call_operand.vmem [shape: bf16[2,64,256], index: 4, kind: output, shape index: {1}]
  %5 = xla_tuple %s3, %s4
  %s6 = sld [smem:[#allocation0]]
  $region53: #{_lambda_.12} parent=0
    _
  %s8 = ssub.s32 1, %s6
  %s9 = scalar_select 0, %s8, %s6
  loop: start=0, step=1, limit=4
  $region2: #{_lambda_.12} parent=0 // loop_pre_header
    _
  $region3: #{_lambda_.12} parent=0 // loop_header
    %s11 = sphi 0, %s15
    %p12 = scmp.ge.s32.totalorder %s11, 4
    %s18 = sphi 0, %s30
    %s19 = sphi 0, %s26
    %s20 = sphi 0, %s18
    %s21 = sphi 0, %s19
    %s22 = sphi 0, %s20
    %s23 = sphi 0, %s21
    %s35 = sphi 0, %s37
    %s38 = sphi 0, %s35
    %s39 = sphi 0, %s38
    %s55 = sphi 0, %s39
    %s59 = sphi 0, %s59
    %s61 = sphi 0, %s59
    %s62 = sphi 0, %s61
    %s76 = sphi 0, %s62
    %s80 = sphi 0, %s80
    %s82 = sphi 0, %s80
    %s83 = sphi 0, %s82
    %s97 = sphi 0, %s83
    %s105 = sphi 0, %s107
    %s108 = sphi 0, %s105
    %s109 = sphi 0, %s108
    %s125 = sphi 0, %s109
    %s133 = sphi 0, %s135
    %s136 = sphi 0, %s133
    %s137 = sphi 0, %s136
    %s153 = sphi 0, %s137
  $region4: #{_lambda_.12} parent=0 // loop_header_branch
    %14 = sbr.rel (%p12) target = $region8
  $region5: #{_lambda_.12} parent=0 // loop_body
    %s16 = ssub.s32 %s11, 1
    %s17 = ssub.s32 %s11, 2
    %s24 = sadd.s32 1, %s19
    %p25 = scmp.ge.s32.totalorder %s24, 1
    %s26 = scalar_select %p25, 0, %s24
    %s27 = sadd.s32 1, %s18
    %s28 = scalar_select %p25, %s27, %s18
    %p29 = scmp.ge.s32.totalorder %s28, 2
    %s30 = scalar_select %p29, 0, %s28
    %s31 = ssub.s32 %s18, %s30
    %s32 = ssub.s32 %s19, %s26
    %s33 = sor.u32 %s31, %s32
    %p34 = scmp.eq.s32.totalorder %s33, 0
    %s36 = sadd.s32 %s35, 1
    %s37 = scalar_select %p34, %s35, %s36
    %p40 = pneg %p34
    %p41 = scmp.eq.s32.totalorder %s11, 1
    %p42 = por %p40, %p41
    %p43 = scmp.ne.s32.totalorder %s35, %s38
    %p44 = scmp.eq.s32.totalorder %s11, 0
    %p45 = por %p43, %p44
    %p46 = scmp.ne.s32.totalorder %s35, %s38
    %p47 = scmp.eq.s32.totalorder %s16, 1
    %p48 = por %p46, %p47
    %p49 = scmp.ne.s32.totalorder %s38, %s39
    %p50 = scmp.eq.s32.totalorder %s16, 0
    %p51 = por %p49, %p50
    %p52 = scmp.ne.s32.totalorder %s38, %s39
    %p53 = scmp.eq.s32.totalorder %s17, 1
    %p54 = por %p52, %p53
    %p56 = scmp.ne.s32.totalorder %s39, %s55
    %p57 = scmp.eq.s32.totalorder %s17, 0
    %p58 = por %p56, %p57
    %s60 = sadd.s32 %s59, 1
    %p63 = scmp.eq.s32.totalorder %s11, 1
    %p64 = scmp.ne.s32.totalorder %s59, %s61
    %p65 = scmp.eq.s32.totalorder %s11, 0
    %p66 = por %p64, %p65
    %p67 = scmp.ne.s32.totalorder %s59, %s61
    %p68 = scmp.eq.s32.totalorder %s16, 1
    %p69 = por %p67, %p68
    %p70 = scmp.ne.s32.totalorder %s61, %s62
    %p71 = scmp.eq.s32.totalorder %s16, 0
    %p72 = por %p70, %p71
    %p73 = scmp.ne.s32.totalorder %s61, %s62
    %p74 = scmp.eq.s32.totalorder %s17, 1
    %p75 = por %p73, %p74
    %p77 = scmp.ne.s32.totalorder %s62, %s76
    %p78 = scmp.eq.s32.totalorder %s17, 0
    %p79 = por %p77, %p78
    %s81 = sadd.s32 %s80, 1
    %p84 = scmp.eq.s32.totalorder %s11, 1
    %p85 = scmp.ne.s32.totalorder %s80, %s82
    %p86 = scmp.eq.s32.totalorder %s11, 0
    %p87 = por %p85, %p86
    %p88 = scmp.ne.s32.totalorder %s80, %s82
    %p89 = scmp.eq.s32.totalorder %s16, 1
    %p90 = por %p88, %p89
    %p91 = scmp.ne.s32.totalorder %s82, %s83
    %p92 = scmp.eq.s32.totalorder %s16, 0
    %p93 = por %p91, %p92
    %p94 = scmp.ne.s32.totalorder %s82, %s83
    %p95 = scmp.eq.s32.totalorder %s17, 1
    %p96 = por %p94, %p95
    %p98 = scmp.ne.s32.totalorder %s83, %s97
    %p99 = scmp.eq.s32.totalorder %s17, 0
    %p100 = por %p98, %p99
    %s101 = ssub.s32 %s18, %s30
    %s102 = ssub.s32 %s19, %s26
    %s103 = sor.u32 %s101, %s102
    %p104 = scmp.eq.s32.totalorder %s103, 0
    %s106 = sadd.s32 %s105, 1
    %s107 = scalar_select %p104, %s105, %s106
    %p110 = pneg %p104
    %p111 = scmp.eq.s32.totalorder %s11, 1
    %p112 = por %p110, %p111
    %p113 = scmp.ne.s32.totalorder %s105, %s108
    %p114 = scmp.eq.s32.totalorder %s11, 0
    %p115 = por %p113, %p114
    %p116 = scmp.ne.s32.totalorder %s105, %s108
    %p117 = scmp.eq.s32.totalorder %s16, 1
    %p118 = por %p116, %p117
    %p119 = scmp.ne.s32.totalorder %s108, %s109
    %p120 = scmp.eq.s32.totalorder %s16, 0
    %p121 = por %p119, %p120
    %p122 = scmp.ne.s32.totalorder %s108, %s109
    %p123 = scmp.eq.s32.totalorder %s17, 1
    %p124 = por %p122, %p123
    %p126 = scmp.ne.s32.totalorder %s109, %s125
    %p127 = scmp.eq.s32.totalorder %s17, 0
    %p128 = por %p126, %p127
    %s129 = ssub.s32 %s18, %s30
    %s130 = ssub.s32 %s19, %s26
    %s131 = sor.u32 %s129, %s130
    %p132 = scmp.eq.s32.totalorder %s131, 0
    %s134 = sadd.s32 %s133, 1
    %s135 = scalar_select %p132, %s133, %s134
    %p138 = pneg %p132
    %p139 = scmp.eq.s32.totalorder %s11, 1
    %p140 = por %p138, %p139
    %p141 = scmp.ne.s32.totalorder %s133, %s136
    %p142 = scmp.eq.s32.totalorder %s11, 0
    %p143 = por %p141, %p142
    %p144 = scmp.ne.s32.totalorder %s133, %s136
    %p145 = scmp.eq.s32.totalorder %s16, 1
    %p146 = por %p144, %p145
    %p147 = scmp.ne.s32.totalorder %s136, %s137
    %p148 = scmp.eq.s32.totalorder %s16, 0
    %p149 = por %p147, %p148
    %p150 = scmp.ne.s32.totalorder %s136, %s137
    %p151 = scmp.eq.s32.totalorder %s17, 1
    %p152 = por %p150, %p151
    %p154 = scmp.ne.s32.totalorder %s137, %s153
    %p155 = scmp.eq.s32.totalorder %s17, 0
    %p156 = por %p154, %p155
    %p157 = scmp.le.s32.totalorder 1, %s11
    %p158 = scmp.lt.s32.totalorder %s11, 3
    %p159 = pnand %p157, %p158
    %p160 = pneg %p159
    // Predicated region
    $region9: #{_lambda_.12} parent=5 // pred_check
      _
    $region10: #{_lambda_.12} parent=5 // pred_check_branch
      %162 = sbr.rel (%p159) target = $region12
    $region11: #{_lambda_.12} parent=5 // pred_region
      %s163 = ssub.s32 %s11, 1
      // Predicated region
      $region13: #{_lambda_.12} parent=11 // pred_check
        %p164 = pneg %p72
      $region14: #{_lambda_.12} parent=11 // pred_check_branch
        %166 = sbr.rel (%p164) target = $region16
      $region15: #{_lambda_.12} parent=11 // pred_region
        _
      $region16: #{_lambda_.12} parent=11 // pred_fallthru
        _
      // Predicated region
      $region17: #{_lambda_.12} parent=11 // pred_check
        %p167 = pneg %p93
      $region18: #{_lambda_.12} parent=11 // pred_check_branch
        %169 = sbr.rel (%p167) target = $region20
      $region19: #{_lambda_.12} parent=11 // pred_region
        _
      $region20: #{_lambda_.12} parent=11 // pred_fallthru
        _
    $region12: #{_lambda_.12} parent=5 // pred_fallthru
      _
    %p170 = scmp.lt.s32.totalorder %s11, 2
    // Predicated region
    $region21: #{_lambda_.12} parent=5 // pred_check
      %p171 = pneg %p170
    $region22: #{_lambda_.12} parent=5 // pred_check_branch
      %173 = sbr.rel (%p171) target = $region24
    $region23: #{_lambda_.12} parent=5 // pred_region
      // Predicated region
      $region25: #{_lambda_.12} parent=23 // pred_check
        %p174 = pneg %p45
      $region26: #{_lambda_.12} parent=23 // pred_check_branch
        %176 = sbr.rel (%p174) target = $region28
      $region27: #{_lambda_.12} parent=23 // pred_region
        %s177 = smul.u32 2, %s19
        %p178 = scmp.lt.s32.totalorder %s18, 1
        %s179 = scalar_select %p178, %s18, 1
        %p180 = scmp.lt.s32.totalorder %s177, 1
        %s181 = scalar_select %p180, %s177, 1
        %s182 = smul.addr %s179, 4
        %s183 = sadd.s32 %s181, %s182
        %s184 = smul.addr %s183, 8
        %s185 = scalar_lea.vmem %s0, %s184
        %s186 = smul.u32 2, %s19
      $region28: #{_lambda_.12} parent=23 // pred_fallthru
        _
    $region24: #{_lambda_.12} parent=5 // pred_fallthru
      _
    %p187 = scmp.le.s32.totalorder 1, %s11
    %p188 = scmp.lt.s32.totalorder %s11, 3
    %p189 = pnand %p187, %p188
    %p190 = pneg %p189
    // Predicated region
    $region29: #{_lambda_.12} parent=5 // pred_check
      _
    $region30: #{_lambda_.12} parent=5 // pred_check_branch
      %192 = sbr.rel (%p189) target = $region32
    $region31: #{_lambda_.12} parent=5 // pred_region
      %s193 = ssub.s32 %s11, 1
      %s194 = smul.u32 2, %s21
      %p195 = scmp.lt.s32.totalorder %s20, 1
      %s196 = scalar_select %p195, %s20, 1
      %p197 = scmp.lt.s32.totalorder %s194, 1
      %s198 = scalar_select %p197, %s194, 1
      %s199 = smul.addr %s196, 4
      %s200 = sadd.s32 %s198, %s199
      %s201 = smul.addr %s200, 8
      %s202 = scalar_lea.vmem %s0, %s201
      %p203 = pneg %p51
      %p204 = pneg %p48
      %p205 = pneg %p72
      %p206 = pneg %p69
      %p207 = pneg %p93
      %p208 = pneg %p90
      %p209 = pneg %p121
      %p210 = pneg %p118
      %s211 = smul.u32 2, %s21
      %p212 = scmp.lt.s32.totalorder %s20, 1
      %s213 = scalar_select %p212, %s20, 1
      %p214 = scmp.lt.s32.totalorder %s211, 1
      %s215 = scalar_select %p214, %s211, 1
      %s216 = smul.addr %s213, 16
      %s217 = sadd.s32 %s215, %s216
      %s218 = smul.addr %s217, 4
      %s219 = scalar_lea.vmem %s3, %s218
      %p220 = pneg %p149
      %p221 = pneg %p146
      %s222 = smul.u32 2, %s21
      %p223 = scmp.lt.s32.totalorder %s20, 1
      %s224 = scalar_select %p223, %s20, 1
      %p225 = scmp.lt.s32.totalorder %s222, 1
      %s226 = scalar_select %p225, %s222, 1
      %s227 = smul.addr %s224, 16
      %s228 = sadd.s32 %s226, %s227
      %s229 = smul.addr %s228, 4
      %s230 = scalar_lea.vmem %s4, %s229
      %s231 = smul.u32 2, %s21
      %p232 = scmp.lt.s32.totalorder %s20, 1
      %s233 = scalar_select %p232, %s20, 1
      %p234 = scmp.lt.s32.totalorder %s231, 1
      %s235 = scalar_select %p234, %s231, 1
      %s236 = smul.addr %s233, 4
      %s237 = sadd.s32 %s235, %s236
      %s238 = smul.addr %s237, 8
      %s239 = scalar_lea.vmem %s0, %s238
      %s240 = smul.u32 2, %s21
      %s241 = smul.u32 2, %s21
      %p242 = scmp.lt.s32.totalorder %s20, 1
      %s243 = scalar_select %p242, %s20, 1
      %p244 = scmp.lt.s32.totalorder %s241, 1
      %s245 = scalar_select %p244, %s241, 1
      %s246 = smul.addr %s243, 16
      %s247 = sadd.s32 %s245, %s246
      %s248 = smul.addr %s247, 4
      %s249 = scalar_lea.vmem %s3, %s248
      %s250 = smul.u32 2, %s21
      %s251 = smul.u32 2, %s21
      %p252 = scmp.lt.s32.totalorder %s20, 1
      %s253 = scalar_select %p252, %s20, 1
      %p254 = scmp.lt.s32.totalorder %s251, 1
      %s255 = scalar_select %p254, %s251, 1
      %s256 = smul.addr %s253, 16
      %s257 = sadd.s32 %s255, %s256
      %s258 = smul.addr %s257, 4
      %s259 = scalar_lea.vmem %s4, %s258
      %s260 = smul.u32 2, %s21
      %v262 = vld [vmem:[%s239] sm:$0xff]
      %v263 = vld [vmem:[%s239 + $0x8] sm:$0xff]
      %v264 = vld [vmem:[%s239 + $0x10] sm:$0xff]
      %v265 = vld [vmem:[%s239 + $0x18] sm:$0xff]
      %v266 = vpack.c.bf16 %v264, %v262
      %v267 = vpack.c.bf16 %v265, %v263
      %v268 = vld [vmem:[%s1] sm:$0xf]
      %v269 = vld [vmem:[%s1 + $0x4] sm:$0xf]
      %v270 = vld [vmem:[%s1 + $0x8] sm:$0xf]
      %v271 = vld [vmem:[%s1 + $0xc] sm:$0xf]
      %v272 = vld [vmem:[%s1 + $0x10] sm:$0xf]
      %v273 = vld [vmem:[%s1 + $0x14] sm:$0xf]
      %v274 = vld [vmem:[%s1 + $0x18] sm:$0xf]
      %v275 = vld [vmem:[%s1 + $0x1c] sm:$0xf]
      %v284 = vunpack.c.l.b16 %v268
      %v285 = vunpack.c.l.b16 %v269
      %v286 = vunpack.c.l.b16 %v270
      %v287 = vunpack.c.l.b16 %v271
      %v288 = vunpack.c.l.b16 %v272
      %v289 = vunpack.c.l.b16 %v273
      %v290 = vunpack.c.l.b16 %v274
      %v291 = vunpack.c.l.b16 %v275
      %v292 = vpack.c.b16 %v285, %v284
      %v293 = vpack.c.b16 %v287, %v286
      %v294 = vpack.c.b16 %v289, %v288
      %v295 = vpack.c.b16 %v291, %v290
      %vm296 = vcmask 130048
      %v298 = vsel %vm296, %v292, 0
      %v301 = vsel %vm296, %v293, 0
      %v304 = vsel %vm296, %v294, 0
      %v307 = vsel %vm296, %v295, 0
      %309 = vmatprep.subr.bf16.mxu0 %v267
      %310 = vmatpush1.bf16.msra.mxu0 %v266
      %311 = vmatprep.subr.bf16.mxu0 0
      %312 = vmatpush1.bf16.msra.mxu0 0
      %313 = vmatprep.subr.bf16.mxu0 0
      %314 = vmatpush1.bf16.msra.mxu0 0
      %315 = vmatprep.subr.bf16.mxu0 0
      %316 = vmatpush1.bf16.msra.mxu0 0
      %317 = vmatprep.subr.bf16.mxu0 0
      %318 = vmatpush1.bf16.msra.mxu0 0
      %319 = vmatprep.subr.bf16.mxu0 0
      %320 = vmatpush1.bf16.msra.mxu0 0
      %321 = vmatprep.subr.bf16.mxu0 0
      %322 = vmatpush1.bf16.msra.mxu0 0
      %323 = vmatprep.subr.bf16.mxu0 0
      %324 = vmatpush1.bf16.msra.mxu0 0
      %325 = vmatprep.subr.bf16.mxu0 0
      %326 = vmatpush1.bf16.msra.mxu0 0
      %327 = vmatprep.subr.bf16.mxu0 0
      %328 = vmatpush1.bf16.msra.mxu0 0
      %329 = vmatprep.subr.bf16.mxu0 0
      %330 = vmatpush1.bf16.msra.mxu0 0
      %331 = vmatprep.subr.bf16.mxu0 0
      %332 = vmatpush1.bf16.msra.mxu0 0
      %333 = vmatprep.subr.bf16.mxu0 0
      %334 = vmatpush1.bf16.msra.mxu0 0
      %335 = vmatprep.subr.bf16.mxu0 0
      %336 = vmatpush1.bf16.msra.mxu0 0
      %337 = vmatprep.subr.bf16.mxu0 0
      %338 = vmatpush1.bf16.msra.mxu0 0
      %339 = vmatprep.subr.bf16.mxu0 0
      %340 = vmatpush1.bf16.msra.mxu0 0
      %341 = vmatprep.mubr.bf16.mxu0 0
      %342 = vmatmul.mubr.bf16.gmra.mrb[0].mxu0 %v298
      %v343 = vpop.f32.mrb[0].mxu0
      %v344 = vadd.f32 0.0, %v343
      %v345 = vpop.f32.mrb[0].mxu0
      %v346 = vadd.f32 0.0, %v345
      %v347 = vpop.f32.mrb[0].mxu0
      %v348 = vadd.f32 0.0, %v347
      %v349 = vpop.f32.mrb[0].mxu0
      %v350 = vadd.f32 0.0, %v349
      %351 = vmatprep.mubr.bf16.mxu0 0
      %352 = vmatmul.mubr.bf16.gmra.mrb[0].mxu0 %v301
      %v353 = vpop.f32.mrb[0].mxu0
      %v354 = vadd.f32 0.0, %v353
      %v355 = vpop.f32.mrb[0].mxu0
      %v356 = vadd.f32 0.0, %v355
      %v357 = vpop.f32.mrb[0].mxu0
      %v358 = vadd.f32 0.0, %v357
      %v359 = vpop.f32.mrb[0].mxu0
      %v360 = vadd.f32 0.0, %v359
      %361 = vmatprep.mubr.bf16.mxu0 0
      %362 = vmatmul.mubr.bf16.gmra.mrb[0].mxu0 %v304
      %v363 = vpop.f32.mrb[0].mxu0
      %v364 = vadd.f32 0.0, %v363
      %v365 = vpop.f32.mrb[0].mxu0
      %v366 = vadd.f32 0.0, %v365
      %v367 = vpop.f32.mrb[0].mxu0
      %v368 = vadd.f32 0.0, %v367
      %v369 = vpop.f32.mrb[0].mxu0
      %v370 = vadd.f32 0.0, %v369
      %371 = vmatprep.mubr.bf16.mxu0 0
      %372 = vmatmul.mubr.bf16.gmra.mrb[0].mxu0 %v307
      %v373 = vpop.f32.mrb[0].mxu0
      %v374 = vadd.f32 0.0, %v373
      %v375 = vpop.f32.mrb[0].mxu0
      %v376 = vadd.f32 0.0, %v375
      %v377 = vpop.f32.mrb[0].mxu0
      %v378 = vadd.f32 0.0, %v377
      %v379 = vpop.f32.mrb[0].mxu0
      %v380 = vadd.f32 0.0, %v379
      %381 = vdwg.mxu0
      %v382 = vld [vmem:[%s2] sm:$0xf]
      %v383 = vld [vmem:[%s2 + $0x4] sm:$0xf]
      %v384 = vld [vmem:[%s2 + $0x8] sm:$0xf]
      %v385 = vld [vmem:[%s2 + $0xc] sm:$0xf]
      %v386 = vld [vmem:[%s2 + $0x10] sm:$0xf]
      %v387 = vld [vmem:[%s2 + $0x14] sm:$0xf]
      %v388 = vld [vmem:[%s2 + $0x18] sm:$0xf]
      %v389 = vld [vmem:[%s2 + $0x1c] sm:$0xf]
      %v398 = vunpack.c.l.b16 %v382
      %v399 = vunpack.c.l.b16 %v383
      %v400 = vunpack.c.l.b16 %v384
      %v401 = vunpack.c.l.b16 %v385
      %v402 = vunpack.c.l.b16 %v386
      %v403 = vunpack.c.l.b16 %v387
      %v404 = vunpack.c.l.b16 %v388
      %v405 = vunpack.c.l.b16 %v389
      %v406 = vpack.c.b16 %v399, %v398
      %v407 = vpack.c.b16 %v401, %v400
      %v408 = vpack.c.b16 %v403, %v402
      %v409 = vpack.c.b16 %v405, %v404
      %v411 = vsel %vm296, %v406, 0
      %v414 = vsel %vm296, %v407, 0
      %v417 = vsel %vm296, %v408, 0
      %v420 = vsel %vm296, %v409, 0
      %422 = vmatprep.subr.bf16.mxu0 %v267
      %423 = vmatpush1.bf16.msra.mxu0 %v266
      %424 = vmatprep.subr.bf16.mxu0 0
      %425 = vmatpush1.bf16.msra.mxu0 0
      %426 = vmatprep.subr.bf16.mxu0 0
      %427 = vmatpush1.bf16.msra.mxu0 0
      %428 = vmatprep.subr.bf16.mxu0 0
      %429 = vmatpush1.bf16.msra.mxu0 0
      %430 = vmatprep.subr.bf16.mxu0 0
      %431 = vmatpush1.bf16.msra.mxu0 0
      %432 = vmatprep.subr.bf16.mxu0 0
      %433 = vmatpush1.bf16.msra.mxu0 0
      %434 = vmatprep.subr.bf16.mxu0 0
      %435 = vmatpush1.bf16.msra.mxu0 0
      %436 = vmatprep.subr.bf16.mxu0 0
      %437 = vmatpush1.bf16.msra.mxu0 0
      %438 = vmatprep.subr.bf16.mxu0 0
      %439 = vmatpush1.bf16.msra.mxu0 0
      %440 = vmatprep.subr.bf16.mxu0 0
      %441 = vmatpush1.bf16.msra.mxu0 0
      %442 = vmatprep.subr.bf16.mxu0 0
      %443 = vmatpush1.bf16.msra.mxu0 0
      %444 = vmatprep.subr.bf16.mxu0 0
      %445 = vmatpush1.bf16.msra.mxu0 0
      %446 = vmatprep.subr.bf16.mxu0 0
      %447 = vmatpush1.bf16.msra.mxu0 0
      %448 = vmatprep.subr.bf16.mxu0 0
      %449 = vmatpush1.bf16.msra.mxu0 0
      %450 = vmatprep.subr.bf16.mxu0 0
      %451 = vmatpush1.bf16.msra.mxu0 0
      %452 = vmatprep.subr.bf16.mxu0 0
      %453 = vmatpush1.bf16.msra.mxu0 0
      %454 = vmatprep.mubr.bf16.mxu0 0
      %455 = vmatmul.mubr.bf16.gmra.mrb[0].mxu0 %v411
      %v456 = vpop.f32.mrb[0].mxu0
      %v457 = vadd.f32 0.0, %v456
      %v458 = vpop.f32.mrb[0].mxu0
      %v459 = vadd.f32 0.0, %v458
      %v460 = vpop.f32.mrb[0].mxu0
      %v461 = vadd.f32 0.0, %v460
      %v462 = vpop.f32.mrb[0].mxu0
      %v463 = vadd.f32 0.0, %v462
      %464 = vmatprep.mubr.bf16.mxu0 0
      %465 = vmatmul.mubr.bf16.gmra.mrb[0].mxu0 %v414
      %v466 = vpop.f32.mrb[0].mxu0
      %v467 = vadd.f32 0.0, %v466
      %v468 = vpop.f32.mrb[0].mxu0
      %v469 = vadd.f32 0.0, %v468
      %v470 = vpop.f32.mrb[0].mxu0
      %v471 = vadd.f32 0.0, %v470
      %v472 = vpop.f32.mrb[0].mxu0
      %v473 = vadd.f32 0.0, %v472
      %474 = vmatprep.mubr.bf16.mxu0 0
      %475 = vmatmul.mubr.bf16.gmra.mrb[0].mxu0 %v417
      %v476 = vpop.f32.mrb[0].mxu0
      %v477 = vadd.f32 0.0, %v476
      %v478 = vpop.f32.mrb[0].mxu0
      %v479 = vadd.f32 0.0, %v478
      %v480 = vpop.f32.mrb[0].mxu0
      %v481 = vadd.f32 0.0, %v480
      %v482 = vpop.f32.mrb[0].mxu0
      %v483 = vadd.f32 0.0, %v482
      %484 = vmatprep.mubr.bf16.mxu0 0
      %485 = vmatmul.mubr.bf16.gmra.mrb[0].mxu0 %v420
      %v486 = vpop.f32.mrb[0].mxu0
      %v487 = vadd.f32 0.0, %v486
      %v488 = vpop.f32.mrb[0].mxu0
      %v489 = vadd.f32 0.0, %v488
      %v490 = vpop.f32.mrb[0].mxu0
      %v491 = vadd.f32 0.0, %v490
      %v492 = vpop.f32.mrb[0].mxu0
      %v493 = vadd.f32 0.0, %v492
      %494 = vdwg.mxu0
      %v495 = vpack.c.bf16 %v348, %v344
      %v496 = vpack.c.bf16 %v350, %v346
      %v497 = vpack.c.bf16 %v358, %v354
      %v498 = vpack.c.bf16 %v360, %v356
      %v499 = vpack.c.bf16 %v368, %v364
      %v500 = vpack.c.bf16 %v370, %v366
      %v501 = vpack.c.bf16 %v378, %v374
      %v502 = vpack.c.bf16 %v380, %v376
      %v511 = vunpack.c.l.b16 %v495
      %v512 = vunpack.c.l.b16 %v496
      %v513 = vunpack.c.h.b16 %v495
      %v514 = vunpack.c.h.b16 %v496
      %v515 = vunpack.c.l.b16 %v497
      %v516 = vunpack.c.l.b16 %v498
      %v517 = vunpack.c.h.b16 %v497
      %v518 = vunpack.c.h.b16 %v498
      %v519 = vunpack.c.l.b16 %v499
      %v520 = vunpack.c.l.b16 %v500
      %v521 = vunpack.c.h.b16 %v499
      %v522 = vunpack.c.h.b16 %v500
      %v523 = vunpack.c.l.b16 %v501
      %v524 = vunpack.c.l.b16 %v502
      %v525 = vunpack.c.h.b16 %v501
      %v526 = vunpack.c.h.b16 %v502
      %v527 = vpack.c.b16 %v512, %v511
      %v528 = vpack.c.b16 %v514, %v513
      %v529 = vpack.c.b16 %v516, %v515
      %v530 = vpack.c.b16 %v518, %v517
      %v531 = vpack.c.b16 %v520, %v519
      %v532 = vpack.c.b16 %v522, %v521
      %v533 = vpack.c.b16 %v524, %v523
      %v534 = vpack.c.b16 %v526, %v525
      %543 = vst [vmem:[%s249] sm:$0xff] %v527
      %544 = vst [vmem:[%s249 + $0x8] sm:$0xff] %v528
      %545 = vst [vmem:[%s249 + $0x10] sm:$0xff] %v529
      %546 = vst [vmem:[%s249 + $0x18] sm:$0xff] %v530
      %547 = vst [vmem:[%s249 + $0x20] sm:$0xff] %v531
      %548 = vst [vmem:[%s249 + $0x28] sm:$0xff] %v532
      %549 = vst [vmem:[%s249 + $0x30] sm:$0xff] %v533
      %550 = vst [vmem:[%s249 + $0x38] sm:$0xff] %v534
      %v551 = vpack.c.bf16 %v461, %v457
      %v552 = vpack.c.bf16 %v463, %v459
      %v553 = vpack.c.bf16 %v471, %v467
      %v554 = vpack.c.bf16 %v473, %v469
      %v555 = vpack.c.bf16 %v481, %v477
      %v556 = vpack.c.bf16 %v483, %v479
      %v557 = vpack.c.bf16 %v491, %v487
      %v558 = vpack.c.bf16 %v493, %v489
      %v567 = vunpack.c.l.b16 %v551
      %v568 = vunpack.c.l.b16 %v552
      %v569 = vunpack.c.h.b16 %v551
      %v570 = vunpack.c.h.b16 %v552
      %v571 = vunpack.c.l.b16 %v553
      %v572 = vunpack.c.l.b16 %v554
      %v573 = vunpack.c.h.b16 %v553
      %v574 = vunpack.c.h.b16 %v554
      %v575 = vunpack.c.l.b16 %v555
      %v576 = vunpack.c.l.b16 %v556
      %v577 = vunpack.c.h.b16 %v555
      %v578 = vunpack.c.h.b16 %v556
      %v579 = vunpack.c.l.b16 %v557
      %v580 = vunpack.c.l.b16 %v558
      %v581 = vunpack.c.h.b16 %v557
      %v582 = vunpack.c.h.b16 %v558
      %v583 = vpack.c.b16 %v568, %v567
      %v584 = vpack.c.b16 %v570, %v569
      %v585 = vpack.c.b16 %v572, %v571
      %v586 = vpack.c.b16 %v574, %v573
      %v587 = vpack.c.b16 %v576, %v575
      %v588 = vpack.c.b16 %v578, %v577
      %v589 = vpack.c.b16 %v580, %v579
      %v590 = vpack.c.b16 %v582, %v581
      %599 = vst [vmem:[%s259] sm:$0xff] %v583
      %600 = vst [vmem:[%s259 + $0x8] sm:$0xff] %v584
      %601 = vst [vmem:[%s259 + $0x10] sm:$0xff] %v585
      %602 = vst [vmem:[%s259 + $0x18] sm:$0xff] %v586
      %603 = vst [vmem:[%s259 + $0x20] sm:$0xff] %v587
      %604 = vst [vmem:[%s259 + $0x28] sm:$0xff] %v588
      %605 = vst [vmem:[%s259 + $0x30] sm:$0xff] %v589
      %606 = vst [vmem:[%s259 + $0x38] sm:$0xff] %v590
      %s607 = smul.u32 2, %s21
      %p608 = scmp.lt.s32.totalorder %s20, 1
      %s609 = scalar_select %p608, %s20, 1
      %p610 = scmp.lt.s32.totalorder %s607, 1
      %s611 = scalar_select %p610, %s607, 1
      %s612 = smul.addr %s609, 16
      %s613 = sadd.s32 %s611, %s612
      %s614 = smul.addr %s613, 4
      %s615 = scalar_lea.vmem %s3, %s614
      %s616 = smul.u32 2, %s21
      %p617 = scmp.lt.s32.totalorder %s20, 1
      %s618 = scalar_select %p617, %s20, 1
      %p619 = scmp.lt.s32.totalorder %s616, 1
      %s620 = scalar_select %p619, %s616, 1
      %s621 = smul.addr %s618, 16
      %s622 = sadd.s32 %s620, %s621
      %s623 = smul.addr %s622, 4
      %s624 = scalar_lea.vmem %s4, %s623
      // Predicated region
      $region33: #{_lambda_.12} parent=31 // pred_check
        %p625 = pneg %p118
      $region34: #{_lambda_.12} parent=31 // pred_check_branch
        %627 = sbr.rel (%p625) target = $region36
      $region35: #{_lambda_.12} parent=31 // pred_region
        %s628 = smul.u32 2, %s21
      $region36: #{_lambda_.12} parent=31 // pred_fallthru
        _
      // Predicated region
      $region37: #{_lambda_.12} parent=31 // pred_check
        %p629 = pneg %p146
      $region38: #{_lambda_.12} parent=31 // pred_check_branch
        %631 = sbr.rel (%p629) target = $region40
      $region39: #{_lambda_.12} parent=31 // pred_region
        %s632 = smul.u32 2, %s21
      $region40: #{_lambda_.12} parent=31 // pred_fallthru
        _
    $region32: #{_lambda_.12} parent=5 // pred_fallthru
      _
    %p633 = scmp.le.s32.totalorder 2, %s11
    // Predicated region
    $region41: #{_lambda_.12} parent=5 // pred_check
      %p634 = pneg %p633
    $region42: #{_lambda_.12} parent=5 // pred_check_branch
      %636 = sbr.rel (%p634) target = $region44
    $region43: #{_lambda_.12} parent=5 // pred_region
      %s637 = ssub.s32 %s11, 2
      // Predicated region
      $region45: #{_lambda_.12} parent=43 // pred_check
        %p638 = pneg %p124
      $region46: #{_lambda_.12} parent=43 // pred_check_branch
        %640 = sbr.rel (%p638) target = $region48
      $region47: #{_lambda_.12} parent=43 // pred_region
        %s641 = smul.u32 2, %s23
        %p642 = scmp.lt.s32.totalorder %s22, 1
        %s643 = scalar_select %p642, %s22, 1
        %p644 = scmp.lt.s32.totalorder %s641, 1
        %s645 = scalar_select %p644, %s641, 1
        %s646 = smul.addr %s643, 16
        %s647 = sadd.s32 %s645, %s646
        %s648 = smul.addr %s647, 4
        %s649 = scalar_lea.vmem %s3, %s648
      $region48: #{_lambda_.12} parent=43 // pred_fallthru
        _
      // Predicated region
      $region49: #{_lambda_.12} parent=43 // pred_check
        %p650 = pneg %p152
      $region50: #{_lambda_.12} parent=43 // pred_check_branch
        %652 = sbr.rel (%p650) target = $region52
      $region51: #{_lambda_.12} parent=43 // pred_region
        %s653 = smul.u32 2, %s23
        %p654 = scmp.lt.s32.totalorder %s22, 1
        %s655 = scalar_select %p654, %s22, 1
        %p656 = scmp.lt.s32.totalorder %s653, 1
        %s657 = scalar_select %p656, %s653, 1
        %s658 = smul.addr %s655, 16
        %s659 = sadd.s32 %s657, %s658
        %s660 = smul.addr %s659, 4
        %s661 = scalar_lea.vmem %s4, %s660
      $region52: #{_lambda_.12} parent=43 // pred_fallthru
        _
    $region44: #{_lambda_.12} parent=5 // pred_fallthru
      _
  $region6: #{_lambda_.12} parent=0 // loop_footer
    %s15 = sadd.s32 1, %s11
  $region7: #{_lambda_.12} parent=0 // loop_footer_branch
    %10 = sbr.rel target = $region3
  $region8: #{_lambda_.12} parent=0 // loop_exit
    _

// kernel: _lambda_.14
$region0: #{_lambda_.14}
  #allocation0 [shape = 'u32[]', space=smem, size = 0x4, offset = 0x4, fixed_abs, tag = 'smem constant byte address 0x4 - core index']
  #allocation1 [shape = 'u32[144,128]{1,0:T(1,128)}', space=vmem, size = 0x12000, scoped, tag = 'internal scratch']
  %s0 = inlined_call_operand.vmem [shape: bf16[2,64,1024], index: 0, kind: input, shape index: {}]
  %s1 = inlined_call_operand.vmem [shape: bf16[4,64], index: 1, kind: input, shape index: {}]
  %s2 = inlined_call_operand.vmem [shape: bf16[16,64], index: 2, kind: input, shape index: {}]
  %s3 = inlined_call_operand.vmem [shape: f32[4,1], index: 3, kind: input, shape index: {}]
  %s4 = inlined_call_operand.vmem [shape: f32[16,1], index: 4, kind: input, shape index: {}]
  %s5 = inlined_call_operand.vmem [shape: bf16[2,4,1024], index: 5, kind: output, shape index: {0}]
  %s6 = inlined_call_operand.vmem [shape: bf16[2,16,1024], index: 6, kind: output, shape index: {1}]
  %7 = xla_tuple %s5, %s6
  %s8 = sld [smem:[#allocation0]]
  $region103: #{_lambda_.14} parent=0
    _
  %s10 = ssub.s32 1, %s8
  %s11 = scalar_select 0, %s10, %s8
  $region1: #{_lambda_.14} parent=0
    #allocation2 [shape = 'u8[131072]{0}', space=vmem, size = 0x20000, scoped, tag = 'input window, operand 0']
    #allocation3 [shape = 'u8[32768]{0}', space=vmem, size = 0x8000, scoped, tag = 'output window, operand 1']
    loop: start=0, step=1, limit=6
    $region2: #{_lambda_.14} parent=1 // loop_pre_header
      _
    $region3: #{_lambda_.14} parent=1 // loop_header
      %s13 = sphi 0, %s17
      %p14 = scmp.ge.s32.totalorder %s13, 6
      %s20 = sphi 0, %s32
      %s21 = sphi 0, %s28
      %s22 = sphi 0, %s20
      %s23 = sphi 0, %s21
      %s24 = sphi 0, %s22
      %s25 = sphi 0, %s23
      %s37 = sphi 0, %s39
      %s40 = sphi 0, %s37
      %s41 = sphi 0, %s40
      %s57 = sphi 0, %s41
      %s61 = sphi 0, %s61
      %s63 = sphi 0, %s61
      %s64 = sphi 0, %s63
      %s78 = sphi 0, %s64
      %s82 = sphi 0, %s82
      %s84 = sphi 0, %s82
      %s85 = sphi 0, %s84
      %s99 = sphi 0, %s85
      %s103 = sphi 0, %s103
      %s105 = sphi 0, %s103
      %s106 = sphi 0, %s105
      %s120 = sphi 0, %s106
      %s124 = sphi 0, %s124
      %s126 = sphi 0, %s124
      %s127 = sphi 0, %s126
      %s141 = sphi 0, %s127
      %s149 = sphi 0, %s151
      %s152 = sphi 0, %s149
      %s153 = sphi 0, %s152
      %s169 = sphi 0, %s153
      %s177 = sphi 0, %s179
      %s180 = sphi 0, %s177
      %s181 = sphi 0, %s180
      %s197 = sphi 0, %s181
    $region4: #{_lambda_.14} parent=1 // loop_header_branch
      %16 = sbr.rel (%p14) target = $region8
    $region5: #{_lambda_.14} parent=1 // loop_body
      %s18 = ssub.s32 %s13, 1
      %s19 = ssub.s32 %s13, 2
      %s26 = sadd.s32 1, %s21
      %p27 = scmp.ge.s32.totalorder %s26, 2
      %s28 = scalar_select %p27, 0, %s26
      %s29 = sadd.s32 1, %s20
      %s30 = scalar_select %p27, %s29, %s20
      %p31 = scmp.ge.s32.totalorder %s30, 2
      %s32 = scalar_select %p31, 0, %s30
      %s33 = ssub.s32 %s20, %s32
      %s34 = ssub.s32 %s21, %s28
      %s35 = sor.u32 %s33, %s34
      %p36 = scmp.eq.s32.totalorder %s35, 0
      %s38 = sadd.s32 %s37, 1
      %s39 = scalar_select %p36, %s37, %s38
      %p42 = pneg %p36
      %p43 = scmp.eq.s32.totalorder %s13, 3
      %p44 = por %p42, %p43
      %p45 = scmp.ne.s32.totalorder %s37, %s40
      %p46 = scmp.eq.s32.totalorder %s13, 0
      %p47 = por %p45, %p46
      %p48 = scmp.ne.s32.totalorder %s37, %s40
      %p49 = scmp.eq.s32.totalorder %s18, 3
      %p50 = por %p48, %p49
      %p51 = scmp.ne.s32.totalorder %s40, %s41
      %p52 = scmp.eq.s32.totalorder %s18, 0
      %p53 = por %p51, %p52
      %p54 = scmp.ne.s32.totalorder %s40, %s41
      %p55 = scmp.eq.s32.totalorder %s19, 3
      %p56 = por %p54, %p55
      %p58 = scmp.ne.s32.totalorder %s41, %s57
      %p59 = scmp.eq.s32.totalorder %s19, 0
      %p60 = por %p58, %p59
      %s62 = sadd.s32 %s61, 1
      %p65 = scmp.eq.s32.totalorder %s13, 3
      %p66 = scmp.ne.s32.totalorder %s61, %s63
      %p67 = scmp.eq.s32.totalorder %s13, 0
      %p68 = por %p66, %p67
      %p69 = scmp.ne.s32.totalorder %s61, %s63
      %p70 = scmp.eq.s32.totalorder %s18, 3
      %p71 = por %p69, %p70
      %p72 = scmp.ne.s32.totalorder %s63, %s64
      %p73 = scmp.eq.s32.totalorder %s18, 0
      %p74 = por %p72, %p73
      %p75 = scmp.ne.s32.totalorder %s63, %s64
      %p76 = scmp.eq.s32.totalorder %s19, 3
      %p77 = por %p75, %p76
      %p79 = scmp.ne.s32.totalorder %s64, %s78
      %p80 = scmp.eq.s32.totalorder %s19, 0
      %p81 = por %p79, %p80
      %s83 = sadd.s32 %s82, 1
      %p86 = scmp.eq.s32.totalorder %s13, 3
      %p87 = scmp.ne.s32.totalorder %s82, %s84
      %p88 = scmp.eq.s32.totalorder %s13, 0
      %p89 = por %p87, %p88
      %p90 = scmp.ne.s32.totalorder %s82, %s84
      %p91 = scmp.eq.s32.totalorder %s18, 3
      %p92 = por %p90, %p91
      %p93 = scmp.ne.s32.totalorder %s84, %s85
      %p94 = scmp.eq.s32.totalorder %s18, 0
      %p95 = por %p93, %p94
      %p96 = scmp.ne.s32.totalorder %s84, %s85
      %p97 = scmp.eq.s32.totalorder %s19, 3
      %p98 = por %p96, %p97
      %p100 = scmp.ne.s32.totalorder %s85, %s99
      %p101 = scmp.eq.s32.totalorder %s19, 0
      %p102 = por %p100, %p101
      %s104 = sadd.s32 %s103, 1
      %p107 = scmp.eq.s32.totalorder %s13, 3
      %p108 = scmp.ne.s32.totalorder %s103, %s105
      %p109 = scmp.eq.s32.totalorder %s13, 0
      %p110 = por %p108, %p109
      %p111 = scmp.ne.s32.totalorder %s103, %s105
      %p112 = scmp.eq.s32.totalorder %s18, 3
      %p113 = por %p111, %p112
      %p114 = scmp.ne.s32.totalorder %s105, %s106
      %p115 = scmp.eq.s32.totalorder %s18, 0
      %p116 = por %p114, %p115
      %p117 = scmp.ne.s32.totalorder %s105, %s106
      %p118 = scmp.eq.s32.totalorder %s19, 3
      %p119 = por %p117, %p118
      %p121 = scmp.ne.s32.totalorder %s106, %s120
      %p122 = scmp.eq.s32.totalorder %s19, 0
      %p123 = por %p121, %p122
      %s125 = sadd.s32 %s124, 1
      %p128 = scmp.eq.s32.totalorder %s13, 3
      %p129 = scmp.ne.s32.totalorder %s124, %s126
      %p130 = scmp.eq.s32.totalorder %s13, 0
      %p131 = por %p129, %p130
      %p132 = scmp.ne.s32.totalorder %s124, %s126
      %p133 = scmp.eq.s32.totalorder %s18, 3
      %p134 = por %p132, %p133
      %p135 = scmp.ne.s32.totalorder %s126, %s127
      %p136 = scmp.eq.s32.totalorder %s18, 0
      %p137 = por %p135, %p136
      %p138 = scmp.ne.s32.totalorder %s126, %s127
      %p139 = scmp.eq.s32.totalorder %s19, 3
      %p140 = por %p138, %p139
      %p142 = scmp.ne.s32.totalorder %s127, %s141
      %p143 = scmp.eq.s32.totalorder %s19, 0
      %p144 = por %p142, %p143
      %s145 = ssub.s32 %s20, %s32
      %s146 = ssub.s32 %s21, %s28
      %s147 = sor.u32 %s145, %s146
      %p148 = scmp.eq.s32.totalorder %s147, 0
      %s150 = sadd.s32 %s149, 1
      %s151 = scalar_select %p148, %s149, %s150
      %p154 = pneg %p148
      %p155 = scmp.eq.s32.totalorder %s13, 3
      %p156 = por %p154, %p155
      %p157 = scmp.ne.s32.totalorder %s149, %s152
      %p158 = scmp.eq.s32.totalorder %s13, 0
      %p159 = por %p157, %p158
      %p160 = scmp.ne.s32.totalorder %s149, %s152
      %p161 = scmp.eq.s32.totalorder %s18, 3
      %p162 = por %p160, %p161
      %p163 = scmp.ne.s32.totalorder %s152, %s153
      %p164 = scmp.eq.s32.totalorder %s18, 0
      %p165 = por %p163, %p164
      %p166 = scmp.ne.s32.totalorder %s152, %s153
      %p167 = scmp.eq.s32.totalorder %s19, 3
      %p168 = por %p166, %p167
      %p170 = scmp.ne.s32.totalorder %s153, %s169
      %p171 = scmp.eq.s32.totalorder %s19, 0
      %p172 = por %p170, %p171
      %s173 = ssub.s32 %s20, %s32
      %s174 = ssub.s32 %s21, %s28
      %s175 = sor.u32 %s173, %s174
      %p176 = scmp.eq.s32.totalorder %s175, 0
      %s178 = sadd.s32 %s177, 1
      %s179 = scalar_select %p176, %s177, %s178
      %p182 = pneg %p176
      %p183 = scmp.eq.s32.totalorder %s13, 3
      %p184 = por %p182, %p183
      %p185 = scmp.ne.s32.totalorder %s177, %s180
      %p186 = scmp.eq.s32.totalorder %s13, 0
      %p187 = por %p185, %p186
      %p188 = scmp.ne.s32.totalorder %s177, %s180
      %p189 = scmp.eq.s32.totalorder %s18, 3
      %p190 = por %p188, %p189
      %p191 = scmp.ne.s32.totalorder %s180, %s181
      %p192 = scmp.eq.s32.totalorder %s18, 0
      %p193 = por %p191, %p192
      %p194 = scmp.ne.s32.totalorder %s180, %s181
      %p195 = scmp.eq.s32.totalorder %s19, 3
      %p196 = por %p194, %p195
      %p198 = scmp.ne.s32.totalorder %s181, %s197
      %p199 = scmp.eq.s32.totalorder %s19, 0
      %p200 = por %p198, %p199
      %p201 = scmp.le.s32.totalorder 1, %s13
      %p202 = scmp.lt.s32.totalorder %s13, 5
      %p203 = pnand %p201, %p202
      %p204 = pneg %p203
      // Predicated region
      $region9: #{_lambda_.14} parent=5 // pred_check
        _
      $region10: #{_lambda_.14} parent=5 // pred_check_branch
        %206 = sbr.rel (%p203) target = $region12
      $region11: #{_lambda_.14} parent=5 // pred_region
        %s207 = ssub.s32 %s13, 1
        // Predicated region
        $region13: #{_lambda_.14} parent=11 // pred_check
          %p208 = pneg %p74
        $region14: #{_lambda_.14} parent=11 // pred_check_branch
          %210 = sbr.rel (%p208) target = $region16
        $region15: #{_lambda_.14} parent=11 // pred_region
          _
        $region16: #{_lambda_.14} parent=11 // pred_fallthru
          _
        // Predicated region
        $region17: #{_lambda_.14} parent=11 // pred_check
          %p211 = pneg %p95
        $region18: #{_lambda_.14} parent=11 // pred_check_branch
          %213 = sbr.rel (%p211) target = $region20
        $region19: #{_lambda_.14} parent=11 // pred_region
          _
        $region20: #{_lambda_.14} parent=11 // pred_fallthru
          _
        // Predicated region
        $region21: #{_lambda_.14} parent=11 // pred_check
          %p214 = pneg %p116
        $region22: #{_lambda_.14} parent=11 // pred_check_branch
          %216 = sbr.rel (%p214) target = $region24
        $region23: #{_lambda_.14} parent=11 // pred_region
          _
        $region24: #{_lambda_.14} parent=11 // pred_fallthru
          _
        // Predicated region
        $region25: #{_lambda_.14} parent=11 // pred_check
          %p217 = pneg %p137
        $region26: #{_lambda_.14} parent=11 // pred_check_branch
          %219 = sbr.rel (%p217) target = $region28
        $region27: #{_lambda_.14} parent=11 // pred_region
          _
        $region28: #{_lambda_.14} parent=11 // pred_fallthru
          _
      $region12: #{_lambda_.14} parent=5 // pred_fallthru
        _
      %p220 = scmp.lt.s32.totalorder %s13, 4
      // Predicated region
      $region29: #{_lambda_.14} parent=5 // pred_check
        %p221 = pneg %p220
      $region30: #{_lambda_.14} parent=5 // pred_check_branch
        %223 = sbr.rel (%p221) target = $region32
      $region31: #{_lambda_.14} parent=5 // pred_region
        // Predicated region
        $region33: #{_lambda_.14} parent=31 // pred_check
          %p224 = pneg %p47
        $region34: #{_lambda_.14} parent=31 // pred_check_branch
          %226 = sbr.rel (%p224) target = $region36
        $region35: #{_lambda_.14} parent=31 // pred_region
          %s227 = sand.u32 %s37, 1
          %s228 = sand.u32 %s37, 1
          %s229 = smul.addr %s228, 128
          %s230 = scalar_lea.vmem [#allocation2], %s229
          %s231 = smul.u32 4, %s21
          %s232 = smul.addr %s20, 64
          %s233 = sadd.s32 %s231, %s232
          %s234 = smul.addr %s233, 4
          %s235 = scalar_lea.vmem %s0, %s234
          // Predicated region
          $region37: #{_lambda_.14} parent=35 // pred_check
            _
          $region38: #{_lambda_.14} parent=35 // pred_check_branch
            %237 = sbr.rel (0) target = $region40
          $region39: #{_lambda_.14} parent=35 // pred_region
            // Predicated region
            $region41: #{_lambda_.14} parent=39 // pred_check
              _
            $region42: #{_lambda_.14} parent=39 // pred_check_branch
              %239 = sbr.rel (0) target = $region44
            $region43: #{_lambda_.14} parent=39 // pred_region
              loop: start=0, step=1, limit=1
              $region45: #{_lambda_.14} parent=43 // loop_pre_header
                _
              $region46: #{_lambda_.14} parent=43 // loop_header
                %s241 = sphi 0, %s245
                %p242 = scmp.ge.s32.totalorder %s241, 1
                %s246 = sphi %s235, %s235
                %s247 = sphi %s230, %s230
              $region47: #{_lambda_.14} parent=43 // loop_header_branch
                %244 = sbr.rel (%p242) target = $region51
              $region48: #{_lambda_.14} parent=43 // loop_body
                %v248 = vld [vmem:[%s246] sm:$0xff]
                %249 = vst [vmem:[%s247] sm:$0xff] %v248
                %v250 = vld [vmem:[%s246 + $0x8] sm:$0xff]
                %251 = vst [vmem:[%s247 + $0x8] sm:$0xff] %v250
                %v252 = vld [vmem:[%s246 + $0x20] sm:$0xff]
                %253 = vst [vmem:[%s247 + $0x10] sm:$0xff] %v252
                %v254 = vld [vmem:[%s246 + $0x28] sm:$0xff]
                %255 = vst [vmem:[%s247 + $0x18] sm:$0xff] %v254
                %v256 = vld [vmem:[%s246 + $0x40] sm:$0xff]
                %257 = vst [vmem:[%s247 + $0x20] sm:$0xff] %v256
                %v258 = vld [vmem:[%s246 + $0x48] sm:$0xff]
                %259 = vst [vmem:[%s247 + $0x28] sm:$0xff] %v258
                %v260 = vld [vmem:[%s246 + $0x60] sm:$0xff]
                %261 = vst [vmem:[%s247 + $0x30] sm:$0xff] %v260
                %v262 = vld [vmem:[%s246 + $0x68] sm:$0xff]
                %263 = vst [vmem:[%s247 + $0x38] sm:$0xff] %v262
                %v264 = vld [vmem:[%s246 + $0x80] sm:$0xff]
                %265 = vst [vmem:[%s247 + $0x40] sm:$0xff] %v264
                %v266 = vld [vmem:[%s246 + $0x88] sm:$0xff]
                %267 = vst [vmem:[%s247 + $0x48] sm:$0xff] %v266
                %v268 = vld [vmem:[%s246 + $0xa0] sm:$0xff]
                %269 = vst [vmem:[%s247 + $0x50] sm:$0xff] %v268
                %v270 = vld [vmem:[%s246 + $0xa8] sm:$0xff]
                %271 = vst [vmem:[%s247 + $0x58] sm:$0xff] %v270
                %v272 = vld [vmem:[%s246 + $0xc0] sm:$0xff]
                %273 = vst [vmem:[%s247 + $0x60] sm:$0xff] %v272
                %v274 = vld [vmem:[%s246 + $0xc8] sm:$0xff]
                %275 = vst [vmem:[%s247 + $0x68] sm:$0xff] %v274
                %v276 = vld [vmem:[%s246 + $0xe0] sm:$0xff]
                %277 = vst [vmem:[%s247 + $0x70] sm:$0xff] %v276
                %v278 = vld [vmem:[%s246 + $0xe8] sm:$0xff]
                %279 = vst [vmem:[%s247 + $0x78] sm:$0xff] %v278
              $region49: #{_lambda_.14} parent=43 // loop_footer
                %s245 = sadd.s32 1, %s241
              $region50: #{_lambda_.14} parent=43 // loop_footer_branch
                %240 = sbr.rel target = $region46
              $region51: #{_lambda_.14} parent=43 // loop_exit
                _
            $region44: #{_lambda_.14} parent=39 // pred_fallthru
              _
            // Predicated region
            $region52: #{_lambda_.14} parent=39 // pred_check
              _
            $region53: #{_lambda_.14} parent=39 // pred_check_branch
              %281 = sbr.rel target = $region55
            $region54: #{_lambda_.14} parent=39 // pred_region
              _
            $region55: #{_lambda_.14} parent=39 // pred_fallthru
              _
          $region40: #{_lambda_.14} parent=35 // pred_fallthru
            _
          %282 = vnop
        $region36: #{_lambda_.14} parent=31 // pred_fallthru
          _
      $region32: #{_lambda_.14} parent=5 // pred_fallthru
        _
      %p283 = scmp.le.s32.totalorder 1, %s13
      %p284 = scmp.lt.s32.totalorder %s13, 5
      %p285 = pnand %p283, %p284
      %p286 = pneg %p285
      // Predicated region
      $region56: #{_lambda_.14} parent=5 // pred_check
        _
      $region57: #{_lambda_.14} parent=5 // pred_check_branch
        %288 = sbr.rel (%p285) target = $region59
      $region58: #{_lambda_.14} parent=5 // pred_region
        %s289 = ssub.s32 %s13, 1
        %s290 = sand.u32 %s40, 1
        %s291 = sand.u32 %s40, 1
        %s292 = smul.addr %s291, 128
        %s293 = scalar_lea.vmem [#allocation2], %s292
        // Predicated region
        $region60: #{_lambda_.14} parent=58 // pred_check
          %p294 = pneg %p53
        $region61: #{_lambda_.14} parent=58 // pred_check_branch
          %296 = sbr.rel (%p294) target = $region63
        $region62: #{_lambda_.14} parent=58 // pred_region
          _
        $region63: #{_lambda_.14} parent=58 // pred_fallthru
          _
        %s297 = sand.u32 %s40, 1
        %s298 = sand.u32 %s40, 1
        %s299 = smul.addr %s298, 128
        %s300 = scalar_lea.vmem [#allocation2], %s299
        %p301 = pneg %p53
        %p302 = pneg %p50
        %p303 = pneg %p74
        %p304 = pneg %p71
        %p305 = pneg %p95
        %p306 = pneg %p92
        %p307 = pneg %p116
        %p308 = pneg %p113
        %p309 = pneg %p137
        %p310 = pneg %p134
        %p311 = pneg %p165
        %p312 = pneg %p162
        %s313 = smul.u32 4, %s23
        %p314 = scmp.lt.s32.totalorder %s22, 1
        %s315 = scalar_select %p314, %s22, 1
        %p316 = scmp.lt.s32.totalorder %s313, 7
        %s317 = scalar_select %p316, %s313, 7
        %s318 = smul.addr %s315, 8
        %s319 = sadd.s32 %s317, %s318
        %s320 = smul.addr %s319, 2
        %s321 = scalar_lea.vmem %s5, %s320
        %p322 = pneg %p193
        %p323 = pneg %p190
        %s324 = sand.u32 %s180, 1
        %s325 = sand.u32 %s180, 1
        %s326 = smul.addr %s325, 32
        %s327 = scalar_lea.vmem [#allocation3], %s326
        %s328 = smul.u32 4, %s23
        %s329 = smul.u32 4, %s23
        %p330 = scmp.lt.s32.totalorder %s22, 1
        %s331 = scalar_select %p330, %s22, 1
        %p332 = scmp.lt.s32.totalorder %s329, 7
        %s333 = scalar_select %p332, %s329, 7
        %s334 = smul.addr %s331, 8
        %s335 = sadd.s32 %s333, %s334
        %s336 = smul.addr %s335, 2
        %s337 = scalar_lea.vmem %s5, %s336
        %s338 = smul.u32 4, %s23
        %s339 = smul.u32 4, %s23
        %v341 = vld [vmem:[%s293] sm:$0xff]
        %v342 = vld [vmem:[%s293 + $0x8] sm:$0xff]
        %v343 = vld [vmem:[%s293 + $0x10] sm:$0xff]
        %v344 = vld [vmem:[%s293 + $0x18] sm:$0xff]
        %v345 = vld [vmem:[%s293 + $0x20] sm:$0xff]
        %v346 = vld [vmem:[%s293 + $0x28] sm:$0xff]
        %v347 = vld [vmem:[%s293 + $0x30] sm:$0xff]
        %v348 = vld [vmem:[%s293 + $0x38] sm:$0xff]
        %v349 = vld [vmem:[%s293 + $0x40] sm:$0xff]
        %v350 = vld [vmem:[%s293 + $0x48] sm:$0xff]
        %v351 = vld [vmem:[%s293 + $0x50] sm:$0xff]
        %v352 = vld [vmem:[%s293 + $0x58] sm:$0xff]
        %v353 = vld [vmem:[%s293 + $0x60] sm:$0xff]
        %v354 = vld [vmem:[%s293 + $0x68] sm:$0xff]
        %v355 = vld [vmem:[%s293 + $0x70] sm:$0xff]
        %v356 = vld [vmem:[%s293 + $0x78] sm:$0xff]
        %v357 = vmax.bf16 %v341, 0
        %v358 = vmax.bf16 %v342, 0
        %v359 = vmax.bf16 %v343, 0
        %v360 = vmax.bf16 %v344, 0
        %v361 = vmax.bf16 %v345, 0
        %v362 = vmax.bf16 %v346, 0
        %v363 = vmax.bf16 %v347, 0
        %v364 = vmax.bf16 %v348, 0
        %v365 = vmax.bf16 %v349, 0
        %v366 = vmax.bf16 %v350, 0
        %v367 = vmax.bf16 %v351, 0
        %v368 = vmax.bf16 %v352, 0
        %v369 = vmax.bf16 %v353, 0
        %v370 = vmax.bf16 %v354, 0
        %v371 = vmax.bf16 %v355, 0
        %v372 = vmax.bf16 %v356, 0
        %v373 = vld [vmem:[%s1] sm:$0x3]
        %v374 = vld [vmem:[%s2] sm:$0xf]
        %v375 = vld [vmem:[%s2 + $0x4] sm:$0xf]
        %v376 = vld [vmem:[%s3] sm:$0xf]
        %378 = vset.pattern.permute.xlu0 0
        %379 = vperm.xlu0 %378, %v376
        %v380 = vpop.permute.xlu0 %379
        %v398 = vunpack.c.l.b16 %v357
        %v399 = vunpack.c.h.b16 %v357
        %v400 = vunpack.c.l.b16 %v358
        %v401 = vunpack.c.h.b16 %v358
        %v402 = vunpack.c.l.b16 %v359
        %v403 = vunpack.c.h.b16 %v359
        %v404 = vunpack.c.l.b16 %v360
        %v405 = vunpack.c.h.b16 %v360
        %v406 = vunpack.c.l.b16 %v361
        %v407 = vunpack.c.h.b16 %v361
        %v408 = vunpack.c.l.b16 %v362
        %v409 = vunpack.c.h.b16 %v362
        %v410 = vunpack.c.l.b16 %v363
        %v411 = vunpack.c.h.b16 %v363
        %v412 = vunpack.c.l.b16 %v364
        %v413 = vunpack.c.h.b16 %v364
        %v414 = vunpack.c.l.b16 %v365
        %v415 = vunpack.c.h.b16 %v365
        %v416 = vunpack.c.l.b16 %v366
        %v417 = vunpack.c.h.b16 %v366
        %v418 = vunpack.c.l.b16 %v367
        %v419 = vunpack.c.h.b16 %v367
        %v420 = vunpack.c.l.b16 %v368
        %v421 = vunpack.c.h.b16 %v368
        %v422 = vunpack.c.l.b16 %v369
        %v423 = vunpack.c.h.b16 %v369
        %v424 = vunpack.c.l.b16 %v370
        %v425 = vunpack.c.h.b16 %v370
        %v426 = vunpack.c.l.b16 %v371
        %v427 = vunpack.c.h.b16 %v371
        %v428 = vunpack.c.l.b16 %v372
        %v429 = vunpack.c.h.b16 %v372
        %v430 = vpack.c.b16 %v402, %v398
        %v431 = vpack.c.b16 %v403, %v399
        %v432 = vpack.c.b16 %v404, %v400
        %v433 = vpack.c.b16 %v405, %v401
        %v434 = vpack.c.b16 %v410, %v406
        %v435 = vpack.c.b16 %v411, %v407
        %v436 = vpack.c.b16 %v412, %v408
        %v437 = vpack.c.b16 %v413, %v409
        %v438 = vpack.c.b16 %v418, %v414
        %v439 = vpack.c.b16 %v419, %v415
        %v440 = vpack.c.b16 %v420, %v416
        %v441 = vpack.c.b16 %v421, %v417
        %v442 = vpack.c.b16 %v426, %v422
        %v443 = vpack.c.b16 %v427, %v423
        %v444 = vpack.c.b16 %v428, %v424
        %v445 = vpack.c.b16 %v429, %v425
        %vm462 = vcmask 523264
        %v464 = vsel %vm462, %v373, 0
        %466 = vmatprep.subr.bf16.mxu0 %v431
        %467 = vmatpush1.bf16.msra.mxu0 %v430
        %468 = vmatprep.subr.bf16.mxu0 %v435
        %469 = vmatpush1.bf16.msra.mxu0 %v434
        %470 = vmatprep.subr.bf16.mxu0 %v439
        %471 = vmatpush1.bf16.msra.mxu0 %v438
        %472 = vmatprep.subr.bf16.mxu0 %v443
        %473 = vmatpush1.bf16.msra.mxu0 %v442
        %474 = vmatprep.subr.bf16.mxu0 0
        %475 = vmatpush1.bf16.msra.mxu0 0
        %476 = vmatprep.subr.bf16.mxu0 0
        %477 = vmatpush1.bf16.msra.mxu0 0
        %478 = vmatprep.subr.bf16.mxu0 0
        %479 = vmatpush1.bf16.msra.mxu0 0
        %480 = vmatprep.subr.bf16.mxu0 0
        %481 = vmatpush1.bf16.msra.mxu0 0
        %482 = vmatprep.subr.bf16.mxu0 0
        %483 = vmatpush1.bf16.msra.mxu0 0
        %484 = vmatprep.subr.bf16.mxu0 0
        %485 = vmatpush1.bf16.msra.mxu0 0
        %486 = vmatprep.subr.bf16.mxu0 0
        %487 = vmatpush1.bf16.msra.mxu0 0
        %488 = vmatprep.subr.bf16.mxu0 0
        %489 = vmatpush1.bf16.msra.mxu0 0
        %490 = vmatprep.subr.bf16.mxu0 0
        %491 = vmatpush1.bf16.msra.mxu0 0
        %492 = vmatprep.subr.bf16.mxu0 0
        %493 = vmatpush1.bf16.msra.mxu0 0
        %494 = vmatprep.subr.bf16.mxu0 0
        %495 = vmatpush1.bf16.msra.mxu0 0
        %496 = vmatprep.subr.bf16.mxu0 0
        %497 = vmatpush1.bf16.msra.mxu0 0
        %498 = vmatprep.mubr.bf16.mxu0 0
        %499 = vmatmul.mubr.bf16.gmra.mrb[0].mxu0 %v464
        %v500 = vpop.f32.mrb[0].mxu0
        %v501 = vadd.f32 %v380, %v500
        %v502 = vpop.f32.mrb[0].mxu0
        %v503 = vadd.f32 %v380, %v502
        %v504 = vpop.f32.mrb[0].mxu0
        %v505 = vpop.f32.mrb[0].mxu0
        %506 = vdwg.mxu0
        %507 = vmatprep.subr.bf16.mxu0 %v433
        %508 = vmatpush1.bf16.msra.mxu0 %v432
        %509 = vmatprep.subr.bf16.mxu0 %v437
        %510 = vmatpush1.bf16.msra.mxu0 %v436
        %511 = vmatprep.subr.bf16.mxu0 %v441
        %512 = vmatpush1.bf16.msra.mxu0 %v440
        %513 = vmatprep.subr.bf16.mxu0 %v445
        %514 = vmatpush1.bf16.msra.mxu0 %v444
        %515 = vmatprep.subr.bf16.mxu0 0
        %516 = vmatpush1.bf16.msra.mxu0 0
        %517 = vmatprep.subr.bf16.mxu0 0
        %518 = vmatpush1.bf16.msra.mxu0 0
        %519 = vmatprep.subr.bf16.mxu0 0
        %520 = vmatpush1.bf16.msra.mxu0 0
        %521 = vmatprep.subr.bf16.mxu0 0
        %522 = vmatpush1.bf16.msra.mxu0 0
        %523 = vmatprep.subr.bf16.mxu0 0
        %524 = vmatpush1.bf16.msra.mxu0 0
        %525 = vmatprep.subr.bf16.mxu0 0
        %526 = vmatpush1.bf16.msra.mxu0 0
        %527 = vmatprep.subr.bf16.mxu0 0
        %528 = vmatpush1.bf16.msra.mxu0 0
        %529 = vmatprep.subr.bf16.mxu0 0
        %530 = vmatpush1.bf16.msra.mxu0 0
        %531 = vmatprep.subr.bf16.mxu0 0
        %532 = vmatpush1.bf16.msra.mxu0 0
        %533 = vmatprep.subr.bf16.mxu0 0
        %534 = vmatpush1.bf16.msra.mxu0 0
        %535 = vmatprep.subr.bf16.mxu0 0
        %536 = vmatpush1.bf16.msra.mxu0 0
        %537 = vmatprep.subr.bf16.mxu0 0
        %538 = vmatpush1.bf16.msra.mxu0 0
        %539 = vmatprep.mubr.bf16.mxu0 0
        %540 = vmatmul.mubr.bf16.gmra.mrb[0].mxu0 %v464
        %v541 = vpop.f32.mrb[0].mxu0
        %v542 = vadd.f32 %v380, %v541
        %v543 = vpop.f32.mrb[0].mxu0
        %v544 = vadd.f32 %v380, %v543
        %v545 = vpop.f32.mrb[0].mxu0
        %v546 = vpop.f32.mrb[0].mxu0
        %547 = vdwg.mxu0
        %v548 = vld [vmem:[%s4] sm:$0xff]
        %v549 = vld [vmem:[%s4 + $0x8] sm:$0xff]
        %551 = vset.pattern.permute.xlu0 0
        %552 = vperm.xlu0 %551, %v548
        %v553 = vpop.permute.xlu0 %552
        %556 = vset.pattern.permute.xlu0 0
        %557 = vperm.xlu0 %556, %v549
        %v558 = vpop.permute.xlu0 %557
        %v562 = vunpack.c.l.b16 %v374
        %v563 = vunpack.c.l.b16 %v375
        %v564 = vpack.c.b16 %v563, %v562
        %v566 = vsel %vm462, %v564, 0
        %568 = vmatprep.subr.bf16.mxu0 %v431
        %569 = vmatpush1.bf16.msra.mxu0 %v430
        %570 = vmatprep.subr.bf16.mxu0 %v435
        %571 = vmatpush1.bf16.msra.mxu0 %v434
        %572 = vmatprep.subr.bf16.mxu0 %v439
        %573 = vmatpush1.bf16.msra.mxu0 %v438
        %574 = vmatprep.subr.bf16.mxu0 %v443
        %575 = vmatpush1.bf16.msra.mxu0 %v442
        %576 = vmatprep.subr.bf16.mxu0 0
        %577 = vmatpush1.bf16.msra.mxu0 0
        %578 = vmatprep.subr.bf16.mxu0 0
        %579 = vmatpush1.bf16.msra.mxu0 0
        %580 = vmatprep.subr.bf16.mxu0 0
        %581 = vmatpush1.bf16.msra.mxu0 0
        %582 = vmatprep.subr.bf16.mxu0 0
        %583 = vmatpush1.bf16.msra.mxu0 0
        %584 = vmatprep.subr.bf16.mxu0 0
        %585 = vmatpush1.bf16.msra.mxu0 0
        %586 = vmatprep.subr.bf16.mxu0 0
        %587 = vmatpush1.bf16.msra.mxu0 0
        %588 = vmatprep.subr.bf16.mxu0 0
        %589 = vmatpush1.bf16.msra.mxu0 0
        %590 = vmatprep.subr.bf16.mxu0 0
        %591 = vmatpush1.bf16.msra.mxu0 0
        %592 = vmatprep.subr.bf16.mxu0 0
        %593 = vmatpush1.bf16.msra.mxu0 0
        %594 = vmatprep.subr.bf16.mxu0 0
        %595 = vmatpush1.bf16.msra.mxu0 0
        %596 = vmatprep.subr.bf16.mxu0 0
        %597 = vmatpush1.bf16.msra.mxu0 0
        %598 = vmatprep.subr.bf16.mxu0 0
        %599 = vmatpush1.bf16.msra.mxu0 0
        %600 = vmatprep.mubr.bf16.mxu0 0
        %601 = vmatmul.mubr.bf16.gmra.mrb[0].mxu0 %v566
        %v602 = vpop.f32.mrb[0].mxu0
        %v603 = vadd.f32 %v553, %v602
        %v604 = vpop.f32.mrb[0].mxu0
        %v605 = vadd.f32 %v553, %v604
        %v606 = vpop.f32.mrb[0].mxu0
        %v607 = vadd.f32 %v558, %v606
        %v608 = vpop.f32.mrb[0].mxu0
        %v609 = vadd.f32 %v558, %v608
        %610 = vdwg.mxu0
        %611 = vmatprep.subr.bf16.mxu0 %v433
        %612 = vmatpush1.bf16.msra.mxu0 %v432
        %613 = vmatprep.subr.bf16.mxu0 %v437
        %614 = vmatpush1.bf16.msra.mxu0 %v436
        %615 = vmatprep.subr.bf16.mxu0 %v441
        %616 = vmatpush1.bf16.msra.mxu0 %v440
        %617 = vmatprep.subr.bf16.mxu0 %v445
        %618 = vmatpush1.bf16.msra.mxu0 %v444
        %619 = vmatprep.subr.bf16.mxu0 0
        %620 = vmatpush1.bf16.msra.mxu0 0
        %621 = vmatprep.subr.bf16.mxu0 0
        %622 = vmatpush1.bf16.msra.mxu0 0
        %623 = vmatprep.subr.bf16.mxu0 0
        %624 = vmatpush1.bf16.msra.mxu0 0
        %625 = vmatprep.subr.bf16.mxu0 0
        %626 = vmatpush1.bf16.msra.mxu0 0
        %627 = vmatprep.subr.bf16.mxu0 0
        %628 = vmatpush1.bf16.msra.mxu0 0
        %629 = vmatprep.subr.bf16.mxu0 0
        %630 = vmatpush1.bf16.msra.mxu0 0
        %631 = vmatprep.subr.bf16.mxu0 0
        %632 = vmatpush1.bf16.msra.mxu0 0
        %633 = vmatprep.subr.bf16.mxu0 0
        %634 = vmatpush1.bf16.msra.mxu0 0
        %635 = vmatprep.subr.bf16.mxu0 0
        %636 = vmatpush1.bf16.msra.mxu0 0
        %637 = vmatprep.subr.bf16.mxu0 0
        %638 = vmatpush1.bf16.msra.mxu0 0
        %639 = vmatprep.subr.bf16.mxu0 0
        %640 = vmatpush1.bf16.msra.mxu0 0
        %641 = vmatprep.subr.bf16.mxu0 0
        %642 = vmatpush1.bf16.msra.mxu0 0
        %643 = vmatprep.mubr.bf16.mxu0 0
        %644 = vmatmul.mubr.bf16.gmra.mrb[0].mxu0 %v566
        %v645 = vpop.f32.mrb[0].mxu0
        %v646 = vadd.f32 %v553, %v645
        %v647 = vpop.f32.mrb[0].mxu0
        %v648 = vadd.f32 %v553, %v647
        %v649 = vpop.f32.mrb[0].mxu0
        %v650 = vadd.f32 %v558, %v649
        %v651 = vpop.f32.mrb[0].mxu0
        %v652 = vadd.f32 %v558, %v651
        %653 = vdwg.mxu0
        %v654 = vpack.c.bf16 %v501, %v501
        %v655 = vpack.c.bf16 %v503, %v503
        %v656 = vpack.c.bf16 %v542, %v542
        %v657 = vpack.c.bf16 %v544, %v544
        %v662 = vcombine.low %v654, %v655
        %v663 = vcombine.low %v656, %v657
        %v665 = vunpack.c.l.s4 1983009808
        %v666 = vunpack.c.0.s8 %v665
        %v667 = vlaneseq
        %v668 = vshrl.u32 %v667, 7
        %v669 = vsub.s32 %v666, %v668
        %v670 = vrot.slane %v662, %v669
        %v672 = vunpack.c.l.s4 1983009808
        %v673 = vunpack.c.0.s8 %v672
        %v674 = vlaneseq
        %v675 = vshrl.u32 %v674, 7
        %v676 = vsub.s32 %v673, %v675
        %v677 = vrot.slane %v663, %v676
        %v678 = vcombine.low %v670, %v677
        %680 = vst [vmem:[%s337] sm:$0xff] %v678
        %v681 = vpack.c.bf16 %v607, %v603
        %v682 = vpack.c.bf16 %v609, %v605
        %v683 = vpack.c.bf16 %v650, %v646
        %v684 = vpack.c.bf16 %v652, %v648
        %v689 = vunpack.c.l.b16 %v681
        %v690 = vunpack.c.l.b16 %v682
        %v691 = vunpack.c.l.b16 %v683
        %v692 = vunpack.c.l.b16 %v684
        %v693 = vunpack.c.h.b16 %v681
        %v694 = vunpack.c.h.b16 %v682
        %v695 = vunpack.c.h.b16 %v683
        %v696 = vunpack.c.h.b16 %v684
        %v697 = vpack.c.b16 %v690, %v689
        %v698 = vpack.c.b16 %v692, %v691
        %v699 = vpack.c.b16 %v694, %v693
        %v700 = vpack.c.b16 %v696, %v695
        %705 = vst [vmem:[%s327] sm:$0xff] %v697
        %706 = vst [vmem:[%s327 + $0x8] sm:$0xff] %v698
        %707 = vst [vmem:[%s327 + $0x10] sm:$0xff] %v699
        %708 = vst [vmem:[%s327 + $0x18] sm:$0xff] %v700
        %s709 = smul.u32 4, %s23
        %p710 = scmp.lt.s32.totalorder %s22, 1
        %s711 = scalar_select %p710, %s22, 1
        %p712 = scmp.lt.s32.totalorder %s709, 7
        %s713 = scalar_select %p712, %s709, 7
        %s714 = smul.addr %s711, 8
        %s715 = sadd.s32 %s713, %s714
        %s716 = smul.addr %s715, 2
        %s717 = scalar_lea.vmem %s5, %s716
        %s718 = sand.u32 %s180, 1
        %s719 = sand.u32 %s180, 1
        %s720 = smul.addr %s719, 32
        %s721 = scalar_lea.vmem [#allocation3], %s720
        // Predicated region
        $region64: #{_lambda_.14} parent=58 // pred_check
          %p722 = pneg %p162
        $region65: #{_lambda_.14} parent=58 // pred_check_branch
          %724 = sbr.rel (%p722) target = $region67
        $region66: #{_lambda_.14} parent=58 // pred_region
          %s725 = smul.u32 4, %s23
        $region67: #{_lambda_.14} parent=58 // pred_fallthru
          _
        // Predicated region
        $region68: #{_lambda_.14} parent=58 // pred_check
          %p726 = pneg %p190
        $region69: #{_lambda_.14} parent=58 // pred_check_branch
          %728 = sbr.rel (%p726) target = $region71
        $region70: #{_lambda_.14} parent=58 // pred_region
          %s729 = smul.u32 4, %s23
          %s730 = smul.addr %s22, 16
          %s731 = sadd.s32 %s729, %s730
          %s732 = smul.addr %s731, 4
          %s733 = scalar_lea.vmem %s6, %s732
          // Predicated region
          $region72: #{_lambda_.14} parent=70 // pred_check
            _
          $region73: #{_lambda_.14} parent=70 // pred_check_branch
            %735 = sbr.rel (0) target = $region75
          $region74: #{_lambda_.14} parent=70 // pred_region
            // Predicated region
            $region76: #{_lambda_.14} parent=74 // pred_check
              _
            $region77: #{_lambda_.14} parent=74 // pred_check_branch
              %737 = sbr.rel (0) target = $region79
            $region78: #{_lambda_.14} parent=74 // pred_region
              loop: start=0, step=1, limit=1
              $region80: #{_lambda_.14} parent=78 // loop_pre_header
                _
              $region81: #{_lambda_.14} parent=78 // loop_header
                %s739 = sphi 0, %s743
                %p740 = scmp.ge.s32.totalorder %s739, 1
                %s744 = sphi %s721, %s721
                %s745 = sphi %s733, %s733
              $region82: #{_lambda_.14} parent=78 // loop_header_branch
                %742 = sbr.rel (%p740) target = $region86
              $region83: #{_lambda_.14} parent=78 // loop_body
                %v746 = vld [vmem:[%s744] sm:$0xff]
                %747 = vst [vmem:[%s745] sm:$0xff] %v746
                %v748 = vld [vmem:[%s744 + $0x8] sm:$0xff]
                %749 = vst [vmem:[%s745 + $0x8] sm:$0xff] %v748
                %v750 = vld [vmem:[%s744 + $0x10] sm:$0xff]
                %751 = vst [vmem:[%s745 + $0x20] sm:$0xff] %v750
                %v752 = vld [vmem:[%s744 + $0x18] sm:$0xff]
                %753 = vst [vmem:[%s745 + $0x28] sm:$0xff] %v752
              $region84: #{_lambda_.14} parent=78 // loop_footer
                %s743 = sadd.s32 1, %s739
              $region85: #{_lambda_.14} parent=78 // loop_footer_branch
                %738 = sbr.rel target = $region81
              $region86: #{_lambda_.14} parent=78 // loop_exit
                _
            $region79: #{_lambda_.14} parent=74 // pred_fallthru
              _
            // Predicated region
            $region87: #{_lambda_.14} parent=74 // pred_check
              _
            $region88: #{_lambda_.14} parent=74 // pred_check_branch
              %755 = sbr.rel target = $region90
            $region89: #{_lambda_.14} parent=74 // pred_region
              _
            $region90: #{_lambda_.14} parent=74 // pred_fallthru
              _
          $region75: #{_lambda_.14} parent=70 // pred_fallthru
            _
          %756 = vnop
        $region71: #{_lambda_.14} parent=58 // pred_fallthru
          _
      $region59: #{_lambda_.14} parent=5 // pred_fallthru
        _
      %p757 = scmp.le.s32.totalorder 2, %s13
      // Predicated region
      $region91: #{_lambda_.14} parent=5 // pred_check
        %p758 = pneg %p757
      $region92: #{_lambda_.14} parent=5 // pred_check_branch
        %760 = sbr.rel (%p758) target = $region94
      $region93: #{_lambda_.14} parent=5 // pred_region
        %s761 = ssub.s32 %s13, 2
        // Predicated region
        $region95: #{_lambda_.14} parent=93 // pred_check
          %p762 = pneg %p168
        $region96: #{_lambda_.14} parent=93 // pred_check_branch
          %764 = sbr.rel (%p762) target = $region98
        $region97: #{_lambda_.14} parent=93 // pred_region
          %s765 = smul.u32 4, %s25
          %p766 = scmp.lt.s32.totalorder %s24, 1
          %s767 = scalar_select %p766, %s24, 1
          %p768 = scmp.lt.s32.totalorder %s765, 7
          %s769 = scalar_select %p768, %s765, 7
          %s770 = smul.addr %s767, 8
          %s771 = sadd.s32 %s769, %s770
          %s772 = smul.addr %s771, 2
          %s773 = scalar_lea.vmem %s5, %s772
        $region98: #{_lambda_.14} parent=93 // pred_fallthru
          _
        // Predicated region
        $region99: #{_lambda_.14} parent=93 // pred_check
          %p774 = pneg %p196
        $region100: #{_lambda_.14} parent=93 // pred_check_branch
          %776 = sbr.rel (%p774) target = $region102
        $region101: #{_lambda_.14} parent=93 // pred_region
          %s777 = sand.u32 %s181, 1
          %s778 = sand.u32 %s181, 1
          %s779 = smul.addr %s778, 32
          %s780 = scalar_lea.vmem [#allocation3], %s779
        $region102: #{_lambda_.14} parent=93 // pred_fallthru
          _
      $region94: #{_lambda_.14} parent=5 // pred_fallthru
        _
    $region6: #{_lambda_.14} parent=1 // loop_footer
      %s17 = sadd.s32 1, %s13
    $region7: #{_lambda_.14} parent=1 // loop_footer_branch
      %12 = sbr.rel target = $region3
    $region8: #{_lambda_.14} parent=1 // loop_exit
      _

// kernel: _lambda_.13
$region0: #{_lambda_.13}
  #allocation0 [shape = 'u32[]', space=smem, size = 0x4, offset = 0x4, fixed_abs, tag = 'smem constant byte address 0x4 - core index']
  #allocation1 [shape = 'u32[144,128]{1,0:T(1,128)}', space=vmem, size = 0x12000, scoped, tag = 'internal scratch']
  %s0 = inlined_call_operand.vmem [shape: bf16[2,64,256], index: 0, kind: input, shape index: {}]
  %s1 = inlined_call_operand.vmem [shape: bf16[4,64], index: 1, kind: input, shape index: {}]
  %s2 = inlined_call_operand.vmem [shape: f32[4,1], index: 2, kind: input, shape index: {}]
  %s3 = inlined_call_operand.vmem [shape: bf16[2,4,256], index: 3, kind: output, shape index: {}]
  %s4 = sld [smem:[#allocation0]]
  $region45: #{_lambda_.13} parent=0
    _
  %s6 = ssub.s32 1, %s4
  %s7 = scalar_select 0, %s6, %s4
  loop: start=0, step=1, limit=4
  $region2: #{_lambda_.13} parent=0 // loop_pre_header
    _
  $region3: #{_lambda_.13} parent=0 // loop_header
    %s9 = sphi 0, %s13
    %p10 = scmp.ge.s32.totalorder %s9, 4
    %s16 = sphi 0, %s28
    %s17 = sphi 0, %s24
    %s18 = sphi 0, %s16
    %s19 = sphi 0, %s17
    %s20 = sphi 0, %s18
    %s21 = sphi 0, %s19
    %s33 = sphi 0, %s35
    %s36 = sphi 0, %s33
    %s37 = sphi 0, %s36
    %s53 = sphi 0, %s37
    %s57 = sphi 0, %s57
    %s59 = sphi 0, %s57
    %s60 = sphi 0, %s59
    %s74 = sphi 0, %s60
    %s78 = sphi 0, %s78
    %s80 = sphi 0, %s78
    %s81 = sphi 0, %s80
    %s95 = sphi 0, %s81
    %s103 = sphi 0, %s105
    %s106 = sphi 0, %s103
    %s107 = sphi 0, %s106
    %s123 = sphi 0, %s107
  $region4: #{_lambda_.13} parent=0 // loop_header_branch
    %12 = sbr.rel (%p10) target = $region8
  $region5: #{_lambda_.13} parent=0 // loop_body
    %s14 = ssub.s32 %s9, 1
    %s15 = ssub.s32 %s9, 2
    %s22 = sadd.s32 1, %s17
    %p23 = scmp.ge.s32.totalorder %s22, 1
    %s24 = scalar_select %p23, 0, %s22
    %s25 = sadd.s32 1, %s16
    %s26 = scalar_select %p23, %s25, %s16
    %p27 = scmp.ge.s32.totalorder %s26, 2
    %s28 = scalar_select %p27, 0, %s26
    %s29 = ssub.s32 %s16, %s28
    %s30 = ssub.s32 %s17, %s24
    %s31 = sor.u32 %s29, %s30
    %p32 = scmp.eq.s32.totalorder %s31, 0
    %s34 = sadd.s32 %s33, 1
    %s35 = scalar_select %p32, %s33, %s34
    %p38 = pneg %p32
    %p39 = scmp.eq.s32.totalorder %s9, 1
    %p40 = por %p38, %p39
    %p41 = scmp.ne.s32.totalorder %s33, %s36
    %p42 = scmp.eq.s32.totalorder %s9, 0
    %p43 = por %p41, %p42
    %p44 = scmp.ne.s32.totalorder %s33, %s36
    %p45 = scmp.eq.s32.totalorder %s14, 1
    %p46 = por %p44, %p45
    %p47 = scmp.ne.s32.totalorder %s36, %s37
    %p48 = scmp.eq.s32.totalorder %s14, 0
    %p49 = por %p47, %p48
    %p50 = scmp.ne.s32.totalorder %s36, %s37
    %p51 = scmp.eq.s32.totalorder %s15, 1
    %p52 = por %p50, %p51
    %p54 = scmp.ne.s32.totalorder %s37, %s53
    %p55 = scmp.eq.s32.totalorder %s15, 0
    %p56 = por %p54, %p55
    %s58 = sadd.s32 %s57, 1
    %p61 = scmp.eq.s32.totalorder %s9, 1
    %p62 = scmp.ne.s32.totalorder %s57, %s59
    %p63 = scmp.eq.s32.totalorder %s9, 0
    %p64 = por %p62, %p63
    %p65 = scmp.ne.s32.totalorder %s57, %s59
    %p66 = scmp.eq.s32.totalorder %s14, 1
    %p67 = por %p65, %p66
    %p68 = scmp.ne.s32.totalorder %s59, %s60
    %p69 = scmp.eq.s32.totalorder %s14, 0
    %p70 = por %p68, %p69
    %p71 = scmp.ne.s32.totalorder %s59, %s60
    %p72 = scmp.eq.s32.totalorder %s15, 1
    %p73 = por %p71, %p72
    %p75 = scmp.ne.s32.totalorder %s60, %s74
    %p76 = scmp.eq.s32.totalorder %s15, 0
    %p77 = por %p75, %p76
    %s79 = sadd.s32 %s78, 1
    %p82 = scmp.eq.s32.totalorder %s9, 1
    %p83 = scmp.ne.s32.totalorder %s78, %s80
    %p84 = scmp.eq.s32.totalorder %s9, 0
    %p85 = por %p83, %p84
    %p86 = scmp.ne.s32.totalorder %s78, %s80
    %p87 = scmp.eq.s32.totalorder %s14, 1
    %p88 = por %p86, %p87
    %p89 = scmp.ne.s32.totalorder %s80, %s81
    %p90 = scmp.eq.s32.totalorder %s14, 0
    %p91 = por %p89, %p90
    %p92 = scmp.ne.s32.totalorder %s80, %s81
    %p93 = scmp.eq.s32.totalorder %s15, 1
    %p94 = por %p92, %p93
    %p96 = scmp.ne.s32.totalorder %s81, %s95
    %p97 = scmp.eq.s32.totalorder %s15, 0
    %p98 = por %p96, %p97
    %s99 = ssub.s32 %s16, %s28
    %s100 = ssub.s32 %s17, %s24
    %s101 = sor.u32 %s99, %s100
    %p102 = scmp.eq.s32.totalorder %s101, 0
    %s104 = sadd.s32 %s103, 1
    %s105 = scalar_select %p102, %s103, %s104
    %p108 = pneg %p102
    %p109 = scmp.eq.s32.totalorder %s9, 1
    %p110 = por %p108, %p109
    %p111 = scmp.ne.s32.totalorder %s103, %s106
    %p112 = scmp.eq.s32.totalorder %s9, 0
    %p113 = por %p111, %p112
    %p114 = scmp.ne.s32.totalorder %s103, %s106
    %p115 = scmp.eq.s32.totalorder %s14, 1
    %p116 = por %p114, %p115
    %p117 = scmp.ne.s32.totalorder %s106, %s107
    %p118 = scmp.eq.s32.totalorder %s14, 0
    %p119 = por %p117, %p118
    %p120 = scmp.ne.s32.totalorder %s106, %s107
    %p121 = scmp.eq.s32.totalorder %s15, 1
    %p122 = por %p120, %p121
    %p124 = scmp.ne.s32.totalorder %s107, %s123
    %p125 = scmp.eq.s32.totalorder %s15, 0
    %p126 = por %p124, %p125
    %p127 = scmp.le.s32.totalorder 1, %s9
    %p128 = scmp.lt.s32.totalorder %s9, 3
    %p129 = pnand %p127, %p128
    %p130 = pneg %p129
    // Predicated region
    $region9: #{_lambda_.13} parent=5 // pred_check
      _
    $region10: #{_lambda_.13} parent=5 // pred_check_branch
      %132 = sbr.rel (%p129) target = $region12
    $region11: #{_lambda_.13} parent=5 // pred_region
      %s133 = ssub.s32 %s9, 1
      // Predicated region
      $region13: #{_lambda_.13} parent=11 // pred_check
        %p134 = pneg %p70
      $region14: #{_lambda_.13} parent=11 // pred_check_branch
        %136 = sbr.rel (%p134) target = $region16
      $region15: #{_lambda_.13} parent=11 // pred_region
        _
      $region16: #{_lambda_.13} parent=11 // pred_fallthru
        _
      // Predicated region
      $region17: #{_lambda_.13} parent=11 // pred_check
        %p137 = pneg %p91
      $region18: #{_lambda_.13} parent=11 // pred_check_branch
        %139 = sbr.rel (%p137) target = $region20
      $region19: #{_lambda_.13} parent=11 // pred_region
        _
      $region20: #{_lambda_.13} parent=11 // pred_fallthru
        _
    $region12: #{_lambda_.13} parent=5 // pred_fallthru
      _
    %p140 = scmp.lt.s32.totalorder %s9, 2
    // Predicated region
    $region21: #{_lambda_.13} parent=5 // pred_check
      %p141 = pneg %p140
    $region22: #{_lambda_.13} parent=5 // pred_check_branch
      %143 = sbr.rel (%p141) target = $region24
    $region23: #{_lambda_.13} parent=5 // pred_region
      // Predicated region
      $region25: #{_lambda_.13} parent=23 // pred_check
        %p144 = pneg %p43
      $region26: #{_lambda_.13} parent=23 // pred_check_branch
        %146 = sbr.rel (%p144) target = $region28
      $region27: #{_lambda_.13} parent=23 // pred_region
        %s147 = smul.u32 2, %s17
        %p148 = scmp.lt.s32.totalorder %s16, 1
        %s149 = scalar_select %p148, %s16, 1
        %p150 = scmp.lt.s32.totalorder %s147, 1
        %s151 = scalar_select %p150, %s147, 1
        %s152 = smul.addr %s149, 16
        %s153 = sadd.s32 %s151, %s152
        %s154 = smul.addr %s153, 4
        %s155 = scalar_lea.vmem %s0, %s154
        %s156 = smul.u32 2, %s17
      $region28: #{_lambda_.13} parent=23 // pred_fallthru
        _
    $region24: #{_lambda_.13} parent=5 // pred_fallthru
      _
    %p157 = scmp.le.s32.totalorder 1, %s9
    %p158 = scmp.lt.s32.totalorder %s9, 3
    %p159 = pnand %p157, %p158
    %p160 = pneg %p159
    // Predicated region
    $region29: #{_lambda_.13} parent=5 // pred_check
      _
    $region30: #{_lambda_.13} parent=5 // pred_check_branch
      %162 = sbr.rel (%p159) target = $region32
    $region31: #{_lambda_.13} parent=5 // pred_region
      %s163 = ssub.s32 %s9, 1
      %s164 = smul.u32 2, %s19
      %p165 = scmp.lt.s32.totalorder %s18, 1
      %s166 = scalar_select %p165, %s18, 1
      %p167 = scmp.lt.s32.totalorder %s164, 1
      %s168 = scalar_select %p167, %s164, 1
      %s169 = smul.addr %s166, 16
      %s170 = sadd.s32 %s168, %s169
      %s171 = smul.addr %s170, 4
      %s172 = scalar_lea.vmem %s0, %s171
      %p173 = pneg %p49
      %p174 = pneg %p46
      %p175 = pneg %p70
      %p176 = pneg %p67
      %p177 = pneg %p91
      %p178 = pneg %p88
      %p179 = pneg %p119
      %p180 = pneg %p116
      %s181 = smul.u32 2, %s19
      %p182 = scmp.lt.s32.totalorder %s18, 1
      %s183 = scalar_select %p182, %s18, 1
      %p184 = scmp.lt.s32.totalorder %s181, 1
      %s185 = scalar_select %p184, %s181, 1
      %s186 = smul.addr %s183, 2
      %s187 = sadd.s32 %s185, %s186
      %s188 = smul.addr %s187, 2
      %s189 = scalar_lea.vmem %s3, %s188
      %s190 = smul.u32 2, %s19
      %p191 = scmp.lt.s32.totalorder %s18, 1
      %s192 = scalar_select %p191, %s18, 1
      %p193 = scmp.lt.s32.totalorder %s190, 1
      %s194 = scalar_select %p193, %s190, 1
      %s195 = smul.addr %s192, 16
      %s196 = sadd.s32 %s194, %s195
      %s197 = smul.addr %s196, 4
      %s198 = scalar_lea.vmem %s0, %s197
      %s199 = smul.u32 2, %s19
      %s200 = smul.u32 2, %s19
      %p201 = scmp.lt.s32.totalorder %s18, 1
      %s202 = scalar_select %p201, %s18, 1
      %p203 = scmp.lt.s32.totalorder %s200, 1
      %s204 = scalar_select %p203, %s200, 1
      %s205 = smul.addr %s202, 2
      %s206 = sadd.s32 %s204, %s205
      %s207 = smul.addr %s206, 2
      %s208 = scalar_lea.vmem %s3, %s207
      %s209 = smul.u32 2, %s19
      %v211 = vld [vmem:[%s198] sm:$0xff]
      %v212 = vld [vmem:[%s198 + $0x8] sm:$0xff]
      %v213 = vld [vmem:[%s198 + $0x10] sm:$0xff]
      %v214 = vld [vmem:[%s198 + $0x18] sm:$0xff]
      %v215 = vld [vmem:[%s198 + $0x20] sm:$0xff]
      %v216 = vld [vmem:[%s198 + $0x28] sm:$0xff]
      %v217 = vld [vmem:[%s198 + $0x30] sm:$0xff]
      %v218 = vld [vmem:[%s198 + $0x38] sm:$0xff]
      %v219 = vmax.bf16 %v211, 0
      %v220 = vmax.bf16 %v212, 0
      %v221 = vmax.bf16 %v213, 0
      %v222 = vmax.bf16 %v214, 0
      %v223 = vmax.bf16 %v215, 0
      %v224 = vmax.bf16 %v216, 0
      %v225 = vmax.bf16 %v217, 0
      %v226 = vmax.bf16 %v218, 0
      %v227 = vld [vmem:[%s1] sm:$0x3]
      %v228 = vld [vmem:[%s2] sm:$0xf]
      %230 = vset.pattern.permute.xlu0 0
      %231 = vperm.xlu0 %230, %v228
      %v232 = vpop.permute.xlu0 %231
      %v242 = vunpack.c.l.b16 %v219
      %v243 = vunpack.c.h.b16 %v219
      %v244 = vunpack.c.l.b16 %v220
      %v245 = vunpack.c.h.b16 %v220
      %v246 = vunpack.c.l.b16 %v221
      %v247 = vunpack.c.h.b16 %v221
      %v248 = vunpack.c.l.b16 %v222
      %v249 = vunpack.c.h.b16 %v222
      %v250 = vunpack.c.l.b16 %v223
      %v251 = vunpack.c.h.b16 %v223
      %v252 = vunpack.c.l.b16 %v224
      %v253 = vunpack.c.h.b16 %v224
      %v254 = vunpack.c.l.b16 %v225
      %v255 = vunpack.c.h.b16 %v225
      %v256 = vunpack.c.l.b16 %v226
      %v257 = vunpack.c.h.b16 %v226
      %v258 = vpack.c.b16 %v244, %v242
      %v259 = vpack.c.b16 %v245, %v243
      %v260 = vpack.c.b16 %v248, %v246
      %v261 = vpack.c.b16 %v249, %v247
      %v262 = vpack.c.b16 %v252, %v250
      %v263 = vpack.c.b16 %v253, %v251
      %v264 = vpack.c.b16 %v256, %v254
      %v265 = vpack.c.b16 %v257, %v255
      %vm274 = vcmask 523264
      %v276 = vsel %vm274, %v227, 0
      %278 = vmatprep.subr.bf16.mxu0 %v259
      %279 = vmatpush1.bf16.msra.mxu0 %v258
      %280 = vmatprep.subr.bf16.mxu0 %v261
      %281 = vmatpush1.bf16.msra.mxu0 %v260
      %282 = vmatprep.subr.bf16.mxu0 %v263
      %283 = vmatpush1.bf16.msra.mxu0 %v262
      %284 = vmatprep.subr.bf16.mxu0 %v265
      %285 = vmatpush1.bf16.msra.mxu0 %v264
      %286 = vmatprep.subr.bf16.mxu0 0
      %287 = vmatpush1.bf16.msra.mxu0 0
      %288 = vmatprep.subr.bf16.mxu0 0
      %289 = vmatpush1.bf16.msra.mxu0 0
      %290 = vmatprep.subr.bf16.mxu0 0
      %291 = vmatpush1.bf16.msra.mxu0 0
      %292 = vmatprep.subr.bf16.mxu0 0
      %293 = vmatpush1.bf16.msra.mxu0 0
      %294 = vmatprep.subr.bf16.mxu0 0
      %295 = vmatpush1.bf16.msra.mxu0 0
      %296 = vmatprep.subr.bf16.mxu0 0
      %297 = vmatpush1.bf16.msra.mxu0 0
      %298 = vmatprep.subr.bf16.mxu0 0
      %299 = vmatpush1.bf16.msra.mxu0 0
      %300 = vmatprep.subr.bf16.mxu0 0
      %301 = vmatpush1.bf16.msra.mxu0 0
      %302 = vmatprep.subr.bf16.mxu0 0
      %303 = vmatpush1.bf16.msra.mxu0 0
      %304 = vmatprep.subr.bf16.mxu0 0
      %305 = vmatpush1.bf16.msra.mxu0 0
      %306 = vmatprep.subr.bf16.mxu0 0
      %307 = vmatpush1.bf16.msra.mxu0 0
      %308 = vmatprep.subr.bf16.mxu0 0
      %309 = vmatpush1.bf16.msra.mxu0 0
      %310 = vmatprep.mubr.bf16.mxu0 0
      %311 = vmatmul.mubr.bf16.gmra.mrb[0].mxu0 %v276
      %v312 = vpop.f32.mrb[0].mxu0
      %v313 = vadd.f32 %v232, %v312
      %v314 = vpop.f32.mrb[0].mxu0
      %v315 = vadd.f32 %v232, %v314
      %v316 = vpop.f32.mrb[0].mxu0
      %v317 = vpop.f32.mrb[0].mxu0
      %318 = vdwg.mxu0
      %v319 = vpack.c.bf16 %v313, %v313
      %v320 = vpack.c.bf16 %v315, %v315
      %v323 = vcombine.low %v319, %v320
      %v325 = vunpack.c.l.s4 1983009808
      %v326 = vunpack.c.0.s8 %v325
      %v327 = vlaneseq
      %v328 = vshrl.u32 %v327, 7
      %v329 = vsub.s32 %v326, %v328
      %v330 = vrot.slane %v323, %v329
      %332 = vst [vmem:[%s208] sm:$0xf] %v330
      %s333 = smul.u32 2, %s19
      %p334 = scmp.lt.s32.totalorder %s18, 1
      %s335 = scalar_select %p334, %s18, 1
      %p336 = scmp.lt.s32.totalorder %s333, 1
      %s337 = scalar_select %p336, %s333, 1
      %s338 = smul.addr %s335, 2
      %s339 = sadd.s32 %s337, %s338
      %s340 = smul.addr %s339, 2
      %s341 = scalar_lea.vmem %s3, %s340
      // Predicated region
      $region33: #{_lambda_.13} parent=31 // pred_check
        %p342 = pneg %p116
      $region34: #{_lambda_.13} parent=31 // pred_check_branch
        %344 = sbr.rel (%p342) target = $region36
      $region35: #{_lambda_.13} parent=31 // pred_region
        %s345 = smul.u32 2, %s19
      $region36: #{_lambda_.13} parent=31 // pred_fallthru
        _
    $region32: #{_lambda_.13} parent=5 // pred_fallthru
      _
    %p346 = scmp.le.s32.totalorder 2, %s9
    // Predicated region
    $region37: #{_lambda_.13} parent=5 // pred_check
      %p347 = pneg %p346
    $region38: #{_lambda_.13} parent=5 // pred_check_branch
      %349 = sbr.rel (%p347) target = $region40
    $region39: #{_lambda_.13} parent=5 // pred_region
      %s350 = ssub.s32 %s9, 2
      // Predicated region
      $region41: #{_lambda_.13} parent=39 // pred_check
        %p351 = pneg %p122
      $region42: #{_lambda_.13} parent=39 // pred_check_branch
        %353 = sbr.rel (%p351) target = $region44
      $region43: #{_lambda_.13} parent=39 // pred_region
        %s354 = smul.u32 2, %s21
        %p355 = scmp.lt.s32.totalorder %s20, 1
        %s356 = scalar_select %p355, %s20, 1
        %p357 = scmp.lt.s32.totalorder %s354, 1
        %s358 = scalar_select %p357, %s354, 1
        %s359 = smul.addr %s356, 2
        %s360 = sadd.s32 %s358, %s359
        %s361 = smul.addr %s360, 2
        %s362 = scalar_lea.vmem %s3, %s361
      $region44: #{_lambda_.13} parent=39 // pred_fallthru
        _
    $region40: #{_lambda_.13} parent=5 // pred_fallthru
      _
  $region6: #{_lambda_.13} parent=0 // loop_footer
    %s13 = sadd.s32 1, %s9
  $region7: #{_lambda_.13} parent=0 // loop_footer_branch
    %8 = sbr.rel target = $region3
  $region8: #{_lambda_.13} parent=0 // loop_exit
    _

// kernel: _lambda_.15
$region0: #{_lambda_.15}
  #allocation0 [shape = 'u32[]', space=smem, size = 0x4, offset = 0x4, fixed_abs, tag = 'smem constant byte address 0x4 - core index']
  #allocation1 [shape = 'u32[144,128]{1,0:T(1,128)}', space=vmem, size = 0x12000, scoped, tag = 'internal scratch']
  %s0 = inlined_call_operand.vmem [shape: bf16[2,4,256], index: 0, kind: input, shape index: {}]
  %s1 = inlined_call_operand.vmem [shape: bf16[2,16,256], index: 1, kind: input, shape index: {}]
  %s2 = inlined_call_operand.vmem [shape: bf16[2,4], index: 2, kind: input, shape index: {}]
  %s3 = inlined_call_operand.vmem [shape: bf16[2,16], index: 3, kind: input, shape index: {}]
  %s4 = inlined_call_operand.vmem [shape: bf16[8,2], index: 4, kind: input, shape index: {}]
  %s5 = inlined_call_operand.vmem [shape: f32[8,1], index: 5, kind: input, shape index: {}]
  %s6 = inlined_call_operand.vmem [shape: bf16[2,8,256], index: 6, kind: output, shape index: {}]
  %s7 = sld [smem:[#allocation0]]
  $region57: #{_lambda_.15} parent=0
    _
  %s9 = ssub.s32 1, %s7
  %s10 = scalar_select 0, %s9, %s7
  loop: start=0, step=1, limit=4
  $region2: #{_lambda_.15} parent=0 // loop_pre_header
    _
  $region3: #{_lambda_.15} parent=0 // loop_header
    %s12 = sphi 0, %s16
    %p13 = scmp.ge.s32.totalorder %s12, 4
    %s19 = sphi 0, %s31
    %s20 = sphi 0, %s27
    %s21 = sphi 0, %s19
    %s22 = sphi 0, %s20
    %s23 = sphi 0, %s21
    %s24 = sphi 0, %s22
    %s36 = sphi 0, %s38
    %s39 = sphi 0, %s36
    %s40 = sphi 0, %s39
    %s56 = sphi 0, %s40
    %s64 = sphi 0, %s66
    %s67 = sphi 0, %s64
    %s68 = sphi 0, %s67
    %s84 = sphi 0, %s68
    %s88 = sphi 0, %s88
    %s90 = sphi 0, %s88
    %s91 = sphi 0, %s90
    %s105 = sphi 0, %s91
    %s109 = sphi 0, %s109
    %s111 = sphi 0, %s109
    %s112 = sphi 0, %s111
    %s126 = sphi 0, %s112
    %s130 = sphi 0, %s130
    %s132 = sphi 0, %s130
    %s133 = sphi 0, %s132
    %s147 = sphi 0, %s133
    %s151 = sphi 0, %s151
    %s153 = sphi 0, %s151
    %s154 = sphi 0, %s153
    %s168 = sphi 0, %s154
    %s176 = sphi 0, %s178
    %s179 = sphi 0, %s176
    %s180 = sphi 0, %s179
    %s196 = sphi 0, %s180
  $region4: #{_lambda_.15} parent=0 // loop_header_branch
    %15 = sbr.rel (%p13) target = $region8
  $region5: #{_lambda_.15} parent=0 // loop_body
    %s17 = ssub.s32 %s12, 1
    %s18 = ssub.s32 %s12, 2
    %s25 = sadd.s32 1, %s20
    %p26 = scmp.ge.s32.totalorder %s25, 1
    %s27 = scalar_select %p26, 0, %s25
    %s28 = sadd.s32 1, %s19
    %s29 = scalar_select %p26, %s28, %s19
    %p30 = scmp.ge.s32.totalorder %s29, 2
    %s31 = scalar_select %p30, 0, %s29
    %s32 = ssub.s32 %s19, %s31
    %s33 = ssub.s32 %s20, %s27
    %s34 = sor.u32 %s32, %s33
    %p35 = scmp.eq.s32.totalorder %s34, 0
    %s37 = sadd.s32 %s36, 1
    %s38 = scalar_select %p35, %s36, %s37
    %p41 = pneg %p35
    %p42 = scmp.eq.s32.totalorder %s12, 1
    %p43 = por %p41, %p42
    %p44 = scmp.ne.s32.totalorder %s36, %s39
    %p45 = scmp.eq.s32.totalorder %s12, 0
    %p46 = por %p44, %p45
    %p47 = scmp.ne.s32.totalorder %s36, %s39
    %p48 = scmp.eq.s32.totalorder %s17, 1
    %p49 = por %p47, %p48
    %p50 = scmp.ne.s32.totalorder %s39, %s40
    %p51 = scmp.eq.s32.totalorder %s17, 0
    %p52 = por %p50, %p51
    %p53 = scmp.ne.s32.totalorder %s39, %s40
    %p54 = scmp.eq.s32.totalorder %s18, 1
    %p55 = por %p53, %p54
    %p57 = scmp.ne.s32.totalorder %s40, %s56
    %p58 = scmp.eq.s32.totalorder %s18, 0
    %p59 = por %p57, %p58
    %s60 = ssub.s32 %s19, %s31
    %s61 = ssub.s32 %s20, %s27
    %s62 = sor.u32 %s60, %s61
    %p63 = scmp.eq.s32.totalorder %s62, 0
    %s65 = sadd.s32 %s64, 1
    %s66 = scalar_select %p63, %s64, %s65
    %p69 = pneg %p63
    %p70 = scmp.eq.s32.totalorder %s12, 1
    %p71 = por %p69, %p70
    %p72 = scmp.ne.s32.totalorder %s64, %s67
    %p73 = scmp.eq.s32.totalorder %s12, 0
    %p74 = por %p72, %p73
    %p75 = scmp.ne.s32.totalorder %s64, %s67
    %p76 = scmp.eq.s32.totalorder %s17, 1
    %p77 = por %p75, %p76
    %p78 = scmp.ne.s32.totalorder %s67, %s68
    %p79 = scmp.eq.s32.totalorder %s17, 0
    %p80 = por %p78, %p79
    %p81 = scmp.ne.s32.totalorder %s67, %s68
    %p82 = scmp.eq.s32.totalorder %s18, 1
    %p83 = por %p81, %p82
    %p85 = scmp.ne.s32.totalorder %s68, %s84
    %p86 = scmp.eq.s32.totalorder %s18, 0
    %p87 = por %p85, %p86
    %s89 = sadd.s32 %s88, 1
    %p92 = scmp.eq.s32.totalorder %s12, 1
    %p93 = scmp.ne.s32.totalorder %s88, %s90
    %p94 = scmp.eq.s32.totalorder %s12, 0
    %p95 = por %p93, %p94
    %p96 = scmp.ne.s32.totalorder %s88, %s90
    %p97 = scmp.eq.s32.totalorder %s17, 1
    %p98 = por %p96, %p97
    %p99 = scmp.ne.s32.totalorder %s90, %s91
    %p100 = scmp.eq.s32.totalorder %s17, 0
    %p101 = por %p99, %p100
    %p102 = scmp.ne.s32.totalorder %s90, %s91
    %p103 = scmp.eq.s32.totalorder %s18, 1
    %p104 = por %p102, %p103
    %p106 = scmp.ne.s32.totalorder %s91, %s105
    %p107 = scmp.eq.s32.totalorder %s18, 0
    %p108 = por %p106, %p107
    %s110 = sadd.s32 %s109, 1
    %p113 = scmp.eq.s32.totalorder %s12, 1
    %p114 = scmp.ne.s32.totalorder %s109, %s111
    %p115 = scmp.eq.s32.totalorder %s12, 0
    %p116 = por %p114, %p115
    %p117 = scmp.ne.s32.totalorder %s109, %s111
    %p118 = scmp.eq.s32.totalorder %s17, 1
    %p119 = por %p117, %p118
    %p120 = scmp.ne.s32.totalorder %s111, %s112
    %p121 = scmp.eq.s32.totalorder %s17, 0
    %p122 = por %p120, %p121
    %p123 = scmp.ne.s32.totalorder %s111, %s112
    %p124 = scmp.eq.s32.totalorder %s18, 1
    %p125 = por %p123, %p124
    %p127 = scmp.ne.s32.totalorder %s112, %s126
    %p128 = scmp.eq.s32.totalorder %s18, 0
    %p129 = por %p127, %p128
    %s131 = sadd.s32 %s130, 1
    %p134 = scmp.eq.s32.totalorder %s12, 1
    %p135 = scmp.ne.s32.totalorder %s130, %s132
    %p136 = scmp.eq.s32.totalorder %s12, 0
    %p137 = por %p135, %p136
    %p138 = scmp.ne.s32.totalorder %s130, %s132
    %p139 = scmp.eq.s32.totalorder %s17, 1
    %p140 = por %p138, %p139
    %p141 = scmp.ne.s32.totalorder %s132, %s133
    %p142 = scmp.eq.s32.totalorder %s17, 0
    %p143 = por %p141, %p142
    %p144 = scmp.ne.s32.totalorder %s132, %s133
    %p145 = scmp.eq.s32.totalorder %s18, 1
    %p146 = por %p144, %p145
    %p148 = scmp.ne.s32.totalorder %s133, %s147
    %p149 = scmp.eq.s32.totalorder %s18, 0
    %p150 = por %p148, %p149
    %s152 = sadd.s32 %s151, 1
    %p155 = scmp.eq.s32.totalorder %s12, 1
    %p156 = scmp.ne.s32.totalorder %s151, %s153
    %p157 = scmp.eq.s32.totalorder %s12, 0
    %p158 = por %p156, %p157
    %p159 = scmp.ne.s32.totalorder %s151, %s153
    %p160 = scmp.eq.s32.totalorder %s17, 1
    %p161 = por %p159, %p160
    %p162 = scmp.ne.s32.totalorder %s153, %s154
    %p163 = scmp.eq.s32.totalorder %s17, 0
    %p164 = por %p162, %p163
    %p165 = scmp.ne.s32.totalorder %s153, %s154
    %p166 = scmp.eq.s32.totalorder %s18, 1
    %p167 = por %p165, %p166
    %p169 = scmp.ne.s32.totalorder %s154, %s168
    %p170 = scmp.eq.s32.totalorder %s18, 0
    %p171 = por %p169, %p170
    %s172 = ssub.s32 %s19, %s31
    %s173 = ssub.s32 %s20, %s27
    %s174 = sor.u32 %s172, %s173
    %p175 = scmp.eq.s32.totalorder %s174, 0
    %s177 = sadd.s32 %s176, 1
    %s178 = scalar_select %p175, %s176, %s177
    %p181 = pneg %p175
    %p182 = scmp.eq.s32.totalorder %s12, 1
    %p183 = por %p181, %p182
    %p184 = scmp.ne.s32.totalorder %s176, %s179
    %p185 = scmp.eq.s32.totalorder %s12, 0
    %p186 = por %p184, %p185
    %p187 = scmp.ne.s32.totalorder %s176, %s179
    %p188 = scmp.eq.s32.totalorder %s17, 1
    %p189 = por %p187, %p188
    %p190 = scmp.ne.s32.totalorder %s179, %s180
    %p191 = scmp.eq.s32.totalorder %s17, 0
    %p192 = por %p190, %p191
    %p193 = scmp.ne.s32.totalorder %s179, %s180
    %p194 = scmp.eq.s32.totalorder %s18, 1
    %p195 = por %p193, %p194
    %p197 = scmp.ne.s32.totalorder %s180, %s196
    %p198 = scmp.eq.s32.totalorder %s18, 0
    %p199 = por %p197, %p198
    %p200 = scmp.le.s32.totalorder 1, %s12
    %p201 = scmp.lt.s32.totalorder %s12, 3
    %p202 = pnand %p200, %p201
    %p203 = pneg %p202
    // Predicated region
    $region9: #{_lambda_.15} parent=5 // pred_check
      _
    $region10: #{_lambda_.15} parent=5 // pred_check_branch
      %205 = sbr.rel (%p202) target = $region12
    $region11: #{_lambda_.15} parent=5 // pred_region
      %s206 = ssub.s32 %s12, 1
      // Predicated region
      $region13: #{_lambda_.15} parent=11 // pred_check
        %p207 = pneg %p101
      $region14: #{_lambda_.15} parent=11 // pred_check_branch
        %209 = sbr.rel (%p207) target = $region16
      $region15: #{_lambda_.15} parent=11 // pred_region
        _
      $region16: #{_lambda_.15} parent=11 // pred_fallthru
        _
      // Predicated region
      $region17: #{_lambda_.15} parent=11 // pred_check
        %p210 = pneg %p122
      $region18: #{_lambda_.15} parent=11 // pred_check_branch
        %212 = sbr.rel (%p210) target = $region20
      $region19: #{_lambda_.15} parent=11 // pred_region
        _
      $region20: #{_lambda_.15} parent=11 // pred_fallthru
        _
      // Predicated region
      $region21: #{_lambda_.15} parent=11 // pred_check
        %p213 = pneg %p143
      $region22: #{_lambda_.15} parent=11 // pred_check_branch
        %215 = sbr.rel (%p213) target = $region24
      $region23: #{_lambda_.15} parent=11 // pred_region
        _
      $region24: #{_lambda_.15} parent=11 // pred_fallthru
        _
      // Predicated region
      $region25: #{_lambda_.15} parent=11 // pred_check
        %p216 = pneg %p164
      $region26: #{_lambda_.15} parent=11 // pred_check_branch
        %218 = sbr.rel (%p216) target = $region28
      $region27: #{_lambda_.15} parent=11 // pred_region
        _
      $region28: #{_lambda_.15} parent=11 // pred_fallthru
        _
    $region12: #{_lambda_.15} parent=5 // pred_fallthru
      _
    %p219 = scmp.lt.s32.totalorder %s12, 2
    // Predicated region
    $region29: #{_lambda_.15} parent=5 // pred_check
      %p220 = pneg %p219
    $region30: #{_lambda_.15} parent=5 // pred_check_branch
      %222 = sbr.rel (%p220) target = $region32
    $region31: #{_lambda_.15} parent=5 // pred_region
      // Predicated region
      $region33: #{_lambda_.15} parent=31 // pred_check
        %p223 = pneg %p46
      $region34: #{_lambda_.15} parent=31 // pred_check_branch
        %225 = sbr.rel (%p223) target = $region36
      $region35: #{_lambda_.15} parent=31 // pred_region
        %s226 = smul.u32 2, %s20
        %p227 = scmp.lt.s32.totalorder %s19, 1
        %s228 = scalar_select %p227, %s19, 1
        %p229 = scmp.lt.s32.totalorder %s226, 1
        %s230 = scalar_select %p229, %s226, 1
        %s231 = smul.addr %s228, 2
        %s232 = sadd.s32 %s230, %s231
        %s233 = smul.addr %s232, 2
        %s234 = scalar_lea.vmem %s0, %s233
        %s235 = smul.u32 2, %s20
      $region36: #{_lambda_.15} parent=31 // pred_fallthru
        _
      // Predicated region
      $region37: #{_lambda_.15} parent=31 // pred_check
        %p236 = pneg %p74
      $region38: #{_lambda_.15} parent=31 // pred_check_branch
        %238 = sbr.rel (%p236) target = $region40
      $region39: #{_lambda_.15} parent=31 // pred_region
        %s239 = smul.u32 2, %s20
        %p240 = scmp.lt.s32.totalorder %s19, 1
        %s241 = scalar_select %p240, %s19, 1
        %p242 = scmp.lt.s32.totalorder %s239, 1
        %s243 = scalar_select %p242, %s239, 1
        %s244 = smul.addr %s241, 4
        %s245 = sadd.s32 %s243, %s244
        %s246 = smul.addr %s245, 4
        %s247 = scalar_lea.vmem %s1, %s246
        %s248 = smul.u32 2, %s20
      $region40: #{_lambda_.15} parent=31 // pred_fallthru
        _
    $region32: #{_lambda_.15} parent=5 // pred_fallthru
      _
    %p249 = scmp.le.s32.totalorder 1, %s12
    %p250 = scmp.lt.s32.totalorder %s12, 3
    %p251 = pnand %p249, %p250
    %p252 = pneg %p251
    // Predicated region
    $region41: #{_lambda_.15} parent=5 // pred_check
      _
    $region42: #{_lambda_.15} parent=5 // pred_check_branch
      %254 = sbr.rel (%p251) target = $region44
    $region43: #{_lambda_.15} parent=5 // pred_region
      %s255 = ssub.s32 %s12, 1
      %s256 = smul.u32 2, %s22
      %p257 = scmp.lt.s32.totalorder %s21, 1
      %s258 = scalar_select %p257, %s21, 1
      %p259 = scmp.lt.s32.totalorder %s256, 1
      %s260 = scalar_select %p259, %s256, 1
      %s261 = smul.addr %s258, 2
      %s262 = sadd.s32 %s260, %s261
      %s263 = smul.addr %s262, 2
      %s264 = scalar_lea.vmem %s0, %s263
      %p265 = pneg %p52
      %p266 = pneg %p49
      %s267 = smul.u32 2, %s22
      %p268 = scmp.lt.s32.totalorder %s21, 1
      %s269 = scalar_select %p268, %s21, 1
      %p270 = scmp.lt.s32.totalorder %s267, 1
      %s271 = scalar_select %p270, %s267, 1
      %s272 = smul.addr %s269, 4
      %s273 = sadd.s32 %s271, %s272
      %s274 = smul.addr %s273, 4
      %s275 = scalar_lea.vmem %s1, %s274
      %p276 = pneg %p80
      %p277 = pneg %p77
      %p278 = pneg %p101
      %p279 = pneg %p98
      %p280 = pneg %p122
      %p281 = pneg %p119
      %p282 = pneg %p143
      %p283 = pneg %p140
      %p284 = pneg %p164
      %p285 = pneg %p161
      %p286 = pneg %p192
      %p287 = pneg %p189
      %s288 = smul.u32 2, %s22
      %p289 = scmp.lt.s32.totalorder %s21, 1
      %s290 = scalar_select %p289, %s21, 1
      %p291 = scmp.lt.s32.totalorder %s288, 1
      %s292 = scalar_select %p291, %s288, 1
      %s293 = smul.addr %s290, 2
      %s294 = sadd.s32 %s292, %s293
      %s295 = smul.addr %s294, 4
      %s296 = scalar_lea.vmem %s6, %s295
      %s297 = smul.u32 2, %s22
      %p298 = scmp.lt.s32.totalorder %s21, 1
      %s299 = scalar_select %p298, %s21, 1
      %p300 = scmp.lt.s32.totalorder %s297, 1
      %s301 = scalar_select %p300, %s297, 1
      %s302 = smul.addr %s299, 2
      %s303 = sadd.s32 %s301, %s302
      %s304 = smul.addr %s303, 2
      %s305 = scalar_lea.vmem %s0, %s304
      %s306 = smul.u32 2, %s22
      %s307 = smul.u32 2, %s22
      %p308 = scmp.lt.s32.totalorder %s21, 1
      %s309 = scalar_select %p308, %s21, 1
      %p310 = scmp.lt.s32.totalorder %s307, 1
      %s311 = scalar_select %p310, %s307, 1
      %s312 = smul.addr %s309, 4
      %s313 = sadd.s32 %s311, %s312
      %s314 = smul.addr %s313, 4
      %s315 = scalar_lea.vmem %s1, %s314
      %s316 = smul.u32 2, %s22
      %s317 = smul.u32 2, %s22
      %p318 = scmp.lt.s32.totalorder %s21, 1
      %s319 = scalar_select %p318, %s21, 1
      %p320 = scmp.lt.s32.totalorder %s317, 1
      %s321 = scalar_select %p320, %s317, 1
      %s322 = smul.addr %s319, 2
      %s323 = sadd.s32 %s321, %s322
      %s324 = smul.addr %s323, 4
      %s325 = scalar_lea.vmem %s6, %s324
      %s326 = smul.u32 2, %s22
      %v328 = vld [vmem:[%s305] sm:$0xf]
      %v329 = vmax.bf16 %v328, 0
      %v330 = vld [vmem:[%s315] sm:$0xff]
      %v331 = vld [vmem:[%s315 + $0x8] sm:$0xff]
      %v332 = vmax.bf16 %v330, 0
      %v333 = vmax.bf16 %v331, 0
      %v334 = vld [vmem:[%s2] sm:$0x1]
      %v335 = vld [vmem:[%s3] sm:$0x1]
      %v338 = vunpack.c.l.b16 %v332
      %v339 = vunpack.c.h.b16 %v332
      %v340 = vunpack.c.l.b16 %v333
      %v341 = vunpack.c.h.b16 %v333
      %v342 = vpack.c.b16 %v340, %v338
      %v343 = vpack.c.b16 %v341, %v339
      %vm346 = vcmask 130048
      %v348 = vsel %vm346, %v335, 0
      %350 = vmatprep.subr.bf16.mxu0 %v343
      %351 = vmatpush1.bf16.msra.mxu0 %v342
      %352 = vmatprep.subr.bf16.mxu0 0
      %353 = vmatpush1.bf16.msra.mxu0 0
      %354 = vmatprep.subr.bf16.mxu0 0
      %355 = vmatpush1.bf16.msra.mxu0 0
      %356 = vmatprep.subr.bf16.mxu0 0
      %357 = vmatpush1.bf16.msra.mxu0 0
      %358 = vmatprep.subr.bf16.mxu0 0
      %359 = vmatpush1.bf16.msra.mxu0 0
      %360 = vmatprep.subr.bf16.mxu0 0
      %361 = vmatpush1.bf16.msra.mxu0 0
      %362 = vmatprep.subr.bf16.mxu0 0
      %363 = vmatpush1.bf16.msra.mxu0 0
      %364 = vmatprep.subr.bf16.mxu0 0
      %365 = vmatpush1.bf16.msra.mxu0 0
      %366 = vmatprep.subr.bf16.mxu0 0
      %367 = vmatpush1.bf16.msra.mxu0 0
      %368 = vmatprep.subr.bf16.mxu0 0
      %369 = vmatpush1.bf16.msra.mxu0 0
      %370 = vmatprep.subr.bf16.mxu0 0
      %371 = vmatpush1.bf16.msra.mxu0 0
      %372 = vmatprep.subr.bf16.mxu0 0
      %373 = vmatpush1.bf16.msra.mxu0 0
      %374 = vmatprep.subr.bf16.mxu0 0
      %375 = vmatpush1.bf16.msra.mxu0 0
      %376 = vmatprep.subr.bf16.mxu0 0
      %377 = vmatpush1.bf16.msra.mxu0 0
      %378 = vmatprep.subr.bf16.mxu0 0
      %379 = vmatpush1.bf16.msra.mxu0 0
      %380 = vmatprep.subr.bf16.mxu0 0
      %381 = vmatpush1.bf16.msra.mxu0 0
      %382 = vmatprep.mubr.bf16.mxu0 0
      %383 = vmatmul.mubr.bf16.gmra.mrb[0].mxu0 %v348
      %v384 = vpop.f32.mrb[0].mxu0
      %v385 = vadd.f32 0.0, %v384
      %v386 = vpop.f32.mrb[0].mxu0
      %v387 = vadd.f32 0.0, %v386
      %v388 = vpop.f32.mrb[0].mxu0
      %v389 = vpop.f32.mrb[0].mxu0
      %390 = vdwg.mxu0
      %v393 = vunpack.c.l.s4 1983009808
      %v394 = vunpack.c.0.s8 %v393
      %v395 = vlaneseq
      %v396 = vshrl.u32 %v395, 7
      %v397 = vsub.s32 %v394, %v396
      %v398 = vrot.slane %v329, %v397
      %v399 = vcombine.high %v398, %v398
      %vm400 = vcmask 31744
      %v402 = vsel %vm400, %v334, 0
      %vm404 = vcmask 1041408
      %v406 = vsel %vm404, %v398, 0
      %v409 = vsel %vm404, %v399, 0
      %411 = vmatprep.subr.bf16.mxu0 %v409
      %412 = vmatpush1.bf16.msra.mxu0 %v406
      %413 = vmatprep.subr.bf16.mxu0 0
      %414 = vmatpush1.bf16.msra.mxu0 0
      %415 = vmatprep.subr.bf16.mxu0 0
      %416 = vmatpush1.bf16.msra.mxu0 0
      %417 = vmatprep.subr.bf16.mxu0 0
      %418 = vmatpush1.bf16.msra.mxu0 0
      %419 = vmatprep.subr.bf16.mxu0 0
      %420 = vmatpush1.bf16.msra.mxu0 0
      %421 = vmatprep.subr.bf16.mxu0 0
      %422 = vmatpush1.bf16.msra.mxu0 0
      %423 = vmatprep.subr.bf16.mxu0 0
      %424 = vmatpush1.bf16.msra.mxu0 0
      %425 = vmatprep.subr.bf16.mxu0 0
      %426 = vmatpush1.bf16.msra.mxu0 0
      %427 = vmatprep.subr.bf16.mxu0 0
      %428 = vmatpush1.bf16.msra.mxu0 0
      %429 = vmatprep.subr.bf16.mxu0 0
      %430 = vmatpush1.bf16.msra.mxu0 0
      %431 = vmatprep.subr.bf16.mxu0 0
      %432 = vmatpush1.bf16.msra.mxu0 0
      %433 = vmatprep.subr.bf16.mxu0 0
      %434 = vmatpush1.bf16.msra.mxu0 0
      %435 = vmatprep.subr.bf16.mxu0 0
      %436 = vmatpush1.bf16.msra.mxu0 0
      %437 = vmatprep.subr.bf16.mxu0 0
      %438 = vmatpush1.bf16.msra.mxu0 0
      %439 = vmatprep.subr.bf16.mxu0 0
      %440 = vmatpush1.bf16.msra.mxu0 0
      %441 = vmatprep.subr.bf16.mxu0 0
      %442 = vmatpush1.bf16.msra.mxu0 0
      %443 = vmatprep.mubr.bf16.mxu0 0
      %444 = vmatmul.mubr.bf16.gmra.mrb[0].mxu0 %v402
      %v445 = vpop.f32.mrb[0].mxu0
      %v446 = vadd.f32 %v385, %v445
      %v447 = vpop.f32.mrb[0].mxu0
      %v448 = vadd.f32 %v387, %v447
      %v449 = vpop.f32.mrb[0].mxu0
      %v450 = vpop.f32.mrb[0].mxu0
      %451 = vdwg.mxu0
      %v452 = vmax.f32 %v446, 0.0
      %v453 = vmax.f32 %v448, 0.0
      %v454 = vpack.c.bf16 %v452, %v452
      %v455 = vpack.c.bf16 %v453, %v453
      %v456 = vld [vmem:[%s4] sm:$0xf]
      %v457 = vld [vmem:[%s5] sm:$0xff]
      %459 = vset.pattern.permute.xlu0 0
      %460 = vperm.xlu0 %459, %v457
      %v461 = vpop.permute.xlu0 %460
      %vm463 = vcmask 15360
      %v465 = vsel %vm463, %v456, 0
      %vm467 = vcmask 1040384
      %v469 = vsel %vm467, %v454, 0
      %v472 = vsel %vm467, %v455, 0
      %474 = vmatprep.subr.bf16.mxu0 %v472
      %475 = vmatpush1.bf16.msra.mxu0 %v469
      %476 = vmatprep.subr.bf16.mxu0 0
      %477 = vmatpush1.bf16.msra.mxu0 0
      %478 = vmatprep.subr.bf16.mxu0 0
      %479 = vmatpush1.bf16.msra.mxu0 0
      %480 = vmatprep.subr.bf16.mxu0 0
      %481 = vmatpush1.bf16.msra.mxu0 0
      %482 = vmatprep.subr.bf16.mxu0 0
      %483 = vmatpush1.bf16.msra.mxu0 0
      %484 = vmatprep.subr.bf16.mxu0 0
      %485 = vmatpush1.bf16.msra.mxu0 0
      %486 = vmatprep.subr.bf16.mxu0 0
      %487 = vmatpush1.bf16.msra.mxu0 0
      %488 = vmatprep.subr.bf16.mxu0 0
      %489 = vmatpush1.bf16.msra.mxu0 0
      %490 = vmatprep.subr.bf16.mxu0 0
      %491 = vmatpush1.bf16.msra.mxu0 0
      %492 = vmatprep.subr.bf16.mxu0 0
      %493 = vmatpush1.bf16.msra.mxu0 0
      %494 = vmatprep.subr.bf16.mxu0 0
      %495 = vmatpush1.bf16.msra.mxu0 0
      %496 = vmatprep.subr.bf16.mxu0 0
      %497 = vmatpush1.bf16.msra.mxu0 0
      %498 = vmatprep.subr.bf16.mxu0 0
      %499 = vmatpush1.bf16.msra.mxu0 0
      %500 = vmatprep.subr.bf16.mxu0 0
      %501 = vmatpush1.bf16.msra.mxu0 0
      %502 = vmatprep.subr.bf16.mxu0 0
      %503 = vmatpush1.bf16.msra.mxu0 0
      %504 = vmatprep.subr.bf16.mxu0 0
      %505 = vmatpush1.bf16.msra.mxu0 0
      %506 = vmatprep.mubr.bf16.mxu0 0
      %507 = vmatmul.mubr.bf16.gmra.mrb[0].mxu0 %v465
      %v508 = vpop.f32.mrb[0].mxu0
      %v509 = vadd.f32 %v461, %v508
      %v510 = vpop.f32.mrb[0].mxu0
      %v511 = vadd.f32 %v461, %v510
      %v512 = vpop.f32.mrb[0].mxu0
      %v513 = vpop.f32.mrb[0].mxu0
      %514 = vdwg.mxu0
      %v515 = vpack.c.bf16 %v509, %v509
      %v516 = vpack.c.bf16 %v511, %v511
      %v519 = vunpack.c.l.b16 %v515
      %v520 = vunpack.c.l.b16 %v516
      %v521 = vpack.c.b16 %v520, %v519
      %523 = vst [vmem:[%s325] sm:$0xff] %v521
      %s524 = smul.u32 2, %s22
      %p525 = scmp.lt.s32.totalorder %s21, 1
      %s526 = scalar_select %p525, %s21, 1
      %p527 = scmp.lt.s32.totalorder %s524, 1
      %s528 = scalar_select %p527, %s524, 1
      %s529 = smul.addr %s526, 2
      %s530 = sadd.s32 %s528, %s529
      %s531 = smul.addr %s530, 4
      %s532 = scalar_lea.vmem %s6, %s531
      // Predicated region
      $region45: #{_lambda_.15} parent=43 // pred_check
        %p533 = pneg %p189
      $region46: #{_lambda_.15} parent=43 // pred_check_branch
        %535 = sbr.rel (%p533) target = $region48
      $region47: #{_lambda_.15} parent=43 // pred_region
        %s536 = smul.u32 2, %s22
      $region48: #{_lambda_.15} parent=43 // pred_fallthru
        _
    $region44: #{_lambda_.15} parent=5 // pred_fallthru
      _
    %p537 = scmp.le.s32.totalorder 2, %s12
    // Predicated region
    $region49: #{_lambda_.15} parent=5 // pred_check
      %p538 = pneg %p537
    $region50: #{_lambda_.15} parent=5 // pred_check_branch
      %540 = sbr.rel (%p538) target = $region52
    $region51: #{_lambda_.15} parent=5 // pred_region
      %s541 = ssub.s32 %s12, 2
      // Predicated region
      $region53: #{_lambda_.15} parent=51 // pred_check
        %p542 = pneg %p195
      $region54: #{_lambda_.15} parent=51 // pred_check_branch
        %544 = sbr.rel (%p542) target = $region56
      $region55: #{_lambda_.15} parent=51 // pred_region
        %s545 = smul.u32 2, %s24
        %p546 = scmp.lt.s32.totalorder %s23, 1
        %s547 = scalar_select %p546, %s23, 1
        %p548 = scmp.lt.s32.totalorder %s545, 1
        %s549 = scalar_select %p548, %s545, 1
        %s550 = smul.addr %s547, 2
        %s551 = sadd.s32 %s549, %s550
        %s552 = smul.addr %s551, 4
        %s553 = scalar_lea.vmem %s6, %s552
      $region56: #{_lambda_.15} parent=51 // pred_fallthru
        _
    $region52: #{_lambda_.15} parent=5 // pred_fallthru
      _
  $region6: #{_lambda_.15} parent=0 // loop_footer
    %s16 = sadd.s32 1, %s12
  $region7: #{_lambda_.15} parent=0 // loop_footer_branch
    %11 = sbr.rel target = $region3
  $region8: #{_lambda_.15} parent=0 // loop_exit
    _

// kernel: _lambda_.16
$region0: #{_lambda_.16}
  #allocation0 [shape = 'u32[]', space=smem, size = 0x4, offset = 0x4, fixed_abs, tag = 'smem constant byte address 0x4 - core index']
  #allocation1 [shape = 'u32[144,128]{1,0:T(1,128)}', space=vmem, size = 0x12000, scoped, tag = 'internal scratch']
  %s0 = inlined_call_operand.vmem [shape: bf16[2,2,4,256], index: 0, kind: input, shape index: {}]
  %s1 = inlined_call_operand.vmem [shape: bf16[16,2,4,256], index: 1, kind: input, shape index: {}]
  %s2 = inlined_call_operand.vmem [shape: bf16[16,2,256], index: 2, kind: output, shape index: {}]
  %s3 = sld [smem:[#allocation0]]
  $region41: #{_lambda_.16} parent=0
    _
  %s5 = ssub.s32 1, %s3
  %s6 = scalar_select 0, %s5, %s3
  loop: start=0, step=1, limit=18
  $region2: #{_lambda_.16} parent=0 // loop_pre_header
    _
  $region3: #{_lambda_.16} parent=0 // loop_header
    %s8 = sphi 0, %s12
    %p9 = scmp.ge.s32.totalorder %s8, 18
    %s15 = sphi 0, %s34
    %s16 = sphi 0, %s30
    %s17 = sphi 0, %s26
    %s18 = sphi 0, %s15
    %s19 = sphi 0, %s16
    %s20 = sphi 0, %s17
    %s21 = sphi 0, %s18
    %s22 = sphi 0, %s19
    %s23 = sphi 0, %s20
    %s39 = sphi 0, %s41
    %s42 = sphi 0, %s39
    %s43 = sphi 0, %s42
    %s59 = sphi 0, %s43
    %s71 = sphi 0, %s73
    %s74 = sphi 0, %s71
    %s75 = sphi 0, %s74
    %s91 = sphi 0, %s75
    %s103 = sphi 0, %s105
    %s106 = sphi 0, %s103
    %s107 = sphi 0, %s106
    %s123 = sphi 0, %s107
  $region4: #{_lambda_.16} parent=0 // loop_header_branch
    %11 = sbr.rel (%p9) target = $region8
  $region5: #{_lambda_.16} parent=0 // loop_body
    %s13 = ssub.s32 %s8, 1
    %s14 = ssub.s32 %s8, 2
    %s24 = sadd.s32 1, %s17
    %p25 = scmp.ge.s32.totalorder %s24, 8
    %s26 = scalar_select %p25, 0, %s24
    %s27 = sadd.s32 1, %s16
    %s28 = scalar_select %p25, %s27, %s16
    %p29 = scmp.ge.s32.totalorder %s28, 1
    %s30 = scalar_select %p29, 0, %s28
    %s31 = sadd.s32 1, %s15
    %s32 = scalar_select %p29, %s31, %s15
    %p33 = scmp.ge.s32.totalorder %s32, 2
    %s34 = scalar_select %p33, 0, %s32
    %s35 = ssub.s32 %s15, %s34
    %s36 = ssub.s32 %s16, %s30
    %s37 = sor.u32 %s35, %s36
    %p38 = scmp.eq.s32.totalorder %s37, 0
    %s40 = sadd.s32 %s39, 1
    %s41 = scalar_select %p38, %s39, %s40
    %p44 = pneg %p38
    %p45 = scmp.eq.s32.totalorder %s8, 15
    %p46 = por %p44, %p45
    %p47 = scmp.ne.s32.totalorder %s39, %s42
    %p48 = scmp.eq.s32.totalorder %s8, 0
    %p49 = por %p47, %p48
    %p50 = scmp.ne.s32.totalorder %s39, %s42
    %p51 = scmp.eq.s32.totalorder %s13, 15
    %p52 = por %p50, %p51
    %p53 = scmp.ne.s32.totalorder %s42, %s43
    %p54 = scmp.eq.s32.totalorder %s13, 0
    %p55 = por %p53, %p54
    %p56 = scmp.ne.s32.totalorder %s42, %s43
    %p57 = scmp.eq.s32.totalorder %s14, 15
    %p58 = por %p56, %p57
    %p60 = scmp.ne.s32.totalorder %s43, %s59
    %p61 = scmp.eq.s32.totalorder %s14, 0
    %p62 = por %p60, %p61
    %s63 = smul.u32 %s15, 8
    %s64 = sadd.s32 %s63, %s17
    %s65 = smul.u32 %s34, 8
    %s66 = sadd.s32 %s65, %s26
    %s67 = ssub.s32 %s64, %s66
    %s68 = ssub.s32 %s16, %s30
    %s69 = sor.u32 %s67, %s68
    %p70 = scmp.eq.s32.totalorder %s69, 0
    %s72 = sadd.s32 %s71, 1
    %s73 = scalar_select %p70, %s71, %s72
    %p76 = pneg %p70
    %p77 = scmp.eq.s32.totalorder %s8, 15
    %p78 = por %p76, %p77
    %p79 = scmp.ne.s32.totalorder %s71, %s74
    %p80 = scmp.eq.s32.totalorder %s8, 0
    %p81 = por %p79, %p80
    %p82 = scmp.ne.s32.totalorder %s71, %s74
    %p83 = scmp.eq.s32.totalorder %s13, 15
    %p84 = por %p82, %p83
    %p85 = scmp.ne.s32.totalorder %s74, %s75
    %p86 = scmp.eq.s32.totalorder %s13, 0
    %p87 = por %p85, %p86
    %p88 = scmp.ne.s32.totalorder %s74, %s75
    %p89 = scmp.eq.s32.totalorder %s14, 15
    %p90 = por %p88, %p89
    %p92 = scmp.ne.s32.totalorder %s75, %s91
    %p93 = scmp.eq.s32.totalorder %s14, 0
    %p94 = por %p92, %p93
    %s95 = smul.u32 %s15, 8
    %s96 = sadd.s32 %s95, %s17
    %s97 = smul.u32 %s34, 8
    %s98 = sadd.s32 %s97, %s26
    %s99 = ssub.s32 %s96, %s98
    %s100 = ssub.s32 %s16, %s30
    %s101 = sor.u32 %s99, %s100
    %p102 = scmp.eq.s32.totalorder %s101, 0
    %s104 = sadd.s32 %s103, 1
    %s105 = scalar_select %p102, %s103, %s104
    %p108 = pneg %p102
    %p109 = scmp.eq.s32.totalorder %s8, 15
    %p110 = por %p108, %p109
    %p111 = scmp.ne.s32.totalorder %s103, %s106
    %p112 = scmp.eq.s32.totalorder %s8, 0
    %p113 = por %p111, %p112
    %p114 = scmp.ne.s32.totalorder %s103, %s106
    %p115 = scmp.eq.s32.totalorder %s13, 15
    %p116 = por %p114, %p115
    %p117 = scmp.ne.s32.totalorder %s106, %s107
    %p118 = scmp.eq.s32.totalorder %s13, 0
    %p119 = por %p117, %p118
    %p120 = scmp.ne.s32.totalorder %s106, %s107
    %p121 = scmp.eq.s32.totalorder %s14, 15
    %p122 = por %p120, %p121
    %p124 = scmp.ne.s32.totalorder %s107, %s123
    %p125 = scmp.eq.s32.totalorder %s14, 0
    %p126 = por %p124, %p125
    %p127 = scmp.le.s32.totalorder 1, %s8
    %p128 = scmp.lt.s32.totalorder %s8, 17
    %p129 = pnand %p127, %p128
    %p130 = pneg %p129
    // Predicated region
    $region9: #{_lambda_.16} parent=5 // pred_check
      _
    $region10: #{_lambda_.16} parent=5 // pred_check_branch
      %132 = sbr.rel (%p129) target = $region12
    $region11: #{_lambda_.16} parent=5 // pred_region
      %s133 = ssub.s32 %s8, 1
    $region12: #{_lambda_.16} parent=5 // pred_fallthru
      _
    %p134 = scmp.lt.s32.totalorder %s8, 16
    // Predicated region
    $region13: #{_lambda_.16} parent=5 // pred_check
      %p135 = pneg %p134
    $region14: #{_lambda_.16} parent=5 // pred_check_branch
      %137 = sbr.rel (%p135) target = $region16
    $region15: #{_lambda_.16} parent=5 // pred_region
      // Predicated region
      $region17: #{_lambda_.16} parent=15 // pred_check
        %p138 = pneg %p49
      $region18: #{_lambda_.16} parent=15 // pred_check_branch
        %140 = sbr.rel (%p138) target = $region20
      $region19: #{_lambda_.16} parent=15 // pred_region
        %s141 = smul.u32 2, %s16
        %p142 = scmp.lt.s32.totalorder %s15, 1
        %s143 = scalar_select %p142, %s15, 1
        %p144 = scmp.lt.s32.totalorder %s141, 1
        %s145 = scalar_select %p144, %s141, 1
        %s146 = smul.addr %s143, 4
        %s147 = sadd.s32 %s145, %s146
        %s148 = smul.addr %s147, 2
        %s149 = scalar_lea.vmem %s0, %s148
        %s150 = smul.u32 2, %s16
      $region20: #{_lambda_.16} parent=15 // pred_fallthru
        _
      // Predicated region
      $region21: #{_lambda_.16} parent=15 // pred_check
        %p151 = pneg %p81
      $region22: #{_lambda_.16} parent=15 // pred_check_branch
        %153 = sbr.rel (%p151) target = $region24
      $region23: #{_lambda_.16} parent=15 // pred_region
        %s154 = smul.u32 %s15, 8
        %s155 = sadd.s32 %s154, %s17
        %s156 = smul.u32 2, %s16
        %p157 = scmp.lt.s32.totalorder %s155, 15
        %s158 = scalar_select %p157, %s155, 15
        %p159 = scmp.lt.s32.totalorder %s156, 1
        %s160 = scalar_select %p159, %s156, 1
        %s161 = smul.addr %s158, 4
        %s162 = sadd.s32 %s160, %s161
        %s163 = smul.addr %s162, 2
        %s164 = scalar_lea.vmem %s1, %s163
        %s165 = smul.u32 %s15, 8
        %s166 = sadd.s32 %s165, %s17
        %s167 = smul.u32 2, %s16
      $region24: #{_lambda_.16} parent=15 // pred_fallthru
        _
    $region16: #{_lambda_.16} parent=5 // pred_fallthru
      _
    %p168 = scmp.le.s32.totalorder 1, %s8
    %p169 = scmp.lt.s32.totalorder %s8, 17
    %p170 = pnand %p168, %p169
    %p171 = pneg %p170
    // Predicated region
    $region25: #{_lambda_.16} parent=5 // pred_check
      _
    $region26: #{_lambda_.16} parent=5 // pred_check_branch
      %173 = sbr.rel (%p170) target = $region28
    $region27: #{_lambda_.16} parent=5 // pred_region
      %s174 = ssub.s32 %s8, 1
      %s175 = smul.u32 2, %s19
      %p176 = scmp.lt.s32.totalorder %s18, 1
      %s177 = scalar_select %p176, %s18, 1
      %p178 = scmp.lt.s32.totalorder %s175, 1
      %s179 = scalar_select %p178, %s175, 1
      %s180 = smul.addr %s177, 4
      %s181 = sadd.s32 %s179, %s180
      %s182 = smul.addr %s181, 2
      %s183 = scalar_lea.vmem %s0, %s182
      %p184 = pneg %p55
      %p185 = pneg %p52
      %s186 = smul.u32 %s18, 8
      %s187 = sadd.s32 %s186, %s20
      %s188 = smul.u32 2, %s19
      %p189 = scmp.lt.s32.totalorder %s187, 15
      %s190 = scalar_select %p189, %s187, 15
      %p191 = scmp.lt.s32.totalorder %s188, 1
      %s192 = scalar_select %p191, %s188, 1
      %s193 = smul.addr %s190, 4
      %s194 = sadd.s32 %s192, %s193
      %s195 = smul.addr %s194, 2
      %s196 = scalar_lea.vmem %s1, %s195
      %p197 = pneg %p87
      %p198 = pneg %p84
      %p199 = pneg %p119
      %p200 = pneg %p116
      %s201 = smul.u32 %s18, 8
      %s202 = sadd.s32 %s201, %s20
      %s203 = smul.u32 2, %s19
      %p204 = scmp.lt.s32.totalorder %s202, 15
      %s205 = scalar_select %p204, %s202, 15
      %p206 = scmp.lt.s32.totalorder %s203, 1
      %s207 = scalar_select %p206, %s203, 1
      %s208 = smul.addr %s205, 2
      %s209 = sadd.s32 %s207, %s208
      %s210 = scalar_lea.vmem %s2, %s209
      %s211 = smul.u32 2, %s19
      %p212 = scmp.lt.s32.totalorder %s18, 1
      %s213 = scalar_select %p212, %s18, 1
      %p214 = scmp.lt.s32.totalorder %s211, 1
      %s215 = scalar_select %p214, %s211, 1
      %s216 = smul.addr %s213, 4
      %s217 = sadd.s32 %s215, %s216
      %s218 = smul.addr %s217, 2
      %s219 = scalar_lea.vmem %s0, %s218
      %s220 = smul.u32 2, %s19
      %s221 = smul.u32 %s18, 8
      %s222 = sadd.s32 %s221, %s20
      %s223 = smul.u32 2, %s19
      %p224 = scmp.lt.s32.totalorder %s222, 15
      %s225 = scalar_select %p224, %s222, 15
      %p226 = scmp.lt.s32.totalorder %s223, 1
      %s227 = scalar_select %p226, %s223, 1
      %s228 = smul.addr %s225, 4
      %s229 = sadd.s32 %s227, %s228
      %s230 = smul.addr %s229, 2
      %s231 = scalar_lea.vmem %s1, %s230
      %s232 = smul.u32 %s18, 8
      %s233 = sadd.s32 %s232, %s20
      %s234 = smul.u32 2, %s19
      %s235 = smul.u32 %s18, 8
      %s236 = sadd.s32 %s235, %s20
      %s237 = smul.u32 2, %s19
      %p238 = scmp.lt.s32.totalorder %s236, 15
      %s239 = scalar_select %p238, %s236, 15
      %p240 = scmp.lt.s32.totalorder %s237, 1
      %s241 = scalar_select %p240, %s237, 1
      %s242 = smul.addr %s239, 2
      %s243 = sadd.s32 %s241, %s242
      %s244 = scalar_lea.vmem %s2, %s243
      %s245 = smul.u32 %s18, 8
      %s246 = sadd.s32 %s245, %s20
      %s247 = smul.u32 2, %s19
      %v248 = vld [vmem:[%s219] sm:$0xf]
      %v249 = vld [vmem:[%s219 + $0x4] sm:$0xf]
      %v250 = vunpack.c.l.bf16 %v248
      %v251 = vunpack.c.l.bf16 %v249
      %v252 = vld [vmem:[%s231] sm:$0xf]
      %v253 = vld [vmem:[%s231 + $0x4] sm:$0xf]
      %v254 = vunpack.c.l.bf16 %v252
      %v255 = vunpack.c.l.bf16 %v253
      %v256 = vmul.f32 %v250, %v254
      %v257 = vmul.f32 %v251, %v255
      %v260 = vcombine.high %v256, %v256
      %v261 = vcombine.high %v257, %v257
      %vm264 = vcmask 1043456
      %v265 = vsel %vm264, %v256, 0.0
      %v266 = vrot.slane %v265, 4
      %v267 = vadd.f32 %v265, %v266
      %v268 = vrot.slane %v267, 2
      %v269 = vadd.f32 %v267, %v268
      %v270 = vrot.slane %v269, 1
      %v271 = vadd.f32 %v269, %v270
      %v272 = vsel %vm264, %v260, 0.0
      %v273 = vrot.slane %v272, 4
      %v274 = vadd.f32 %v272, %v273
      %v275 = vrot.slane %v274, 2
      %v276 = vadd.f32 %v274, %v275
      %v277 = vrot.slane %v276, 1
      %v278 = vadd.f32 %v276, %v277
      %v279 = vsel %vm264, %v257, 0.0
      %v280 = vrot.slane %v279, 4
      %v281 = vadd.f32 %v279, %v280
      %v282 = vrot.slane %v281, 2
      %v283 = vadd.f32 %v281, %v282
      %v284 = vrot.slane %v283, 1
      %v285 = vadd.f32 %v283, %v284
      %v286 = vsel %vm264, %v261, 0.0
      %v287 = vrot.slane %v286, 4
      %v288 = vadd.f32 %v286, %v287
      %v289 = vrot.slane %v288, 2
      %v290 = vadd.f32 %v288, %v289
      %v291 = vrot.slane %v290, 1
      %v292 = vadd.f32 %v290, %v291
      %v293 = vmax.f32 %v271, 0.0
      %v294 = vmax.f32 %v278, 0.0
      %v295 = vmax.f32 %v285, 0.0
      %v296 = vmax.f32 %v292, 0.0
      %v297 = vpack.c.bf16 %v293, %v293
      %v298 = vpack.c.bf16 %v294, %v294
      %v299 = vpack.c.bf16 %v295, %v295
      %v300 = vpack.c.bf16 %v296, %v296
      %v305 = vcombine.low %v297, %v298
      %v307 = vunpack.c.l.s4 1966171168
      %v308 = vunpack.c.0.s8 %v307
      %v309 = vlaneseq
      %v310 = vshrl.u32 %v309, 7
      %v311 = vsub.s32 %v308, %v310
      %v312 = vrot.slane %v305, %v311
      %v314 = vunpack.c.l.s4 1966171168
      %v315 = vunpack.c.0.s8 %v314
      %v316 = vlaneseq
      %v317 = vshrl.u32 %v316, 7
      %v318 = vsub.s32 %v315, %v317
      %v319 = vrot.slane %v312, %v318
      %v320 = vcombine.low %v299, %v300
      %v322 = vunpack.c.l.s4 1966171168
      %v323 = vunpack.c.0.s8 %v322
      %v324 = vlaneseq
      %v325 = vshrl.u32 %v324, 7
      %v326 = vsub.s32 %v323, %v325
      %v327 = vrot.slane %v320, %v326
      %v329 = vunpack.c.l.s4 1966171168
      %v330 = vunpack.c.0.s8 %v329
      %v331 = vlaneseq
      %v332 = vshrl.u32 %v331, 7
      %v333 = vsub.s32 %v330, %v332
      %v334 = vrot.slane %v327, %v333
      %v336 = vunpack.c.l.s4 1935823168
      %v337 = vunpack.c.0.s8 %v336
      %v338 = vlaneseq
      %v339 = vshrl.u32 %v338, 7
      %v340 = vsub.s32 %v337, %v339
      %v341 = vrot.slane %v319, %v340
      %v343 = vunpack.c.l.s4 1935823168
      %v344 = vunpack.c.0.s8 %v343
      %v345 = vlaneseq
      %v346 = vshrl.u32 %v345, 7
      %v347 = vsub.s32 %v344, %v346
      %v348 = vrot.slane %v341, %v347
      %v350 = vunpack.c.l.s4 1935823168
      %v351 = vunpack.c.0.s8 %v350
      %v352 = vlaneseq
      %v353 = vshrl.u32 %v352, 7
      %v354 = vsub.s32 %v351, %v353
      %v355 = vrot.slane %v334, %v354
      %v357 = vunpack.c.l.s4 1935823168
      %v358 = vunpack.c.0.s8 %v357
      %v359 = vlaneseq
      %v360 = vshrl.u32 %v359, 7
      %v361 = vsub.s32 %v358, %v360
      %v362 = vrot.slane %v355, %v361
      %v363 = vunpack.c.l.b16 %v348
      %v364 = vunpack.c.h.b16 %v348
      %v365 = vunpack.c.l.b16 %v362
      %v366 = vunpack.c.h.b16 %v362
      %v367 = vrot.slane %v365, 7
      %vm368 = vcmask 1041409
      %v369 = vsel %vm368, %v367, %v363
      %v370 = vrot.slane %v366, 7
      %v371 = vsel %vm368, %v370, %v364
      %v372 = vpack.c.b16 %v371, %v369
      %v374 = vunpack.c.l.s4 1966171168
      %v375 = vunpack.c.0.s8 %v374
      %v376 = vlaneseq
      %v377 = vshrl.u32 %v376, 7
      %v378 = vsub.s32 %v375, %v377
      %v379 = vrot.slane %v372, %v378
      %v381 = vunpack.c.l.s4 1966171168
      %v382 = vunpack.c.0.s8 %v381
      %v383 = vlaneseq
      %v384 = vshrl.u32 %v383, 7
      %v385 = vsub.s32 %v382, %v384
      %v386 = vrot.slane %v379, %v385
      %388 = vst [vmem:[%s244] sm:$0x3] %v386
      %s389 = smul.u32 %s18, 8
      %s390 = sadd.s32 %s389, %s20
      %s391 = smul.u32 2, %s19
      %p392 = scmp.lt.s32.totalorder %s390, 15
      %s393 = scalar_select %p392, %s390, 15
      %p394 = scmp.lt.s32.totalorder %s391, 1
      %s395 = scalar_select %p394, %s391, 1
      %s396 = smul.addr %s393, 2
      %s397 = sadd.s32 %s395, %s396
      %s398 = scalar_lea.vmem %s2, %s397
      // Predicated region
      $region29: #{_lambda_.16} parent=27 // pred_check
        %p399 = pneg %p116
      $region30: #{_lambda_.16} parent=27 // pred_check_branch
        %401 = sbr.rel (%p399) target = $region32
      $region31: #{_lambda_.16} parent=27 // pred_region
        %s402 = smul.u32 %s18, 8
        %s403 = sadd.s32 %s402, %s20
        %s404 = smul.u32 2, %s19
      $region32: #{_lambda_.16} parent=27 // pred_fallthru
        _
    $region28: #{_lambda_.16} parent=5 // pred_fallthru
      _
    %p405 = scmp.le.s32.totalorder 2, %s8
    // Predicated region
    $region33: #{_lambda_.16} parent=5 // pred_check
      %p406 = pneg %p405
    $region34: #{_lambda_.16} parent=5 // pred_check_branch
      %408 = sbr.rel (%p406) target = $region36
    $region35: #{_lambda_.16} parent=5 // pred_region
      %s409 = ssub.s32 %s8, 2
      // Predicated region
      $region37: #{_lambda_.16} parent=35 // pred_check
        %p410 = pneg %p122
      $region38: #{_lambda_.16} parent=35 // pred_check_branch
        %412 = sbr.rel (%p410) target = $region40
      $region39: #{_lambda_.16} parent=35 // pred_region
        %s413 = smul.u32 %s21, 8
        %s414 = sadd.s32 %s413, %s23
        %s415 = smul.u32 2, %s22
        %p416 = scmp.lt.s32.totalorder %s414, 15
        %s417 = scalar_select %p416, %s414, 15
        %p418 = scmp.lt.s32.totalorder %s415, 1
        %s419 = scalar_select %p418, %s415, 1
        %s420 = smul.addr %s417, 2
        %s421 = sadd.s32 %s419, %s420
        %s422 = scalar_lea.vmem %s2, %s421
      $region40: #{_lambda_.16} parent=35 // pred_fallthru
        _
    $region36: #{_lambda_.16} parent=5 // pred_fallthru
      _
  $region6: #{_lambda_.16} parent=0 // loop_footer
    %s12 = sadd.s32 1, %s8
  $region7: #{_lambda_.16} parent=0 // loop_footer_branch
    %7 = sbr.rel target = $region3
  $region8: #{_lambda_.16} parent=0 // loop_exit
    _

// kernel: _lambda_.17
$region0: #{_lambda_.17}
  #allocation0 [shape = 'u32[]', space=smem, size = 0x4, offset = 0x4, fixed_abs, tag = 'smem constant byte address 0x4 - core index']
  #allocation1 [shape = 'u32[144,128]{1,0:T(1,128)}', space=vmem, size = 0x12000, scoped, tag = 'internal scratch']
  %s0 = inlined_call_operand.vmem [shape: bf16[2,16,256], index: 0, kind: input, shape index: {}]
  %s1 = inlined_call_operand.vmem [shape: bf16[64,16], index: 1, kind: input, shape index: {}]
  %s2 = inlined_call_operand.vmem [shape: f32[64,1], index: 2, kind: input, shape index: {}]
  %s3 = inlined_call_operand.vmem [shape: bf16[2,64,256], index: 3, kind: input, shape index: {}]
  %s4 = inlined_call_operand.vmem [shape: bf16[2,64,256], index: 4, kind: output, shape index: {}]
  %s5 = sld [smem:[#allocation0]]
  $region49: #{_lambda_.17} parent=0
    _
  %s7 = ssub.s32 1, %s5
  %s8 = scalar_select 0, %s7, %s5
  loop: start=0, step=1, limit=4
  $region2: #{_lambda_.17} parent=0 // loop_pre_header
    _
  $region3: #{_lambda_.17} parent=0 // loop_header
    %s10 = sphi 0, %s14
    %p11 = scmp.ge.s32.totalorder %s10, 4
    %s17 = sphi 0, %s29
    %s18 = sphi 0, %s25
    %s19 = sphi 0, %s17
    %s20 = sphi 0, %s18
    %s21 = sphi 0, %s19
    %s22 = sphi 0, %s20
    %s34 = sphi 0, %s36
    %s37 = sphi 0, %s34
    %s38 = sphi 0, %s37
    %s54 = sphi 0, %s38
    %s58 = sphi 0, %s58
    %s60 = sphi 0, %s58
    %s61 = sphi 0, %s60
    %s75 = sphi 0, %s61
    %s79 = sphi 0, %s79
    %s81 = sphi 0, %s79
    %s82 = sphi 0, %s81
    %s96 = sphi 0, %s82
    %s104 = sphi 0, %s106
    %s107 = sphi 0, %s104
    %s108 = sphi 0, %s107
    %s124 = sphi 0, %s108
    %s132 = sphi 0, %s134
    %s135 = sphi 0, %s132
    %s136 = sphi 0, %s135
    %s152 = sphi 0, %s136
  $region4: #{_lambda_.17} parent=0 // loop_header_branch
    %13 = sbr.rel (%p11) target = $region8
  $region5: #{_lambda_.17} parent=0 // loop_body
    %s15 = ssub.s32 %s10, 1
    %s16 = ssub.s32 %s10, 2
    %s23 = sadd.s32 1, %s18
    %p24 = scmp.ge.s32.totalorder %s23, 1
    %s25 = scalar_select %p24, 0, %s23
    %s26 = sadd.s32 1, %s17
    %s27 = scalar_select %p24, %s26, %s17
    %p28 = scmp.ge.s32.totalorder %s27, 2
    %s29 = scalar_select %p28, 0, %s27
    %s30 = ssub.s32 %s17, %s29
    %s31 = ssub.s32 %s18, %s25
    %s32 = sor.u32 %s30, %s31
    %p33 = scmp.eq.s32.totalorder %s32, 0
    %s35 = sadd.s32 %s34, 1
    %s36 = scalar_select %p33, %s34, %s35
    %p39 = pneg %p33
    %p40 = scmp.eq.s32.totalorder %s10, 1
    %p41 = por %p39, %p40
    %p42 = scmp.ne.s32.totalorder %s34, %s37
    %p43 = scmp.eq.s32.totalorder %s10, 0
    %p44 = por %p42, %p43
    %p45 = scmp.ne.s32.totalorder %s34, %s37
    %p46 = scmp.eq.s32.totalorder %s15, 1
    %p47 = por %p45, %p46
    %p48 = scmp.ne.s32.totalorder %s37, %s38
    %p49 = scmp.eq.s32.totalorder %s15, 0
    %p50 = por %p48, %p49
    %p51 = scmp.ne.s32.totalorder %s37, %s38
    %p52 = scmp.eq.s32.totalorder %s16, 1
    %p53 = por %p51, %p52
    %p55 = scmp.ne.s32.totalorder %s38, %s54
    %p56 = scmp.eq.s32.totalorder %s16, 0
    %p57 = por %p55, %p56
    %s59 = sadd.s32 %s58, 1
    %p62 = scmp.eq.s32.totalorder %s10, 1
    %p63 = scmp.ne.s32.totalorder %s58, %s60
    %p64 = scmp.eq.s32.totalorder %s10, 0
    %p65 = por %p63, %p64
    %p66 = scmp.ne.s32.totalorder %s58, %s60
    %p67 = scmp.eq.s32.totalorder %s15, 1
    %p68 = por %p66, %p67
    %p69 = scmp.ne.s32.totalorder %s60, %s61
    %p70 = scmp.eq.s32.totalorder %s15, 0
    %p71 = por %p69, %p70
    %p72 = scmp.ne.s32.totalorder %s60, %s61
    %p73 = scmp.eq.s32.totalorder %s16, 1
    %p74 = por %p72, %p73
    %p76 = scmp.ne.s32.totalorder %s61, %s75
    %p77 = scmp.eq.s32.totalorder %s16, 0
    %p78 = por %p76, %p77
    %s80 = sadd.s32 %s79, 1
    %p83 = scmp.eq.s32.totalorder %s10, 1
    %p84 = scmp.ne.s32.totalorder %s79, %s81
    %p85 = scmp.eq.s32.totalorder %s10, 0
    %p86 = por %p84, %p85
    %p87 = scmp.ne.s32.totalorder %s79, %s81
    %p88 = scmp.eq.s32.totalorder %s15, 1
    %p89 = por %p87, %p88
    %p90 = scmp.ne.s32.totalorder %s81, %s82
    %p91 = scmp.eq.s32.totalorder %s15, 0
    %p92 = por %p90, %p91
    %p93 = scmp.ne.s32.totalorder %s81, %s82
    %p94 = scmp.eq.s32.totalorder %s16, 1
    %p95 = por %p93, %p94
    %p97 = scmp.ne.s32.totalorder %s82, %s96
    %p98 = scmp.eq.s32.totalorder %s16, 0
    %p99 = por %p97, %p98
    %s100 = ssub.s32 %s17, %s29
    %s101 = ssub.s32 %s18, %s25
    %s102 = sor.u32 %s100, %s101
    %p103 = scmp.eq.s32.totalorder %s102, 0
    %s105 = sadd.s32 %s104, 1
    %s106 = scalar_select %p103, %s104, %s105
    %p109 = pneg %p103
    %p110 = scmp.eq.s32.totalorder %s10, 1
    %p111 = por %p109, %p110
    %p112 = scmp.ne.s32.totalorder %s104, %s107
    %p113 = scmp.eq.s32.totalorder %s10, 0
    %p114 = por %p112, %p113
    %p115 = scmp.ne.s32.totalorder %s104, %s107
    %p116 = scmp.eq.s32.totalorder %s15, 1
    %p117 = por %p115, %p116
    %p118 = scmp.ne.s32.totalorder %s107, %s108
    %p119 = scmp.eq.s32.totalorder %s15, 0
    %p120 = por %p118, %p119
    %p121 = scmp.ne.s32.totalorder %s107, %s108
    %p122 = scmp.eq.s32.totalorder %s16, 1
    %p123 = por %p121, %p122
    %p125 = scmp.ne.s32.totalorder %s108, %s124
    %p126 = scmp.eq.s32.totalorder %s16, 0
    %p127 = por %p125, %p126
    %s128 = ssub.s32 %s17, %s29
    %s129 = ssub.s32 %s18, %s25
    %s130 = sor.u32 %s128, %s129
    %p131 = scmp.eq.s32.totalorder %s130, 0
    %s133 = sadd.s32 %s132, 1
    %s134 = scalar_select %p131, %s132, %s133
    %p137 = pneg %p131
    %p138 = scmp.eq.s32.totalorder %s10, 1
    %p139 = por %p137, %p138
    %p140 = scmp.ne.s32.totalorder %s132, %s135
    %p141 = scmp.eq.s32.totalorder %s10, 0
    %p142 = por %p140, %p141
    %p143 = scmp.ne.s32.totalorder %s132, %s135
    %p144 = scmp.eq.s32.totalorder %s15, 1
    %p145 = por %p143, %p144
    %p146 = scmp.ne.s32.totalorder %s135, %s136
    %p147 = scmp.eq.s32.totalorder %s15, 0
    %p148 = por %p146, %p147
    %p149 = scmp.ne.s32.totalorder %s135, %s136
    %p150 = scmp.eq.s32.totalorder %s16, 1
    %p151 = por %p149, %p150
    %p153 = scmp.ne.s32.totalorder %s136, %s152
    %p154 = scmp.eq.s32.totalorder %s16, 0
    %p155 = por %p153, %p154
    %p156 = scmp.le.s32.totalorder 1, %s10
    %p157 = scmp.lt.s32.totalorder %s10, 3
    %p158 = pnand %p156, %p157
    %p159 = pneg %p158
    // Predicated region
    $region9: #{_lambda_.17} parent=5 // pred_check
      _
    $region10: #{_lambda_.17} parent=5 // pred_check_branch
      %161 = sbr.rel (%p158) target = $region12
    $region11: #{_lambda_.17} parent=5 // pred_region
      %s162 = ssub.s32 %s10, 1
      // Predicated region
      $region13: #{_lambda_.17} parent=11 // pred_check
        %p163 = pneg %p71
      $region14: #{_lambda_.17} parent=11 // pred_check_branch
        %165 = sbr.rel (%p163) target = $region16
      $region15: #{_lambda_.17} parent=11 // pred_region
        _
      $region16: #{_lambda_.17} parent=11 // pred_fallthru
        _
      // Predicated region
      $region17: #{_lambda_.17} parent=11 // pred_check
        %p166 = pneg %p92
      $region18: #{_lambda_.17} parent=11 // pred_check_branch
        %168 = sbr.rel (%p166) target = $region20
      $region19: #{_lambda_.17} parent=11 // pred_region
        _
      $region20: #{_lambda_.17} parent=11 // pred_fallthru
        _
    $region12: #{_lambda_.17} parent=5 // pred_fallthru
      _
    %p169 = scmp.lt.s32.totalorder %s10, 2
    // Predicated region
    $region21: #{_lambda_.17} parent=5 // pred_check
      %p170 = pneg %p169
    $region22: #{_lambda_.17} parent=5 // pred_check_branch
      %172 = sbr.rel (%p170) target = $region24
    $region23: #{_lambda_.17} parent=5 // pred_region
      // Predicated region
      $region25: #{_lambda_.17} parent=23 // pred_check
        %p173 = pneg %p44
      $region26: #{_lambda_.17} parent=23 // pred_check_branch
        %175 = sbr.rel (%p173) target = $region28
      $region27: #{_lambda_.17} parent=23 // pred_region
        %s176 = smul.u32 2, %s18
        %p177 = scmp.lt.s32.totalorder %s17, 1
        %s178 = scalar_select %p177, %s17, 1
        %p179 = scmp.lt.s32.totalorder %s176, 1
        %s180 = scalar_select %p179, %s176, 1
        %s181 = smul.addr %s178, 4
        %s182 = sadd.s32 %s180, %s181
        %s183 = smul.addr %s182, 4
        %s184 = scalar_lea.vmem %s0, %s183
        %s185 = smul.u32 2, %s18
      $region28: #{_lambda_.17} parent=23 // pred_fallthru
        _
      // Predicated region
      $region29: #{_lambda_.17} parent=23 // pred_check
        %p186 = pneg %p114
      $region30: #{_lambda_.17} parent=23 // pred_check_branch
        %188 = sbr.rel (%p186) target = $region32
      $region31: #{_lambda_.17} parent=23 // pred_region
        %s189 = smul.u32 2, %s18
        %p190 = scmp.lt.s32.totalorder %s17, 1
        %s191 = scalar_select %p190, %s17, 1
        %p192 = scmp.lt.s32.totalorder %s189, 1
        %s193 = scalar_select %p192, %s189, 1
        %s194 = smul.addr %s191, 16
        %s195 = sadd.s32 %s193, %s194
        %s196 = smul.addr %s195, 4
        %s197 = scalar_lea.vmem %s3, %s196
        %s198 = smul.u32 2, %s18
      $region32: #{_lambda_.17} parent=23 // pred_fallthru
        _
    $region24: #{_lambda_.17} parent=5 // pred_fallthru
      _
    %p199 = scmp.le.s32.totalorder 1, %s10
    %p200 = scmp.lt.s32.totalorder %s10, 3
    %p201 = pnand %p199, %p200
    %p202 = pneg %p201
    // Predicated region
    $region33: #{_lambda_.17} parent=5 // pred_check
      _
    $region34: #{_lambda_.17} parent=5 // pred_check_branch
      %204 = sbr.rel (%p201) target = $region36
    $region35: #{_lambda_.17} parent=5 // pred_region
      %s205 = ssub.s32 %s10, 1
      %s206 = smul.u32 2, %s20
      %p207 = scmp.lt.s32.totalorder %s19, 1
      %s208 = scalar_select %p207, %s19, 1
      %p209 = scmp.lt.s32.totalorder %s206, 1
      %s210 = scalar_select %p209, %s206, 1
      %s211 = smul.addr %s208, 4
      %s212 = sadd.s32 %s210, %s211
      %s213 = smul.addr %s212, 4
      %s214 = scalar_lea.vmem %s0, %s213
      %p215 = pneg %p50
      %p216 = pneg %p47
      %p217 = pneg %p71
      %p218 = pneg %p68
      %p219 = pneg %p92
      %p220 = pneg %p89
      %s221 = smul.u32 2, %s20
      %p222 = scmp.lt.s32.totalorder %s19, 1
      %s223 = scalar_select %p222, %s19, 1
      %p224 = scmp.lt.s32.totalorder %s221, 1
      %s225 = scalar_select %p224, %s221, 1
      %s226 = smul.addr %s223, 16
      %s227 = sadd.s32 %s225, %s226
      %s228 = smul.addr %s227, 4
      %s229 = scalar_lea.vmem %s3, %s228
      %p230 = pneg %p120
      %p231 = pneg %p117
      %p232 = pneg %p148
      %p233 = pneg %p145
      %s234 = smul.u32 2, %s20
      %p235 = scmp.lt.s32.totalorder %s19, 1
      %s236 = scalar_select %p235, %s19, 1
      %p237 = scmp.lt.s32.totalorder %s234, 1
      %s238 = scalar_select %p237, %s234, 1
      %s239 = smul.addr %s236, 16
      %s240 = sadd.s32 %s238, %s239
      %s241 = smul.addr %s240, 4
      %s242 = scalar_lea.vmem %s4, %s241
      %s243 = smul.u32 2, %s20
      %p244 = scmp.lt.s32.totalorder %s19, 1
      %s245 = scalar_select %p244, %s19, 1
      %p246 = scmp.lt.s32.totalorder %s243, 1
      %s247 = scalar_select %p246, %s243, 1
      %s248 = smul.addr %s245, 4
      %s249 = sadd.s32 %s247, %s248
      %s250 = smul.addr %s249, 4
      %s251 = scalar_lea.vmem %s0, %s250
      %s252 = smul.u32 2, %s20
      %s253 = smul.u32 2, %s20
      %p254 = scmp.lt.s32.totalorder %s19, 1
      %s255 = scalar_select %p254, %s19, 1
      %p256 = scmp.lt.s32.totalorder %s253, 1
      %s257 = scalar_select %p256, %s253, 1
      %s258 = smul.addr %s255, 16
      %s259 = sadd.s32 %s257, %s258
      %s260 = smul.addr %s259, 4
      %s261 = scalar_lea.vmem %s3, %s260
      %s262 = smul.u32 2, %s20
      %s263 = smul.u32 2, %s20
      %p264 = scmp.lt.s32.totalorder %s19, 1
      %s265 = scalar_select %p264, %s19, 1
      %p266 = scmp.lt.s32.totalorder %s263, 1
      %s267 = scalar_select %p266, %s263, 1
      %s268 = smul.addr %s265, 16
      %s269 = sadd.s32 %s267, %s268
      %s270 = smul.addr %s269, 4
      %s271 = scalar_lea.vmem %s4, %s270
      %s272 = smul.u32 2, %s20
      %v274 = vld [vmem:[%s251] sm:$0xff]
      %v275 = vld [vmem:[%s251 + $0x8] sm:$0xff]
      %v276 = vld [vmem:[%s1] sm:$0xf]
      %v277 = vld [vmem:[%s1 + $0x4] sm:$0xf]
      %v278 = vld [vmem:[%s1 + $0x8] sm:$0xf]
      %v279 = vld [vmem:[%s1 + $0xc] sm:$0xf]
      %v280 = vld [vmem:[%s1 + $0x10] sm:$0xf]
      %v281 = vld [vmem:[%s1 + $0x14] sm:$0xf]
      %v282 = vld [vmem:[%s1 + $0x18] sm:$0xf]
      %v283 = vld [vmem:[%s1 + $0x1c] sm:$0xf]
      %v284 = vld [vmem:[%s2] sm:$0xff]
      %v285 = vld [vmem:[%s2 + $0x8] sm:$0xff]
      %v286 = vld [vmem:[%s2 + $0x10] sm:$0xff]
      %v287 = vld [vmem:[%s2 + $0x18] sm:$0xff]
      %v288 = vld [vmem:[%s2 + $0x20] sm:$0xff]
      %v289 = vld [vmem:[%s2 + $0x28] sm:$0xff]
      %v290 = vld [vmem:[%s2 + $0x30] sm:$0xff]
      %v291 = vld [vmem:[%s2 + $0x38] sm:$0xff]
      %293 = vset.pattern.permute.xlu0 0
      %294 = vperm.xlu0 %293, %v284
      %v295 = vpop.permute.xlu0 %294
      %298 = vset.pattern.permute.xlu0 0
      %299 = vperm.xlu0 %298, %v285
      %v300 = vpop.permute.xlu0 %299
      %303 = vset.pattern.permute.xlu0 0
      %304 = vperm.xlu0 %303, %v286
      %v305 = vpop.permute.xlu0 %304
      %308 = vset.pattern.permute.xlu0 0
      %309 = vperm.xlu0 %308, %v287
      %v310 = vpop.permute.xlu0 %309
      %313 = vset.pattern.permute.xlu0 0
      %314 = vperm.xlu0 %313, %v288
      %v315 = vpop.permute.xlu0 %314
      %318 = vset.pattern.permute.xlu0 0
      %319 = vperm.xlu0 %318, %v289
      %v320 = vpop.permute.xlu0 %319
      %323 = vset.pattern.permute.xlu0 0
      %324 = vperm.xlu0 %323, %v290
      %v325 = vpop.permute.xlu0 %324
      %328 = vset.pattern.permute.xlu0 0
      %329 = vperm.xlu0 %328, %v291
      %v330 = vpop.permute.xlu0 %329
      %v340 = vunpack.c.l.b16 %v276
      %v341 = vunpack.c.l.b16 %v277
      %v342 = vunpack.c.l.b16 %v278
      %v343 = vunpack.c.l.b16 %v279
      %v344 = vunpack.c.l.b16 %v280
      %v345 = vunpack.c.l.b16 %v281
      %v346 = vunpack.c.l.b16 %v282
      %v347 = vunpack.c.l.b16 %v283
      %v348 = vpack.c.b16 %v341, %v340
      %v349 = vpack.c.b16 %v343, %v342
      %v350 = vpack.c.b16 %v345, %v344
      %v351 = vpack.c.b16 %v347, %v346
      %v354 = vunpack.c.l.b16 %v274
      %v355 = vunpack.c.h.b16 %v274
      %v356 = vunpack.c.l.b16 %v275
      %v357 = vunpack.c.h.b16 %v275
      %v358 = vpack.c.b16 %v356, %v354
      %v359 = vpack.c.b16 %v357, %v355
      %vm362 = vcmask 130048
      %v364 = vsel %vm362, %v348, 0
      %v367 = vsel %vm362, %v349, 0
      %v370 = vsel %vm362, %v350, 0
      %v373 = vsel %vm362, %v351, 0
      %375 = vmatprep.subr.bf16.mxu0 %v359
      %376 = vmatpush1.bf16.msra.mxu0 %v358
      %377 = vmatprep.subr.bf16.mxu0 0
      %378 = vmatpush1.bf16.msra.mxu0 0
      %379 = vmatprep.subr.bf16.mxu0 0
      %380 = vmatpush1.bf16.msra.mxu0 0
      %381 = vmatprep.subr.bf16.mxu0 0
      %382 = vmatpush1.bf16.msra.mxu0 0
      %383 = vmatprep.subr.bf16.mxu0 0
      %384 = vmatpush1.bf16.msra.mxu0 0
      %385 = vmatprep.subr.bf16.mxu0 0
      %386 = vmatpush1.bf16.msra.mxu0 0
      %387 = vmatprep.subr.bf16.mxu0 0
      %388 = vmatpush1.bf16.msra.mxu0 0
      %389 = vmatprep.subr.bf16.mxu0 0
      %390 = vmatpush1.bf16.msra.mxu0 0
      %391 = vmatprep.subr.bf16.mxu0 0
      %392 = vmatpush1.bf16.msra.mxu0 0
      %393 = vmatprep.subr.bf16.mxu0 0
      %394 = vmatpush1.bf16.msra.mxu0 0
      %395 = vmatprep.subr.bf16.mxu0 0
      %396 = vmatpush1.bf16.msra.mxu0 0
      %397 = vmatprep.subr.bf16.mxu0 0
      %398 = vmatpush1.bf16.msra.mxu0 0
      %399 = vmatprep.subr.bf16.mxu0 0
      %400 = vmatpush1.bf16.msra.mxu0 0
      %401 = vmatprep.subr.bf16.mxu0 0
      %402 = vmatpush1.bf16.msra.mxu0 0
      %403 = vmatprep.subr.bf16.mxu0 0
      %404 = vmatpush1.bf16.msra.mxu0 0
      %405 = vmatprep.subr.bf16.mxu0 0
      %406 = vmatpush1.bf16.msra.mxu0 0
      %407 = vmatprep.mubr.bf16.mxu0 0
      %408 = vmatmul.mubr.bf16.gmra.mrb[0].mxu0 %v364
      %v409 = vpop.f32.mrb[0].mxu0
      %v410 = vadd.f32 %v295, %v409
      %v411 = vpop.f32.mrb[0].mxu0
      %v412 = vadd.f32 %v295, %v411
      %v413 = vpop.f32.mrb[0].mxu0
      %v414 = vadd.f32 %v300, %v413
      %v415 = vpop.f32.mrb[0].mxu0
      %v416 = vadd.f32 %v300, %v415
      %417 = vmatprep.mubr.bf16.mxu0 0
      %418 = vmatmul.mubr.bf16.gmra.mrb[0].mxu0 %v367
      %v419 = vpop.f32.mrb[0].mxu0
      %v420 = vadd.f32 %v305, %v419
      %v421 = vpop.f32.mrb[0].mxu0
      %v422 = vadd.f32 %v305, %v421
      %v423 = vpop.f32.mrb[0].mxu0
      %v424 = vadd.f32 %v310, %v423
      %v425 = vpop.f32.mrb[0].mxu0
      %v426 = vadd.f32 %v310, %v425
      %427 = vmatprep.mubr.bf16.mxu0 0
      %428 = vmatmul.mubr.bf16.gmra.mrb[0].mxu0 %v370
      %v429 = vpop.f32.mrb[0].mxu0
      %v430 = vadd.f32 %v315, %v429
      %v431 = vpop.f32.mrb[0].mxu0
      %v432 = vadd.f32 %v315, %v431
      %v433 = vpop.f32.mrb[0].mxu0
      %v434 = vadd.f32 %v320, %v433
      %v435 = vpop.f32.mrb[0].mxu0
      %v436 = vadd.f32 %v320, %v435
      %437 = vmatprep.mubr.bf16.mxu0 0
      %438 = vmatmul.mubr.bf16.gmra.mrb[0].mxu0 %v373
      %v439 = vpop.f32.mrb[0].mxu0
      %v440 = vadd.f32 %v325, %v439
      %v441 = vpop.f32.mrb[0].mxu0
      %v442 = vadd.f32 %v325, %v441
      %v443 = vpop.f32.mrb[0].mxu0
      %v444 = vadd.f32 %v330, %v443
      %v445 = vpop.f32.mrb[0].mxu0
      %v446 = vadd.f32 %v330, %v445
      %447 = vdwg.mxu0
      %v448 = vld [vmem:[%s261] sm:$0xff]
      %v449 = vld [vmem:[%s261 + $0x8] sm:$0xff]
      %v450 = vld [vmem:[%s261 + $0x10] sm:$0xff]
      %v451 = vld [vmem:[%s261 + $0x18] sm:$0xff]
      %v452 = vld [vmem:[%s261 + $0x20] sm:$0xff]
      %v453 = vld [vmem:[%s261 + $0x28] sm:$0xff]
      %v454 = vld [vmem:[%s261 + $0x30] sm:$0xff]
      %v455 = vld [vmem:[%s261 + $0x38] sm:$0xff]
      %v456 = vunpack.c.l.bf16 %v448
      %v457 = vunpack.c.h.bf16 %v448
      %v458 = vunpack.c.l.bf16 %v449
      %v459 = vunpack.c.h.bf16 %v449
      %v460 = vunpack.c.l.bf16 %v450
      %v461 = vunpack.c.h.bf16 %v450
      %v462 = vunpack.c.l.bf16 %v451
      %v463 = vunpack.c.h.bf16 %v451
      %v464 = vunpack.c.l.bf16 %v452
      %v465 = vunpack.c.h.bf16 %v452
      %v466 = vunpack.c.l.bf16 %v453
      %v467 = vunpack.c.h.bf16 %v453
      %v468 = vunpack.c.l.bf16 %v454
      %v469 = vunpack.c.h.bf16 %v454
      %v470 = vunpack.c.l.bf16 %v455
      %v471 = vunpack.c.h.bf16 %v455
      %v472 = vadd.f32 %v410, %v456
      %v473 = vadd.f32 %v412, %v457
      %v474 = vadd.f32 %v414, %v458
      %v475 = vadd.f32 %v416, %v459
      %v476 = vadd.f32 %v420, %v460
      %v477 = vadd.f32 %v422, %v461
      %v478 = vadd.f32 %v424, %v462
      %v479 = vadd.f32 %v426, %v463
      %v480 = vadd.f32 %v430, %v464
      %v481 = vadd.f32 %v432, %v465
      %v482 = vadd.f32 %v434, %v466
      %v483 = vadd.f32 %v436, %v467
      %v484 = vadd.f32 %v440, %v468
      %v485 = vadd.f32 %v442, %v469
      %v486 = vadd.f32 %v444, %v470
      %v487 = vadd.f32 %v446, %v471
      %v488 = vmax.f32 %v472, 0.0
      %v489 = vmax.f32 %v473, 0.0
      %v490 = vmax.f32 %v474, 0.0
      %v491 = vmax.f32 %v475, 0.0
      %v492 = vmax.f32 %v476, 0.0
      %v493 = vmax.f32 %v477, 0.0
      %v494 = vmax.f32 %v478, 0.0
      %v495 = vmax.f32 %v479, 0.0
      %v496 = vmax.f32 %v480, 0.0
      %v497 = vmax.f32 %v481, 0.0
      %v498 = vmax.f32 %v482, 0.0
      %v499 = vmax.f32 %v483, 0.0
      %v500 = vmax.f32 %v484, 0.0
      %v501 = vmax.f32 %v485, 0.0
      %v502 = vmax.f32 %v486, 0.0
      %v503 = vmax.f32 %v487, 0.0
      %v504 = vpack.c.bf16 %v490, %v488
      %v505 = vpack.c.bf16 %v491, %v489
      %v506 = vpack.c.bf16 %v494, %v492
      %v507 = vpack.c.bf16 %v495, %v493
      %v508 = vpack.c.bf16 %v498, %v496
      %v509 = vpack.c.bf16 %v499, %v497
      %v510 = vpack.c.bf16 %v502, %v500
      %v511 = vpack.c.bf16 %v503, %v501
      %v520 = vunpack.c.l.b16 %v504
      %v521 = vunpack.c.l.b16 %v505
      %v522 = vunpack.c.h.b16 %v504
      %v523 = vunpack.c.h.b16 %v505
      %v524 = vunpack.c.l.b16 %v506
      %v525 = vunpack.c.l.b16 %v507
      %v526 = vunpack.c.h.b16 %v506
      %v527 = vunpack.c.h.b16 %v507
      %v528 = vunpack.c.l.b16 %v508
      %v529 = vunpack.c.l.b16 %v509
      %v530 = vunpack.c.h.b16 %v508
      %v531 = vunpack.c.h.b16 %v509
      %v532 = vunpack.c.l.b16 %v510
      %v533 = vunpack.c.l.b16 %v511
      %v534 = vunpack.c.h.b16 %v510
      %v535 = vunpack.c.h.b16 %v511
      %v536 = vpack.c.b16 %v521, %v520
      %v537 = vpack.c.b16 %v523, %v522
      %v538 = vpack.c.b16 %v525, %v524
      %v539 = vpack.c.b16 %v527, %v526
      %v540 = vpack.c.b16 %v529, %v528
      %v541 = vpack.c.b16 %v531, %v530
      %v542 = vpack.c.b16 %v533, %v532
      %v543 = vpack.c.b16 %v535, %v534
      %552 = vst [vmem:[%s271] sm:$0xff] %v536
      %553 = vst [vmem:[%s271 + $0x8] sm:$0xff] %v537
      %554 = vst [vmem:[%s271 + $0x10] sm:$0xff] %v538
      %555 = vst [vmem:[%s271 + $0x18] sm:$0xff] %v539
      %556 = vst [vmem:[%s271 + $0x20] sm:$0xff] %v540
      %557 = vst [vmem:[%s271 + $0x28] sm:$0xff] %v541
      %558 = vst [vmem:[%s271 + $0x30] sm:$0xff] %v542
      %559 = vst [vmem:[%s271 + $0x38] sm:$0xff] %v543
      %s560 = smul.u32 2, %s20
      %p561 = scmp.lt.s32.totalorder %s19, 1
      %s562 = scalar_select %p561, %s19, 1
      %p563 = scmp.lt.s32.totalorder %s560, 1
      %s564 = scalar_select %p563, %s560, 1
      %s565 = smul.addr %s562, 16
      %s566 = sadd.s32 %s564, %s565
      %s567 = smul.addr %s566, 4
      %s568 = scalar_lea.vmem %s4, %s567
      // Predicated region
      $region37: #{_lambda_.17} parent=35 // pred_check
        %p569 = pneg %p145
      $region38: #{_lambda_.17} parent=35 // pred_check_branch
        %571 = sbr.rel (%p569) target = $region40
      $region39: #{_lambda_.17} parent=35 // pred_region
        %s572 = smul.u32 2, %s20
      $region40: #{_lambda_.17} parent=35 // pred_fallthru
        _
    $region36: #{_lambda_.17} parent=5 // pred_fallthru
      _
    %p573 = scmp.le.s32.totalorder 2, %s10
    // Predicated region
    $region41: #{_lambda_.17} parent=5 // pred_check
      %p574 = pneg %p573
    $region42: #{_lambda_.17} parent=5 // pred_check_branch
      %576 = sbr.rel (%p574) target = $region44
    $region43: #{_lambda_.17} parent=5 // pred_region
      %s577 = ssub.s32 %s10, 2
      // Predicated region
      $region45: #{_lambda_.17} parent=43 // pred_check
        %p578 = pneg %p151
      $region46: #{_lambda_.17} parent=43 // pred_check_branch
        %580 = sbr.rel (%p578) target = $region48
      $region47: #{_lambda_.17} parent=43 // pred_region
        %s581 = smul.u32 2, %s22
        %p582 = scmp.lt.s32.totalorder %s21, 1
        %s583 = scalar_select %p582, %s21, 1
        %p584 = scmp.lt.s32.totalorder %s581, 1
        %s585 = scalar_select %p584, %s581, 1
        %s586 = smul.addr %s583, 16
        %s587 = sadd.s32 %s585, %s586
        %s588 = smul.addr %s587, 4
        %s589 = scalar_lea.vmem %s4, %s588
      $region48: #{_lambda_.17} parent=43 // pred_fallthru
        _
    $region44: #{_lambda_.17} parent=5 // pred_fallthru
      _
  $region6: #{_lambda_.17} parent=0 // loop_footer
    %s14 = sadd.s32 1, %s10
  $region7: #{_lambda_.17} parent=0 // loop_footer_branch
    %9 = sbr.rel target = $region3
  $region8: #{_lambda_.17} parent=0 // loop_exit
    _

// kernel: _lambda_.19
$region0: #{_lambda_.19}
  #allocation0 [shape = 'u32[]', space=smem, size = 0x4, offset = 0x4, fixed_abs, tag = 'smem constant byte address 0x4 - core index']
  #allocation1 [shape = 'u32[144,128]{1,0:T(1,128)}', space=vmem, size = 0x12000, scoped, tag = 'internal scratch']
  %s0 = inlined_call_operand.vmem [shape: bf16[2,64,2048], index: 0, kind: input, shape index: {}]
  %s1 = inlined_call_operand.vmem [shape: bf16[4,64], index: 1, kind: input, shape index: {}]
  %s2 = inlined_call_operand.vmem [shape: bf16[16,64], index: 2, kind: input, shape index: {}]
  %s3 = inlined_call_operand.vmem [shape: f32[4,1], index: 3, kind: input, shape index: {}]
  %s4 = inlined_call_operand.vmem [shape: f32[16,1], index: 4, kind: input, shape index: {}]
  %s5 = inlined_call_operand.vmem [shape: bf16[2,4,2048], index: 5, kind: output, shape index: {0}]
  %s6 = inlined_call_operand.vmem [shape: bf16[2,16,2048], index: 6, kind: output, shape index: {1}]
  %7 = xla_tuple %s5, %s6
  %s8 = sld [smem:[#allocation0]]
  $region103: #{_lambda_.19} parent=0
    _
  %s10 = ssub.s32 1, %s8
  %s11 = scalar_select 0, %s10, %s8
  $region1: #{_lambda_.19} parent=0
    #allocation2 [shape = 'u8[131072]{0}', space=vmem, size = 0x20000, scoped, tag = 'input window, operand 0']
    #allocation3 [shape = 'u8[32768]{0}', space=vmem, size = 0x8000, scoped, tag = 'output window, operand 1']
    loop: start=0, step=1, limit=10
    $region2: #{_lambda_.19} parent=1 // loop_pre_header
      _
    $region3: #{_lambda_.19} parent=1 // loop_header
      %s13 = sphi 0, %s17
      %p14 = scmp.ge.s32.totalorder %s13, 10
      %s20 = sphi 0, %s32
      %s21 = sphi 0, %s28
      %s22 = sphi 0, %s20
      %s23 = sphi 0, %s21
      %s24 = sphi 0, %s22
      %s25 = sphi 0, %s23
      %s37 = sphi 0, %s39
      %s40 = sphi 0, %s37
      %s41 = sphi 0, %s40
      %s57 = sphi 0, %s41
      %s61 = sphi 0, %s61
      %s63 = sphi 0, %s61
      %s64 = sphi 0, %s63
      %s78 = sphi 0, %s64
      %s82 = sphi 0, %s82
      %s84 = sphi 0, %s82
      %s85 = sphi 0, %s84
      %s99 = sphi 0, %s85
      %s103 = sphi 0, %s103
      %s105 = sphi 0, %s103
      %s106 = sphi 0, %s105
      %s120 = sphi 0, %s106
      %s124 = sphi 0, %s124
      %s126 = sphi 0, %s124
      %s127 = sphi 0, %s126
      %s141 = sphi 0, %s127
      %s149 = sphi 0, %s151
      %s152 = sphi 0, %s149
      %s153 = sphi 0, %s152
      %s169 = sphi 0, %s153
      %s177 = sphi 0, %s179
      %s180 = sphi 0, %s177
      %s181 = sphi 0, %s180
      %s197 = sphi 0, %s181
    $region4: #{_lambda_.19} parent=1 // loop_header_branch
      %16 = sbr.rel (%p14) target = $region8
    $region5: #{_lambda_.19} parent=1 // loop_body
      %s18 = ssub.s32 %s13, 1
      %s19 = ssub.s32 %s13, 2
      %s26 = sadd.s32 1, %s21
      %p27 = scmp.ge.s32.totalorder %s26, 4
      %s28 = scalar_select %p27, 0, %s26
      %s29 = sadd.s32 1, %s20
      %s30 = scalar_select %p27, %s29, %s20
      %p31 = scmp.ge.s32.totalorder %s30, 2
      %s32 = scalar_select %p31, 0, %s30
      %s33 = ssub.s32 %s20, %s32
      %s34 = ssub.s32 %s21, %s28
      %s35 = sor.u32 %s33, %s34
      %p36 = scmp.eq.s32.totalorder %s35, 0
      %s38 = sadd.s32 %s37, 1
      %s39 = scalar_select %p36, %s37, %s38
      %p42 = pneg %p36
      %p43 = scmp.eq.s32.totalorder %s13, 7
      %p44 = por %p42, %p43
      %p45 = scmp.ne.s32.totalorder %s37, %s40
      %p46 = scmp.eq.s32.totalorder %s13, 0
      %p47 = por %p45, %p46
      %p48 = scmp.ne.s32.totalorder %s37, %s40
      %p49 = scmp.eq.s32.totalorder %s18, 7
      %p50 = por %p48, %p49
      %p51 = scmp.ne.s32.totalorder %s40, %s41
      %p52 = scmp.eq.s32.totalorder %s18, 0
      %p53 = por %p51, %p52
      %p54 = scmp.ne.s32.totalorder %s40, %s41
      %p55 = scmp.eq.s32.totalorder %s19, 7
      %p56 = por %p54, %p55
      %p58 = scmp.ne.s32.totalorder %s41, %s57
      %p59 = scmp.eq.s32.totalorder %s19, 0
      %p60 = por %p58, %p59
      %s62 = sadd.s32 %s61, 1
      %p65 = scmp.eq.s32.totalorder %s13, 7
      %p66 = scmp.ne.s32.totalorder %s61, %s63
      %p67 = scmp.eq.s32.totalorder %s13, 0
      %p68 = por %p66, %p67
      %p69 = scmp.ne.s32.totalorder %s61, %s63
      %p70 = scmp.eq.s32.totalorder %s18, 7
      %p71 = por %p69, %p70
      %p72 = scmp.ne.s32.totalorder %s63, %s64
      %p73 = scmp.eq.s32.totalorder %s18, 0
      %p74 = por %p72, %p73
      %p75 = scmp.ne.s32.totalorder %s63, %s64
      %p76 = scmp.eq.s32.totalorder %s19, 7
      %p77 = por %p75, %p76
      %p79 = scmp.ne.s32.totalorder %s64, %s78
      %p80 = scmp.eq.s32.totalorder %s19, 0
      %p81 = por %p79, %p80
      %s83 = sadd.s32 %s82, 1
      %p86 = scmp.eq.s32.totalorder %s13, 7
      %p87 = scmp.ne.s32.totalorder %s82, %s84
      %p88 = scmp.eq.s32.totalorder %s13, 0
      %p89 = por %p87, %p88
      %p90 = scmp.ne.s32.totalorder %s82, %s84
      %p91 = scmp.eq.s32.totalorder %s18, 7
      %p92 = por %p90, %p91
      %p93 = scmp.ne.s32.totalorder %s84, %s85
      %p94 = scmp.eq.s32.totalorder %s18, 0
      %p95 = por %p93, %p94
      %p96 = scmp.ne.s32.totalorder %s84, %s85
      %p97 = scmp.eq.s32.totalorder %s19, 7
      %p98 = por %p96, %p97
      %p100 = scmp.ne.s32.totalorder %s85, %s99
      %p101 = scmp.eq.s32.totalorder %s19, 0
      %p102 = por %p100, %p101
      %s104 = sadd.s32 %s103, 1
      %p107 = scmp.eq.s32.totalorder %s13, 7
      %p108 = scmp.ne.s32.totalorder %s103, %s105
      %p109 = scmp.eq.s32.totalorder %s13, 0
      %p110 = por %p108, %p109
      %p111 = scmp.ne.s32.totalorder %s103, %s105
      %p112 = scmp.eq.s32.totalorder %s18, 7
      %p113 = por %p111, %p112
      %p114 = scmp.ne.s32.totalorder %s105, %s106
      %p115 = scmp.eq.s32.totalorder %s18, 0
      %p116 = por %p114, %p115
      %p117 = scmp.ne.s32.totalorder %s105, %s106
      %p118 = scmp.eq.s32.totalorder %s19, 7
      %p119 = por %p117, %p118
      %p121 = scmp.ne.s32.totalorder %s106, %s120
      %p122 = scmp.eq.s32.totalorder %s19, 0
      %p123 = por %p121, %p122
      %s125 = sadd.s32 %s124, 1
      %p128 = scmp.eq.s32.totalorder %s13, 7
      %p129 = scmp.ne.s32.totalorder %s124, %s126
      %p130 = scmp.eq.s32.totalorder %s13, 0
      %p131 = por %p129, %p130
      %p132 = scmp.ne.s32.totalorder %s124, %s126
      %p133 = scmp.eq.s32.totalorder %s18, 7
      %p134 = por %p132, %p133
      %p135 = scmp.ne.s32.totalorder %s126, %s127
      %p136 = scmp.eq.s32.totalorder %s18, 0
      %p137 = por %p135, %p136
      %p138 = scmp.ne.s32.totalorder %s126, %s127
      %p139 = scmp.eq.s32.totalorder %s19, 7
      %p140 = por %p138, %p139
      %p142 = scmp.ne.s32.totalorder %s127, %s141
      %p143 = scmp.eq.s32.totalorder %s19, 0
      %p144 = por %p142, %p143
      %s145 = ssub.s32 %s20, %s32
      %s146 = ssub.s32 %s21, %s28
      %s147 = sor.u32 %s145, %s146
      %p148 = scmp.eq.s32.totalorder %s147, 0
      %s150 = sadd.s32 %s149, 1
      %s151 = scalar_select %p148, %s149, %s150
      %p154 = pneg %p148
      %p155 = scmp.eq.s32.totalorder %s13, 7
      %p156 = por %p154, %p155
      %p157 = scmp.ne.s32.totalorder %s149, %s152
      %p158 = scmp.eq.s32.totalorder %s13, 0
      %p159 = por %p157, %p158
      %p160 = scmp.ne.s32.totalorder %s149, %s152
      %p161 = scmp.eq.s32.totalorder %s18, 7
      %p162 = por %p160, %p161
      %p163 = scmp.ne.s32.totalorder %s152, %s153
      %p164 = scmp.eq.s32.totalorder %s18, 0
      %p165 = por %p163, %p164
      %p166 = scmp.ne.s32.totalorder %s152, %s153
      %p167 = scmp.eq.s32.totalorder %s19, 7
      %p168 = por %p166, %p167
      %p170 = scmp.ne.s32.totalorder %s153, %s169
      %p171 = scmp.eq.s32.totalorder %s19, 0
      %p172 = por %p170, %p171
      %s173 = ssub.s32 %s20, %s32
      %s174 = ssub.s32 %s21, %s28
      %s175 = sor.u32 %s173, %s174
      %p176 = scmp.eq.s32.totalorder %s175, 0
      %s178 = sadd.s32 %s177, 1
      %s179 = scalar_select %p176, %s177, %s178
      %p182 = pneg %p176
      %p183 = scmp.eq.s32.totalorder %s13, 7
      %p184 = por %p182, %p183
      %p185 = scmp.ne.s32.totalorder %s177, %s180
      %p186 = scmp.eq.s32.totalorder %s13, 0
      %p187 = por %p185, %p186
      %p188 = scmp.ne.s32.totalorder %s177, %s180
      %p189 = scmp.eq.s32.totalorder %s18, 7
      %p190 = por %p188, %p189
      %p191 = scmp.ne.s32.totalorder %s180, %s181
      %p192 = scmp.eq.s32.totalorder %s18, 0
      %p193 = por %p191, %p192
      %p194 = scmp.ne.s32.totalorder %s180, %s181
      %p195 = scmp.eq.s32.totalorder %s19, 7
      %p196 = por %p194, %p195
      %p198 = scmp.ne.s32.totalorder %s181, %s197
      %p199 = scmp.eq.s32.totalorder %s19, 0
      %p200 = por %p198, %p199
      %p201 = scmp.le.s32.totalorder 1, %s13
      %p202 = scmp.lt.s32.totalorder %s13, 9
      %p203 = pnand %p201, %p202
      %p204 = pneg %p203
      // Predicated region
      $region9: #{_lambda_.19} parent=5 // pred_check
        _
      $region10: #{_lambda_.19} parent=5 // pred_check_branch
        %206 = sbr.rel (%p203) target = $region12
      $region11: #{_lambda_.19} parent=5 // pred_region
        %s207 = ssub.s32 %s13, 1
        // Predicated region
        $region13: #{_lambda_.19} parent=11 // pred_check
          %p208 = pneg %p74
        $region14: #{_lambda_.19} parent=11 // pred_check_branch
          %210 = sbr.rel (%p208) target = $region16
        $region15: #{_lambda_.19} parent=11 // pred_region
          _
        $region16: #{_lambda_.19} parent=11 // pred_fallthru
          _
        // Predicated region
        $region17: #{_lambda_.19} parent=11 // pred_check
          %p211 = pneg %p95
        $region18: #{_lambda_.19} parent=11 // pred_check_branch
          %213 = sbr.rel (%p211) target = $region20
        $region19: #{_lambda_.19} parent=11 // pred_region
          _
        $region20: #{_lambda_.19} parent=11 // pred_fallthru
          _
        // Predicated region
        $region21: #{_lambda_.19} parent=11 // pred_check
          %p214 = pneg %p116
        $region22: #{_lambda_.19} parent=11 // pred_check_branch
          %216 = sbr.rel (%p214) target = $region24
        $region23: #{_lambda_.19} parent=11 // pred_region
          _
        $region24: #{_lambda_.19} parent=11 // pred_fallthru
          _
        // Predicated region
        $region25: #{_lambda_.19} parent=11 // pred_check
          %p217 = pneg %p137
        $region26: #{_lambda_.19} parent=11 // pred_check_branch
          %219 = sbr.rel (%p217) target = $region28
        $region27: #{_lambda_.19} parent=11 // pred_region
          _
        $region28: #{_lambda_.19} parent=11 // pred_fallthru
          _
      $region12: #{_lambda_.19} parent=5 // pred_fallthru
        _
      %p220 = scmp.lt.s32.totalorder %s13, 8
      // Predicated region
      $region29: #{_lambda_.19} parent=5 // pred_check
        %p221 = pneg %p220
      $region30: #{_lambda_.19} parent=5 // pred_check_branch
        %223 = sbr.rel (%p221) target = $region32
      $region31: #{_lambda_.19} parent=5 // pred_region
        // Predicated region
        $region33: #{_lambda_.19} parent=31 // pred_check
          %p224 = pneg %p47
        $region34: #{_lambda_.19} parent=31 // pred_check_branch
          %226 = sbr.rel (%p224) target = $region36
        $region35: #{_lambda_.19} parent=31 // pred_region
          %s227 = sand.u32 %s37, 1
          %s228 = sand.u32 %s37, 1
          %s229 = smul.addr %s228, 128
          %s230 = scalar_lea.vmem [#allocation2], %s229
          %s231 = smul.u32 4, %s21
          %s232 = smul.addr %s20, 128
          %s233 = sadd.s32 %s231, %s232
          %s234 = smul.addr %s233, 4
          %s235 = scalar_lea.vmem %s0, %s234
          // Predicated region
          $region37: #{_lambda_.19} parent=35 // pred_check
            _
          $region38: #{_lambda_.19} parent=35 // pred_check_branch
            %237 = sbr.rel (0) target = $region40
          $region39: #{_lambda_.19} parent=35 // pred_region
            // Predicated region
            $region41: #{_lambda_.19} parent=39 // pred_check
              _
            $region42: #{_lambda_.19} parent=39 // pred_check_branch
              %239 = sbr.rel (0) target = $region44
            $region43: #{_lambda_.19} parent=39 // pred_region
              loop: start=0, step=1, limit=1
              $region45: #{_lambda_.19} parent=43 // loop_pre_header
                _
              $region46: #{_lambda_.19} parent=43 // loop_header
                %s241 = sphi 0, %s245
                %p242 = scmp.ge.s32.totalorder %s241, 1
                %s246 = sphi %s235, %s235
                %s247 = sphi %s230, %s230
              $region47: #{_lambda_.19} parent=43 // loop_header_branch
                %244 = sbr.rel (%p242) target = $region51
              $region48: #{_lambda_.19} parent=43 // loop_body
                %v248 = vld [vmem:[%s246] sm:$0xff]
                %249 = vst [vmem:[%s247] sm:$0xff] %v248
                %v250 = vld [vmem:[%s246 + $0x8] sm:$0xff]
                %251 = vst [vmem:[%s247 + $0x8] sm:$0xff] %v250
                %v252 = vld [vmem:[%s246 + $0x40] sm:$0xff]
                %253 = vst [vmem:[%s247 + $0x10] sm:$0xff] %v252
                %v254 = vld [vmem:[%s246 + $0x48] sm:$0xff]
                %255 = vst [vmem:[%s247 + $0x18] sm:$0xff] %v254
                %v256 = vld [vmem:[%s246 + $0x80] sm:$0xff]
                %257 = vst [vmem:[%s247 + $0x20] sm:$0xff] %v256
                %v258 = vld [vmem:[%s246 + $0x88] sm:$0xff]
                %259 = vst [vmem:[%s247 + $0x28] sm:$0xff] %v258
                %v260 = vld [vmem:[%s246 + $0xc0] sm:$0xff]
                %261 = vst [vmem:[%s247 + $0x30] sm:$0xff] %v260
                %v262 = vld [vmem:[%s246 + $0xc8] sm:$0xff]
                %263 = vst [vmem:[%s247 + $0x38] sm:$0xff] %v262
                %v264 = vld [vmem:[%s246 + $0x100] sm:$0xff]
                %265 = vst [vmem:[%s247 + $0x40] sm:$0xff] %v264
                %v266 = vld [vmem:[%s246 + $0x108] sm:$0xff]
                %267 = vst [vmem:[%s247 + $0x48] sm:$0xff] %v266
                %v268 = vld [vmem:[%s246 + $0x140] sm:$0xff]
                %269 = vst [vmem:[%s247 + $0x50] sm:$0xff] %v268
                %v270 = vld [vmem:[%s246 + $0x148] sm:$0xff]
                %271 = vst [vmem:[%s247 + $0x58] sm:$0xff] %v270
                %v272 = vld [vmem:[%s246 + $0x180] sm:$0xff]
                %273 = vst [vmem:[%s247 + $0x60] sm:$0xff] %v272
                %v274 = vld [vmem:[%s246 + $0x188] sm:$0xff]
                %275 = vst [vmem:[%s247 + $0x68] sm:$0xff] %v274
                %v276 = vld [vmem:[%s246 + $0x1c0] sm:$0xff]
                %277 = vst [vmem:[%s247 + $0x70] sm:$0xff] %v276
                %v278 = vld [vmem:[%s246 + $0x1c8] sm:$0xff]
                %279 = vst [vmem:[%s247 + $0x78] sm:$0xff] %v278
              $region49: #{_lambda_.19} parent=43 // loop_footer
                %s245 = sadd.s32 1, %s241
              $region50: #{_lambda_.19} parent=43 // loop_footer_branch
                %240 = sbr.rel target = $region46
              $region51: #{_lambda_.19} parent=43 // loop_exit
                _
            $region44: #{_lambda_.19} parent=39 // pred_fallthru
              _
            // Predicated region
            $region52: #{_lambda_.19} parent=39 // pred_check
              _
            $region53: #{_lambda_.19} parent=39 // pred_check_branch
              %281 = sbr.rel target = $region55
            $region54: #{_lambda_.19} parent=39 // pred_region
              _
            $region55: #{_lambda_.19} parent=39 // pred_fallthru
              _
          $region40: #{_lambda_.19} parent=35 // pred_fallthru
            _
          %282 = vnop
        $region36: #{_lambda_.19} parent=31 // pred_fallthru
          _
      $region32: #{_lambda_.19} parent=5 // pred_fallthru
        _
      %p283 = scmp.le.s32.totalorder 1, %s13
      %p284 = scmp.lt.s32.totalorder %s13, 9
      %p285 = pnand %p283, %p284
      %p286 = pneg %p285
      // Predicated region
      $region56: #{_lambda_.19} parent=5 // pred_check
        _
      $region57: #{_lambda_.19} parent=5 // pred_check_branch
        %288 = sbr.rel (%p285) target = $region59
      $region58: #{_lambda_.19} parent=5 // pred_region
        %s289 = ssub.s32 %s13, 1
        %s290 = sand.u32 %s40, 1
        %s291 = sand.u32 %s40, 1
        %s292 = smul.addr %s291, 128
        %s293 = scalar_lea.vmem [#allocation2], %s292
        // Predicated region
        $region60: #{_lambda_.19} parent=58 // pred_check
          %p294 = pneg %p53
        $region61: #{_lambda_.19} parent=58 // pred_check_branch
          %296 = sbr.rel (%p294) target = $region63
        $region62: #{_lambda_.19} parent=58 // pred_region
          _
        $region63: #{_lambda_.19} parent=58 // pred_fallthru
          _
        %s297 = sand.u32 %s40, 1
        %s298 = sand.u32 %s40, 1
        %s299 = smul.addr %s298, 128
        %s300 = scalar_lea.vmem [#allocation2], %s299
        %p301 = pneg %p53
        %p302 = pneg %p50
        %p303 = pneg %p74
        %p304 = pneg %p71
        %p305 = pneg %p95
        %p306 = pneg %p92
        %p307 = pneg %p116
        %p308 = pneg %p113
        %p309 = pneg %p137
        %p310 = pneg %p134
        %p311 = pneg %p165
        %p312 = pneg %p162
        %s313 = smul.u32 4, %s23
        %p314 = scmp.lt.s32.totalorder %s22, 1
        %s315 = scalar_select %p314, %s22, 1
        %p316 = scmp.lt.s32.totalorder %s313, 15
        %s317 = scalar_select %p316, %s313, 15
        %s318 = smul.addr %s315, 16
        %s319 = sadd.s32 %s317, %s318
        %s320 = smul.addr %s319, 2
        %s321 = scalar_lea.vmem %s5, %s320
        %p322 = pneg %p193
        %p323 = pneg %p190
        %s324 = sand.u32 %s180, 1
        %s325 = sand.u32 %s180, 1
        %s326 = smul.addr %s325, 32
        %s327 = scalar_lea.vmem [#allocation3], %s326
        %s328 = smul.u32 4, %s23
        %s329 = smul.u32 4, %s23
        %p330 = scmp.lt.s32.totalorder %s22, 1
        %s331 = scalar_select %p330, %s22, 1
        %p332 = scmp.lt.s32.totalorder %s329, 15
        %s333 = scalar_select %p332, %s329, 15
        %s334 = smul.addr %s331, 16
        %s335 = sadd.s32 %s333, %s334
        %s336 = smul.addr %s335, 2
        %s337 = scalar_lea.vmem %s5, %s336
        %s338 = smul.u32 4, %s23
        %s339 = smul.u32 4, %s23
        %v341 = vld [vmem:[%s293] sm:$0xff]
        %v342 = vld [vmem:[%s293 + $0x8] sm:$0xff]
        %v343 = vld [vmem:[%s293 + $0x10] sm:$0xff]
        %v344 = vld [vmem:[%s293 + $0x18] sm:$0xff]
        %v345 = vld [vmem:[%s293 + $0x20] sm:$0xff]
        %v346 = vld [vmem:[%s293 + $0x28] sm:$0xff]
        %v347 = vld [vmem:[%s293 + $0x30] sm:$0xff]
        %v348 = vld [vmem:[%s293 + $0x38] sm:$0xff]
        %v349 = vld [vmem:[%s293 + $0x40] sm:$0xff]
        %v350 = vld [vmem:[%s293 + $0x48] sm:$0xff]
        %v351 = vld [vmem:[%s293 + $0x50] sm:$0xff]
        %v352 = vld [vmem:[%s293 + $0x58] sm:$0xff]
        %v353 = vld [vmem:[%s293 + $0x60] sm:$0xff]
        %v354 = vld [vmem:[%s293 + $0x68] sm:$0xff]
        %v355 = vld [vmem:[%s293 + $0x70] sm:$0xff]
        %v356 = vld [vmem:[%s293 + $0x78] sm:$0xff]
        %v357 = vmax.bf16 %v341, 0
        %v358 = vmax.bf16 %v342, 0
        %v359 = vmax.bf16 %v343, 0
        %v360 = vmax.bf16 %v344, 0
        %v361 = vmax.bf16 %v345, 0
        %v362 = vmax.bf16 %v346, 0
        %v363 = vmax.bf16 %v347, 0
        %v364 = vmax.bf16 %v348, 0
        %v365 = vmax.bf16 %v349, 0
        %v366 = vmax.bf16 %v350, 0
        %v367 = vmax.bf16 %v351, 0
        %v368 = vmax.bf16 %v352, 0
        %v369 = vmax.bf16 %v353, 0
        %v370 = vmax.bf16 %v354, 0
        %v371 = vmax.bf16 %v355, 0
        %v372 = vmax.bf16 %v356, 0
        %v373 = vld [vmem:[%s1] sm:$0x3]
        %v374 = vld [vmem:[%s2] sm:$0xf]
        %v375 = vld [vmem:[%s2 + $0x4] sm:$0xf]
        %v376 = vld [vmem:[%s3] sm:$0xf]
        %378 = vset.pattern.permute.xlu0 0
        %379 = vperm.xlu0 %378, %v376
        %v380 = vpop.permute.xlu0 %379
        %v398 = vunpack.c.l.b16 %v357
        %v399 = vunpack.c.h.b16 %v357
        %v400 = vunpack.c.l.b16 %v358
        %v401 = vunpack.c.h.b16 %v358
        %v402 = vunpack.c.l.b16 %v359
        %v403 = vunpack.c.h.b16 %v359
        %v404 = vunpack.c.l.b16 %v360
        %v405 = vunpack.c.h.b16 %v360
        %v406 = vunpack.c.l.b16 %v361
        %v407 = vunpack.c.h.b16 %v361
        %v408 = vunpack.c.l.b16 %v362
        %v409 = vunpack.c.h.b16 %v362
        %v410 = vunpack.c.l.b16 %v363
        %v411 = vunpack.c.h.b16 %v363
        %v412 = vunpack.c.l.b16 %v364
        %v413 = vunpack.c.h.b16 %v364
        %v414 = vunpack.c.l.b16 %v365
        %v415 = vunpack.c.h.b16 %v365
        %v416 = vunpack.c.l.b16 %v366
        %v417 = vunpack.c.h.b16 %v366
        %v418 = vunpack.c.l.b16 %v367
        %v419 = vunpack.c.h.b16 %v367
        %v420 = vunpack.c.l.b16 %v368
        %v421 = vunpack.c.h.b16 %v368
        %v422 = vunpack.c.l.b16 %v369
        %v423 = vunpack.c.h.b16 %v369
        %v424 = vunpack.c.l.b16 %v370
        %v425 = vunpack.c.h.b16 %v370
        %v426 = vunpack.c.l.b16 %v371
        %v427 = vunpack.c.h.b16 %v371
        %v428 = vunpack.c.l.b16 %v372
        %v429 = vunpack.c.h.b16 %v372
        %v430 = vpack.c.b16 %v402, %v398
        %v431 = vpack.c.b16 %v403, %v399
        %v432 = vpack.c.b16 %v404, %v400
        %v433 = vpack.c.b16 %v405, %v401
        %v434 = vpack.c.b16 %v410, %v406
        %v435 = vpack.c.b16 %v411, %v407
        %v436 = vpack.c.b16 %v412, %v408
        %v437 = vpack.c.b16 %v413, %v409
        %v438 = vpack.c.b16 %v418, %v414
        %v439 = vpack.c.b16 %v419, %v415
        %v440 = vpack.c.b16 %v420, %v416
        %v441 = vpack.c.b16 %v421, %v417
        %v442 = vpack.c.b16 %v426, %v422
        %v443 = vpack.c.b16 %v427, %v423
        %v444 = vpack.c.b16 %v428, %v424
        %v445 = vpack.c.b16 %v429, %v425
        %vm462 = vcmask 523264
        %v464 = vsel %vm462, %v373, 0
        %466 = vmatprep.subr.bf16.mxu0 %v431
        %467 = vmatpush1.bf16.msra.mxu0 %v430
        %468 = vmatprep.subr.bf16.mxu0 %v435
        %469 = vmatpush1.bf16.msra.mxu0 %v434
        %470 = vmatprep.subr.bf16.mxu0 %v439
        %471 = vmatpush1.bf16.msra.mxu0 %v438
        %472 = vmatprep.subr.bf16.mxu0 %v443
        %473 = vmatpush1.bf16.msra.mxu0 %v442
        %474 = vmatprep.subr.bf16.mxu0 0
        %475 = vmatpush1.bf16.msra.mxu0 0
        %476 = vmatprep.subr.bf16.mxu0 0
        %477 = vmatpush1.bf16.msra.mxu0 0
        %478 = vmatprep.subr.bf16.mxu0 0
        %479 = vmatpush1.bf16.msra.mxu0 0
        %480 = vmatprep.subr.bf16.mxu0 0
        %481 = vmatpush1.bf16.msra.mxu0 0
        %482 = vmatprep.subr.bf16.mxu0 0
        %483 = vmatpush1.bf16.msra.mxu0 0
        %484 = vmatprep.subr.bf16.mxu0 0
        %485 = vmatpush1.bf16.msra.mxu0 0
        %486 = vmatprep.subr.bf16.mxu0 0
        %487 = vmatpush1.bf16.msra.mxu0 0
        %488 = vmatprep.subr.bf16.mxu0 0
        %489 = vmatpush1.bf16.msra.mxu0 0
        %490 = vmatprep.subr.bf16.mxu0 0
        %491 = vmatpush1.bf16.msra.mxu0 0
        %492 = vmatprep.subr.bf16.mxu0 0
        %493 = vmatpush1.bf16.msra.mxu0 0
        %494 = vmatprep.subr.bf16.mxu0 0
        %495 = vmatpush1.bf16.msra.mxu0 0
        %496 = vmatprep.subr.bf16.mxu0 0
        %497 = vmatpush1.bf16.msra.mxu0 0
        %498 = vmatprep.mubr.bf16.mxu0 0
        %499 = vmatmul.mubr.bf16.gmra.mrb[0].mxu0 %v464
        %v500 = vpop.f32.mrb[0].mxu0
        %v501 = vadd.f32 %v380, %v500
        %v502 = vpop.f32.mrb[0].mxu0
        %v503 = vadd.f32 %v380, %v502
        %v504 = vpop.f32.mrb[0].mxu0
        %v505 = vpop.f32.mrb[0].mxu0
        %506 = vdwg.mxu0
        %507 = vmatprep.subr.bf16.mxu0 %v433
        %508 = vmatpush1.bf16.msra.mxu0 %v432
        %509 = vmatprep.subr.bf16.mxu0 %v437
        %510 = vmatpush1.bf16.msra.mxu0 %v436
        %511 = vmatprep.subr.bf16.mxu0 %v441
        %512 = vmatpush1.bf16.msra.mxu0 %v440
        %513 = vmatprep.subr.bf16.mxu0 %v445
        %514 = vmatpush1.bf16.msra.mxu0 %v444
        %515 = vmatprep.subr.bf16.mxu0 0
        %516 = vmatpush1.bf16.msra.mxu0 0
        %517 = vmatprep.subr.bf16.mxu0 0
        %518 = vmatpush1.bf16.msra.mxu0 0
        %519 = vmatprep.subr.bf16.mxu0 0
        %520 = vmatpush1.bf16.msra.mxu0 0
        %521 = vmatprep.subr.bf16.mxu0 0
        %522 = vmatpush1.bf16.msra.mxu0 0
        %523 = vmatprep.subr.bf16.mxu0 0
        %524 = vmatpush1.bf16.msra.mxu0 0
        %525 = vmatprep.subr.bf16.mxu0 0
        %526 = vmatpush1.bf16.msra.mxu0 0
        %527 = vmatprep.subr.bf16.mxu0 0
        %528 = vmatpush1.bf16.msra.mxu0 0
        %529 = vmatprep.subr.bf16.mxu0 0
        %530 = vmatpush1.bf16.msra.mxu0 0
        %531 = vmatprep.subr.bf16.mxu0 0
        %532 = vmatpush1.bf16.msra.mxu0 0
        %533 = vmatprep.subr.bf16.mxu0 0
        %534 = vmatpush1.bf16.msra.mxu0 0
        %535 = vmatprep.subr.bf16.mxu0 0
        %536 = vmatpush1.bf16.msra.mxu0 0
        %537 = vmatprep.subr.bf16.mxu0 0
        %538 = vmatpush1.bf16.msra.mxu0 0
        %539 = vmatprep.mubr.bf16.mxu0 0
        %540 = vmatmul.mubr.bf16.gmra.mrb[0].mxu0 %v464
        %v541 = vpop.f32.mrb[0].mxu0
        %v542 = vadd.f32 %v380, %v541
        %v543 = vpop.f32.mrb[0].mxu0
        %v544 = vadd.f32 %v380, %v543
        %v545 = vpop.f32.mrb[0].mxu0
        %v546 = vpop.f32.mrb[0].mxu0
        %547 = vdwg.mxu0
        %v548 = vld [vmem:[%s4] sm:$0xff]
        %v549 = vld [vmem:[%s4 + $0x8] sm:$0xff]
        %551 = vset.pattern.permute.xlu0 0
        %552 = vperm.xlu0 %551, %v548
        %v553 = vpop.permute.xlu0 %552
        %556 = vset.pattern.permute.xlu0 0
        %557 = vperm.xlu0 %556, %v549
        %v558 = vpop.permute.xlu0 %557
        %v562 = vunpack.c.l.b16 %v374
        %v563 = vunpack.c.l.b16 %v375
        %v564 = vpack.c.b16 %v563, %v562
        %v566 = vsel %vm462, %v564, 0
        %568 = vmatprep.subr.bf16.mxu0 %v431
        %569 = vmatpush1.bf16.msra.mxu0 %v430
        %570 = vmatprep.subr.bf16.mxu0 %v435
        %571 = vmatpush1.bf16.msra.mxu0 %v434
        %572 = vmatprep.subr.bf16.mxu0 %v439
        %573 = vmatpush1.bf16.msra.mxu0 %v438
        %574 = vmatprep.subr.bf16.mxu0 %v443
        %575 = vmatpush1.bf16.msra.mxu0 %v442
        %576 = vmatprep.subr.bf16.mxu0 0
        %577 = vmatpush1.bf16.msra.mxu0 0
        %578 = vmatprep.subr.bf16.mxu0 0
        %579 = vmatpush1.bf16.msra.mxu0 0
        %580 = vmatprep.subr.bf16.mxu0 0
        %581 = vmatpush1.bf16.msra.mxu0 0
        %582 = vmatprep.subr.bf16.mxu0 0
        %583 = vmatpush1.bf16.msra.mxu0 0
        %584 = vmatprep.subr.bf16.mxu0 0
        %585 = vmatpush1.bf16.msra.mxu0 0
        %586 = vmatprep.subr.bf16.mxu0 0
        %587 = vmatpush1.bf16.msra.mxu0 0
        %588 = vmatprep.subr.bf16.mxu0 0
        %589 = vmatpush1.bf16.msra.mxu0 0
        %590 = vmatprep.subr.bf16.mxu0 0
        %591 = vmatpush1.bf16.msra.mxu0 0
        %592 = vmatprep.subr.bf16.mxu0 0
        %593 = vmatpush1.bf16.msra.mxu0 0
        %594 = vmatprep.subr.bf16.mxu0 0
        %595 = vmatpush1.bf16.msra.mxu0 0
        %596 = vmatprep.subr.bf16.mxu0 0
        %597 = vmatpush1.bf16.msra.mxu0 0
        %598 = vmatprep.subr.bf16.mxu0 0
        %599 = vmatpush1.bf16.msra.mxu0 0
        %600 = vmatprep.mubr.bf16.mxu0 0
        %601 = vmatmul.mubr.bf16.gmra.mrb[0].mxu0 %v566
        %v602 = vpop.f32.mrb[0].mxu0
        %v603 = vadd.f32 %v553, %v602
        %v604 = vpop.f32.mrb[0].mxu0
        %v605 = vadd.f32 %v553, %v604
        %v606 = vpop.f32.mrb[0].mxu0
        %v607 = vadd.f32 %v558, %v606
        %v608 = vpop.f32.mrb[0].mxu0
        %v609 = vadd.f32 %v558, %v608
        %610 = vdwg.mxu0
        %611 = vmatprep.subr.bf16.mxu0 %v433
        %612 = vmatpush1.bf16.msra.mxu0 %v432
        %613 = vmatprep.subr.bf16.mxu0 %v437
        %614 = vmatpush1.bf16.msra.mxu0 %v436
        %615 = vmatprep.subr.bf16.mxu0 %v441
        %616 = vmatpush1.bf16.msra.mxu0 %v440
        %617 = vmatprep.subr.bf16.mxu0 %v445
        %618 = vmatpush1.bf16.msra.mxu0 %v444
        %619 = vmatprep.subr.bf16.mxu0 0
        %620 = vmatpush1.bf16.msra.mxu0 0
        %621 = vmatprep.subr.bf16.mxu0 0
        %622 = vmatpush1.bf16.msra.mxu0 0
        %623 = vmatprep.subr.bf16.mxu0 0
        %624 = vmatpush1.bf16.msra.mxu0 0
        %625 = vmatprep.subr.bf16.mxu0 0
        %626 = vmatpush1.bf16.msra.mxu0 0
        %627 = vmatprep.subr.bf16.mxu0 0
        %628 = vmatpush1.bf16.msra.mxu0 0
        %629 = vmatprep.subr.bf16.mxu0 0
        %630 = vmatpush1.bf16.msra.mxu0 0
        %631 = vmatprep.subr.bf16.mxu0 0
        %632 = vmatpush1.bf16.msra.mxu0 0
        %633 = vmatprep.subr.bf16.mxu0 0
        %634 = vmatpush1.bf16.msra.mxu0 0
        %635 = vmatprep.subr.bf16.mxu0 0
        %636 = vmatpush1.bf16.msra.mxu0 0
        %637 = vmatprep.subr.bf16.mxu0 0
        %638 = vmatpush1.bf16.msra.mxu0 0
        %639 = vmatprep.subr.bf16.mxu0 0
        %640 = vmatpush1.bf16.msra.mxu0 0
        %641 = vmatprep.subr.bf16.mxu0 0
        %642 = vmatpush1.bf16.msra.mxu0 0
        %643 = vmatprep.mubr.bf16.mxu0 0
        %644 = vmatmul.mubr.bf16.gmra.mrb[0].mxu0 %v566
        %v645 = vpop.f32.mrb[0].mxu0
        %v646 = vadd.f32 %v553, %v645
        %v647 = vpop.f32.mrb[0].mxu0
        %v648 = vadd.f32 %v553, %v647
        %v649 = vpop.f32.mrb[0].mxu0
        %v650 = vadd.f32 %v558, %v649
        %v651 = vpop.f32.mrb[0].mxu0
        %v652 = vadd.f32 %v558, %v651
        %653 = vdwg.mxu0
        %v654 = vpack.c.bf16 %v501, %v501
        %v655 = vpack.c.bf16 %v503, %v503
        %v656 = vpack.c.bf16 %v542, %v542
        %v657 = vpack.c.bf16 %v544, %v544
        %v662 = vcombine.low %v654, %v655
        %v663 = vcombine.low %v656, %v657
        %v665 = vunpack.c.l.s4 1983009808
        %v666 = vunpack.c.0.s8 %v665
        %v667 = vlaneseq
        %v668 = vshrl.u32 %v667, 7
        %v669 = vsub.s32 %v666, %v668
        %v670 = vrot.slane %v662, %v669
        %v672 = vunpack.c.l.s4 1983009808
        %v673 = vunpack.c.0.s8 %v672
        %v674 = vlaneseq
        %v675 = vshrl.u32 %v674, 7
        %v676 = vsub.s32 %v673, %v675
        %v677 = vrot.slane %v663, %v676
        %v678 = vcombine.low %v670, %v677
        %680 = vst [vmem:[%s337] sm:$0xff] %v678
        %v681 = vpack.c.bf16 %v607, %v603
        %v682 = vpack.c.bf16 %v609, %v605
        %v683 = vpack.c.bf16 %v650, %v646
        %v684 = vpack.c.bf16 %v652, %v648
        %v689 = vunpack.c.l.b16 %v681
        %v690 = vunpack.c.l.b16 %v682
        %v691 = vunpack.c.l.b16 %v683
        %v692 = vunpack.c.l.b16 %v684
        %v693 = vunpack.c.h.b16 %v681
        %v694 = vunpack.c.h.b16 %v682
        %v695 = vunpack.c.h.b16 %v683
        %v696 = vunpack.c.h.b16 %v684
        %v697 = vpack.c.b16 %v690, %v689
        %v698 = vpack.c.b16 %v692, %v691
        %v699 = vpack.c.b16 %v694, %v693
        %v700 = vpack.c.b16 %v696, %v695
        %705 = vst [vmem:[%s327] sm:$0xff] %v697
        %706 = vst [vmem:[%s327 + $0x8] sm:$0xff] %v698
        %707 = vst [vmem:[%s327 + $0x10] sm:$0xff] %v699
        %708 = vst [vmem:[%s327 + $0x18] sm:$0xff] %v700
        %s709 = smul.u32 4, %s23
        %p710 = scmp.lt.s32.totalorder %s22, 1
        %s711 = scalar_select %p710, %s22, 1
        %p712 = scmp.lt.s32.totalorder %s709, 15
        %s713 = scalar_select %p712, %s709, 15
        %s714 = smul.addr %s711, 16
        %s715 = sadd.s32 %s713, %s714
        %s716 = smul.addr %s715, 2
        %s717 = scalar_lea.vmem %s5, %s716
        %s718 = sand.u32 %s180, 1
        %s719 = sand.u32 %s180, 1
        %s720 = smul.addr %s719, 32
        %s721 = scalar_lea.vmem [#allocation3], %s720
        // Predicated region
        $region64: #{_lambda_.19} parent=58 // pred_check
          %p722 = pneg %p162
        $region65: #{_lambda_.19} parent=58 // pred_check_branch
          %724 = sbr.rel (%p722) target = $region67
        $region66: #{_lambda_.19} parent=58 // pred_region
          %s725 = smul.u32 4, %s23
        $region67: #{_lambda_.19} parent=58 // pred_fallthru
          _
        // Predicated region
        $region68: #{_lambda_.19} parent=58 // pred_check
          %p726 = pneg %p190
        $region69: #{_lambda_.19} parent=58 // pred_check_branch
          %728 = sbr.rel (%p726) target = $region71
        $region70: #{_lambda_.19} parent=58 // pred_region
          %s729 = smul.u32 4, %s23
          %s730 = smul.addr %s22, 32
          %s731 = sadd.s32 %s729, %s730
          %s732 = smul.addr %s731, 4
          %s733 = scalar_lea.vmem %s6, %s732
          // Predicated region
          $region72: #{_lambda_.19} parent=70 // pred_check
            _
          $region73: #{_lambda_.19} parent=70 // pred_check_branch
            %735 = sbr.rel (0) target = $region75
          $region74: #{_lambda_.19} parent=70 // pred_region
            // Predicated region
            $region76: #{_lambda_.19} parent=74 // pred_check
              _
            $region77: #{_lambda_.19} parent=74 // pred_check_branch
              %737 = sbr.rel (0) target = $region79
            $region78: #{_lambda_.19} parent=74 // pred_region
              loop: start=0, step=1, limit=1
              $region80: #{_lambda_.19} parent=78 // loop_pre_header
                _
              $region81: #{_lambda_.19} parent=78 // loop_header
                %s739 = sphi 0, %s743
                %p740 = scmp.ge.s32.totalorder %s739, 1
                %s744 = sphi %s721, %s721
                %s745 = sphi %s733, %s733
              $region82: #{_lambda_.19} parent=78 // loop_header_branch
                %742 = sbr.rel (%p740) target = $region86
              $region83: #{_lambda_.19} parent=78 // loop_body
                %v746 = vld [vmem:[%s744] sm:$0xff]
                %747 = vst [vmem:[%s745] sm:$0xff] %v746
                %v748 = vld [vmem:[%s744 + $0x8] sm:$0xff]
                %749 = vst [vmem:[%s745 + $0x8] sm:$0xff] %v748
                %v750 = vld [vmem:[%s744 + $0x10] sm:$0xff]
                %751 = vst [vmem:[%s745 + $0x40] sm:$0xff] %v750
                %v752 = vld [vmem:[%s744 + $0x18] sm:$0xff]
                %753 = vst [vmem:[%s745 + $0x48] sm:$0xff] %v752
              $region84: #{_lambda_.19} parent=78 // loop_footer
                %s743 = sadd.s32 1, %s739
              $region85: #{_lambda_.19} parent=78 // loop_footer_branch
                %738 = sbr.rel target = $region81
              $region86: #{_lambda_.19} parent=78 // loop_exit
                _
            $region79: #{_lambda_.19} parent=74 // pred_fallthru
              _
            // Predicated region
            $region87: #{_lambda_.19} parent=74 // pred_check
              _
            $region88: #{_lambda_.19} parent=74 // pred_check_branch
              %755 = sbr.rel target = $region90
            $region89: #{_lambda_.19} parent=74 // pred_region
              _
            $region90: #{_lambda_.19} parent=74 // pred_fallthru
              _
          $region75: #{_lambda_.19} parent=70 // pred_fallthru
            _
          %756 = vnop
        $region71: #{_lambda_.19} parent=58 // pred_fallthru
          _
      $region59: #{_lambda_.19} parent=5 // pred_fallthru
        _
      %p757 = scmp.le.s32.totalorder 2, %s13
      // Predicated region
      $region91: #{_lambda_.19} parent=5 // pred_check
        %p758 = pneg %p757
      $region92: #{_lambda_.19} parent=5 // pred_check_branch
        %760 = sbr.rel (%p758) target = $region94
      $region93: #{_lambda_.19} parent=5 // pred_region
        %s761 = ssub.s32 %s13, 2
        // Predicated region
        $region95: #{_lambda_.19} parent=93 // pred_check
          %p762 = pneg %p168
        $region96: #{_lambda_.19} parent=93 // pred_check_branch
          %764 = sbr.rel (%p762) target = $region98
        $region97: #{_lambda_.19} parent=93 // pred_region
          %s765 = smul.u32 4, %s25
          %p766 = scmp.lt.s32.totalorder %s24, 1
          %s767 = scalar_select %p766, %s24, 1
          %p768 = scmp.lt.s32.totalorder %s765, 15
          %s769 = scalar_select %p768, %s765, 15
          %s770 = smul.addr %s767, 16
          %s771 = sadd.s32 %s769, %s770
          %s772 = smul.addr %s771, 2
          %s773 = scalar_lea.vmem %s5, %s772
        $region98: #{_lambda_.19} parent=93 // pred_fallthru
          _
        // Predicated region
        $region99: #{_lambda_.19} parent=93 // pred_check
          %p774 = pneg %p196
        $region100: #{_lambda_.19} parent=93 // pred_check_branch
          %776 = sbr.rel (%p774) target = $region102
        $region101: #{_lambda_.19} parent=93 // pred_region
          %s777 = sand.u32 %s181, 1
          %s778 = sand.u32 %s181, 1
          %s779 = smul.addr %s778, 32
          %s780 = scalar_lea.vmem [#allocation3], %s779
        $region102: #{_lambda_.19} parent=93 // pred_fallthru
          _
      $region94: #{_lambda_.19} parent=5 // pred_fallthru
        _
    $region6: #{_lambda_.19} parent=1 // loop_footer
      %s17 = sadd.s32 1, %s13
    $region7: #{_lambda_.19} parent=1 // loop_footer_branch
      %12 = sbr.rel target = $region3
    $region8: #{_lambda_.19} parent=1 // loop_exit
      _

// kernel: _lambda_.20
$region0: #{_lambda_.20}
  #allocation0 [shape = 'u32[]', space=smem, size = 0x4, offset = 0x4, fixed_abs, tag = 'smem constant byte address 0x4 - core index']
  #allocation1 [shape = 'u32[144,128]{1,0:T(1,128)}', space=vmem, size = 0x12000, scoped, tag = 'internal scratch']
  %s0 = inlined_call_operand.vmem [shape: bf16[2,4,256], index: 0, kind: input, shape index: {}]
  %s1 = inlined_call_operand.vmem [shape: bf16[2,32,256], index: 1, kind: input, shape index: {}]
  %s2 = inlined_call_operand.vmem [shape: bf16[2,4], index: 2, kind: input, shape index: {}]
  %s3 = inlined_call_operand.vmem [shape: bf16[2,32], index: 3, kind: input, shape index: {}]
  %s4 = inlined_call_operand.vmem [shape: bf16[16,2], index: 4, kind: input, shape index: {}]
  %s5 = inlined_call_operand.vmem [shape: f32[16,1], index: 5, kind: input, shape index: {}]
  %s6 = inlined_call_operand.vmem [shape: bf16[2,16,256], index: 6, kind: output, shape index: {}]
  %s7 = sld [smem:[#allocation0]]
  $region57: #{_lambda_.20} parent=0
    _
  %s9 = ssub.s32 1, %s7
  %s10 = scalar_select 0, %s9, %s7
  loop: start=0, step=1, limit=4
  $region2: #{_lambda_.20} parent=0 // loop_pre_header
    _
  $region3: #{_lambda_.20} parent=0 // loop_header
    %s12 = sphi 0, %s16
    %p13 = scmp.ge.s32.totalorder %s12, 4
    %s19 = sphi 0, %s31
    %s20 = sphi 0, %s27
    %s21 = sphi 0, %s19
    %s22 = sphi 0, %s20
    %s23 = sphi 0, %s21
    %s24 = sphi 0, %s22
    %s36 = sphi 0, %s38
    %s39 = sphi 0, %s36
    %s40 = sphi 0, %s39
    %s56 = sphi 0, %s40
    %s64 = sphi 0, %s66
    %s67 = sphi 0, %s64
    %s68 = sphi 0, %s67
    %s84 = sphi 0, %s68
    %s88 = sphi 0, %s88
    %s90 = sphi 0, %s88
    %s91 = sphi 0, %s90
    %s105 = sphi 0, %s91
    %s109 = sphi 0, %s109
    %s111 = sphi 0, %s109
    %s112 = sphi 0, %s111
    %s126 = sphi 0, %s112
    %s130 = sphi 0, %s130
    %s132 = sphi 0, %s130
    %s133 = sphi 0, %s132
    %s147 = sphi 0, %s133
    %s151 = sphi 0, %s151
    %s153 = sphi 0, %s151
    %s154 = sphi 0, %s153
    %s168 = sphi 0, %s154
    %s176 = sphi 0, %s178
    %s179 = sphi 0, %s176
    %s180 = sphi 0, %s179
    %s196 = sphi 0, %s180
  $region4: #{_lambda_.20} parent=0 // loop_header_branch
    %15 = sbr.rel (%p13) target = $region8
  $region5: #{_lambda_.20} parent=0 // loop_body
    %s17 = ssub.s32 %s12, 1
    %s18 = ssub.s32 %s12, 2
    %s25 = sadd.s32 1, %s20
    %p26 = scmp.ge.s32.totalorder %s25, 1
    %s27 = scalar_select %p26, 0, %s25
    %s28 = sadd.s32 1, %s19
    %s29 = scalar_select %p26, %s28, %s19
    %p30 = scmp.ge.s32.totalorder %s29, 2
    %s31 = scalar_select %p30, 0, %s29
    %s32 = ssub.s32 %s19, %s31
    %s33 = ssub.s32 %s20, %s27
    %s34 = sor.u32 %s32, %s33
    %p35 = scmp.eq.s32.totalorder %s34, 0
    %s37 = sadd.s32 %s36, 1
    %s38 = scalar_select %p35, %s36, %s37
    %p41 = pneg %p35
    %p42 = scmp.eq.s32.totalorder %s12, 1
    %p43 = por %p41, %p42
    %p44 = scmp.ne.s32.totalorder %s36, %s39
    %p45 = scmp.eq.s32.totalorder %s12, 0
    %p46 = por %p44, %p45
    %p47 = scmp.ne.s32.totalorder %s36, %s39
    %p48 = scmp.eq.s32.totalorder %s17, 1
    %p49 = por %p47, %p48
    %p50 = scmp.ne.s32.totalorder %s39, %s40
    %p51 = scmp.eq.s32.totalorder %s17, 0
    %p52 = por %p50, %p51
    %p53 = scmp.ne.s32.totalorder %s39, %s40
    %p54 = scmp.eq.s32.totalorder %s18, 1
    %p55 = por %p53, %p54
    %p57 = scmp.ne.s32.totalorder %s40, %s56
    %p58 = scmp.eq.s32.totalorder %s18, 0
    %p59 = por %p57, %p58
    %s60 = ssub.s32 %s19, %s31
    %s61 = ssub.s32 %s20, %s27
    %s62 = sor.u32 %s60, %s61
    %p63 = scmp.eq.s32.totalorder %s62, 0
    %s65 = sadd.s32 %s64, 1
    %s66 = scalar_select %p63, %s64, %s65
    %p69 = pneg %p63
    %p70 = scmp.eq.s32.totalorder %s12, 1
    %p71 = por %p69, %p70
    %p72 = scmp.ne.s32.totalorder %s64, %s67
    %p73 = scmp.eq.s32.totalorder %s12, 0
    %p74 = por %p72, %p73
    %p75 = scmp.ne.s32.totalorder %s64, %s67
    %p76 = scmp.eq.s32.totalorder %s17, 1
    %p77 = por %p75, %p76
    %p78 = scmp.ne.s32.totalorder %s67, %s68
    %p79 = scmp.eq.s32.totalorder %s17, 0
    %p80 = por %p78, %p79
    %p81 = scmp.ne.s32.totalorder %s67, %s68
    %p82 = scmp.eq.s32.totalorder %s18, 1
    %p83 = por %p81, %p82
    %p85 = scmp.ne.s32.totalorder %s68, %s84
    %p86 = scmp.eq.s32.totalorder %s18, 0
    %p87 = por %p85, %p86
    %s89 = sadd.s32 %s88, 1
    %p92 = scmp.eq.s32.totalorder %s12, 1
    %p93 = scmp.ne.s32.totalorder %s88, %s90
    %p94 = scmp.eq.s32.totalorder %s12, 0
    %p95 = por %p93, %p94
    %p96 = scmp.ne.s32.totalorder %s88, %s90
    %p97 = scmp.eq.s32.totalorder %s17, 1
    %p98 = por %p96, %p97
    %p99 = scmp.ne.s32.totalorder %s90, %s91
    %p100 = scmp.eq.s32.totalorder %s17, 0
    %p101 = por %p99, %p100
    %p102 = scmp.ne.s32.totalorder %s90, %s91
    %p103 = scmp.eq.s32.totalorder %s18, 1
    %p104 = por %p102, %p103
    %p106 = scmp.ne.s32.totalorder %s91, %s105
    %p107 = scmp.eq.s32.totalorder %s18, 0
    %p108 = por %p106, %p107
    %s110 = sadd.s32 %s109, 1
    %p113 = scmp.eq.s32.totalorder %s12, 1
    %p114 = scmp.ne.s32.totalorder %s109, %s111
    %p115 = scmp.eq.s32.totalorder %s12, 0
    %p116 = por %p114, %p115
    %p117 = scmp.ne.s32.totalorder %s109, %s111
    %p118 = scmp.eq.s32.totalorder %s17, 1
    %p119 = por %p117, %p118
    %p120 = scmp.ne.s32.totalorder %s111, %s112
    %p121 = scmp.eq.s32.totalorder %s17, 0
    %p122 = por %p120, %p121
    %p123 = scmp.ne.s32.totalorder %s111, %s112
    %p124 = scmp.eq.s32.totalorder %s18, 1
    %p125 = por %p123, %p124
    %p127 = scmp.ne.s32.totalorder %s112, %s126
    %p128 = scmp.eq.s32.totalorder %s18, 0
    %p129 = por %p127, %p128
    %s131 = sadd.s32 %s130, 1
    %p134 = scmp.eq.s32.totalorder %s12, 1
    %p135 = scmp.ne.s32.totalorder %s130, %s132
    %p136 = scmp.eq.s32.totalorder %s12, 0
    %p137 = por %p135, %p136
    %p138 = scmp.ne.s32.totalorder %s130, %s132
    %p139 = scmp.eq.s32.totalorder %s17, 1
    %p140 = por %p138, %p139
    %p141 = scmp.ne.s32.totalorder %s132, %s133
    %p142 = scmp.eq.s32.totalorder %s17, 0
    %p143 = por %p141, %p142
    %p144 = scmp.ne.s32.totalorder %s132, %s133
    %p145 = scmp.eq.s32.totalorder %s18, 1
    %p146 = por %p144, %p145
    %p148 = scmp.ne.s32.totalorder %s133, %s147
    %p149 = scmp.eq.s32.totalorder %s18, 0
    %p150 = por %p148, %p149
    %s152 = sadd.s32 %s151, 1
    %p155 = scmp.eq.s32.totalorder %s12, 1
    %p156 = scmp.ne.s32.totalorder %s151, %s153
    %p157 = scmp.eq.s32.totalorder %s12, 0
    %p158 = por %p156, %p157
    %p159 = scmp.ne.s32.totalorder %s151, %s153
    %p160 = scmp.eq.s32.totalorder %s17, 1
    %p161 = por %p159, %p160
    %p162 = scmp.ne.s32.totalorder %s153, %s154
    %p163 = scmp.eq.s32.totalorder %s17, 0
    %p164 = por %p162, %p163
    %p165 = scmp.ne.s32.totalorder %s153, %s154
    %p166 = scmp.eq.s32.totalorder %s18, 1
    %p167 = por %p165, %p166
    %p169 = scmp.ne.s32.totalorder %s154, %s168
    %p170 = scmp.eq.s32.totalorder %s18, 0
    %p171 = por %p169, %p170
    %s172 = ssub.s32 %s19, %s31
    %s173 = ssub.s32 %s20, %s27
    %s174 = sor.u32 %s172, %s173
    %p175 = scmp.eq.s32.totalorder %s174, 0
    %s177 = sadd.s32 %s176, 1
    %s178 = scalar_select %p175, %s176, %s177
    %p181 = pneg %p175
    %p182 = scmp.eq.s32.totalorder %s12, 1
    %p183 = por %p181, %p182
    %p184 = scmp.ne.s32.totalorder %s176, %s179
    %p185 = scmp.eq.s32.totalorder %s12, 0
    %p186 = por %p184, %p185
    %p187 = scmp.ne.s32.totalorder %s176, %s179
    %p188 = scmp.eq.s32.totalorder %s17, 1
    %p189 = por %p187, %p188
    %p190 = scmp.ne.s32.totalorder %s179, %s180
    %p191 = scmp.eq.s32.totalorder %s17, 0
    %p192 = por %p190, %p191
    %p193 = scmp.ne.s32.totalorder %s179, %s180
    %p194 = scmp.eq.s32.totalorder %s18, 1
    %p195 = por %p193, %p194
    %p197 = scmp.ne.s32.totalorder %s180, %s196
    %p198 = scmp.eq.s32.totalorder %s18, 0
    %p199 = por %p197, %p198
    %p200 = scmp.le.s32.totalorder 1, %s12
    %p201 = scmp.lt.s32.totalorder %s12, 3
    %p202 = pnand %p200, %p201
    %p203 = pneg %p202
    // Predicated region
    $region9: #{_lambda_.20} parent=5 // pred_check
      _
    $region10: #{_lambda_.20} parent=5 // pred_check_branch
      %205 = sbr.rel (%p202) target = $region12
    $region11: #{_lambda_.20} parent=5 // pred_region
      %s206 = ssub.s32 %s12, 1
      // Predicated region
      $region13: #{_lambda_.20} parent=11 // pred_check
        %p207 = pneg %p101
      $region14: #{_lambda_.20} parent=11 // pred_check_branch
        %209 = sbr.rel (%p207) target = $region16
      $region15: #{_lambda_.20} parent=11 // pred_region
        _
      $region16: #{_lambda_.20} parent=11 // pred_fallthru
        _
      // Predicated region
      $region17: #{_lambda_.20} parent=11 // pred_check
        %p210 = pneg %p122
      $region18: #{_lambda_.20} parent=11 // pred_check_branch
        %212 = sbr.rel (%p210) target = $region20
      $region19: #{_lambda_.20} parent=11 // pred_region
        _
      $region20: #{_lambda_.20} parent=11 // pred_fallthru
        _
      // Predicated region
      $region21: #{_lambda_.20} parent=11 // pred_check
        %p213 = pneg %p143
      $region22: #{_lambda_.20} parent=11 // pred_check_branch
        %215 = sbr.rel (%p213) target = $region24
      $region23: #{_lambda_.20} parent=11 // pred_region
        _
      $region24: #{_lambda_.20} parent=11 // pred_fallthru
        _
      // Predicated region
      $region25: #{_lambda_.20} parent=11 // pred_check
        %p216 = pneg %p164
      $region26: #{_lambda_.20} parent=11 // pred_check_branch
        %218 = sbr.rel (%p216) target = $region28
      $region27: #{_lambda_.20} parent=11 // pred_region
        _
      $region28: #{_lambda_.20} parent=11 // pred_fallthru
        _
    $region12: #{_lambda_.20} parent=5 // pred_fallthru
      _
    %p219 = scmp.lt.s32.totalorder %s12, 2
    // Predicated region
    $region29: #{_lambda_.20} parent=5 // pred_check
      %p220 = pneg %p219
    $region30: #{_lambda_.20} parent=5 // pred_check_branch
      %222 = sbr.rel (%p220) target = $region32
    $region31: #{_lambda_.20} parent=5 // pred_region
      // Predicated region
      $region33: #{_lambda_.20} parent=31 // pred_check
        %p223 = pneg %p46
      $region34: #{_lambda_.20} parent=31 // pred_check_branch
        %225 = sbr.rel (%p223) target = $region36
      $region35: #{_lambda_.20} parent=31 // pred_region
        %s226 = smul.u32 2, %s20
        %p227 = scmp.lt.s32.totalorder %s19, 1
        %s228 = scalar_select %p227, %s19, 1
        %p229 = scmp.lt.s32.totalorder %s226, 1
        %s230 = scalar_select %p229, %s226, 1
        %s231 = smul.addr %s228, 2
        %s232 = sadd.s32 %s230, %s231
        %s233 = smul.addr %s232, 2
        %s234 = scalar_lea.vmem %s0, %s233
        %s235 = smul.u32 2, %s20
      $region36: #{_lambda_.20} parent=31 // pred_fallthru
        _
      // Predicated region
      $region37: #{_lambda_.20} parent=31 // pred_check
        %p236 = pneg %p74
      $region38: #{_lambda_.20} parent=31 // pred_check_branch
        %238 = sbr.rel (%p236) target = $region40
      $region39: #{_lambda_.20} parent=31 // pred_region
        %s239 = smul.u32 2, %s20
        %p240 = scmp.lt.s32.totalorder %s19, 1
        %s241 = scalar_select %p240, %s19, 1
        %p242 = scmp.lt.s32.totalorder %s239, 1
        %s243 = scalar_select %p242, %s239, 1
        %s244 = smul.addr %s241, 8
        %s245 = sadd.s32 %s243, %s244
        %s246 = smul.addr %s245, 4
        %s247 = scalar_lea.vmem %s1, %s246
        %s248 = smul.u32 2, %s20
      $region40: #{_lambda_.20} parent=31 // pred_fallthru
        _
    $region32: #{_lambda_.20} parent=5 // pred_fallthru
      _
    %p249 = scmp.le.s32.totalorder 1, %s12
    %p250 = scmp.lt.s32.totalorder %s12, 3
    %p251 = pnand %p249, %p250
    %p252 = pneg %p251
    // Predicated region
    $region41: #{_lambda_.20} parent=5 // pred_check
      _
    $region42: #{_lambda_.20} parent=5 // pred_check_branch
      %254 = sbr.rel (%p251) target = $region44
    $region43: #{_lambda_.20} parent=5 // pred_region
      %s255 = ssub.s32 %s12, 1
      %s256 = smul.u32 2, %s22
      %p257 = scmp.lt.s32.totalorder %s21, 1
      %s258 = scalar_select %p257, %s21, 1
      %p259 = scmp.lt.s32.totalorder %s256, 1
      %s260 = scalar_select %p259, %s256, 1
      %s261 = smul.addr %s258, 2
      %s262 = sadd.s32 %s260, %s261
      %s263 = smul.addr %s262, 2
      %s264 = scalar_lea.vmem %s0, %s263
      %p265 = pneg %p52
      %p266 = pneg %p49
      %s267 = smul.u32 2, %s22
      %p268 = scmp.lt.s32.totalorder %s21, 1
      %s269 = scalar_select %p268, %s21, 1
      %p270 = scmp.lt.s32.totalorder %s267, 1
      %s271 = scalar_select %p270, %s267, 1
      %s272 = smul.addr %s269, 8
      %s273 = sadd.s32 %s271, %s272
      %s274 = smul.addr %s273, 4
      %s275 = scalar_lea.vmem %s1, %s274
      %p276 = pneg %p80
      %p277 = pneg %p77
      %p278 = pneg %p101
      %p279 = pneg %p98
      %p280 = pneg %p122
      %p281 = pneg %p119
      %p282 = pneg %p143
      %p283 = pneg %p140
      %p284 = pneg %p164
      %p285 = pneg %p161
      %p286 = pneg %p192
      %p287 = pneg %p189
      %s288 = smul.u32 2, %s22
      %p289 = scmp.lt.s32.totalorder %s21, 1
      %s290 = scalar_select %p289, %s21, 1
      %p291 = scmp.lt.s32.totalorder %s288, 1
      %s292 = scalar_select %p291, %s288, 1
      %s293 = smul.addr %s290, 4
      %s294 = sadd.s32 %s292, %s293
      %s295 = smul.addr %s294, 4
      %s296 = scalar_lea.vmem %s6, %s295
      %s297 = smul.u32 2, %s22
      %p298 = scmp.lt.s32.totalorder %s21, 1
      %s299 = scalar_select %p298, %s21, 1
      %p300 = scmp.lt.s32.totalorder %s297, 1
      %s301 = scalar_select %p300, %s297, 1
      %s302 = smul.addr %s299, 2
      %s303 = sadd.s32 %s301, %s302
      %s304 = smul.addr %s303, 2
      %s305 = scalar_lea.vmem %s0, %s304
      %s306 = smul.u32 2, %s22
      %s307 = smul.u32 2, %s22
      %p308 = scmp.lt.s32.totalorder %s21, 1
      %s309 = scalar_select %p308, %s21, 1
      %p310 = scmp.lt.s32.totalorder %s307, 1
      %s311 = scalar_select %p310, %s307, 1
      %s312 = smul.addr %s309, 8
      %s313 = sadd.s32 %s311, %s312
      %s314 = smul.addr %s313, 4
      %s315 = scalar_lea.vmem %s1, %s314
      %s316 = smul.u32 2, %s22
      %s317 = smul.u32 2, %s22
      %p318 = scmp.lt.s32.totalorder %s21, 1
      %s319 = scalar_select %p318, %s21, 1
      %p320 = scmp.lt.s32.totalorder %s317, 1
      %s321 = scalar_select %p320, %s317, 1
      %s322 = smul.addr %s319, 4
      %s323 = sadd.s32 %s321, %s322
      %s324 = smul.addr %s323, 4
      %s325 = scalar_lea.vmem %s6, %s324
      %s326 = smul.u32 2, %s22
      %v328 = vld [vmem:[%s305] sm:$0xf]
      %v329 = vmax.bf16 %v328, 0
      %v330 = vld [vmem:[%s315] sm:$0xff]
      %v331 = vld [vmem:[%s315 + $0x8] sm:$0xff]
      %v332 = vld [vmem:[%s315 + $0x10] sm:$0xff]
      %v333 = vld [vmem:[%s315 + $0x18] sm:$0xff]
      %v334 = vmax.bf16 %v330, 0
      %v335 = vmax.bf16 %v331, 0
      %v336 = vmax.bf16 %v332, 0
      %v337 = vmax.bf16 %v333, 0
      %v338 = vld [vmem:[%s2] sm:$0x1]
      %v339 = vld [vmem:[%s3] sm:$0x1]
      %v344 = vunpack.c.l.b16 %v334
      %v345 = vunpack.c.h.b16 %v334
      %v346 = vunpack.c.l.b16 %v335
      %v347 = vunpack.c.h.b16 %v335
      %v348 = vunpack.c.l.b16 %v336
      %v349 = vunpack.c.h.b16 %v336
      %v350 = vunpack.c.l.b16 %v337
      %v351 = vunpack.c.h.b16 %v337
      %v352 = vpack.c.b16 %v346, %v344
      %v353 = vpack.c.b16 %v347, %v345
      %v354 = vpack.c.b16 %v350, %v348
      %v355 = vpack.c.b16 %v351, %v349
      %vm360 = vcmask 261120
      %v362 = vsel %vm360, %v339, 0
      %364 = vmatprep.subr.bf16.mxu0 %v353
      %365 = vmatpush1.bf16.msra.mxu0 %v352
      %366 = vmatprep.subr.bf16.mxu0 %v355
      %367 = vmatpush1.bf16.msra.mxu0 %v354
      %368 = vmatprep.subr.bf16.mxu0 0
      %369 = vmatpush1.bf16.msra.mxu0 0
      %370 = vmatprep.subr.bf16.mxu0 0
      %371 = vmatpush1.bf16.msra.mxu0 0
      %372 = vmatprep.subr.bf16.mxu0 0
      %373 = vmatpush1.bf16.msra.mxu0 0
      %374 = vmatprep.subr.bf16.mxu0 0
      %375 = vmatpush1.bf16.msra.mxu0 0
      %376 = vmatprep.subr.bf16.mxu0 0
      %377 = vmatpush1.bf16.msra.mxu0 0
      %378 = vmatprep.subr.bf16.mxu0 0
      %379 = vmatpush1.bf16.msra.mxu0 0
      %380 = vmatprep.subr.bf16.mxu0 0
      %381 = vmatpush1.bf16.msra.mxu0 0
      %382 = vmatprep.subr.bf16.mxu0 0
      %383 = vmatpush1.bf16.msra.mxu0 0
      %384 = vmatprep.subr.bf16.mxu0 0
      %385 = vmatpush1.bf16.msra.mxu0 0
      %386 = vmatprep.subr.bf16.mxu0 0
      %387 = vmatpush1.bf16.msra.mxu0 0
      %388 = vmatprep.subr.bf16.mxu0 0
      %389 = vmatpush1.bf16.msra.mxu0 0
      %390 = vmatprep.subr.bf16.mxu0 0
      %391 = vmatpush1.bf16.msra.mxu0 0
      %392 = vmatprep.subr.bf16.mxu0 0
      %393 = vmatpush1.bf16.msra.mxu0 0
      %394 = vmatprep.subr.bf16.mxu0 0
      %395 = vmatpush1.bf16.msra.mxu0 0
      %396 = vmatprep.mubr.bf16.mxu0 0
      %397 = vmatmul.mubr.bf16.gmra.mrb[0].mxu0 %v362
      %v398 = vpop.f32.mrb[0].mxu0
      %v399 = vadd.f32 0.0, %v398
      %v400 = vpop.f32.mrb[0].mxu0
      %v401 = vadd.f32 0.0, %v400
      %v402 = vpop.f32.mrb[0].mxu0
      %v403 = vpop.f32.mrb[0].mxu0
      %404 = vdwg.mxu0
      %v407 = vunpack.c.l.s4 1983009808
      %v408 = vunpack.c.0.s8 %v407
      %v409 = vlaneseq
      %v410 = vshrl.u32 %v409, 7
      %v411 = vsub.s32 %v408, %v410
      %v412 = vrot.slane %v329, %v411
      %v413 = vcombine.high %v412, %v412
      %vm414 = vcmask 31744
      %v416 = vsel %vm414, %v338, 0
      %vm418 = vcmask 1041408
      %v420 = vsel %vm418, %v412, 0
      %v423 = vsel %vm418, %v413, 0
      %425 = vmatprep.subr.bf16.mxu0 %v423
      %426 = vmatpush1.bf16.msra.mxu0 %v420
      %427 = vmatprep.subr.bf16.mxu0 0
      %428 = vmatpush1.bf16.msra.mxu0 0
      %429 = vmatprep.subr.bf16.mxu0 0
      %430 = vmatpush1.bf16.msra.mxu0 0
      %431 = vmatprep.subr.bf16.mxu0 0
      %432 = vmatpush1.bf16.msra.mxu0 0
      %433 = vmatprep.subr.bf16.mxu0 0
      %434 = vmatpush1.bf16.msra.mxu0 0
      %435 = vmatprep.subr.bf16.mxu0 0
      %436 = vmatpush1.bf16.msra.mxu0 0
      %437 = vmatprep.subr.bf16.mxu0 0
      %438 = vmatpush1.bf16.msra.mxu0 0
      %439 = vmatprep.subr.bf16.mxu0 0
      %440 = vmatpush1.bf16.msra.mxu0 0
      %441 = vmatprep.subr.bf16.mxu0 0
      %442 = vmatpush1.bf16.msra.mxu0 0
      %443 = vmatprep.subr.bf16.mxu0 0
      %444 = vmatpush1.bf16.msra.mxu0 0
      %445 = vmatprep.subr.bf16.mxu0 0
      %446 = vmatpush1.bf16.msra.mxu0 0
      %447 = vmatprep.subr.bf16.mxu0 0
      %448 = vmatpush1.bf16.msra.mxu0 0
      %449 = vmatprep.subr.bf16.mxu0 0
      %450 = vmatpush1.bf16.msra.mxu0 0
      %451 = vmatprep.subr.bf16.mxu0 0
      %452 = vmatpush1.bf16.msra.mxu0 0
      %453 = vmatprep.subr.bf16.mxu0 0
      %454 = vmatpush1.bf16.msra.mxu0 0
      %455 = vmatprep.subr.bf16.mxu0 0
      %456 = vmatpush1.bf16.msra.mxu0 0
      %457 = vmatprep.mubr.bf16.mxu0 0
      %458 = vmatmul.mubr.bf16.gmra.mrb[0].mxu0 %v416
      %v459 = vpop.f32.mrb[0].mxu0
      %v460 = vadd.f32 %v399, %v459
      %v461 = vpop.f32.mrb[0].mxu0
      %v462 = vadd.f32 %v401, %v461
      %v463 = vpop.f32.mrb[0].mxu0
      %v464 = vpop.f32.mrb[0].mxu0
      %465 = vdwg.mxu0
      %v466 = vmax.f32 %v460, 0.0
      %v467 = vmax.f32 %v462, 0.0
      %v468 = vpack.c.bf16 %v466, %v466
      %v469 = vpack.c.bf16 %v467, %v467
      %v470 = vld [vmem:[%s4] sm:$0xf]
      %v471 = vld [vmem:[%s4 + $0x4] sm:$0xf]
      %v472 = vld [vmem:[%s5] sm:$0xff]
      %v473 = vld [vmem:[%s5 + $0x8] sm:$0xff]
      %475 = vset.pattern.permute.xlu0 0
      %476 = vperm.xlu0 %475, %v472
      %v477 = vpop.permute.xlu0 %476
      %480 = vset.pattern.permute.xlu0 0
      %481 = vperm.xlu0 %480, %v473
      %v482 = vpop.permute.xlu0 %481
      %v486 = vunpack.c.l.b16 %v470
      %v487 = vunpack.c.l.b16 %v471
      %v488 = vpack.c.b16 %v487, %v486
      %vm489 = vcmask 15360
      %v491 = vsel %vm489, %v488, 0
      %vm493 = vcmask 1040384
      %v495 = vsel %vm493, %v468, 0
      %v498 = vsel %vm493, %v469, 0
      %500 = vmatprep.subr.bf16.mxu0 %v498
      %501 = vmatpush1.bf16.msra.mxu0 %v495
      %502 = vmatprep.subr.bf16.mxu0 0
      %503 = vmatpush1.bf16.msra.mxu0 0
      %504 = vmatprep.subr.bf16.mxu0 0
      %505 = vmatpush1.bf16.msra.mxu0 0
      %506 = vmatprep.subr.bf16.mxu0 0
      %507 = vmatpush1.bf16.msra.mxu0 0
      %508 = vmatprep.subr.bf16.mxu0 0
      %509 = vmatpush1.bf16.msra.mxu0 0
      %510 = vmatprep.subr.bf16.mxu0 0
      %511 = vmatpush1.bf16.msra.mxu0 0
      %512 = vmatprep.subr.bf16.mxu0 0
      %513 = vmatpush1.bf16.msra.mxu0 0
      %514 = vmatprep.subr.bf16.mxu0 0
      %515 = vmatpush1.bf16.msra.mxu0 0
      %516 = vmatprep.subr.bf16.mxu0 0
      %517 = vmatpush1.bf16.msra.mxu0 0
      %518 = vmatprep.subr.bf16.mxu0 0
      %519 = vmatpush1.bf16.msra.mxu0 0
      %520 = vmatprep.subr.bf16.mxu0 0
      %521 = vmatpush1.bf16.msra.mxu0 0
      %522 = vmatprep.subr.bf16.mxu0 0
      %523 = vmatpush1.bf16.msra.mxu0 0
      %524 = vmatprep.subr.bf16.mxu0 0
      %525 = vmatpush1.bf16.msra.mxu0 0
      %526 = vmatprep.subr.bf16.mxu0 0
      %527 = vmatpush1.bf16.msra.mxu0 0
      %528 = vmatprep.subr.bf16.mxu0 0
      %529 = vmatpush1.bf16.msra.mxu0 0
      %530 = vmatprep.subr.bf16.mxu0 0
      %531 = vmatpush1.bf16.msra.mxu0 0
      %532 = vmatprep.mubr.bf16.mxu0 0
      %533 = vmatmul.mubr.bf16.gmra.mrb[0].mxu0 %v491
      %v534 = vpop.f32.mrb[0].mxu0
      %v535 = vadd.f32 %v477, %v534
      %v536 = vpop.f32.mrb[0].mxu0
      %v537 = vadd.f32 %v477, %v536
      %v538 = vpop.f32.mrb[0].mxu0
      %v539 = vadd.f32 %v482, %v538
      %v540 = vpop.f32.mrb[0].mxu0
      %v541 = vadd.f32 %v482, %v540
      %542 = vdwg.mxu0
      %v543 = vpack.c.bf16 %v539, %v535
      %v544 = vpack.c.bf16 %v541, %v537
      %v547 = vunpack.c.l.b16 %v543
      %v548 = vunpack.c.l.b16 %v544
      %v549 = vunpack.c.h.b16 %v543
      %v550 = vunpack.c.h.b16 %v544
      %v551 = vpack.c.b16 %v548, %v547
      %v552 = vpack.c.b16 %v550, %v549
      %555 = vst [vmem:[%s325] sm:$0xff] %v551
      %556 = vst [vmem:[%s325 + $0x8] sm:$0xff] %v552
      %s557 = smul.u32 2, %s22
      %p558 = scmp.lt.s32.totalorder %s21, 1
      %s559 = scalar_select %p558, %s21, 1
      %p560 = scmp.lt.s32.totalorder %s557, 1
      %s561 = scalar_select %p560, %s557, 1
      %s562 = smul.addr %s559, 4
      %s563 = sadd.s32 %s561, %s562
      %s564 = smul.addr %s563, 4
      %s565 = scalar_lea.vmem %s6, %s564
      // Predicated region
      $region45: #{_lambda_.20} parent=43 // pred_check
        %p566 = pneg %p189
      $region46: #{_lambda_.20} parent=43 // pred_check_branch
        %568 = sbr.rel (%p566) target = $region48
      $region47: #{_lambda_.20} parent=43 // pred_region
        %s569 = smul.u32 2, %s22
      $region48: #{_lambda_.20} parent=43 // pred_fallthru
        _
    $region44: #{_lambda_.20} parent=5 // pred_fallthru
      _
    %p570 = scmp.le.s32.totalorder 2, %s12
    // Predicated region
    $region49: #{_lambda_.20} parent=5 // pred_check
      %p571 = pneg %p570
    $region50: #{_lambda_.20} parent=5 // pred_check_branch
      %573 = sbr.rel (%p571) target = $region52
    $region51: #{_lambda_.20} parent=5 // pred_region
      %s574 = ssub.s32 %s12, 2
      // Predicated region
      $region53: #{_lambda_.20} parent=51 // pred_check
        %p575 = pneg %p195
      $region54: #{_lambda_.20} parent=51 // pred_check_branch
        %577 = sbr.rel (%p575) target = $region56
      $region55: #{_lambda_.20} parent=51 // pred_region
        %s578 = smul.u32 2, %s24
        %p579 = scmp.lt.s32.totalorder %s23, 1
        %s580 = scalar_select %p579, %s23, 1
        %p581 = scmp.lt.s32.totalorder %s578, 1
        %s582 = scalar_select %p581, %s578, 1
        %s583 = smul.addr %s580, 4
        %s584 = sadd.s32 %s582, %s583
        %s585 = smul.addr %s584, 4
        %s586 = scalar_lea.vmem %s6, %s585
      $region56: #{_lambda_.20} parent=51 // pred_fallthru
        _
    $region52: #{_lambda_.20} parent=5 // pred_fallthru
      _
  $region6: #{_lambda_.20} parent=0 // loop_footer
    %s16 = sadd.s32 1, %s12
  $region7: #{_lambda_.20} parent=0 // loop_footer_branch
    %11 = sbr.rel target = $region3
  $region8: #{_lambda_.20} parent=0 // loop_exit
    _

// kernel: _lambda_.21
$region0: #{_lambda_.21}
  #allocation0 [shape = 'u32[]', space=smem, size = 0x4, offset = 0x4, fixed_abs, tag = 'smem constant byte address 0x4 - core index']
  #allocation1 [shape = 'u32[144,128]{1,0:T(1,128)}', space=vmem, size = 0x12000, scoped, tag = 'internal scratch']
  %s0 = inlined_call_operand.vmem [shape: bf16[2,2,8,256], index: 0, kind: input, shape index: {}]
  %s1 = inlined_call_operand.vmem [shape: bf16[16,2,8,256], index: 1, kind: input, shape index: {}]
  %s2 = inlined_call_operand.vmem [shape: bf16[16,2,256], index: 2, kind: output, shape index: {}]
  %s3 = sld [smem:[#allocation0]]
  $region41: #{_lambda_.21} parent=0
    _
  %s5 = ssub.s32 1, %s3
  %s6 = scalar_select 0, %s5, %s3
  loop: start=0, step=1, limit=18
  $region2: #{_lambda_.21} parent=0 // loop_pre_header
    _
  $region3: #{_lambda_.21} parent=0 // loop_header
    %s8 = sphi 0, %s12
    %p9 = scmp.ge.s32.totalorder %s8, 18
    %s15 = sphi 0, %s34
    %s16 = sphi 0, %s30
    %s17 = sphi 0, %s26
    %s18 = sphi 0, %s15
    %s19 = sphi 0, %s16
    %s20 = sphi 0, %s17
    %s21 = sphi 0, %s18
    %s22 = sphi 0, %s19
    %s23 = sphi 0, %s20
    %s39 = sphi 0, %s41
    %s42 = sphi 0, %s39
    %s43 = sphi 0, %s42
    %s59 = sphi 0, %s43
    %s71 = sphi 0, %s73
    %s74 = sphi 0, %s71
    %s75 = sphi 0, %s74
    %s91 = sphi 0, %s75
    %s103 = sphi 0, %s105
    %s106 = sphi 0, %s103
    %s107 = sphi 0, %s106
    %s123 = sphi 0, %s107
  $region4: #{_lambda_.21} parent=0 // loop_header_branch
    %11 = sbr.rel (%p9) target = $region8
  $region5: #{_lambda_.21} parent=0 // loop_body
    %s13 = ssub.s32 %s8, 1
    %s14 = ssub.s32 %s8, 2
    %s24 = sadd.s32 1, %s17
    %p25 = scmp.ge.s32.totalorder %s24, 8
    %s26 = scalar_select %p25, 0, %s24
    %s27 = sadd.s32 1, %s16
    %s28 = scalar_select %p25, %s27, %s16
    %p29 = scmp.ge.s32.totalorder %s28, 1
    %s30 = scalar_select %p29, 0, %s28
    %s31 = sadd.s32 1, %s15
    %s32 = scalar_select %p29, %s31, %s15
    %p33 = scmp.ge.s32.totalorder %s32, 2
    %s34 = scalar_select %p33, 0, %s32
    %s35 = ssub.s32 %s15, %s34
    %s36 = ssub.s32 %s16, %s30
    %s37 = sor.u32 %s35, %s36
    %p38 = scmp.eq.s32.totalorder %s37, 0
    %s40 = sadd.s32 %s39, 1
    %s41 = scalar_select %p38, %s39, %s40
    %p44 = pneg %p38
    %p45 = scmp.eq.s32.totalorder %s8, 15
    %p46 = por %p44, %p45
    %p47 = scmp.ne.s32.totalorder %s39, %s42
    %p48 = scmp.eq.s32.totalorder %s8, 0
    %p49 = por %p47, %p48
    %p50 = scmp.ne.s32.totalorder %s39, %s42
    %p51 = scmp.eq.s32.totalorder %s13, 15
    %p52 = por %p50, %p51
    %p53 = scmp.ne.s32.totalorder %s42, %s43
    %p54 = scmp.eq.s32.totalorder %s13, 0
    %p55 = por %p53, %p54
    %p56 = scmp.ne.s32.totalorder %s42, %s43
    %p57 = scmp.eq.s32.totalorder %s14, 15
    %p58 = por %p56, %p57
    %p60 = scmp.ne.s32.totalorder %s43, %s59
    %p61 = scmp.eq.s32.totalorder %s14, 0
    %p62 = por %p60, %p61
    %s63 = smul.u32 %s15, 8
    %s64 = sadd.s32 %s63, %s17
    %s65 = smul.u32 %s34, 8
    %s66 = sadd.s32 %s65, %s26
    %s67 = ssub.s32 %s64, %s66
    %s68 = ssub.s32 %s16, %s30
    %s69 = sor.u32 %s67, %s68
    %p70 = scmp.eq.s32.totalorder %s69, 0
    %s72 = sadd.s32 %s71, 1
    %s73 = scalar_select %p70, %s71, %s72
    %p76 = pneg %p70
    %p77 = scmp.eq.s32.totalorder %s8, 15
    %p78 = por %p76, %p77
    %p79 = scmp.ne.s32.totalorder %s71, %s74
    %p80 = scmp.eq.s32.totalorder %s8, 0
    %p81 = por %p79, %p80
    %p82 = scmp.ne.s32.totalorder %s71, %s74
    %p83 = scmp.eq.s32.totalorder %s13, 15
    %p84 = por %p82, %p83
    %p85 = scmp.ne.s32.totalorder %s74, %s75
    %p86 = scmp.eq.s32.totalorder %s13, 0
    %p87 = por %p85, %p86
    %p88 = scmp.ne.s32.totalorder %s74, %s75
    %p89 = scmp.eq.s32.totalorder %s14, 15
    %p90 = por %p88, %p89
    %p92 = scmp.ne.s32.totalorder %s75, %s91
    %p93 = scmp.eq.s32.totalorder %s14, 0
    %p94 = por %p92, %p93
    %s95 = smul.u32 %s15, 8
    %s96 = sadd.s32 %s95, %s17
    %s97 = smul.u32 %s34, 8
    %s98 = sadd.s32 %s97, %s26
    %s99 = ssub.s32 %s96, %s98
    %s100 = ssub.s32 %s16, %s30
    %s101 = sor.u32 %s99, %s100
    %p102 = scmp.eq.s32.totalorder %s101, 0
    %s104 = sadd.s32 %s103, 1
    %s105 = scalar_select %p102, %s103, %s104
    %p108 = pneg %p102
    %p109 = scmp.eq.s32.totalorder %s8, 15
    %p110 = por %p108, %p109
    %p111 = scmp.ne.s32.totalorder %s103, %s106
    %p112 = scmp.eq.s32.totalorder %s8, 0
    %p113 = por %p111, %p112
    %p114 = scmp.ne.s32.totalorder %s103, %s106
    %p115 = scmp.eq.s32.totalorder %s13, 15
    %p116 = por %p114, %p115
    %p117 = scmp.ne.s32.totalorder %s106, %s107
    %p118 = scmp.eq.s32.totalorder %s13, 0
    %p119 = por %p117, %p118
    %p120 = scmp.ne.s32.totalorder %s106, %s107
    %p121 = scmp.eq.s32.totalorder %s14, 15
    %p122 = por %p120, %p121
    %p124 = scmp.ne.s32.totalorder %s107, %s123
    %p125 = scmp.eq.s32.totalorder %s14, 0
    %p126 = por %p124, %p125
    %p127 = scmp.le.s32.totalorder 1, %s8
    %p128 = scmp.lt.s32.totalorder %s8, 17
    %p129 = pnand %p127, %p128
    %p130 = pneg %p129
    // Predicated region
    $region9: #{_lambda_.21} parent=5 // pred_check
      _
    $region10: #{_lambda_.21} parent=5 // pred_check_branch
      %132 = sbr.rel (%p129) target = $region12
    $region11: #{_lambda_.21} parent=5 // pred_region
      %s133 = ssub.s32 %s8, 1
    $region12: #{_lambda_.21} parent=5 // pred_fallthru
      _
    %p134 = scmp.lt.s32.totalorder %s8, 16
    // Predicated region
    $region13: #{_lambda_.21} parent=5 // pred_check
      %p135 = pneg %p134
    $region14: #{_lambda_.21} parent=5 // pred_check_branch
      %137 = sbr.rel (%p135) target = $region16
    $region15: #{_lambda_.21} parent=5 // pred_region
      // Predicated region
      $region17: #{_lambda_.21} parent=15 // pred_check
        %p138 = pneg %p49
      $region18: #{_lambda_.21} parent=15 // pred_check_branch
        %140 = sbr.rel (%p138) target = $region20
      $region19: #{_lambda_.21} parent=15 // pred_region
        %s141 = smul.u32 2, %s16
        %p142 = scmp.lt.s32.totalorder %s15, 1
        %s143 = scalar_select %p142, %s15, 1
        %p144 = scmp.lt.s32.totalorder %s141, 1
        %s145 = scalar_select %p144, %s141, 1
        %s146 = smul.addr %s143, 4
        %s147 = sadd.s32 %s145, %s146
        %s148 = smul.addr %s147, 4
        %s149 = scalar_lea.vmem %s0, %s148
        %s150 = smul.u32 2, %s16
      $region20: #{_lambda_.21} parent=15 // pred_fallthru
        _
      // Predicated region
      $region21: #{_lambda_.21} parent=15 // pred_check
        %p151 = pneg %p81
      $region22: #{_lambda_.21} parent=15 // pred_check_branch
        %153 = sbr.rel (%p151) target = $region24
      $region23: #{_lambda_.21} parent=15 // pred_region
        %s154 = smul.u32 %s15, 8
        %s155 = sadd.s32 %s154, %s17
        %s156 = smul.u32 2, %s16
        %p157 = scmp.lt.s32.totalorder %s155, 15
        %s158 = scalar_select %p157, %s155, 15
        %p159 = scmp.lt.s32.totalorder %s156, 1
        %s160 = scalar_select %p159, %s156, 1
        %s161 = smul.addr %s158, 4
        %s162 = sadd.s32 %s160, %s161
        %s163 = smul.addr %s162, 4
        %s164 = scalar_lea.vmem %s1, %s163
        %s165 = smul.u32 %s15, 8
        %s166 = sadd.s32 %s165, %s17
        %s167 = smul.u32 2, %s16
      $region24: #{_lambda_.21} parent=15 // pred_fallthru
        _
    $region16: #{_lambda_.21} parent=5 // pred_fallthru
      _
    %p168 = scmp.le.s32.totalorder 1, %s8
    %p169 = scmp.lt.s32.totalorder %s8, 17
    %p170 = pnand %p168, %p169
    %p171 = pneg %p170
    // Predicated region
    $region25: #{_lambda_.21} parent=5 // pred_check
      _
    $region26: #{_lambda_.21} parent=5 // pred_check_branch
      %173 = sbr.rel (%p170) target = $region28
    $region27: #{_lambda_.21} parent=5 // pred_region
      %s174 = ssub.s32 %s8, 1
      %s175 = smul.u32 2, %s19
      %p176 = scmp.lt.s32.totalorder %s18, 1
      %s177 = scalar_select %p176, %s18, 1
      %p178 = scmp.lt.s32.totalorder %s175, 1
      %s179 = scalar_select %p178, %s175, 1
      %s180 = smul.addr %s177, 4
      %s181 = sadd.s32 %s179, %s180
      %s182 = smul.addr %s181, 4
      %s183 = scalar_lea.vmem %s0, %s182
      %p184 = pneg %p55
      %p185 = pneg %p52
      %s186 = smul.u32 %s18, 8
      %s187 = sadd.s32 %s186, %s20
      %s188 = smul.u32 2, %s19
      %p189 = scmp.lt.s32.totalorder %s187, 15
      %s190 = scalar_select %p189, %s187, 15
      %p191 = scmp.lt.s32.totalorder %s188, 1
      %s192 = scalar_select %p191, %s188, 1
      %s193 = smul.addr %s190, 4
      %s194 = sadd.s32 %s192, %s193
      %s195 = smul.addr %s194, 4
      %s196 = scalar_lea.vmem %s1, %s195
      %p197 = pneg %p87
      %p198 = pneg %p84
      %p199 = pneg %p119
      %p200 = pneg %p116
      %s201 = smul.u32 %s18, 8
      %s202 = sadd.s32 %s201, %s20
      %s203 = smul.u32 2, %s19
      %p204 = scmp.lt.s32.totalorder %s202, 15
      %s205 = scalar_select %p204, %s202, 15
      %p206 = scmp.lt.s32.totalorder %s203, 1
      %s207 = scalar_select %p206, %s203, 1
      %s208 = smul.addr %s205, 2
      %s209 = sadd.s32 %s207, %s208
      %s210 = scalar_lea.vmem %s2, %s209
      %s211 = smul.u32 2, %s19
      %p212 = scmp.lt.s32.totalorder %s18, 1
      %s213 = scalar_select %p212, %s18, 1
      %p214 = scmp.lt.s32.totalorder %s211, 1
      %s215 = scalar_select %p214, %s211, 1
      %s216 = smul.addr %s213, 4
      %s217 = sadd.s32 %s215, %s216
      %s218 = smul.addr %s217, 4
      %s219 = scalar_lea.vmem %s0, %s218
      %s220 = smul.u32 2, %s19
      %s221 = smul.u32 %s18, 8
      %s222 = sadd.s32 %s221, %s20
      %s223 = smul.u32 2, %s19
      %p224 = scmp.lt.s32.totalorder %s222, 15
      %s225 = scalar_select %p224, %s222, 15
      %p226 = scmp.lt.s32.totalorder %s223, 1
      %s227 = scalar_select %p226, %s223, 1
      %s228 = smul.addr %s225, 4
      %s229 = sadd.s32 %s227, %s228
      %s230 = smul.addr %s229, 4
      %s231 = scalar_lea.vmem %s1, %s230
      %s232 = smul.u32 %s18, 8
      %s233 = sadd.s32 %s232, %s20
      %s234 = smul.u32 2, %s19
      %s235 = smul.u32 %s18, 8
      %s236 = sadd.s32 %s235, %s20
      %s237 = smul.u32 2, %s19
      %p238 = scmp.lt.s32.totalorder %s236, 15
      %s239 = scalar_select %p238, %s236, 15
      %p240 = scmp.lt.s32.totalorder %s237, 1
      %s241 = scalar_select %p240, %s237, 1
      %s242 = smul.addr %s239, 2
      %s243 = sadd.s32 %s241, %s242
      %s244 = scalar_lea.vmem %s2, %s243
      %s245 = smul.u32 %s18, 8
      %s246 = sadd.s32 %s245, %s20
      %s247 = smul.u32 2, %s19
      %v248 = vld [vmem:[%s219] sm:$0xff]
      %v249 = vld [vmem:[%s219 + $0x8] sm:$0xff]
      %v250 = vunpack.c.l.bf16 %v248
      %v251 = vunpack.c.h.bf16 %v248
      %v252 = vunpack.c.l.bf16 %v249
      %v253 = vunpack.c.h.bf16 %v249
      %v254 = vld [vmem:[%s231] sm:$0xff]
      %v255 = vld [vmem:[%s231 + $0x8] sm:$0xff]
      %v256 = vunpack.c.l.bf16 %v254
      %v257 = vunpack.c.h.bf16 %v254
      %v258 = vunpack.c.l.bf16 %v255
      %v259 = vunpack.c.h.bf16 %v255
      %v260 = vmul.f32 %v250, %v256
      %v261 = vmul.f32 %v251, %v257
      %v262 = vmul.f32 %v252, %v258
      %v263 = vmul.f32 %v253, %v259
      %v264 = vrot.slane %v260, 4
      %v265 = vadd.f32 %v260, %v264
      %v266 = vrot.slane %v265, 2
      %v267 = vadd.f32 %v265, %v266
      %v268 = vrot.slane %v267, 1
      %v269 = vadd.f32 %v267, %v268
      %v270 = vrot.slane %v261, 4
      %v271 = vadd.f32 %v261, %v270
      %v272 = vrot.slane %v271, 2
      %v273 = vadd.f32 %v271, %v272
      %v274 = vrot.slane %v273, 1
      %v275 = vadd.f32 %v273, %v274
      %v276 = vrot.slane %v262, 4
      %v277 = vadd.f32 %v262, %v276
      %v278 = vrot.slane %v277, 2
      %v279 = vadd.f32 %v277, %v278
      %v280 = vrot.slane %v279, 1
      %v281 = vadd.f32 %v279, %v280
      %v282 = vrot.slane %v263, 4
      %v283 = vadd.f32 %v263, %v282
      %v284 = vrot.slane %v283, 2
      %v285 = vadd.f32 %v283, %v284
      %v286 = vrot.slane %v285, 1
      %v287 = vadd.f32 %v285, %v286
      %v288 = vmax.f32 %v269, 0.0
      %v289 = vmax.f32 %v275, 0.0
      %v290 = vmax.f32 %v281, 0.0
      %v291 = vmax.f32 %v287, 0.0
      %v292 = vpack.c.bf16 %v288, %v288
      %v293 = vpack.c.bf16 %v289, %v289
      %v294 = vpack.c.bf16 %v290, %v290
      %v295 = vpack.c.bf16 %v291, %v291
      %v300 = vcombine.low %v292, %v293
      %v302 = vunpack.c.l.s4 1966171168
      %v303 = vunpack.c.0.s8 %v302
      %v304 = vlaneseq
      %v305 = vshrl.u32 %v304, 7
      %v306 = vsub.s32 %v303, %v305
      %v307 = vrot.slane %v300, %v306
      %v309 = vunpack.c.l.s4 1966171168
      %v310 = vunpack.c.0.s8 %v309
      %v311 = vlaneseq
      %v312 = vshrl.u32 %v311, 7
      %v313 = vsub.s32 %v310, %v312
      %v314 = vrot.slane %v307, %v313
      %v315 = vcombine.low %v294, %v295
      %v317 = vunpack.c.l.s4 1966171168
      %v318 = vunpack.c.0.s8 %v317
      %v319 = vlaneseq
      %v320 = vshrl.u32 %v319, 7
      %v321 = vsub.s32 %v318, %v320
      %v322 = vrot.slane %v315, %v321
      %v324 = vunpack.c.l.s4 1966171168
      %v325 = vunpack.c.0.s8 %v324
      %v326 = vlaneseq
      %v327 = vshrl.u32 %v326, 7
      %v328 = vsub.s32 %v325, %v327
      %v329 = vrot.slane %v322, %v328
      %v331 = vunpack.c.l.s4 1935823168
      %v332 = vunpack.c.0.s8 %v331
      %v333 = vlaneseq
      %v334 = vshrl.u32 %v333, 7
      %v335 = vsub.s32 %v332, %v334
      %v336 = vrot.slane %v314, %v335
      %v338 = vunpack.c.l.s4 1935823168
      %v339 = vunpack.c.0.s8 %v338
      %v340 = vlaneseq
      %v341 = vshrl.u32 %v340, 7
      %v342 = vsub.s32 %v339, %v341
      %v343 = vrot.slane %v336, %v342
      %v345 = vunpack.c.l.s4 1935823168
      %v346 = vunpack.c.0.s8 %v345
      %v347 = vlaneseq
      %v348 = vshrl.u32 %v347, 7
      %v349 = vsub.s32 %v346, %v348
      %v350 = vrot.slane %v329, %v349
      %v352 = vunpack.c.l.s4 1935823168
      %v353 = vunpack.c.0.s8 %v352
      %v354 = vlaneseq
      %v355 = vshrl.u32 %v354, 7
      %v356 = vsub.s32 %v353, %v355
      %v357 = vrot.slane %v350, %v356
      %v358 = vunpack.c.l.b16 %v343
      %v359 = vunpack.c.h.b16 %v343
      %v360 = vunpack.c.l.b16 %v357
      %v361 = vunpack.c.h.b16 %v357
      %v362 = vrot.slane %v360, 7
      %vm363 = vcmask 1041409
      %v364 = vsel %vm363, %v362, %v358
      %v365 = vrot.slane %v361, 7
      %v366 = vsel %vm363, %v365, %v359
      %v367 = vpack.c.b16 %v366, %v364
      %v369 = vunpack.c.l.s4 1966171168
      %v370 = vunpack.c.0.s8 %v369
      %v371 = vlaneseq
      %v372 = vshrl.u32 %v371, 7
      %v373 = vsub.s32 %v370, %v372
      %v374 = vrot.slane %v367, %v373
      %v376 = vunpack.c.l.s4 1966171168
      %v377 = vunpack.c.0.s8 %v376
      %v378 = vlaneseq
      %v379 = vshrl.u32 %v378, 7
      %v380 = vsub.s32 %v377, %v379
      %v381 = vrot.slane %v374, %v380
      %383 = vst [vmem:[%s244] sm:$0x3] %v381
      %s384 = smul.u32 %s18, 8
      %s385 = sadd.s32 %s384, %s20
      %s386 = smul.u32 2, %s19
      %p387 = scmp.lt.s32.totalorder %s385, 15
      %s388 = scalar_select %p387, %s385, 15
      %p389 = scmp.lt.s32.totalorder %s386, 1
      %s390 = scalar_select %p389, %s386, 1
      %s391 = smul.addr %s388, 2
      %s392 = sadd.s32 %s390, %s391
      %s393 = scalar_lea.vmem %s2, %s392
      // Predicated region
      $region29: #{_lambda_.21} parent=27 // pred_check
        %p394 = pneg %p116
      $region30: #{_lambda_.21} parent=27 // pred_check_branch
        %396 = sbr.rel (%p394) target = $region32
      $region31: #{_lambda_.21} parent=27 // pred_region
        %s397 = smul.u32 %s18, 8
        %s398 = sadd.s32 %s397, %s20
        %s399 = smul.u32 2, %s19
      $region32: #{_lambda_.21} parent=27 // pred_fallthru
        _
    $region28: #{_lambda_.21} parent=5 // pred_fallthru
      _
    %p400 = scmp.le.s32.totalorder 2, %s8
    // Predicated region
    $region33: #{_lambda_.21} parent=5 // pred_check
      %p401 = pneg %p400
    $region34: #{_lambda_.21} parent=5 // pred_check_branch
      %403 = sbr.rel (%p401) target = $region36
    $region35: #{_lambda_.21} parent=5 // pred_region
      %s404 = ssub.s32 %s8, 2
      // Predicated region
      $region37: #{_lambda_.21} parent=35 // pred_check
        %p405 = pneg %p122
      $region38: #{_lambda_.21} parent=35 // pred_check_branch
        %407 = sbr.rel (%p405) target = $region40
      $region39: #{_lambda_.21} parent=35 // pred_region
        %s408 = smul.u32 %s21, 8
        %s409 = sadd.s32 %s408, %s23
        %s410 = smul.u32 2, %s22
        %p411 = scmp.lt.s32.totalorder %s409, 15
        %s412 = scalar_select %p411, %s409, 15
        %p413 = scmp.lt.s32.totalorder %s410, 1
        %s414 = scalar_select %p413, %s410, 1
        %s415 = smul.addr %s412, 2
        %s416 = sadd.s32 %s414, %s415
        %s417 = scalar_lea.vmem %s2, %s416
      $region40: #{_lambda_.21} parent=35 // pred_fallthru
        _
    $region36: #{_lambda_.21} parent=5 // pred_fallthru
      _
  $region6: #{_lambda_.21} parent=0 // loop_footer
    %s12 = sadd.s32 1, %s8
  $region7: #{_lambda_.21} parent=0 // loop_footer_branch
    %7 = sbr.rel target = $region3
  $region8: #{_lambda_.21} parent=0 // loop_exit
    _

// kernel: _lambda_.23
$region0: #{_lambda_.23}
  #allocation0 [shape = 'u32[]', space=smem, size = 0x4, offset = 0x4, fixed_abs, tag = 'smem constant byte address 0x4 - core index']
  #allocation1 [shape = 'u32[144,128]{1,0:T(1,128)}', space=vmem, size = 0x12000, scoped, tag = 'internal scratch']
  %s0 = inlined_call_operand.vmem [shape: bf16[2,64,256], index: 0, kind: input, shape index: {}]
  %s1 = inlined_call_operand.vmem [shape: bf16[64,64], index: 1, kind: input, shape index: {}]
  %s2 = inlined_call_operand.vmem [shape: bf16[2,64,256], index: 2, kind: input, shape index: {}]
  %s3 = inlined_call_operand.vmem [shape: f32[2,64,256], index: 3, kind: output, shape index: {}]
  %s4 = sld [smem:[#allocation0]]
  $region45: #{_lambda_.23} parent=0
    _
  %s6 = ssub.s32 1, %s4
  %s7 = scalar_select 0, %s6, %s4
  loop: start=0, step=1, limit=4
  $region2: #{_lambda_.23} parent=0 // loop_pre_header
    _
  $region3: #{_lambda_.23} parent=0 // loop_header
    %s9 = sphi 0, %s13
    %p10 = scmp.ge.s32.totalorder %s9, 4
    %s16 = sphi 0, %s28
    %s17 = sphi 0, %s24
    %s18 = sphi 0, %s16
    %s19 = sphi 0, %s17
    %s20 = sphi 0, %s18
    %s21 = sphi 0, %s19
    %s33 = sphi 0, %s35
    %s36 = sphi 0, %s33
    %s37 = sphi 0, %s36
    %s53 = sphi 0, %s37
    %s57 = sphi 0, %s57
    %s59 = sphi 0, %s57
    %s60 = sphi 0, %s59
    %s74 = sphi 0, %s60
    %s82 = sphi 0, %s84
    %s85 = sphi 0, %s82
    %s86 = sphi 0, %s85
    %s102 = sphi 0, %s86
    %s110 = sphi 0, %s112
    %s113 = sphi 0, %s110
    %s114 = sphi 0, %s113
    %s130 = sphi 0, %s114
  $region4: #{_lambda_.23} parent=0 // loop_header_branch
    %12 = sbr.rel (%p10) target = $region8
  $region5: #{_lambda_.23} parent=0 // loop_body
    %s14 = ssub.s32 %s9, 1
    %s15 = ssub.s32 %s9, 2
    %s22 = sadd.s32 1, %s17
    %p23 = scmp.ge.s32.totalorder %s22, 1
    %s24 = scalar_select %p23, 0, %s22
    %s25 = sadd.s32 1, %s16
    %s26 = scalar_select %p23, %s25, %s16
    %p27 = scmp.ge.s32.totalorder %s26, 2
    %s28 = scalar_select %p27, 0, %s26
    %s29 = ssub.s32 %s16, %s28
    %s30 = ssub.s32 %s17, %s24
    %s31 = sor.u32 %s29, %s30
    %p32 = scmp.eq.s32.totalorder %s31, 0
    %s34 = sadd.s32 %s33, 1
    %s35 = scalar_select %p32, %s33, %s34
    %p38 = pneg %p32
    %p39 = scmp.eq.s32.totalorder %s9, 1
    %p40 = por %p38, %p39
    %p41 = scmp.ne.s32.totalorder %s33, %s36
    %p42 = scmp.eq.s32.totalorder %s9, 0
    %p43 = por %p41, %p42
    %p44 = scmp.ne.s32.totalorder %s33, %s36
    %p45 = scmp.eq.s32.totalorder %s14, 1
    %p46 = por %p44, %p45
    %p47 = scmp.ne.s32.totalorder %s36, %s37
    %p48 = scmp.eq.s32.totalorder %s14, 0
    %p49 = por %p47, %p48
    %p50 = scmp.ne.s32.totalorder %s36, %s37
    %p51 = scmp.eq.s32.totalorder %s15, 1
    %p52 = por %p50, %p51
    %p54 = scmp.ne.s32.totalorder %s37, %s53
    %p55 = scmp.eq.s32.totalorder %s15, 0
    %p56 = por %p54, %p55
    %s58 = sadd.s32 %s57, 1
    %p61 = scmp.eq.s32.totalorder %s9, 1
    %p62 = scmp.ne.s32.totalorder %s57, %s59
    %p63 = scmp.eq.s32.totalorder %s9, 0
    %p64 = por %p62, %p63
    %p65 = scmp.ne.s32.totalorder %s57, %s59
    %p66 = scmp.eq.s32.totalorder %s14, 1
    %p67 = por %p65, %p66
    %p68 = scmp.ne.s32.totalorder %s59, %s60
    %p69 = scmp.eq.s32.totalorder %s14, 0
    %p70 = por %p68, %p69
    %p71 = scmp.ne.s32.totalorder %s59, %s60
    %p72 = scmp.eq.s32.totalorder %s15, 1
    %p73 = por %p71, %p72
    %p75 = scmp.ne.s32.totalorder %s60, %s74
    %p76 = scmp.eq.s32.totalorder %s15, 0
    %p77 = por %p75, %p76
    %s78 = ssub.s32 %s16, %s28
    %s79 = ssub.s32 %s17, %s24
    %s80 = sor.u32 %s78, %s79
    %p81 = scmp.eq.s32.totalorder %s80, 0
    %s83 = sadd.s32 %s82, 1
    %s84 = scalar_select %p81, %s82, %s83
    %p87 = pneg %p81
    %p88 = scmp.eq.s32.totalorder %s9, 1
    %p89 = por %p87, %p88
    %p90 = scmp.ne.s32.totalorder %s82, %s85
    %p91 = scmp.eq.s32.totalorder %s9, 0
    %p92 = por %p90, %p91
    %p93 = scmp.ne.s32.totalorder %s82, %s85
    %p94 = scmp.eq.s32.totalorder %s14, 1
    %p95 = por %p93, %p94
    %p96 = scmp.ne.s32.totalorder %s85, %s86
    %p97 = scmp.eq.s32.totalorder %s14, 0
    %p98 = por %p96, %p97
    %p99 = scmp.ne.s32.totalorder %s85, %s86
    %p100 = scmp.eq.s32.totalorder %s15, 1
    %p101 = por %p99, %p100
    %p103 = scmp.ne.s32.totalorder %s86, %s102
    %p104 = scmp.eq.s32.totalorder %s15, 0
    %p105 = por %p103, %p104
    %s106 = ssub.s32 %s16, %s28
    %s107 = ssub.s32 %s17, %s24
    %s108 = sor.u32 %s106, %s107
    %p109 = scmp.eq.s32.totalorder %s108, 0
    %s111 = sadd.s32 %s110, 1
    %s112 = scalar_select %p109, %s110, %s111
    %p115 = pneg %p109
    %p116 = scmp.eq.s32.totalorder %s9, 1
    %p117 = por %p115, %p116
    %p118 = scmp.ne.s32.totalorder %s110, %s113
    %p119 = scmp.eq.s32.totalorder %s9, 0
    %p120 = por %p118, %p119
    %p121 = scmp.ne.s32.totalorder %s110, %s113
    %p122 = scmp.eq.s32.totalorder %s14, 1
    %p123 = por %p121, %p122
    %p124 = scmp.ne.s32.totalorder %s113, %s114
    %p125 = scmp.eq.s32.totalorder %s14, 0
    %p126 = por %p124, %p125
    %p127 = scmp.ne.s32.totalorder %s113, %s114
    %p128 = scmp.eq.s32.totalorder %s15, 1
    %p129 = por %p127, %p128
    %p131 = scmp.ne.s32.totalorder %s114, %s130
    %p132 = scmp.eq.s32.totalorder %s15, 0
    %p133 = por %p131, %p132
    %p134 = scmp.le.s32.totalorder 1, %s9
    %p135 = scmp.lt.s32.totalorder %s9, 3
    %p136 = pnand %p134, %p135
    %p137 = pneg %p136
    // Predicated region
    $region9: #{_lambda_.23} parent=5 // pred_check
      _
    $region10: #{_lambda_.23} parent=5 // pred_check_branch
      %139 = sbr.rel (%p136) target = $region12
    $region11: #{_lambda_.23} parent=5 // pred_region
      %s140 = ssub.s32 %s9, 1
      // Predicated region
      $region13: #{_lambda_.23} parent=11 // pred_check
        %p141 = pneg %p70
      $region14: #{_lambda_.23} parent=11 // pred_check_branch
        %143 = sbr.rel (%p141) target = $region16
      $region15: #{_lambda_.23} parent=11 // pred_region
        _
      $region16: #{_lambda_.23} parent=11 // pred_fallthru
        _
    $region12: #{_lambda_.23} parent=5 // pred_fallthru
      _
    %p144 = scmp.lt.s32.totalorder %s9, 2
    // Predicated region
    $region17: #{_lambda_.23} parent=5 // pred_check
      %p145 = pneg %p144
    $region18: #{_lambda_.23} parent=5 // pred_check_branch
      %147 = sbr.rel (%p145) target = $region20
    $region19: #{_lambda_.23} parent=5 // pred_region
      // Predicated region
      $region21: #{_lambda_.23} parent=19 // pred_check
        %p148 = pneg %p43
      $region22: #{_lambda_.23} parent=19 // pred_check_branch
        %150 = sbr.rel (%p148) target = $region24
      $region23: #{_lambda_.23} parent=19 // pred_region
        %s151 = smul.u32 2, %s17
        %p152 = scmp.lt.s32.totalorder %s16, 1
        %s153 = scalar_select %p152, %s16, 1
        %p154 = scmp.lt.s32.totalorder %s151, 1
        %s155 = scalar_select %p154, %s151, 1
        %s156 = smul.addr %s153, 16
        %s157 = sadd.s32 %s155, %s156
        %s158 = smul.addr %s157, 4
        %s159 = scalar_lea.vmem %s0, %s158
        %s160 = smul.u32 2, %s17
      $region24: #{_lambda_.23} parent=19 // pred_fallthru
        _
      // Predicated region
      $region25: #{_lambda_.23} parent=19 // pred_check
        %p161 = pneg %p92
      $region26: #{_lambda_.23} parent=19 // pred_check_branch
        %163 = sbr.rel (%p161) target = $region28
      $region27: #{_lambda_.23} parent=19 // pred_region
        %s164 = smul.u32 2, %s17
        %p165 = scmp.lt.s32.totalorder %s16, 1
        %s166 = scalar_select %p165, %s16, 1
        %p167 = scmp.lt.s32.totalorder %s164, 1
        %s168 = scalar_select %p167, %s164, 1
        %s169 = smul.addr %s166, 16
        %s170 = sadd.s32 %s168, %s169
        %s171 = smul.addr %s170, 4
        %s172 = scalar_lea.vmem %s2, %s171
        %s173 = smul.u32 2, %s17
      $region28: #{_lambda_.23} parent=19 // pred_fallthru
        _
    $region20: #{_lambda_.23} parent=5 // pred_fallthru
      _
    %p174 = scmp.le.s32.totalorder 1, %s9
    %p175 = scmp.lt.s32.totalorder %s9, 3
    %p176 = pnand %p174, %p175
    %p177 = pneg %p176
    // Predicated region
    $region29: #{_lambda_.23} parent=5 // pred_check
      _
    $region30: #{_lambda_.23} parent=5 // pred_check_branch
      %179 = sbr.rel (%p176) target = $region32
    $region31: #{_lambda_.23} parent=5 // pred_region
      %s180 = ssub.s32 %s9, 1
      %s181 = smul.u32 2, %s19
      %p182 = scmp.lt.s32.totalorder %s18, 1
      %s183 = scalar_select %p182, %s18, 1
      %p184 = scmp.lt.s32.totalorder %s181, 1
      %s185 = scalar_select %p184, %s181, 1
      %s186 = smul.addr %s183, 16
      %s187 = sadd.s32 %s185, %s186
      %s188 = smul.addr %s187, 4
      %s189 = scalar_lea.vmem %s0, %s188
      %p190 = pneg %p49
      %p191 = pneg %p46
      %p192 = pneg %p70
      %p193 = pneg %p67
      %s194 = smul.u32 2, %s19
      %p195 = scmp.lt.s32.totalorder %s18, 1
      %s196 = scalar_select %p195, %s18, 1
      %p197 = scmp.lt.s32.totalorder %s194, 1
      %s198 = scalar_select %p197, %s194, 1
      %s199 = smul.addr %s196, 16
      %s200 = sadd.s32 %s198, %s199
      %s201 = smul.addr %s200, 4
      %s202 = scalar_lea.vmem %s2, %s201
      %p203 = pneg %p98
      %p204 = pneg %p95
      %p205 = pneg %p126
      %p206 = pneg %p123
      %s207 = smul.u32 2, %s19
      %p208 = scmp.lt.s32.totalorder %s18, 1
      %s209 = scalar_select %p208, %s18, 1
      %p210 = scmp.lt.s32.totalorder %s207, 1
      %s211 = scalar_select %p210, %s207, 1
      %s212 = smul.addr %s209, 16
      %s213 = sadd.s32 %s211, %s212
      %s214 = smul.addr %s213, 8
      %s215 = scalar_lea.vmem %s3, %s214
      %s216 = smul.u32 2, %s19
      %p217 = scmp.lt.s32.totalorder %s18, 1
      %s218 = scalar_select %p217, %s18, 1
      %p219 = scmp.lt.s32.totalorder %s216, 1
      %s220 = scalar_select %p219, %s216, 1
      %s221 = smul.addr %s218, 16
      %s222 = sadd.s32 %s220, %s221
      %s223 = smul.addr %s222, 4
      %s224 = scalar_lea.vmem %s0, %s223
      %s225 = smul.u32 2, %s19
      %s226 = smul.u32 2, %s19
      %p227 = scmp.lt.s32.totalorder %s18, 1
      %s228 = scalar_select %p227, %s18, 1
      %p229 = scmp.lt.s32.totalorder %s226, 1
      %s230 = scalar_select %p229, %s226, 1
      %s231 = smul.addr %s228, 16
      %s232 = sadd.s32 %s230, %s231
      %s233 = smul.addr %s232, 4
      %s234 = scalar_lea.vmem %s2, %s233
      %s235 = smul.u32 2, %s19
      %s236 = smul.u32 2, %s19
      %p237 = scmp.lt.s32.totalorder %s18, 1
      %s238 = scalar_select %p237, %s18, 1
      %p239 = scmp.lt.s32.totalorder %s236, 1
      %s240 = scalar_select %p239, %s236, 1
      %s241 = smul.addr %s238, 16
      %s242 = sadd.s32 %s240, %s241
      %s243 = smul.addr %s242, 8
      %s244 = scalar_lea.vmem %s3, %s243
      %s245 = smul.u32 2, %s19
      %v247 = vld [vmem:[%s224] sm:$0xff]
      %v248 = vld [vmem:[%s224 + $0x8] sm:$0xff]
      %v249 = vld [vmem:[%s224 + $0x10] sm:$0xff]
      %v250 = vld [vmem:[%s224 + $0x18] sm:$0xff]
      %v251 = vld [vmem:[%s224 + $0x20] sm:$0xff]
      %v252 = vld [vmem:[%s224 + $0x28] sm:$0xff]
      %v253 = vld [vmem:[%s224 + $0x30] sm:$0xff]
      %v254 = vld [vmem:[%s224 + $0x38] sm:$0xff]
      %v255 = vmax.bf16 %v247, 0
      %v256 = vmax.bf16 %v248, 0
      %v257 = vmax.bf16 %v249, 0
      %v258 = vmax.bf16 %v250, 0
      %v259 = vmax.bf16 %v251, 0
      %v260 = vmax.bf16 %v252, 0
      %v261 = vmax.bf16 %v253, 0
      %v262 = vmax.bf16 %v254, 0
      %v263 = vld [vmem:[%s1] sm:$0xf]
      %v264 = vld [vmem:[%s1 + $0x4] sm:$0xf]
      %v265 = vld [vmem:[%s1 + $0x8] sm:$0xf]
      %v266 = vld [vmem:[%s1 + $0xc] sm:$0xf]
      %v267 = vld [vmem:[%s1 + $0x10] sm:$0xf]
      %v268 = vld [vmem:[%s1 + $0x14] sm:$0xf]
      %v269 = vld [vmem:[%s1 + $0x18] sm:$0xf]
      %v270 = vld [vmem:[%s1 + $0x1c] sm:$0xf]
      %v271 = vld [vmem:[%s234] sm:$0xff]
      %v272 = vld [vmem:[%s234 + $0x8] sm:$0xff]
      %v273 = vld [vmem:[%s234 + $0x10] sm:$0xff]
      %v274 = vld [vmem:[%s234 + $0x18] sm:$0xff]
      %v275 = vld [vmem:[%s234 + $0x20] sm:$0xff]
      %v276 = vld [vmem:[%s234 + $0x28] sm:$0xff]
      %v277 = vld [vmem:[%s234 + $0x30] sm:$0xff]
      %v278 = vld [vmem:[%s234 + $0x38] sm:$0xff]
      %v279 = vunpack.c.l.bf16 %v271
      %v280 = vunpack.c.h.bf16 %v271
      %v281 = vunpack.c.l.bf16 %v272
      %v282 = vunpack.c.h.bf16 %v272
      %v283 = vunpack.c.l.bf16 %v273
      %v284 = vunpack.c.h.bf16 %v273
      %v285 = vunpack.c.l.bf16 %v274
      %v286 = vunpack.c.h.bf16 %v274
      %v287 = vunpack.c.l.bf16 %v275
      %v288 = vunpack.c.h.bf16 %v275
      %v289 = vunpack.c.l.bf16 %v276
      %v290 = vunpack.c.h.bf16 %v276
      %v291 = vunpack.c.l.bf16 %v277
      %v292 = vunpack.c.h.bf16 %v277
      %v293 = vunpack.c.l.bf16 %v278
      %v294 = vunpack.c.h.bf16 %v278
      %v303 = vunpack.c.l.b16 %v263
      %v304 = vunpack.c.l.b16 %v264
      %v305 = vunpack.c.l.b16 %v265
      %v306 = vunpack.c.l.b16 %v266
      %v307 = vunpack.c.l.b16 %v267
      %v308 = vunpack.c.l.b16 %v268
      %v309 = vunpack.c.l.b16 %v269
      %v310 = vunpack.c.l.b16 %v270
      %v311 = vpack.c.b16 %v304, %v303
      %v312 = vpack.c.b16 %v306, %v305
      %v313 = vpack.c.b16 %v308, %v307
      %v314 = vpack.c.b16 %v310, %v309
      %v323 = vunpack.c.l.b16 %v255
      %v324 = vunpack.c.h.b16 %v255
      %v325 = vunpack.c.l.b16 %v256
      %v326 = vunpack.c.h.b16 %v256
      %v327 = vunpack.c.l.b16 %v257
      %v328 = vunpack.c.h.b16 %v257
      %v329 = vunpack.c.l.b16 %v258
      %v330 = vunpack.c.h.b16 %v258
      %v331 = vunpack.c.l.b16 %v259
      %v332 = vunpack.c.h.b16 %v259
      %v333 = vunpack.c.l.b16 %v260
      %v334 = vunpack.c.h.b16 %v260
      %v335 = vunpack.c.l.b16 %v261
      %v336 = vunpack.c.h.b16 %v261
      %v337 = vunpack.c.l.b16 %v262
      %v338 = vunpack.c.h.b16 %v262
      %v339 = vpack.c.b16 %v325, %v323
      %v340 = vpack.c.b16 %v326, %v324
      %v341 = vpack.c.b16 %v329, %v327
      %v342 = vpack.c.b16 %v330, %v328
      %v343 = vpack.c.b16 %v333, %v331
      %v344 = vpack.c.b16 %v334, %v332
      %v345 = vpack.c.b16 %v337, %v335
      %v346 = vpack.c.b16 %v338, %v336
      %vm355 = vcmask 523264
      %v357 = vsel %vm355, %v311, 0
      %v360 = vsel %vm355, %v312, 0
      %v363 = vsel %vm355, %v313, 0
      %v366 = vsel %vm355, %v314, 0
      %368 = vmatprep.subr.bf16.mxu0 %v340
      %369 = vmatpush1.bf16.msra.mxu0 %v339
      %370 = vmatprep.subr.bf16.mxu0 %v342
      %371 = vmatpush1.bf16.msra.mxu0 %v341
      %372 = vmatprep.subr.bf16.mxu0 %v344
      %373 = vmatpush1.bf16.msra.mxu0 %v343
      %374 = vmatprep.subr.bf16.mxu0 %v346
      %375 = vmatpush1.bf16.msra.mxu0 %v345
      %376 = vmatprep.subr.bf16.mxu0 0
      %377 = vmatpush1.bf16.msra.mxu0 0
      %378 = vmatprep.subr.bf16.mxu0 0
      %379 = vmatpush1.bf16.msra.mxu0 0
      %380 = vmatprep.subr.bf16.mxu0 0
      %381 = vmatpush1.bf16.msra.mxu0 0
      %382 = vmatprep.subr.bf16.mxu0 0
      %383 = vmatpush1.bf16.msra.mxu0 0
      %384 = vmatprep.subr.bf16.mxu0 0
      %385 = vmatpush1.bf16.msra.mxu0 0
      %386 = vmatprep.subr.bf16.mxu0 0
      %387 = vmatpush1.bf16.msra.mxu0 0
      %388 = vmatprep.subr.bf16.mxu0 0
      %389 = vmatpush1.bf16.msra.mxu0 0
      %390 = vmatprep.subr.bf16.mxu0 0
      %391 = vmatpush1.bf16.msra.mxu0 0
      %392 = vmatprep.subr.bf16.mxu0 0
      %393 = vmatpush1.bf16.msra.mxu0 0
      %394 = vmatprep.subr.bf16.mxu0 0
      %395 = vmatpush1.bf16.msra.mxu0 0
      %396 = vmatprep.subr.bf16.mxu0 0
      %397 = vmatpush1.bf16.msra.mxu0 0
      %398 = vmatprep.subr.bf16.mxu0 0
      %399 = vmatpush1.bf16.msra.mxu0 0
      %400 = vmatprep.mubr.bf16.mxu0 0
      %401 = vmatmul.mubr.bf16.gmra.mrb[0].mxu0 %v357
      %v402 = vpop.f32.mrb[0].mxu0
      %v403 = vadd.f32 %v279, %v402
      %v404 = vpop.f32.mrb[0].mxu0
      %v405 = vadd.f32 %v280, %v404
      %v406 = vpop.f32.mrb[0].mxu0
      %v407 = vadd.f32 %v281, %v406
      %v408 = vpop.f32.mrb[0].mxu0
      %v409 = vadd.f32 %v282, %v408
      %410 = vmatprep.mubr.bf16.mxu0 0
      %411 = vmatmul.mubr.bf16.gmra.mrb[0].mxu0 %v360
      %v412 = vpop.f32.mrb[0].mxu0
      %v413 = vadd.f32 %v283, %v412
      %v414 = vpop.f32.mrb[0].mxu0
      %v415 = vadd.f32 %v284, %v414
      %v416 = vpop.f32.mrb[0].mxu0
      %v417 = vadd.f32 %v285, %v416
      %v418 = vpop.f32.mrb[0].mxu0
      %v419 = vadd.f32 %v286, %v418
      %420 = vmatprep.mubr.bf16.mxu0 0
      %421 = vmatmul.mubr.bf16.gmra.mrb[0].mxu0 %v363
      %v422 = vpop.f32.mrb[0].mxu0
      %v423 = vadd.f32 %v287, %v422
      %v424 = vpop.f32.mrb[0].mxu0
      %v425 = vadd.f32 %v288, %v424
      %v426 = vpop.f32.mrb[0].mxu0
      %v427 = vadd.f32 %v289, %v426
      %v428 = vpop.f32.mrb[0].mxu0
      %v429 = vadd.f32 %v290, %v428
      %430 = vmatprep.mubr.bf16.mxu0 0
      %431 = vmatmul.mubr.bf16.gmra.mrb[0].mxu0 %v366
      %v432 = vpop.f32.mrb[0].mxu0
      %v433 = vadd.f32 %v291, %v432
      %v434 = vpop.f32.mrb[0].mxu0
      %v435 = vadd.f32 %v292, %v434
      %v436 = vpop.f32.mrb[0].mxu0
      %v437 = vadd.f32 %v293, %v436
      %v438 = vpop.f32.mrb[0].mxu0
      %v439 = vadd.f32 %v294, %v438
      %440 = vdwg.mxu0
      %441 = vst [vmem:[%s244] sm:$0xff] %v403
      %442 = vst [vmem:[%s244 + $0x8] sm:$0xff] %v405
      %443 = vst [vmem:[%s244 + $0x10] sm:$0xff] %v407
      %444 = vst [vmem:[%s244 + $0x18] sm:$0xff] %v409
      %445 = vst [vmem:[%s244 + $0x20] sm:$0xff] %v413
      %446 = vst [vmem:[%s244 + $0x28] sm:$0xff] %v415
      %447 = vst [vmem:[%s244 + $0x30] sm:$0xff] %v417
      %448 = vst [vmem:[%s244 + $0x38] sm:$0xff] %v419
      %449 = vst [vmem:[%s244 + $0x40] sm:$0xff] %v423
      %450 = vst [vmem:[%s244 + $0x48] sm:$0xff] %v425
      %451 = vst [vmem:[%s244 + $0x50] sm:$0xff] %v427
      %452 = vst [vmem:[%s244 + $0x58] sm:$0xff] %v429
      %453 = vst [vmem:[%s244 + $0x60] sm:$0xff] %v433
      %454 = vst [vmem:[%s244 + $0x68] sm:$0xff] %v435
      %455 = vst [vmem:[%s244 + $0x70] sm:$0xff] %v437
      %456 = vst [vmem:[%s244 + $0x78] sm:$0xff] %v439
      %s457 = smul.u32 2, %s19
      %p458 = scmp.lt.s32.totalorder %s18, 1
      %s459 = scalar_select %p458, %s18, 1
      %p460 = scmp.lt.s32.totalorder %s457, 1
      %s461 = scalar_select %p460, %s457, 1
      %s462 = smul.addr %s459, 16
      %s463 = sadd.s32 %s461, %s462
      %s464 = smul.addr %s463, 8
      %s465 = scalar_lea.vmem %s3, %s464
      // Predicated region
      $region33: #{_lambda_.23} parent=31 // pred_check
        %p466 = pneg %p123
      $region34: #{_lambda_.23} parent=31 // pred_check_branch
        %468 = sbr.rel (%p466) target = $region36
      $region35: #{_lambda_.23} parent=31 // pred_region
        %s469 = smul.u32 2, %s19
      $region36: #{_lambda_.23} parent=31 // pred_fallthru
        _
    $region32: #{_lambda_.23} parent=5 // pred_fallthru
      _
    %p470 = scmp.le.s32.totalorder 2, %s9
    // Predicated region
    $region37: #{_lambda_.23} parent=5 // pred_check
      %p471 = pneg %p470
    $region38: #{_lambda_.23} parent=5 // pred_check_branch
      %473 = sbr.rel (%p471) target = $region40
    $region39: #{_lambda_.23} parent=5 // pred_region
      %s474 = ssub.s32 %s9, 2
      // Predicated region
      $region41: #{_lambda_.23} parent=39 // pred_check
        %p475 = pneg %p129
      $region42: #{_lambda_.23} parent=39 // pred_check_branch
        %477 = sbr.rel (%p475) target = $region44
      $region43: #{_lambda_.23} parent=39 // pred_region
        %s478 = smul.u32 2, %s21
        %p479 = scmp.lt.s32.totalorder %s20, 1
        %s480 = scalar_select %p479, %s20, 1
        %p481 = scmp.lt.s32.totalorder %s478, 1
        %s482 = scalar_select %p481, %s478, 1
        %s483 = smul.addr %s480, 16
        %s484 = sadd.s32 %s482, %s483
        %s485 = smul.addr %s484, 8
        %s486 = scalar_lea.vmem %s3, %s485
      $region44: #{_lambda_.23} parent=39 // pred_fallthru
        _
    $region40: #{_lambda_.23} parent=5 // pred_fallthru
      _
  $region6: #{_lambda_.23} parent=0 // loop_footer
    %s13 = sadd.s32 1, %s9
  $region7: #{_lambda_.23} parent=0 // loop_footer_branch
    %8 = sbr.rel target = $region3
  $region8: #{_lambda_.23} parent=0 // loop_exit
    _

</llo_original>
